<compile_context>
chip_gen: v7x
topology: tpu7x:2x2x1
jax: 0.10.0
libtpu: 0.0.40
codegen_flags: <defaults>
</compile_context>

<pallas_src>
from functools import partial

import jax
import jax.numpy as jnp
from jax.experimental import pallas as pl
from jax.experimental.pallas import tpu as pltpu


NUM_CLASSES = 4
ANCHORS = [6, 6, 6, 6, 4, 4]          # RFB_Net_vgg multibox anchor plan
# Synthetic backbone channel plan (Cin, Cout) for the 6 source feature maps.
BACKBONE_IO = [(3, 8), (8, 16), (16, 8), (8, 8), (8, 8), (8, 8)]
# Whether each backbone stage downsamples (stride-2) after its conv.
DOWNSAMPLE = [True, True, True, True, True, False]


# ----------------------------------------------------------------------------
# Pallas kernel: fused 3x3 conv (+bias, optional ReLU, optional head softmax)
# ----------------------------------------------------------------------------
def _conv3x3_kernel(x_ref, w_ref, b_ref, o_ref, *, wp, relu, softmax_groups):
    """3x3 conv as one lane-dense matmul with the taps folded into K.

    x_ref: (1, Cin, Lp)  zero-padded feature map, spatially flattened row-major
                         with padded row width `wp`; Lp = (H+2)*wp + 2.
    w_ref: (Cout, 9*Cin) weights, tap-major / Cin-minor along the contraction dim.
    b_ref: (Cout, 1)
    o_ref: (1, Cout, L)  L = H*wp (columns W..wp-1 of each row are junk; dropped
                         by the wrapper).
    """
    L = o_ref.shape[2]
    x = x_ref[0]                                   # (Cin, Lp), bf16
    taps = []
    for kh in range(3):                            # 9 lane-shifted slices, no HBM copy
        for kw in range(3):
            off = kh * wp + kw
            taps.append(x[:, off:off + L])         # (Cin, L)
    xt = jnp.concatenate(taps, axis=0)             # (9*Cin, L), lane-dense

    acc = jnp.dot(w_ref[...], xt,                  # single MXU matmul, K = 9*Cin
                  preferred_element_type=jnp.float32)  # (Cout, L) f32
    acc = acc + b_ref[...]                         # (Cout, 1) broadcast over lanes
    if relu:
        acc = jnp.maximum(acc, 0.0)

    if softmax_groups is not None:
        # Fused test-phase softmax: conf rows are grouped (anchor-major,
        # class-minor) along the sublane dim; reduce each NC-row group.
        loc_rows, num_anchors, nc = softmax_groups
        parts = [acc[:loc_rows]]                   # loc rows pass through untouched
        for a in range(num_anchors):
            g = acc[loc_rows + a * nc: loc_rows + (a + 1) * nc]   # (NC, L)
            m = jnp.max(g, axis=0, keepdims=True)
            e = jnp.exp(g - m)
            s = jnp.sum(e, axis=0, keepdims=True)
            parts.append(e * pl.reciprocal(s, approx=True))       # EUP divide
        acc = jnp.concatenate(parts, axis=0)

    o_ref[0] = acc.astype(o_ref.dtype)


# ----------------------------------------------------------------------------
# Wrapper around pallas_call
# ----------------------------------------------------------------------------
def conv3x3(x, w_mat, b, *, relu=False, softmax_groups=None):
    """3x3 conv, padding=1, stride=1, channel-first.

    x: (B, Cin, H, W) f32.  w_mat: (Cout, 9*Cin).  b: (Cout,).
    Returns (B, Cout, H, W) f32.
    """
    B, Cin, H, W = x.shape
    Cout = w_mat.shape[0]
    wp = W + 2
    L = H * wp
    Lp = (H + 2) * wp + 2

    # Single spatial zero-pad + flatten (1x HBM traffic; taps sliced in-kernel).
    xp = jnp.pad(x, ((0, 0), (0, 0), (1, 1), (1, 1)))        # (B, Cin, H+2, wp)
    xf = xp.reshape(B, Cin, (H + 2) * wp)
    xf = jnp.pad(xf, ((0, 0), (0, 0), (0, 2)))               # (B, Cin, Lp)
    xf = xf.astype(jnp.bfloat16)                             # bf16 feed, f32 accum
    wq = w_mat.astype(jnp.bfloat16)
    b2 = b.reshape(Cout, 1).astype(jnp.float32)

    kernel = partial(_conv3x3_kernel, wp=wp, relu=relu,
                     softmax_groups=softmax_groups)
    out = pl.pallas_call(
        kernel,
        out_shape=jax.ShapeDtypeStruct((B, Cout, L), jnp.float32),
        grid=(B,),
        in_specs=[
            pl.BlockSpec((1, Cin, Lp), lambda bb: (bb, 0, 0)),
            pl.BlockSpec((Cout, 9 * Cin), lambda bb: (0, 0)),
            pl.BlockSpec((Cout, 1), lambda bb: (0, 0)),
        ],
        out_specs=pl.BlockSpec((1, Cout, L), lambda bb: (bb, 0, 0)),
        compiler_params=pltpu.CompilerParams(
            dimension_semantics=("parallel",)),
    )(xf, wq, b2)
    # Drop the 2 junk (padded-width) columns of each output row.
    return out.reshape(B, Cout, H, wp)[:, :, :, :W]


# ----------------------------------------------------------------------------
# Parameters (deterministic, synthetic)
# ----------------------------------------------------------------------------
def _hwio_to_mat(w):
    """(3,3,Cin,Cout) HWIO conv weight -> (Cout, 9*Cin) tap-major/Cin-minor."""
    kh, kw, cin, cout = w.shape
    return jnp.transpose(w, (3, 0, 1, 2)).reshape(cout, kh * kw * cin)


def init_params(key):
    src_channels = [io[1] for io in BACKBONE_IO]
    n_convs = len(BACKBONE_IO) + 2 * len(src_channels)
    keys = iter(jax.random.split(key, n_convs))

    def conv_p(cin, cout):
        w = 0.1 * jax.random.normal(next(keys), (3, 3, cin, cout),
                                    dtype=jnp.float32)
        b = 0.01 * jnp.arange(cout, dtype=jnp.float32)
        return _hwio_to_mat(w), b

    params = {"backbone": [], "head": []}
    for cin, cout in BACKBONE_IO:
        params["backbone"].append(conv_p(cin, cout))
    for c, a in zip(src_channels, ANCHORS):
        wl, bl = conv_p(c, a * 4)
        wc, bc = conv_p(c, a * NUM_CLASSES)
        # Fuse loc + conf head convs: one matmul with Cout = A*4 + A*NUM_CLASSES.
        params["head"].append((jnp.concatenate([wl, wc], axis=0),
                               jnp.concatenate([bl, bc], axis=0)))
    return params


# ----------------------------------------------------------------------------
# RFBNet forward
# ----------------------------------------------------------------------------
@partial(jax.jit, static_argnames=("phase",))
def rfbnet_forward(x_nchw, params, phase="test"):
    # TODO(synk): `Backbone()` is not defined in the reference snippet; a synthetic
    # 6-scale conv trunk (3x3 conv + ReLU, stride-2 via subsampling the full conv
    # output, which is mathematically identical to a stride-2 conv) stands in for it.
    feats = []
    h = x_nchw                                    # kernels are channel-first already
    for i, (w, b) in enumerate(params["backbone"]):
        h = conv3x3(h, w, b, relu=True)
        if DOWNSAMPLE[i]:
            h = h[:, :, ::2, ::2]
        feats.append(h)

    loc_list, conf_list = [], []
    for f, (wh, bh), a in zip(feats, params["head"], ANCHORS):
        loc_rows = a * 4
        sm = (loc_rows, a, NUM_CLASSES) if phase == "test" else None
        o = conv3x3(f, wh, bh, relu=False, softmax_groups=sm)  # (B, A*4+A*NC, H, W)
        B = o.shape[0]
        loc = o[:, :loc_rows]                     # (B, A*4, H, W)
        conf = o[:, loc_rows:]                    # (B, A*NC, H, W)
        # PyTorch: permute(0, 2, 3, 1).contiguous().view(B, -1)
        loc_list.append(jnp.transpose(loc, (0, 2, 3, 1)).reshape(B, -1))
        conf_list.append(jnp.transpose(conf, (0, 2, 3, 1)).reshape(B, -1))

    loc = jnp.concatenate(loc_list, axis=1)
    conf = jnp.concatenate(conf_list, axis=1)
    B = loc.shape[0]
    loc_out = loc.reshape(B, -1, 4)

    if phase == "test":
        # Softmax was applied per (anchor, class) group inside the head kernels.
        conf_out = conf.reshape(-1, NUM_CLASSES)
    else:
        conf_out = conf.reshape(B, -1, NUM_CLASSES)
    return loc_out, conf_out


# ----------------------------------------------------------------------------
if __name__ == "__main__":
    key = jax.random.PRNGKey(0)
    pkey, xkey = jax.random.split(key)
    params = init_params(pkey)

    # Small NCHW input, matching PyTorch conventions: (B=2, C=3, H=32, W=32).
    x = jax.random.normal(xkey, (2, 3, 32, 32), dtype=jnp.float32)

    loc_out, conf_out = rfbnet_forward(x, params, phase="test")
    loc_out = jax.block_until_ready(loc_out)
    conf_out = jax.block_until_ready(conf_out)

    # Prior count: 16*16*6 + 8*8*6 + 4*4*6 + 2*2*6 + 1*4 + 1*4 = 2048.
    assert loc_out.shape == (2, 2048, 4), loc_out.shape
    assert conf_out.shape == (2 * 2048, NUM_CLASSES), conf_out.shape
    assert bool(jnp.all(jnp.isfinite(loc_out)))
    assert bool(jnp.all(jnp.isfinite(conf_out)))
    row_sums = jnp.sum(conf_out, axis=-1)
    # Softmax uses the EUP approx reciprocal, so row sums are 1 to ~1e-3.
    assert bool(jnp.allclose(row_sums, 1.0, atol=5e-3)), \
        float(jnp.max(jnp.abs(row_sums - 1.0)))

    print("KERNEL_OK")
</pallas_src>

<mosaic_0001>
module attributes {stable_mosaic.version = 11 : i64} {
  func.func @_conv3x3_kernel(%arg0: i32, %arg1: memref<1x3x1158xbf16, #tpu.memory_space<vmem>>, %arg2: memref<8x27xbf16, #tpu.memory_space<vmem>>, %arg3: memref<8x1xf32, #tpu.memory_space<vmem>>, %arg4: memref<1x8x1088xf32, #tpu.memory_space<vmem>>) attributes {dimension_semantics = [#tpu.dimension_semantics<parallel>], iteration_bounds = array<i64: 2>, scalar_prefetch = 0 : i64, scratch_operands = 0 : i64, tpu.core_type = #tpu.core_type<tc>, window_params = [{transform_indices = @transform_0, window_bounds = array<i64: 1, 3, 1158>}, {pipeline_mode = #tpu.pipeline_mode<synchronous>, transform_indices = @transform_1, window_bounds = array<i64: 8, 27>}, {pipeline_mode = #tpu.pipeline_mode<synchronous>, transform_indices = @transform_2, window_bounds = array<i64: 8, 1>}, {transform_indices = @transform_3, window_bounds = array<i64: 1, 8, 1088>}]} {
    %c0 = arith.constant 0 : index
    %c0_0 = arith.constant 0 : index
    %c0_1 = arith.constant 0 : index
    %0 = vector.load %arg1[%c0, %c0_0, %c0_1] : memref<1x3x1158xbf16, #tpu.memory_space<vmem>>, vector<1x3x1158xbf16>
    %1 = vector.shape_cast %0 : vector<1x3x1158xbf16> to vector<3x1158xbf16>
    %2 = vector.extract_strided_slice %1 {offsets = [0, 0], sizes = [3, 1088], strides = [1, 1]} : vector<3x1158xbf16> to vector<3x1088xbf16>
    %3 = vector.extract_strided_slice %1 {offsets = [0, 1], sizes = [3, 1088], strides = [1, 1]} : vector<3x1158xbf16> to vector<3x1088xbf16>
    %4 = vector.extract_strided_slice %1 {offsets = [0, 2], sizes = [3, 1088], strides = [1, 1]} : vector<3x1158xbf16> to vector<3x1088xbf16>
    %5 = vector.extract_strided_slice %1 {offsets = [0, 34], sizes = [3, 1088], strides = [1, 1]} : vector<3x1158xbf16> to vector<3x1088xbf16>
    %6 = vector.extract_strided_slice %1 {offsets = [0, 35], sizes = [3, 1088], strides = [1, 1]} : vector<3x1158xbf16> to vector<3x1088xbf16>
    %7 = vector.extract_strided_slice %1 {offsets = [0, 36], sizes = [3, 1088], strides = [1, 1]} : vector<3x1158xbf16> to vector<3x1088xbf16>
    %8 = vector.extract_strided_slice %1 {offsets = [0, 68], sizes = [3, 1088], strides = [1, 1]} : vector<3x1158xbf16> to vector<3x1088xbf16>
    %9 = vector.extract_strided_slice %1 {offsets = [0, 69], sizes = [3, 1088], strides = [1, 1]} : vector<3x1158xbf16> to vector<3x1088xbf16>
    %10 = vector.extract_strided_slice %1 {offsets = [0, 70], sizes = [3, 1088], strides = [1, 1]} : vector<3x1158xbf16> to vector<3x1088xbf16>
    %11 = tpu.concatenate %2, %3, %4, %5, %6, %7, %8, %9, %10 in 0 : vector<3x1088xbf16>, vector<3x1088xbf16>, vector<3x1088xbf16>, vector<3x1088xbf16>, vector<3x1088xbf16>, vector<3x1088xbf16>, vector<3x1088xbf16>, vector<3x1088xbf16>, vector<3x1088xbf16> -> vector<27x1088xbf16>
    %c0_2 = arith.constant 0 : index
    %c0_3 = arith.constant 0 : index
    %12 = vector.load %arg2[%c0_2, %c0_3] : memref<8x27xbf16, #tpu.memory_space<vmem>>, vector<8x27xbf16>
    %cst = arith.constant dense<0.000000e+00> : vector<8x1088xf32>
    %13 = tpu.matmul %12, %11, %cst {dimension_numbers = #tpu.dot_dimension_numbers<[1], [0], [0], [1], [0, 0, 1, 1], [], []>} : vector<8x27xbf16>, vector<27x1088xbf16>, vector<8x1088xf32> -> vector<8x1088xf32>
    %c0_4 = arith.constant 0 : index
    %c0_5 = arith.constant 0 : index
    %14 = vector.load %arg3[%c0_4, %c0_5] : memref<8x1xf32, #tpu.memory_space<vmem>>, vector<8x1xf32>
    %15 = vector.broadcast %14 : vector<8x1xf32> to vector<8x1088xf32>
    %16 = arith.addf %13, %15 : vector<8x1088xf32>
    %cst_6 = arith.constant 0.000000e+00 : f32
    %17 = vector.broadcast %cst_6 : f32 to vector<8x1088xf32>
    %18 = arith.maximumf %16, %17 : vector<8x1088xf32>
    %c0_7 = arith.constant 0 : index
    %c0_8 = arith.constant 0 : index
    %c0_9 = arith.constant 0 : index
    %19 = vector.load %arg4[%c0_7, %c0_8, %c0_9] : memref<1x8x1088xf32, #tpu.memory_space<vmem>>, vector<1x8x1088xf32>
    %20 = vector.shape_cast %19 : vector<1x8x1088xf32> to vector<8x1088xf32>
    %21 = vector.shape_cast %18 : vector<8x1088xf32> to vector<1x8x1088xf32>
    tpu.vector_store %arg4[%c0_7, %c0_8, %c0_9], %21 {strides = array<i32>} : memref<1x8x1088xf32, #tpu.memory_space<vmem>>, vector<1x8x1088xf32>,
    return
  }
  func.func @transform_0(%arg0: i32) -> (i32, i32, i32) {
    %c0_i32 = arith.constant 0 : i32
    %c0_i32_0 = arith.constant 0 : i32
    %c0_i32_1 = arith.constant 0 : i32
    return %arg0, %c0_i32, %c0_i32_0 : i32, i32, i32
  }
  func.func @transform_1(%arg0: i32) -> (i32, i32) {
    %c0_i32 = arith.constant 0 : i32
    %c0_i32_0 = arith.constant 0 : i32
    %c0_i32_1 = arith.constant 0 : i32
    return %c0_i32, %c0_i32_0 : i32, i32
  }
  func.func @transform_2(%arg0: i32) -> (i32, i32) {
    %c0_i32 = arith.constant 0 : i32
    %c0_i32_0 = arith.constant 0 : i32
    %c0_i32_1 = arith.constant 0 : i32
    return %c0_i32, %c0_i32_0 : i32, i32
  }
  func.func @transform_3(%arg0: i32) -> (i32, i32, i32) {
    %c0_i32 = arith.constant 0 : i32
    %c0_i32_0 = arith.constant 0 : i32
    %c0_i32_1 = arith.constant 0 : i32
    return %arg0, %c0_i32, %c0_i32_0 : i32, i32, i32
  }
}

module attributes {stable_mosaic.version = 11 : i64} {
  func.func @_conv3x3_kernel(%arg0: i32, %arg1: memref<1x8x326xbf16, #tpu.memory_space<vmem>>, %arg2: memref<16x72xbf16, #tpu.memory_space<vmem>>, %arg3: memref<16x1xf32, #tpu.memory_space<vmem>>, %arg4: memref<1x16x288xf32, #tpu.memory_space<vmem>>) attributes {dimension_semantics = [#tpu.dimension_semantics<parallel>], iteration_bounds = array<i64: 2>, scalar_prefetch = 0 : i64, scratch_operands = 0 : i64, tpu.core_type = #tpu.core_type<tc>, window_params = [{transform_indices = @transform_0, window_bounds = array<i64: 1, 8, 326>}, {pipeline_mode = #tpu.pipeline_mode<synchronous>, transform_indices = @transform_1, window_bounds = array<i64: 16, 72>}, {pipeline_mode = #tpu.pipeline_mode<synchronous>, transform_indices = @transform_2, window_bounds = array<i64: 16, 1>}, {transform_indices = @transform_3, window_bounds = array<i64: 1, 16, 288>}]} {
    %c0 = arith.constant 0 : index
    %c0_0 = arith.constant 0 : index
    %c0_1 = arith.constant 0 : index
    %0 = vector.load %arg1[%c0, %c0_0, %c0_1] : memref<1x8x326xbf16, #tpu.memory_space<vmem>>, vector<1x8x326xbf16>
    %1 = vector.shape_cast %0 : vector<1x8x326xbf16> to vector<8x326xbf16>
    %2 = vector.extract_strided_slice %1 {offsets = [0, 0], sizes = [8, 288], strides = [1, 1]} : vector<8x326xbf16> to vector<8x288xbf16>
    %3 = vector.extract_strided_slice %1 {offsets = [0, 1], sizes = [8, 288], strides = [1, 1]} : vector<8x326xbf16> to vector<8x288xbf16>
    %4 = vector.extract_strided_slice %1 {offsets = [0, 2], sizes = [8, 288], strides = [1, 1]} : vector<8x326xbf16> to vector<8x288xbf16>
    %5 = vector.extract_strided_slice %1 {offsets = [0, 18], sizes = [8, 288], strides = [1, 1]} : vector<8x326xbf16> to vector<8x288xbf16>
    %6 = vector.extract_strided_slice %1 {offsets = [0, 19], sizes = [8, 288], strides = [1, 1]} : vector<8x326xbf16> to vector<8x288xbf16>
    %7 = vector.extract_strided_slice %1 {offsets = [0, 20], sizes = [8, 288], strides = [1, 1]} : vector<8x326xbf16> to vector<8x288xbf16>
    %8 = vector.extract_strided_slice %1 {offsets = [0, 36], sizes = [8, 288], strides = [1, 1]} : vector<8x326xbf16> to vector<8x288xbf16>
    %9 = vector.extract_strided_slice %1 {offsets = [0, 37], sizes = [8, 288], strides = [1, 1]} : vector<8x326xbf16> to vector<8x288xbf16>
    %10 = vector.extract_strided_slice %1 {offsets = [0, 38], sizes = [8, 288], strides = [1, 1]} : vector<8x326xbf16> to vector<8x288xbf16>
    %11 = tpu.concatenate %2, %3, %4, %5, %6, %7, %8, %9, %10 in 0 : vector<8x288xbf16>, vector<8x288xbf16>, vector<8x288xbf16>, vector<8x288xbf16>, vector<8x288xbf16>, vector<8x288xbf16>, vector<8x288xbf16>, vector<8x288xbf16>, vector<8x288xbf16> -> vector<72x288xbf16>
    %c0_2 = arith.constant 0 : index
    %c0_3 = arith.constant 0 : index
    %12 = vector.load %arg2[%c0_2, %c0_3] : memref<16x72xbf16, #tpu.memory_space<vmem>>, vector<16x72xbf16>
    %cst = arith.constant dense<0.000000e+00> : vector<16x288xf32>
    %13 = tpu.matmul %12, %11, %cst {dimension_numbers = #tpu.dot_dimension_numbers<[1], [0], [0], [1], [0, 0, 1, 1], [], []>} : vector<16x72xbf16>, vector<72x288xbf16>, vector<16x288xf32> -> vector<16x288xf32>
    %c0_4 = arith.constant 0 : index
    %c0_5 = arith.constant 0 : index
    %14 = vector.load %arg3[%c0_4, %c0_5] : memref<16x1xf32, #tpu.memory_space<vmem>>, vector<16x1xf32>
    %15 = vector.broadcast %14 : vector<16x1xf32> to vector<16x288xf32>
    %16 = arith.addf %13, %15 : vector<16x288xf32>
    %cst_6 = arith.constant 0.000000e+00 : f32
    %17 = vector.broadcast %cst_6 : f32 to vector<16x288xf32>
    %18 = arith.maximumf %16, %17 : vector<16x288xf32>
    %c0_7 = arith.constant 0 : index
    %c0_8 = arith.constant 0 : index
    %c0_9 = arith.constant 0 : index
    %19 = vector.load %arg4[%c0_7, %c0_8, %c0_9] : memref<1x16x288xf32, #tpu.memory_space<vmem>>, vector<1x16x288xf32>
    %20 = vector.shape_cast %19 : vector<1x16x288xf32> to vector<16x288xf32>
    %21 = vector.shape_cast %18 : vector<16x288xf32> to vector<1x16x288xf32>
    tpu.vector_store %arg4[%c0_7, %c0_8, %c0_9], %21 {strides = array<i32>} : memref<1x16x288xf32, #tpu.memory_space<vmem>>, vector<1x16x288xf32>,
    return
  }
  func.func @transform_0(%arg0: i32) -> (i32, i32, i32) {
    %c0_i32 = arith.constant 0 : i32
    %c0_i32_0 = arith.constant 0 : i32
    %c0_i32_1 = arith.constant 0 : i32
    return %arg0, %c0_i32, %c0_i32_0 : i32, i32, i32
  }
  func.func @transform_1(%arg0: i32) -> (i32, i32) {
    %c0_i32 = arith.constant 0 : i32
    %c0_i32_0 = arith.constant 0 : i32
    %c0_i32_1 = arith.constant 0 : i32
    return %c0_i32, %c0_i32_0 : i32, i32
  }
  func.func @transform_2(%arg0: i32) -> (i32, i32) {
    %c0_i32 = arith.constant 0 : i32
    %c0_i32_0 = arith.constant 0 : i32
    %c0_i32_1 = arith.constant 0 : i32
    return %c0_i32, %c0_i32_0 : i32, i32
  }
  func.func @transform_3(%arg0: i32) -> (i32, i32, i32) {
    %c0_i32 = arith.constant 0 : i32
    %c0_i32_0 = arith.constant 0 : i32
    %c0_i32_1 = arith.constant 0 : i32
    return %arg0, %c0_i32, %c0_i32_0 : i32, i32, i32
  }
}

module attributes {stable_mosaic.version = 11 : i64} {
  func.func @_conv3x3_kernel(%arg0: i32, %arg1: memref<1x8x326xbf16, #tpu.memory_space<vmem>>, %arg2: memref<48x72xbf16, #tpu.memory_space<vmem>>, %arg3: memref<48x1xf32, #tpu.memory_space<vmem>>, %arg4: memref<1x48x288xf32, #tpu.memory_space<vmem>>) attributes {dimension_semantics = [#tpu.dimension_semantics<parallel>], iteration_bounds = array<i64: 2>, scalar_prefetch = 0 : i64, scratch_operands = 0 : i64, tpu.core_type = #tpu.core_type<tc>, window_params = [{transform_indices = @transform_0, window_bounds = array<i64: 1, 8, 326>}, {pipeline_mode = #tpu.pipeline_mode<synchronous>, transform_indices = @transform_1, window_bounds = array<i64: 48, 72>}, {pipeline_mode = #tpu.pipeline_mode<synchronous>, transform_indices = @transform_2, window_bounds = array<i64: 48, 1>}, {transform_indices = @transform_3, window_bounds = array<i64: 1, 48, 288>}]} {
    %c0 = arith.constant 0 : index
    %c0_0 = arith.constant 0 : index
    %c0_1 = arith.constant 0 : index
    %0 = vector.load %arg1[%c0, %c0_0, %c0_1] : memref<1x8x326xbf16, #tpu.memory_space<vmem>>, vector<1x8x326xbf16>
    %1 = vector.shape_cast %0 : vector<1x8x326xbf16> to vector<8x326xbf16>
    %2 = vector.extract_strided_slice %1 {offsets = [0, 0], sizes = [8, 288], strides = [1, 1]} : vector<8x326xbf16> to vector<8x288xbf16>
    %3 = vector.extract_strided_slice %1 {offsets = [0, 1], sizes = [8, 288], strides = [1, 1]} : vector<8x326xbf16> to vector<8x288xbf16>
    %4 = vector.extract_strided_slice %1 {offsets = [0, 2], sizes = [8, 288], strides = [1, 1]} : vector<8x326xbf16> to vector<8x288xbf16>
    %5 = vector.extract_strided_slice %1 {offsets = [0, 18], sizes = [8, 288], strides = [1, 1]} : vector<8x326xbf16> to vector<8x288xbf16>
    %6 = vector.extract_strided_slice %1 {offsets = [0, 19], sizes = [8, 288], strides = [1, 1]} : vector<8x326xbf16> to vector<8x288xbf16>
    %7 = vector.extract_strided_slice %1 {offsets = [0, 20], sizes = [8, 288], strides = [1, 1]} : vector<8x326xbf16> to vector<8x288xbf16>
    %8 = vector.extract_strided_slice %1 {offsets = [0, 36], sizes = [8, 288], strides = [1, 1]} : vector<8x326xbf16> to vector<8x288xbf16>
    %9 = vector.extract_strided_slice %1 {offsets = [0, 37], sizes = [8, 288], strides = [1, 1]} : vector<8x326xbf16> to vector<8x288xbf16>
    %10 = vector.extract_strided_slice %1 {offsets = [0, 38], sizes = [8, 288], strides = [1, 1]} : vector<8x326xbf16> to vector<8x288xbf16>
    %11 = tpu.concatenate %2, %3, %4, %5, %6, %7, %8, %9, %10 in 0 : vector<8x288xbf16>, vector<8x288xbf16>, vector<8x288xbf16>, vector<8x288xbf16>, vector<8x288xbf16>, vector<8x288xbf16>, vector<8x288xbf16>, vector<8x288xbf16>, vector<8x288xbf16> -> vector<72x288xbf16>
    %c0_2 = arith.constant 0 : index
    %c0_3 = arith.constant 0 : index
    %12 = vector.load %arg2[%c0_2, %c0_3] : memref<48x72xbf16, #tpu.memory_space<vmem>>, vector<48x72xbf16>
    %cst = arith.constant dense<0.000000e+00> : vector<48x288xf32>
    %13 = tpu.matmul %12, %11, %cst {dimension_numbers = #tpu.dot_dimension_numbers<[1], [0], [0], [1], [0, 0, 1, 1], [], []>} : vector<48x72xbf16>, vector<72x288xbf16>, vector<48x288xf32> -> vector<48x288xf32>
    %c0_4 = arith.constant 0 : index
    %c0_5 = arith.constant 0 : index
    %14 = vector.load %arg3[%c0_4, %c0_5] : memref<48x1xf32, #tpu.memory_space<vmem>>, vector<48x1xf32>
    %15 = vector.broadcast %14 : vector<48x1xf32> to vector<48x288xf32>
    %16 = arith.addf %13, %15 : vector<48x288xf32>
    %17 = vector.extract_strided_slice %16 {offsets = [0, 0], sizes = [24, 288], strides = [1, 1]} : vector<48x288xf32> to vector<24x288xf32>
    %18 = vector.extract_strided_slice %16 {offsets = [24, 0], sizes = [4, 288], strides = [1, 1]} : vector<48x288xf32> to vector<4x288xf32>
    %cst_6 = arith.constant dense<0xFF800000> : vector<288xf32>
    %19 = vector.multi_reduction <maximumf>, %18, %cst_6 [0] : vector<4x288xf32> to vector<288xf32>
    %20 = vector.shape_cast %19 : vector<288xf32> to vector<1x288xf32>
    %21 = vector.broadcast %20 : vector<1x288xf32> to vector<4x288xf32>
    %22 = arith.subf %18, %21 : vector<4x288xf32>
    %23 = math.exp %22 : vector<4x288xf32>
    %cst_7 = arith.constant dense<0.000000e+00> : vector<288xf32>
    %24 = vector.multi_reduction <add>, %23, %cst_7 [0] : vector<4x288xf32> to vector<288xf32>
    %25 = vector.shape_cast %24 : vector<288xf32> to vector<1x288xf32>
    %26 = tpu.reciprocal %25 {approx = true} : vector<1x288xf32> -> vector<1x288xf32>
    %27 = vector.broadcast %26 : vector<1x288xf32> to vector<4x288xf32>
    %28 = arith.mulf %23, %27 : vector<4x288xf32>
    %29 = vector.extract_strided_slice %16 {offsets = [28, 0], sizes = [4, 288], strides = [1, 1]} : vector<48x288xf32> to vector<4x288xf32>
    %cst_8 = arith.constant dense<0xFF800000> : vector<288xf32>
    %30 = vector.multi_reduction <maximumf>, %29, %cst_8 [0] : vector<4x288xf32> to vector<288xf32>
    %31 = vector.shape_cast %30 : vector<288xf32> to vector<1x288xf32>
    %32 = vector.broadcast %31 : vector<1x288xf32> to vector<4x288xf32>
    %33 = arith.subf %29, %32 : vector<4x288xf32>
    %34 = math.exp %33 : vector<4x288xf32>
    %cst_9 = arith.constant dense<0.000000e+00> : vector<288xf32>
    %35 = vector.multi_reduction <add>, %34, %cst_9 [0] : vector<4x288xf32> to vector<288xf32>
    %36 = vector.shape_cast %35 : vector<288xf32> to vector<1x288xf32>
    %37 = tpu.reciprocal %36 {approx = true} : vector<1x288xf32> -> vector<1x288xf32>
    %38 = vector.broadcast %37 : vector<1x288xf32> to vector<4x288xf32>
    %39 = arith.mulf %34, %38 : vector<4x288xf32>
    %40 = vector.extract_strided_slice %16 {offsets = [32, 0], sizes = [4, 288], strides = [1, 1]} : vector<48x288xf32> to vector<4x288xf32>
    %cst_10 = arith.constant dense<0xFF800000> : vector<288xf32>
    %41 = vector.multi_reduction <maximumf>, %40, %cst_10 [0] : vector<4x288xf32> to vector<288xf32>
    %42 = vector.shape_cast %41 : vector<288xf32> to vector<1x288xf32>
    %43 = vector.broadcast %42 : vector<1x288xf32> to vector<4x288xf32>
    %44 = arith.subf %40, %43 : vector<4x288xf32>
    %45 = math.exp %44 : vector<4x288xf32>
    %cst_11 = arith.constant dense<0.000000e+00> : vector<288xf32>
    %46 = vector.multi_reduction <add>, %45, %cst_11 [0] : vector<4x288xf32> to vector<288xf32>
    %47 = vector.shape_cast %46 : vector<288xf32> to vector<1x288xf32>
    %48 = tpu.reciprocal %47 {approx = true} : vector<1x288xf32> -> vector<1x288xf32>
    %49 = vector.broadcast %48 : vector<1x288xf32> to vector<4x288xf32>
    %50 = arith.mulf %45, %49 : vector<4x288xf32>
    %51 = vector.extract_strided_slice %16 {offsets = [36, 0], sizes = [4, 288], strides = [1, 1]} : vector<48x288xf32> to vector<4x288xf32>
    %cst_12 = arith.constant dense<0xFF800000> : vector<288xf32>
    %52 = vector.multi_reduction <maximumf>, %51, %cst_12 [0] : vector<4x288xf32> to vector<288xf32>
    %53 = vector.shape_cast %52 : vector<288xf32> to vector<1x288xf32>
    %54 = vector.broadcast %53 : vector<1x288xf32> to vector<4x288xf32>
    %55 = arith.subf %51, %54 : vector<4x288xf32>
    %56 = math.exp %55 : vector<4x288xf32>
    %cst_13 = arith.constant dense<0.000000e+00> : vector<288xf32>
    %57 = vector.multi_reduction <add>, %56, %cst_13 [0] : vector<4x288xf32> to vector<288xf32>
    %58 = vector.shape_cast %57 : vector<288xf32> to vector<1x288xf32>
    %59 = tpu.reciprocal %58 {approx = true} : vector<1x288xf32> -> vector<1x288xf32>
    %60 = vector.broadcast %59 : vector<1x288xf32> to vector<4x288xf32>
    %61 = arith.mulf %56, %60 : vector<4x288xf32>
    %62 = vector.extract_strided_slice %16 {offsets = [40, 0], sizes = [4, 288], strides = [1, 1]} : vector<48x288xf32> to vector<4x288xf32>
    %cst_14 = arith.constant dense<0xFF800000> : vector<288xf32>
    %63 = vector.multi_reduction <maximumf>, %62, %cst_14 [0] : vector<4x288xf32> to vector<288xf32>
    %64 = vector.shape_cast %63 : vector<288xf32> to vector<1x288xf32>
    %65 = vector.broadcast %64 : vector<1x288xf32> to vector<4x288xf32>
    %66 = arith.subf %62, %65 : vector<4x288xf32>
    %67 = math.exp %66 : vector<4x288xf32>
    %cst_15 = arith.constant dense<0.000000e+00> : vector<288xf32>
    %68 = vector.multi_reduction <add>, %67, %cst_15 [0] : vector<4x288xf32> to vector<288xf32>
    %69 = vector.shape_cast %68 : vector<288xf32> to vector<1x288xf32>
    %70 = tpu.reciprocal %69 {approx = true} : vector<1x288xf32> -> vector<1x288xf32>
    %71 = vector.broadcast %70 : vector<1x288xf32> to vector<4x288xf32>
    %72 = arith.mulf %67, %71 : vector<4x288xf32>
    %73 = vector.extract_strided_slice %16 {offsets = [44, 0], sizes = [4, 288], strides = [1, 1]} : vector<48x288xf32> to vector<4x288xf32>
    %cst_16 = arith.constant dense<0xFF800000> : vector<288xf32>
    %74 = vector.multi_reduction <maximumf>, %73, %cst_16 [0] : vector<4x288xf32> to vector<288xf32>
    %75 = vector.shape_cast %74 : vector<288xf32> to vector<1x288xf32>
    %76 = vector.broadcast %75 : vector<1x288xf32> to vector<4x288xf32>
    %77 = arith.subf %73, %76 : vector<4x288xf32>
    %78 = math.exp %77 : vector<4x288xf32>
    %cst_17 = arith.constant dense<0.000000e+00> : vector<288xf32>
    %79 = vector.multi_reduction <add>, %78, %cst_17 [0] : vector<4x288xf32> to vector<288xf32>
    %80 = vector.shape_cast %79 : vector<288xf32> to vector<1x288xf32>
    %81 = tpu.reciprocal %80 {approx = true} : vector<1x288xf32> -> vector<1x288xf32>
    %82 = vector.broadcast %81 : vector<1x288xf32> to vector<4x288xf32>
    %83 = arith.mulf %78, %82 : vector<4x288xf32>
    %84 = tpu.concatenate %17, %28, %39, %50, %61, %72, %83 in 0 : vector<24x288xf32>, vector<4x288xf32>, vector<4x288xf32>, vector<4x288xf32>, vector<4x288xf32>, vector<4x288xf32>, vector<4x288xf32> -> vector<48x288xf32>
    %c0_18 = arith.constant 0 : index
    %c0_19 = arith.constant 0 : index
    %c0_20 = arith.constant 0 : index
    %85 = vector.load %arg4[%c0_18, %c0_19, %c0_20] : memref<1x48x288xf32, #tpu.memory_space<vmem>>, vector<1x48x288xf32>
    %86 = vector.shape_cast %85 : vector<1x48x288xf32> to vector<48x288xf32>
    %87 = vector.shape_cast %84 : vector<48x288xf32> to vector<1x48x288xf32>
    tpu.vector_store %arg4[%c0_18, %c0_19, %c0_20], %87 {strides = array<i32>} : memref<1x48x288xf32, #tpu.memory_space<vmem>>, vector<1x48x288xf32>,
    return
  }
  func.func @transform_0(%arg0: i32) -> (i32, i32, i32) {
    %c0_i32 = arith.constant 0 : i32
    %c0_i32_0 = arith.constant 0 : i32
    %c0_i32_1 = arith.constant 0 : i32
    return %arg0, %c0_i32, %c0_i32_0 : i32, i32, i32
  }
  func.func @transform_1(%arg0: i32) -> (i32, i32) {
    %c0_i32 = arith.constant 0 : i32
    %c0_i32_0 = arith.constant 0 : i32
    %c0_i32_1 = arith.constant 0 : i32
    return %c0_i32, %c0_i32_0 : i32, i32
  }
  func.func @transform_2(%arg0: i32) -> (i32, i32) {
    %c0_i32 = arith.constant 0 : i32
    %c0_i32_0 = arith.constant 0 : i32
    %c0_i32_1 = arith.constant 0 : i32
    return %c0_i32, %c0_i32_0 : i32, i32
  }
  func.func @transform_3(%arg0: i32) -> (i32, i32, i32) {
    %c0_i32 = arith.constant 0 : i32
    %c0_i32_0 = arith.constant 0 : i32
    %c0_i32_1 = arith.constant 0 : i32
    return %arg0, %c0_i32, %c0_i32_0 : i32, i32, i32
  }
}

module attributes {stable_mosaic.version = 11 : i64} {
  func.func @_conv3x3_kernel(%arg0: i32, %arg1: memref<1x16x102xbf16, #tpu.memory_space<vmem>>, %arg2: memref<8x144xbf16, #tpu.memory_space<vmem>>, %arg3: memref<8x1xf32, #tpu.memory_space<vmem>>, %arg4: memref<1x8x80xf32, #tpu.memory_space<vmem>>) attributes {dimension_semantics = [#tpu.dimension_semantics<parallel>], iteration_bounds = array<i64: 2>, scalar_prefetch = 0 : i64, scratch_operands = 0 : i64, tpu.core_type = #tpu.core_type<tc>, window_params = [{transform_indices = @transform_0, window_bounds = array<i64: 1, 16, 102>}, {pipeline_mode = #tpu.pipeline_mode<synchronous>, transform_indices = @transform_1, window_bounds = array<i64: 8, 144>}, {pipeline_mode = #tpu.pipeline_mode<synchronous>, transform_indices = @transform_2, window_bounds = array<i64: 8, 1>}, {transform_indices = @transform_3, window_bounds = array<i64: 1, 8, 80>}]} {
    %c0 = arith.constant 0 : index
    %c0_0 = arith.constant 0 : index
    %c0_1 = arith.constant 0 : index
    %0 = vector.load %arg1[%c0, %c0_0, %c0_1] : memref<1x16x102xbf16, #tpu.memory_space<vmem>>, vector<1x16x102xbf16>
    %1 = vector.shape_cast %0 : vector<1x16x102xbf16> to vector<16x102xbf16>
    %2 = vector.extract_strided_slice %1 {offsets = [0, 0], sizes = [16, 80], strides = [1, 1]} : vector<16x102xbf16> to vector<16x80xbf16>
    %3 = vector.extract_strided_slice %1 {offsets = [0, 1], sizes = [16, 80], strides = [1, 1]} : vector<16x102xbf16> to vector<16x80xbf16>
    %4 = vector.extract_strided_slice %1 {offsets = [0, 2], sizes = [16, 80], strides = [1, 1]} : vector<16x102xbf16> to vector<16x80xbf16>
    %5 = vector.extract_strided_slice %1 {offsets = [0, 10], sizes = [16, 80], strides = [1, 1]} : vector<16x102xbf16> to vector<16x80xbf16>
    %6 = vector.extract_strided_slice %1 {offsets = [0, 11], sizes = [16, 80], strides = [1, 1]} : vector<16x102xbf16> to vector<16x80xbf16>
    %7 = vector.extract_strided_slice %1 {offsets = [0, 12], sizes = [16, 80], strides = [1, 1]} : vector<16x102xbf16> to vector<16x80xbf16>
    %8 = vector.extract_strided_slice %1 {offsets = [0, 20], sizes = [16, 80], strides = [1, 1]} : vector<16x102xbf16> to vector<16x80xbf16>
    %9 = vector.extract_strided_slice %1 {offsets = [0, 21], sizes = [16, 80], strides = [1, 1]} : vector<16x102xbf16> to vector<16x80xbf16>
    %10 = vector.extract_strided_slice %1 {offsets = [0, 22], sizes = [16, 80], strides = [1, 1]} : vector<16x102xbf16> to vector<16x80xbf16>
    %11 = tpu.concatenate %2, %3, %4, %5, %6, %7, %8, %9, %10 in 0 : vector<16x80xbf16>, vector<16x80xbf16>, vector<16x80xbf16>, vector<16x80xbf16>, vector<16x80xbf16>, vector<16x80xbf16>, vector<16x80xbf16>, vector<16x80xbf16>, vector<16x80xbf16> -> vector<144x80xbf16>
    %c0_2 = arith.constant 0 : index
    %c0_3 = arith.constant 0 : index
    %12 = vector.load %arg2[%c0_2, %c0_3] : memref<8x144xbf16, #tpu.memory_space<vmem>>, vector<8x144xbf16>
    %cst = arith.constant dense<0.000000e+00> : vector<8x80xf32>
    %13 = tpu.matmul %12, %11, %cst {dimension_numbers = #tpu.dot_dimension_numbers<[1], [0], [0], [1], [0, 0, 1, 1], [], []>} : vector<8x144xbf16>, vector<144x80xbf16>, vector<8x80xf32> -> vector<8x80xf32>
    %c0_4 = arith.constant 0 : index
    %c0_5 = arith.constant 0 : index
    %14 = vector.load %arg3[%c0_4, %c0_5] : memref<8x1xf32, #tpu.memory_space<vmem>>, vector<8x1xf32>
    %15 = vector.broadcast %14 : vector<8x1xf32> to vector<8x80xf32>
    %16 = arith.addf %13, %15 : vector<8x80xf32>
    %cst_6 = arith.constant 0.000000e+00 : f32
    %17 = vector.broadcast %cst_6 : f32 to vector<8x80xf32>
    %18 = arith.maximumf %16, %17 : vector<8x80xf32>
    %c0_7 = arith.constant 0 : index
    %c0_8 = arith.constant 0 : index
    %c0_9 = arith.constant 0 : index
    %19 = vector.load %arg4[%c0_7, %c0_8, %c0_9] : memref<1x8x80xf32, #tpu.memory_space<vmem>>, vector<1x8x80xf32>
    %20 = vector.shape_cast %19 : vector<1x8x80xf32> to vector<8x80xf32>
    %21 = vector.shape_cast %18 : vector<8x80xf32> to vector<1x8x80xf32>
    tpu.vector_store %arg4[%c0_7, %c0_8, %c0_9], %21 {strides = array<i32>} : memref<1x8x80xf32, #tpu.memory_space<vmem>>, vector<1x8x80xf32>,
    return
  }
  func.func @transform_0(%arg0: i32) -> (i32, i32, i32) {
    %c0_i32 = arith.constant 0 : i32
    %c0_i32_0 = arith.constant 0 : i32
    %c0_i32_1 = arith.constant 0 : i32
    return %arg0, %c0_i32, %c0_i32_0 : i32, i32, i32
  }
  func.func @transform_1(%arg0: i32) -> (i32, i32) {
    %c0_i32 = arith.constant 0 : i32
    %c0_i32_0 = arith.constant 0 : i32
    %c0_i32_1 = arith.constant 0 : i32
    return %c0_i32, %c0_i32_0 : i32, i32
  }
  func.func @transform_2(%arg0: i32) -> (i32, i32) {
    %c0_i32 = arith.constant 0 : i32
    %c0_i32_0 = arith.constant 0 : i32
    %c0_i32_1 = arith.constant 0 : i32
    return %c0_i32, %c0_i32_0 : i32, i32
  }
  func.func @transform_3(%arg0: i32) -> (i32, i32, i32) {
    %c0_i32 = arith.constant 0 : i32
    %c0_i32_0 = arith.constant 0 : i32
    %c0_i32_1 = arith.constant 0 : i32
    return %arg0, %c0_i32, %c0_i32_0 : i32, i32, i32
  }
}

module attributes {stable_mosaic.version = 11 : i64} {
  func.func @_conv3x3_kernel(%arg0: i32, %arg1: memref<1x16x102xbf16, #tpu.memory_space<vmem>>, %arg2: memref<48x144xbf16, #tpu.memory_space<vmem>>, %arg3: memref<48x1xf32, #tpu.memory_space<vmem>>, %arg4: memref<1x48x80xf32, #tpu.memory_space<vmem>>) attributes {dimension_semantics = [#tpu.dimension_semantics<parallel>], iteration_bounds = array<i64: 2>, scalar_prefetch = 0 : i64, scratch_operands = 0 : i64, tpu.core_type = #tpu.core_type<tc>, window_params = [{transform_indices = @transform_0, window_bounds = array<i64: 1, 16, 102>}, {pipeline_mode = #tpu.pipeline_mode<synchronous>, transform_indices = @transform_1, window_bounds = array<i64: 48, 144>}, {pipeline_mode = #tpu.pipeline_mode<synchronous>, transform_indices = @transform_2, window_bounds = array<i64: 48, 1>}, {transform_indices = @transform_3, window_bounds = array<i64: 1, 48, 80>}]} {
    %c0 = arith.constant 0 : index
    %c0_0 = arith.constant 0 : index
    %c0_1 = arith.constant 0 : index
    %0 = vector.load %arg1[%c0, %c0_0, %c0_1] : memref<1x16x102xbf16, #tpu.memory_space<vmem>>, vector<1x16x102xbf16>
    %1 = vector.shape_cast %0 : vector<1x16x102xbf16> to vector<16x102xbf16>
    %2 = vector.extract_strided_slice %1 {offsets = [0, 0], sizes = [16, 80], strides = [1, 1]} : vector<16x102xbf16> to vector<16x80xbf16>
    %3 = vector.extract_strided_slice %1 {offsets = [0, 1], sizes = [16, 80], strides = [1, 1]} : vector<16x102xbf16> to vector<16x80xbf16>
    %4 = vector.extract_strided_slice %1 {offsets = [0, 2], sizes = [16, 80], strides = [1, 1]} : vector<16x102xbf16> to vector<16x80xbf16>
    %5 = vector.extract_strided_slice %1 {offsets = [0, 10], sizes = [16, 80], strides = [1, 1]} : vector<16x102xbf16> to vector<16x80xbf16>
    %6 = vector.extract_strided_slice %1 {offsets = [0, 11], sizes = [16, 80], strides = [1, 1]} : vector<16x102xbf16> to vector<16x80xbf16>
    %7 = vector.extract_strided_slice %1 {offsets = [0, 12], sizes = [16, 80], strides = [1, 1]} : vector<16x102xbf16> to vector<16x80xbf16>
    %8 = vector.extract_strided_slice %1 {offsets = [0, 20], sizes = [16, 80], strides = [1, 1]} : vector<16x102xbf16> to vector<16x80xbf16>
    %9 = vector.extract_strided_slice %1 {offsets = [0, 21], sizes = [16, 80], strides = [1, 1]} : vector<16x102xbf16> to vector<16x80xbf16>
    %10 = vector.extract_strided_slice %1 {offsets = [0, 22], sizes = [16, 80], strides = [1, 1]} : vector<16x102xbf16> to vector<16x80xbf16>
    %11 = tpu.concatenate %2, %3, %4, %5, %6, %7, %8, %9, %10 in 0 : vector<16x80xbf16>, vector<16x80xbf16>, vector<16x80xbf16>, vector<16x80xbf16>, vector<16x80xbf16>, vector<16x80xbf16>, vector<16x80xbf16>, vector<16x80xbf16>, vector<16x80xbf16> -> vector<144x80xbf16>
    %c0_2 = arith.constant 0 : index
    %c0_3 = arith.constant 0 : index
    %12 = vector.load %arg2[%c0_2, %c0_3] : memref<48x144xbf16, #tpu.memory_space<vmem>>, vector<48x144xbf16>
    %cst = arith.constant dense<0.000000e+00> : vector<48x80xf32>
    %13 = tpu.matmul %12, %11, %cst {dimension_numbers = #tpu.dot_dimension_numbers<[1], [0], [0], [1], [0, 0, 1, 1], [], []>} : vector<48x144xbf16>, vector<144x80xbf16>, vector<48x80xf32> -> vector<48x80xf32>
    %c0_4 = arith.constant 0 : index
    %c0_5 = arith.constant 0 : index
    %14 = vector.load %arg3[%c0_4, %c0_5] : memref<48x1xf32, #tpu.memory_space<vmem>>, vector<48x1xf32>
    %15 = vector.broadcast %14 : vector<48x1xf32> to vector<48x80xf32>
    %16 = arith.addf %13, %15 : vector<48x80xf32>
    %17 = vector.extract_strided_slice %16 {offsets = [0, 0], sizes = [24, 80], strides = [1, 1]} : vector<48x80xf32> to vector<24x80xf32>
    %18 = vector.extract_strided_slice %16 {offsets = [24, 0], sizes = [4, 80], strides = [1, 1]} : vector<48x80xf32> to vector<4x80xf32>
    %cst_6 = arith.constant dense<0xFF800000> : vector<80xf32>
    %19 = vector.multi_reduction <maximumf>, %18, %cst_6 [0] : vector<4x80xf32> to vector<80xf32>
    %20 = vector.shape_cast %19 : vector<80xf32> to vector<1x80xf32>
    %21 = vector.broadcast %20 : vector<1x80xf32> to vector<4x80xf32>
    %22 = arith.subf %18, %21 : vector<4x80xf32>
    %23 = math.exp %22 : vector<4x80xf32>
    %cst_7 = arith.constant dense<0.000000e+00> : vector<80xf32>
    %24 = vector.multi_reduction <add>, %23, %cst_7 [0] : vector<4x80xf32> to vector<80xf32>
    %25 = vector.shape_cast %24 : vector<80xf32> to vector<1x80xf32>
    %26 = tpu.reciprocal %25 {approx = true} : vector<1x80xf32> -> vector<1x80xf32>
    %27 = vector.broadcast %26 : vector<1x80xf32> to vector<4x80xf32>
    %28 = arith.mulf %23, %27 : vector<4x80xf32>
    %29 = vector.extract_strided_slice %16 {offsets = [28, 0], sizes = [4, 80], strides = [1, 1]} : vector<48x80xf32> to vector<4x80xf32>
    %cst_8 = arith.constant dense<0xFF800000> : vector<80xf32>
    %30 = vector.multi_reduction <maximumf>, %29, %cst_8 [0] : vector<4x80xf32> to vector<80xf32>
    %31 = vector.shape_cast %30 : vector<80xf32> to vector<1x80xf32>
    %32 = vector.broadcast %31 : vector<1x80xf32> to vector<4x80xf32>
    %33 = arith.subf %29, %32 : vector<4x80xf32>
    %34 = math.exp %33 : vector<4x80xf32>
    %cst_9 = arith.constant dense<0.000000e+00> : vector<80xf32>
    %35 = vector.multi_reduction <add>, %34, %cst_9 [0] : vector<4x80xf32> to vector<80xf32>
    %36 = vector.shape_cast %35 : vector<80xf32> to vector<1x80xf32>
    %37 = tpu.reciprocal %36 {approx = true} : vector<1x80xf32> -> vector<1x80xf32>
    %38 = vector.broadcast %37 : vector<1x80xf32> to vector<4x80xf32>
    %39 = arith.mulf %34, %38 : vector<4x80xf32>
    %40 = vector.extract_strided_slice %16 {offsets = [32, 0], sizes = [4, 80], strides = [1, 1]} : vector<48x80xf32> to vector<4x80xf32>
    %cst_10 = arith.constant dense<0xFF800000> : vector<80xf32>
    %41 = vector.multi_reduction <maximumf>, %40, %cst_10 [0] : vector<4x80xf32> to vector<80xf32>
    %42 = vector.shape_cast %41 : vector<80xf32> to vector<1x80xf32>
    %43 = vector.broadcast %42 : vector<1x80xf32> to vector<4x80xf32>
    %44 = arith.subf %40, %43 : vector<4x80xf32>
    %45 = math.exp %44 : vector<4x80xf32>
    %cst_11 = arith.constant dense<0.000000e+00> : vector<80xf32>
    %46 = vector.multi_reduction <add>, %45, %cst_11 [0] : vector<4x80xf32> to vector<80xf32>
    %47 = vector.shape_cast %46 : vector<80xf32> to vector<1x80xf32>
    %48 = tpu.reciprocal %47 {approx = true} : vector<1x80xf32> -> vector<1x80xf32>
    %49 = vector.broadcast %48 : vector<1x80xf32> to vector<4x80xf32>
    %50 = arith.mulf %45, %49 : vector<4x80xf32>
    %51 = vector.extract_strided_slice %16 {offsets = [36, 0], sizes = [4, 80], strides = [1, 1]} : vector<48x80xf32> to vector<4x80xf32>
    %cst_12 = arith.constant dense<0xFF800000> : vector<80xf32>
    %52 = vector.multi_reduction <maximumf>, %51, %cst_12 [0] : vector<4x80xf32> to vector<80xf32>
    %53 = vector.shape_cast %52 : vector<80xf32> to vector<1x80xf32>
    %54 = vector.broadcast %53 : vector<1x80xf32> to vector<4x80xf32>
    %55 = arith.subf %51, %54 : vector<4x80xf32>
    %56 = math.exp %55 : vector<4x80xf32>
    %cst_13 = arith.constant dense<0.000000e+00> : vector<80xf32>
    %57 = vector.multi_reduction <add>, %56, %cst_13 [0] : vector<4x80xf32> to vector<80xf32>
    %58 = vector.shape_cast %57 : vector<80xf32> to vector<1x80xf32>
    %59 = tpu.reciprocal %58 {approx = true} : vector<1x80xf32> -> vector<1x80xf32>
    %60 = vector.broadcast %59 : vector<1x80xf32> to vector<4x80xf32>
    %61 = arith.mulf %56, %60 : vector<4x80xf32>
    %62 = vector.extract_strided_slice %16 {offsets = [40, 0], sizes = [4, 80], strides = [1, 1]} : vector<48x80xf32> to vector<4x80xf32>
    %cst_14 = arith.constant dense<0xFF800000> : vector<80xf32>
    %63 = vector.multi_reduction <maximumf>, %62, %cst_14 [0] : vector<4x80xf32> to vector<80xf32>
    %64 = vector.shape_cast %63 : vector<80xf32> to vector<1x80xf32>
    %65 = vector.broadcast %64 : vector<1x80xf32> to vector<4x80xf32>
    %66 = arith.subf %62, %65 : vector<4x80xf32>
    %67 = math.exp %66 : vector<4x80xf32>
    %cst_15 = arith.constant dense<0.000000e+00> : vector<80xf32>
    %68 = vector.multi_reduction <add>, %67, %cst_15 [0] : vector<4x80xf32> to vector<80xf32>
    %69 = vector.shape_cast %68 : vector<80xf32> to vector<1x80xf32>
    %70 = tpu.reciprocal %69 {approx = true} : vector<1x80xf32> -> vector<1x80xf32>
    %71 = vector.broadcast %70 : vector<1x80xf32> to vector<4x80xf32>
    %72 = arith.mulf %67, %71 : vector<4x80xf32>
    %73 = vector.extract_strided_slice %16 {offsets = [44, 0], sizes = [4, 80], strides = [1, 1]} : vector<48x80xf32> to vector<4x80xf32>
    %cst_16 = arith.constant dense<0xFF800000> : vector<80xf32>
    %74 = vector.multi_reduction <maximumf>, %73, %cst_16 [0] : vector<4x80xf32> to vector<80xf32>
    %75 = vector.shape_cast %74 : vector<80xf32> to vector<1x80xf32>
    %76 = vector.broadcast %75 : vector<1x80xf32> to vector<4x80xf32>
    %77 = arith.subf %73, %76 : vector<4x80xf32>
    %78 = math.exp %77 : vector<4x80xf32>
    %cst_17 = arith.constant dense<0.000000e+00> : vector<80xf32>
    %79 = vector.multi_reduction <add>, %78, %cst_17 [0] : vector<4x80xf32> to vector<80xf32>
    %80 = vector.shape_cast %79 : vector<80xf32> to vector<1x80xf32>
    %81 = tpu.reciprocal %80 {approx = true} : vector<1x80xf32> -> vector<1x80xf32>
    %82 = vector.broadcast %81 : vector<1x80xf32> to vector<4x80xf32>
    %83 = arith.mulf %78, %82 : vector<4x80xf32>
    %84 = tpu.concatenate %17, %28, %39, %50, %61, %72, %83 in 0 : vector<24x80xf32>, vector<4x80xf32>, vector<4x80xf32>, vector<4x80xf32>, vector<4x80xf32>, vector<4x80xf32>, vector<4x80xf32> -> vector<48x80xf32>
    %c0_18 = arith.constant 0 : index
    %c0_19 = arith.constant 0 : index
    %c0_20 = arith.constant 0 : index
    %85 = vector.load %arg4[%c0_18, %c0_19, %c0_20] : memref<1x48x80xf32, #tpu.memory_space<vmem>>, vector<1x48x80xf32>
    %86 = vector.shape_cast %85 : vector<1x48x80xf32> to vector<48x80xf32>
    %87 = vector.shape_cast %84 : vector<48x80xf32> to vector<1x48x80xf32>
    tpu.vector_store %arg4[%c0_18, %c0_19, %c0_20], %87 {strides = array<i32>} : memref<1x48x80xf32, #tpu.memory_space<vmem>>, vector<1x48x80xf32>,
    return
  }
  func.func @transform_0(%arg0: i32) -> (i32, i32, i32) {
    %c0_i32 = arith.constant 0 : i32
    %c0_i32_0 = arith.constant 0 : i32
    %c0_i32_1 = arith.constant 0 : i32
    return %arg0, %c0_i32, %c0_i32_0 : i32, i32, i32
  }
  func.func @transform_1(%arg0: i32) -> (i32, i32) {
    %c0_i32 = arith.constant 0 : i32
    %c0_i32_0 = arith.constant 0 : i32
    %c0_i32_1 = arith.constant 0 : i32
    return %c0_i32, %c0_i32_0 : i32, i32
  }
  func.func @transform_2(%arg0: i32) -> (i32, i32) {
    %c0_i32 = arith.constant 0 : i32
    %c0_i32_0 = arith.constant 0 : i32
    %c0_i32_1 = arith.constant 0 : i32
    return %c0_i32, %c0_i32_0 : i32, i32
  }
  func.func @transform_3(%arg0: i32) -> (i32, i32, i32) {
    %c0_i32 = arith.constant 0 : i32
    %c0_i32_0 = arith.constant 0 : i32
    %c0_i32_1 = arith.constant 0 : i32
    return %arg0, %c0_i32, %c0_i32_0 : i32, i32, i32
  }
}

module attributes {stable_mosaic.version = 11 : i64} {
  func.func @_conv3x3_kernel(%arg0: i32, %arg1: memref<1x8x38xbf16, #tpu.memory_space<vmem>>, %arg2: memref<48x72xbf16, #tpu.memory_space<vmem>>, %arg3: memref<48x1xf32, #tpu.memory_space<vmem>>, %arg4: memref<1x48x24xf32, #tpu.memory_space<vmem>>) attributes {dimension_semantics = [#tpu.dimension_semantics<parallel>], iteration_bounds = array<i64: 2>, scalar_prefetch = 0 : i64, scratch_operands = 0 : i64, tpu.core_type = #tpu.core_type<tc>, window_params = [{transform_indices = @transform_0, window_bounds = array<i64: 1, 8, 38>}, {pipeline_mode = #tpu.pipeline_mode<synchronous>, transform_indices = @transform_1, window_bounds = array<i64: 48, 72>}, {pipeline_mode = #tpu.pipeline_mode<synchronous>, transform_indices = @transform_2, window_bounds = array<i64: 48, 1>}, {transform_indices = @transform_3, window_bounds = array<i64: 1, 48, 24>}]} {
    %c0 = arith.constant 0 : index
    %c0_0 = arith.constant 0 : index
    %c0_1 = arith.constant 0 : index
    %0 = vector.load %arg1[%c0, %c0_0, %c0_1] : memref<1x8x38xbf16, #tpu.memory_space<vmem>>, vector<1x8x38xbf16>
    %1 = vector.shape_cast %0 : vector<1x8x38xbf16> to vector<8x38xbf16>
    %2 = vector.extract_strided_slice %1 {offsets = [0, 0], sizes = [8, 24], strides = [1, 1]} : vector<8x38xbf16> to vector<8x24xbf16>
    %3 = vector.extract_strided_slice %1 {offsets = [0, 1], sizes = [8, 24], strides = [1, 1]} : vector<8x38xbf16> to vector<8x24xbf16>
    %4 = vector.extract_strided_slice %1 {offsets = [0, 2], sizes = [8, 24], strides = [1, 1]} : vector<8x38xbf16> to vector<8x24xbf16>
    %5 = vector.extract_strided_slice %1 {offsets = [0, 6], sizes = [8, 24], strides = [1, 1]} : vector<8x38xbf16> to vector<8x24xbf16>
    %6 = vector.extract_strided_slice %1 {offsets = [0, 7], sizes = [8, 24], strides = [1, 1]} : vector<8x38xbf16> to vector<8x24xbf16>
    %7 = vector.extract_strided_slice %1 {offsets = [0, 8], sizes = [8, 24], strides = [1, 1]} : vector<8x38xbf16> to vector<8x24xbf16>
    %8 = vector.extract_strided_slice %1 {offsets = [0, 12], sizes = [8, 24], strides = [1, 1]} : vector<8x38xbf16> to vector<8x24xbf16>
    %9 = vector.extract_strided_slice %1 {offsets = [0, 13], sizes = [8, 24], strides = [1, 1]} : vector<8x38xbf16> to vector<8x24xbf16>
    %10 = vector.extract_strided_slice %1 {offsets = [0, 14], sizes = [8, 24], strides = [1, 1]} : vector<8x38xbf16> to vector<8x24xbf16>
    %11 = tpu.concatenate %2, %3, %4, %5, %6, %7, %8, %9, %10 in 0 : vector<8x24xbf16>, vector<8x24xbf16>, vector<8x24xbf16>, vector<8x24xbf16>, vector<8x24xbf16>, vector<8x24xbf16>, vector<8x24xbf16>, vector<8x24xbf16>, vector<8x24xbf16> -> vector<72x24xbf16>
    %c0_2 = arith.constant 0 : index
    %c0_3 = arith.constant 0 : index
    %12 = vector.load %arg2[%c0_2, %c0_3] : memref<48x72xbf16, #tpu.memory_space<vmem>>, vector<48x72xbf16>
    %cst = arith.constant dense<0.000000e+00> : vector<48x24xf32>
    %13 = tpu.matmul %12, %11, %cst {dimension_numbers = #tpu.dot_dimension_numbers<[1], [0], [0], [1], [0, 0, 1, 1], [], []>} : vector<48x72xbf16>, vector<72x24xbf16>, vector<48x24xf32> -> vector<48x24xf32>
    %c0_4 = arith.constant 0 : index
    %c0_5 = arith.constant 0 : index
    %14 = vector.load %arg3[%c0_4, %c0_5] : memref<48x1xf32, #tpu.memory_space<vmem>>, vector<48x1xf32>
    %15 = vector.broadcast %14 : vector<48x1xf32> to vector<48x24xf32>
    %16 = arith.addf %13, %15 : vector<48x24xf32>
    %17 = vector.extract_strided_slice %16 {offsets = [0, 0], sizes = [24, 24], strides = [1, 1]} : vector<48x24xf32> to vector<24x24xf32>
    %18 = vector.extract_strided_slice %16 {offsets = [24, 0], sizes = [4, 24], strides = [1, 1]} : vector<48x24xf32> to vector<4x24xf32>
    %cst_6 = arith.constant dense<0xFF800000> : vector<24xf32>
    %19 = vector.multi_reduction <maximumf>, %18, %cst_6 [0] : vector<4x24xf32> to vector<24xf32>
    %20 = vector.shape_cast %19 : vector<24xf32> to vector<1x24xf32>
    %21 = vector.broadcast %20 : vector<1x24xf32> to vector<4x24xf32>
    %22 = arith.subf %18, %21 : vector<4x24xf32>
    %23 = math.exp %22 : vector<4x24xf32>
    %cst_7 = arith.constant dense<0.000000e+00> : vector<24xf32>
    %24 = vector.multi_reduction <add>, %23, %cst_7 [0] : vector<4x24xf32> to vector<24xf32>
    %25 = vector.shape_cast %24 : vector<24xf32> to vector<1x24xf32>
    %26 = tpu.reciprocal %25 {approx = true} : vector<1x24xf32> -> vector<1x24xf32>
    %27 = vector.broadcast %26 : vector<1x24xf32> to vector<4x24xf32>
    %28 = arith.mulf %23, %27 : vector<4x24xf32>
    %29 = vector.extract_strided_slice %16 {offsets = [28, 0], sizes = [4, 24], strides = [1, 1]} : vector<48x24xf32> to vector<4x24xf32>
    %cst_8 = arith.constant dense<0xFF800000> : vector<24xf32>
    %30 = vector.multi_reduction <maximumf>, %29, %cst_8 [0] : vector<4x24xf32> to vector<24xf32>
    %31 = vector.shape_cast %30 : vector<24xf32> to vector<1x24xf32>
    %32 = vector.broadcast %31 : vector<1x24xf32> to vector<4x24xf32>
    %33 = arith.subf %29, %32 : vector<4x24xf32>
    %34 = math.exp %33 : vector<4x24xf32>
    %cst_9 = arith.constant dense<0.000000e+00> : vector<24xf32>
    %35 = vector.multi_reduction <add>, %34, %cst_9 [0] : vector<4x24xf32> to vector<24xf32>
    %36 = vector.shape_cast %35 : vector<24xf32> to vector<1x24xf32>
    %37 = tpu.reciprocal %36 {approx = true} : vector<1x24xf32> -> vector<1x24xf32>
    %38 = vector.broadcast %37 : vector<1x24xf32> to vector<4x24xf32>
    %39 = arith.mulf %34, %38 : vector<4x24xf32>
    %40 = vector.extract_strided_slice %16 {offsets = [32, 0], sizes = [4, 24], strides = [1, 1]} : vector<48x24xf32> to vector<4x24xf32>
    %cst_10 = arith.constant dense<0xFF800000> : vector<24xf32>
    %41 = vector.multi_reduction <maximumf>, %40, %cst_10 [0] : vector<4x24xf32> to vector<24xf32>
    %42 = vector.shape_cast %41 : vector<24xf32> to vector<1x24xf32>
    %43 = vector.broadcast %42 : vector<1x24xf32> to vector<4x24xf32>
    %44 = arith.subf %40, %43 : vector<4x24xf32>
    %45 = math.exp %44 : vector<4x24xf32>
    %cst_11 = arith.constant dense<0.000000e+00> : vector<24xf32>
    %46 = vector.multi_reduction <add>, %45, %cst_11 [0] : vector<4x24xf32> to vector<24xf32>
    %47 = vector.shape_cast %46 : vector<24xf32> to vector<1x24xf32>
    %48 = tpu.reciprocal %47 {approx = true} : vector<1x24xf32> -> vector<1x24xf32>
    %49 = vector.broadcast %48 : vector<1x24xf32> to vector<4x24xf32>
    %50 = arith.mulf %45, %49 : vector<4x24xf32>
    %51 = vector.extract_strided_slice %16 {offsets = [36, 0], sizes = [4, 24], strides = [1, 1]} : vector<48x24xf32> to vector<4x24xf32>
    %cst_12 = arith.constant dense<0xFF800000> : vector<24xf32>
    %52 = vector.multi_reduction <maximumf>, %51, %cst_12 [0] : vector<4x24xf32> to vector<24xf32>
    %53 = vector.shape_cast %52 : vector<24xf32> to vector<1x24xf32>
    %54 = vector.broadcast %53 : vector<1x24xf32> to vector<4x24xf32>
    %55 = arith.subf %51, %54 : vector<4x24xf32>
    %56 = math.exp %55 : vector<4x24xf32>
    %cst_13 = arith.constant dense<0.000000e+00> : vector<24xf32>
    %57 = vector.multi_reduction <add>, %56, %cst_13 [0] : vector<4x24xf32> to vector<24xf32>
    %58 = vector.shape_cast %57 : vector<24xf32> to vector<1x24xf32>
    %59 = tpu.reciprocal %58 {approx = true} : vector<1x24xf32> -> vector<1x24xf32>
    %60 = vector.broadcast %59 : vector<1x24xf32> to vector<4x24xf32>
    %61 = arith.mulf %56, %60 : vector<4x24xf32>
    %62 = vector.extract_strided_slice %16 {offsets = [40, 0], sizes = [4, 24], strides = [1, 1]} : vector<48x24xf32> to vector<4x24xf32>
    %cst_14 = arith.constant dense<0xFF800000> : vector<24xf32>
    %63 = vector.multi_reduction <maximumf>, %62, %cst_14 [0] : vector<4x24xf32> to vector<24xf32>
    %64 = vector.shape_cast %63 : vector<24xf32> to vector<1x24xf32>
    %65 = vector.broadcast %64 : vector<1x24xf32> to vector<4x24xf32>
    %66 = arith.subf %62, %65 : vector<4x24xf32>
    %67 = math.exp %66 : vector<4x24xf32>
    %cst_15 = arith.constant dense<0.000000e+00> : vector<24xf32>
    %68 = vector.multi_reduction <add>, %67, %cst_15 [0] : vector<4x24xf32> to vector<24xf32>
    %69 = vector.shape_cast %68 : vector<24xf32> to vector<1x24xf32>
    %70 = tpu.reciprocal %69 {approx = true} : vector<1x24xf32> -> vector<1x24xf32>
    %71 = vector.broadcast %70 : vector<1x24xf32> to vector<4x24xf32>
    %72 = arith.mulf %67, %71 : vector<4x24xf32>
    %73 = vector.extract_strided_slice %16 {offsets = [44, 0], sizes = [4, 24], strides = [1, 1]} : vector<48x24xf32> to vector<4x24xf32>
    %cst_16 = arith.constant dense<0xFF800000> : vector<24xf32>
    %74 = vector.multi_reduction <maximumf>, %73, %cst_16 [0] : vector<4x24xf32> to vector<24xf32>
    %75 = vector.shape_cast %74 : vector<24xf32> to vector<1x24xf32>
    %76 = vector.broadcast %75 : vector<1x24xf32> to vector<4x24xf32>
    %77 = arith.subf %73, %76 : vector<4x24xf32>
    %78 = math.exp %77 : vector<4x24xf32>
    %cst_17 = arith.constant dense<0.000000e+00> : vector<24xf32>
    %79 = vector.multi_reduction <add>, %78, %cst_17 [0] : vector<4x24xf32> to vector<24xf32>
    %80 = vector.shape_cast %79 : vector<24xf32> to vector<1x24xf32>
    %81 = tpu.reciprocal %80 {approx = true} : vector<1x24xf32> -> vector<1x24xf32>
    %82 = vector.broadcast %81 : vector<1x24xf32> to vector<4x24xf32>
    %83 = arith.mulf %78, %82 : vector<4x24xf32>
    %84 = tpu.concatenate %17, %28, %39, %50, %61, %72, %83 in 0 : vector<24x24xf32>, vector<4x24xf32>, vector<4x24xf32>, vector<4x24xf32>, vector<4x24xf32>, vector<4x24xf32>, vector<4x24xf32> -> vector<48x24xf32>
    %c0_18 = arith.constant 0 : index
    %c0_19 = arith.constant 0 : index
    %c0_20 = arith.constant 0 : index
    %85 = vector.load %arg4[%c0_18, %c0_19, %c0_20] : memref<1x48x24xf32, #tpu.memory_space<vmem>>, vector<1x48x24xf32>
    %86 = vector.shape_cast %85 : vector<1x48x24xf32> to vector<48x24xf32>
    %87 = vector.shape_cast %84 : vector<48x24xf32> to vector<1x48x24xf32>
    tpu.vector_store %arg4[%c0_18, %c0_19, %c0_20], %87 {strides = array<i32>} : memref<1x48x24xf32, #tpu.memory_space<vmem>>, vector<1x48x24xf32>,
    return
  }
  func.func @transform_0(%arg0: i32) -> (i32, i32, i32) {
    %c0_i32 = arith.constant 0 : i32
    %c0_i32_0 = arith.constant 0 : i32
    %c0_i32_1 = arith.constant 0 : i32
    return %arg0, %c0_i32, %c0_i32_0 : i32, i32, i32
  }
  func.func @transform_1(%arg0: i32) -> (i32, i32) {
    %c0_i32 = arith.constant 0 : i32
    %c0_i32_0 = arith.constant 0 : i32
    %c0_i32_1 = arith.constant 0 : i32
    return %c0_i32, %c0_i32_0 : i32, i32
  }
  func.func @transform_2(%arg0: i32) -> (i32, i32) {
    %c0_i32 = arith.constant 0 : i32
    %c0_i32_0 = arith.constant 0 : i32
    %c0_i32_1 = arith.constant 0 : i32
    return %c0_i32, %c0_i32_0 : i32, i32
  }
  func.func @transform_3(%arg0: i32) -> (i32, i32, i32) {
    %c0_i32 = arith.constant 0 : i32
    %c0_i32_0 = arith.constant 0 : i32
    %c0_i32_1 = arith.constant 0 : i32
    return %arg0, %c0_i32, %c0_i32_0 : i32, i32, i32
  }
}

module attributes {stable_mosaic.version = 11 : i64} {
  func.func @_conv3x3_kernel(%arg0: i32, %arg1: memref<1x8x38xbf16, #tpu.memory_space<vmem>>, %arg2: memref<8x72xbf16, #tpu.memory_space<vmem>>, %arg3: memref<8x1xf32, #tpu.memory_space<vmem>>, %arg4: memref<1x8x24xf32, #tpu.memory_space<vmem>>) attributes {dimension_semantics = [#tpu.dimension_semantics<parallel>], iteration_bounds = array<i64: 2>, scalar_prefetch = 0 : i64, scratch_operands = 0 : i64, tpu.core_type = #tpu.core_type<tc>, window_params = [{transform_indices = @transform_0, window_bounds = array<i64: 1, 8, 38>}, {pipeline_mode = #tpu.pipeline_mode<synchronous>, transform_indices = @transform_1, window_bounds = array<i64: 8, 72>}, {pipeline_mode = #tpu.pipeline_mode<synchronous>, transform_indices = @transform_2, window_bounds = array<i64: 8, 1>}, {transform_indices = @transform_3, window_bounds = array<i64: 1, 8, 24>}]} {
    %c0 = arith.constant 0 : index
    %c0_0 = arith.constant 0 : index
    %c0_1 = arith.constant 0 : index
    %0 = vector.load %arg1[%c0, %c0_0, %c0_1] : memref<1x8x38xbf16, #tpu.memory_space<vmem>>, vector<1x8x38xbf16>
    %1 = vector.shape_cast %0 : vector<1x8x38xbf16> to vector<8x38xbf16>
    %2 = vector.extract_strided_slice %1 {offsets = [0, 0], sizes = [8, 24], strides = [1, 1]} : vector<8x38xbf16> to vector<8x24xbf16>
    %3 = vector.extract_strided_slice %1 {offsets = [0, 1], sizes = [8, 24], strides = [1, 1]} : vector<8x38xbf16> to vector<8x24xbf16>
    %4 = vector.extract_strided_slice %1 {offsets = [0, 2], sizes = [8, 24], strides = [1, 1]} : vector<8x38xbf16> to vector<8x24xbf16>
    %5 = vector.extract_strided_slice %1 {offsets = [0, 6], sizes = [8, 24], strides = [1, 1]} : vector<8x38xbf16> to vector<8x24xbf16>
    %6 = vector.extract_strided_slice %1 {offsets = [0, 7], sizes = [8, 24], strides = [1, 1]} : vector<8x38xbf16> to vector<8x24xbf16>
    %7 = vector.extract_strided_slice %1 {offsets = [0, 8], sizes = [8, 24], strides = [1, 1]} : vector<8x38xbf16> to vector<8x24xbf16>
    %8 = vector.extract_strided_slice %1 {offsets = [0, 12], sizes = [8, 24], strides = [1, 1]} : vector<8x38xbf16> to vector<8x24xbf16>
    %9 = vector.extract_strided_slice %1 {offsets = [0, 13], sizes = [8, 24], strides = [1, 1]} : vector<8x38xbf16> to vector<8x24xbf16>
    %10 = vector.extract_strided_slice %1 {offsets = [0, 14], sizes = [8, 24], strides = [1, 1]} : vector<8x38xbf16> to vector<8x24xbf16>
    %11 = tpu.concatenate %2, %3, %4, %5, %6, %7, %8, %9, %10 in 0 : vector<8x24xbf16>, vector<8x24xbf16>, vector<8x24xbf16>, vector<8x24xbf16>, vector<8x24xbf16>, vector<8x24xbf16>, vector<8x24xbf16>, vector<8x24xbf16>, vector<8x24xbf16> -> vector<72x24xbf16>
    %c0_2 = arith.constant 0 : index
    %c0_3 = arith.constant 0 : index
    %12 = vector.load %arg2[%c0_2, %c0_3] : memref<8x72xbf16, #tpu.memory_space<vmem>>, vector<8x72xbf16>
    %cst = arith.constant dense<0.000000e+00> : vector<8x24xf32>
    %13 = tpu.matmul %12, %11, %cst {dimension_numbers = #tpu.dot_dimension_numbers<[1], [0], [0], [1], [0, 0, 1, 1], [], []>} : vector<8x72xbf16>, vector<72x24xbf16>, vector<8x24xf32> -> vector<8x24xf32>
    %c0_4 = arith.constant 0 : index
    %c0_5 = arith.constant 0 : index
    %14 = vector.load %arg3[%c0_4, %c0_5] : memref<8x1xf32, #tpu.memory_space<vmem>>, vector<8x1xf32>
    %15 = vector.broadcast %14 : vector<8x1xf32> to vector<8x24xf32>
    %16 = arith.addf %13, %15 : vector<8x24xf32>
    %cst_6 = arith.constant 0.000000e+00 : f32
    %17 = vector.broadcast %cst_6 : f32 to vector<8x24xf32>
    %18 = arith.maximumf %16, %17 : vector<8x24xf32>
    %c0_7 = arith.constant 0 : index
    %c0_8 = arith.constant 0 : index
    %c0_9 = arith.constant 0 : index
    %19 = vector.load %arg4[%c0_7, %c0_8, %c0_9] : memref<1x8x24xf32, #tpu.memory_space<vmem>>, vector<1x8x24xf32>
    %20 = vector.shape_cast %19 : vector<1x8x24xf32> to vector<8x24xf32>
    %21 = vector.shape_cast %18 : vector<8x24xf32> to vector<1x8x24xf32>
    tpu.vector_store %arg4[%c0_7, %c0_8, %c0_9], %21 {strides = array<i32>} : memref<1x8x24xf32, #tpu.memory_space<vmem>>, vector<1x8x24xf32>,
    return
  }
  func.func @transform_0(%arg0: i32) -> (i32, i32, i32) {
    %c0_i32 = arith.constant 0 : i32
    %c0_i32_0 = arith.constant 0 : i32
    %c0_i32_1 = arith.constant 0 : i32
    return %arg0, %c0_i32, %c0_i32_0 : i32, i32, i32
  }
  func.func @transform_1(%arg0: i32) -> (i32, i32) {
    %c0_i32 = arith.constant 0 : i32
    %c0_i32_0 = arith.constant 0 : i32
    %c0_i32_1 = arith.constant 0 : i32
    return %c0_i32, %c0_i32_0 : i32, i32
  }
  func.func @transform_2(%arg0: i32) -> (i32, i32) {
    %c0_i32 = arith.constant 0 : i32
    %c0_i32_0 = arith.constant 0 : i32
    %c0_i32_1 = arith.constant 0 : i32
    return %c0_i32, %c0_i32_0 : i32, i32
  }
  func.func @transform_3(%arg0: i32) -> (i32, i32, i32) {
    %c0_i32 = arith.constant 0 : i32
    %c0_i32_0 = arith.constant 0 : i32
    %c0_i32_1 = arith.constant 0 : i32
    return %arg0, %c0_i32, %c0_i32_0 : i32, i32, i32
  }
}

module attributes {stable_mosaic.version = 11 : i64} {
  func.func @_conv3x3_kernel(%arg0: i32, %arg1: memref<1x8x18xbf16, #tpu.memory_space<vmem>>, %arg2: memref<8x72xbf16, #tpu.memory_space<vmem>>, %arg3: memref<8x1xf32, #tpu.memory_space<vmem>>, %arg4: memref<1x8x8xf32, #tpu.memory_space<vmem>>) attributes {dimension_semantics = [#tpu.dimension_semantics<parallel>], iteration_bounds = array<i64: 2>, scalar_prefetch = 0 : i64, scratch_operands = 0 : i64, tpu.core_type = #tpu.core_type<tc>, window_params = [{transform_indices = @transform_0, window_bounds = array<i64: 1, 8, 18>}, {pipeline_mode = #tpu.pipeline_mode<synchronous>, transform_indices = @transform_1, window_bounds = array<i64: 8, 72>}, {pipeline_mode = #tpu.pipeline_mode<synchronous>, transform_indices = @transform_2, window_bounds = array<i64: 8, 1>}, {transform_indices = @transform_3, window_bounds = array<i64: 1, 8, 8>}]} {
    %c0 = arith.constant 0 : index
    %c0_0 = arith.constant 0 : index
    %c0_1 = arith.constant 0 : index
    %0 = vector.load %arg1[%c0, %c0_0, %c0_1] : memref<1x8x18xbf16, #tpu.memory_space<vmem>>, vector<1x8x18xbf16>
    %1 = vector.shape_cast %0 : vector<1x8x18xbf16> to vector<8x18xbf16>
    %2 = vector.extract_strided_slice %1 {offsets = [0, 0], sizes = [8, 8], strides = [1, 1]} : vector<8x18xbf16> to vector<8x8xbf16>
    %3 = vector.extract_strided_slice %1 {offsets = [0, 1], sizes = [8, 8], strides = [1, 1]} : vector<8x18xbf16> to vector<8x8xbf16>
    %4 = vector.extract_strided_slice %1 {offsets = [0, 2], sizes = [8, 8], strides = [1, 1]} : vector<8x18xbf16> to vector<8x8xbf16>
    %5 = vector.extract_strided_slice %1 {offsets = [0, 4], sizes = [8, 8], strides = [1, 1]} : vector<8x18xbf16> to vector<8x8xbf16>
    %6 = vector.extract_strided_slice %1 {offsets = [0, 5], sizes = [8, 8], strides = [1, 1]} : vector<8x18xbf16> to vector<8x8xbf16>
    %7 = vector.extract_strided_slice %1 {offsets = [0, 6], sizes = [8, 8], strides = [1, 1]} : vector<8x18xbf16> to vector<8x8xbf16>
    %8 = vector.extract_strided_slice %1 {offsets = [0, 8], sizes = [8, 8], strides = [1, 1]} : vector<8x18xbf16> to vector<8x8xbf16>
    %9 = vector.extract_strided_slice %1 {offsets = [0, 9], sizes = [8, 8], strides = [1, 1]} : vector<8x18xbf16> to vector<8x8xbf16>
    %10 = vector.extract_strided_slice %1 {offsets = [0, 10], sizes = [8, 8], strides = [1, 1]} : vector<8x18xbf16> to vector<8x8xbf16>
    %11 = tpu.concatenate %2, %3, %4, %5, %6, %7, %8, %9, %10 in 0 : vector<8x8xbf16>, vector<8x8xbf16>, vector<8x8xbf16>, vector<8x8xbf16>, vector<8x8xbf16>, vector<8x8xbf16>, vector<8x8xbf16>, vector<8x8xbf16>, vector<8x8xbf16> -> vector<72x8xbf16>
    %c0_2 = arith.constant 0 : index
    %c0_3 = arith.constant 0 : index
    %12 = vector.load %arg2[%c0_2, %c0_3] : memref<8x72xbf16, #tpu.memory_space<vmem>>, vector<8x72xbf16>
    %cst = arith.constant dense<0.000000e+00> : vector<8x8xf32>
    %13 = tpu.matmul %12, %11, %cst {dimension_numbers = #tpu.dot_dimension_numbers<[1], [0], [0], [1], [0, 0, 1, 1], [], []>} : vector<8x72xbf16>, vector<72x8xbf16>, vector<8x8xf32> -> vector<8x8xf32>
    %c0_4 = arith.constant 0 : index
    %c0_5 = arith.constant 0 : index
    %14 = vector.load %arg3[%c0_4, %c0_5] : memref<8x1xf32, #tpu.memory_space<vmem>>, vector<8x1xf32>
    %15 = vector.broadcast %14 : vector<8x1xf32> to vector<8x8xf32>
    %16 = arith.addf %13, %15 : vector<8x8xf32>
    %cst_6 = arith.constant 0.000000e+00 : f32
    %17 = vector.broadcast %cst_6 : f32 to vector<8x8xf32>
    %18 = arith.maximumf %16, %17 : vector<8x8xf32>
    %c0_7 = arith.constant 0 : index
    %c0_8 = arith.constant 0 : index
    %c0_9 = arith.constant 0 : index
    %19 = vector.load %arg4[%c0_7, %c0_8, %c0_9] : memref<1x8x8xf32, #tpu.memory_space<vmem>>, vector<1x8x8xf32>
    %20 = vector.shape_cast %19 : vector<1x8x8xf32> to vector<8x8xf32>
    %21 = vector.shape_cast %18 : vector<8x8xf32> to vector<1x8x8xf32>
    tpu.vector_store %arg4[%c0_7, %c0_8, %c0_9], %21 {strides = array<i32>} : memref<1x8x8xf32, #tpu.memory_space<vmem>>, vector<1x8x8xf32>,
    return
  }
  func.func @transform_0(%arg0: i32) -> (i32, i32, i32) {
    %c0_i32 = arith.constant 0 : i32
    %c0_i32_0 = arith.constant 0 : i32
    %c0_i32_1 = arith.constant 0 : i32
    return %arg0, %c0_i32, %c0_i32_0 : i32, i32, i32
  }
  func.func @transform_1(%arg0: i32) -> (i32, i32) {
    %c0_i32 = arith.constant 0 : i32
    %c0_i32_0 = arith.constant 0 : i32
    %c0_i32_1 = arith.constant 0 : i32
    return %c0_i32, %c0_i32_0 : i32, i32
  }
  func.func @transform_2(%arg0: i32) -> (i32, i32) {
    %c0_i32 = arith.constant 0 : i32
    %c0_i32_0 = arith.constant 0 : i32
    %c0_i32_1 = arith.constant 0 : i32
    return %c0_i32, %c0_i32_0 : i32, i32
  }
  func.func @transform_3(%arg0: i32) -> (i32, i32, i32) {
    %c0_i32 = arith.constant 0 : i32
    %c0_i32_0 = arith.constant 0 : i32
    %c0_i32_1 = arith.constant 0 : i32
    return %arg0, %c0_i32, %c0_i32_0 : i32, i32, i32
  }
}

module attributes {stable_mosaic.version = 11 : i64} {
  func.func @_conv3x3_kernel(%arg0: i32, %arg1: memref<1x8x11xbf16, #tpu.memory_space<vmem>>, %arg2: memref<8x72xbf16, #tpu.memory_space<vmem>>, %arg3: memref<8x1xf32, #tpu.memory_space<vmem>>, %arg4: memref<1x8x3xf32, #tpu.memory_space<vmem>>) attributes {dimension_semantics = [#tpu.dimension_semantics<parallel>], iteration_bounds = array<i64: 2>, scalar_prefetch = 0 : i64, scratch_operands = 0 : i64, tpu.core_type = #tpu.core_type<tc>, window_params = [{transform_indices = @transform_0, window_bounds = array<i64: 1, 8, 11>}, {pipeline_mode = #tpu.pipeline_mode<synchronous>, transform_indices = @transform_1, window_bounds = array<i64: 8, 72>}, {pipeline_mode = #tpu.pipeline_mode<synchronous>, transform_indices = @transform_2, window_bounds = array<i64: 8, 1>}, {transform_indices = @transform_3, window_bounds = array<i64: 1, 8, 3>}]} {
    %c0 = arith.constant 0 : index
    %c0_0 = arith.constant 0 : index
    %c0_1 = arith.constant 0 : index
    %0 = vector.load %arg1[%c0, %c0_0, %c0_1] : memref<1x8x11xbf16, #tpu.memory_space<vmem>>, vector<1x8x11xbf16>
    %1 = vector.shape_cast %0 : vector<1x8x11xbf16> to vector<8x11xbf16>
    %2 = vector.extract_strided_slice %1 {offsets = [0, 0], sizes = [8, 3], strides = [1, 1]} : vector<8x11xbf16> to vector<8x3xbf16>
    %3 = vector.extract_strided_slice %1 {offsets = [0, 1], sizes = [8, 3], strides = [1, 1]} : vector<8x11xbf16> to vector<8x3xbf16>
    %4 = vector.extract_strided_slice %1 {offsets = [0, 2], sizes = [8, 3], strides = [1, 1]} : vector<8x11xbf16> to vector<8x3xbf16>
    %5 = vector.extract_strided_slice %1 {offsets = [0, 3], sizes = [8, 3], strides = [1, 1]} : vector<8x11xbf16> to vector<8x3xbf16>
    %6 = vector.extract_strided_slice %1 {offsets = [0, 4], sizes = [8, 3], strides = [1, 1]} : vector<8x11xbf16> to vector<8x3xbf16>
    %7 = vector.extract_strided_slice %1 {offsets = [0, 5], sizes = [8, 3], strides = [1, 1]} : vector<8x11xbf16> to vector<8x3xbf16>
    %8 = vector.extract_strided_slice %1 {offsets = [0, 6], sizes = [8, 3], strides = [1, 1]} : vector<8x11xbf16> to vector<8x3xbf16>
    %9 = vector.extract_strided_slice %1 {offsets = [0, 7], sizes = [8, 3], strides = [1, 1]} : vector<8x11xbf16> to vector<8x3xbf16>
    %10 = vector.extract_strided_slice %1 {offsets = [0, 8], sizes = [8, 3], strides = [1, 1]} : vector<8x11xbf16> to vector<8x3xbf16>
    %11 = tpu.concatenate %2, %3, %4, %5, %6, %7, %8, %9, %10 in 0 : vector<8x3xbf16>, vector<8x3xbf16>, vector<8x3xbf16>, vector<8x3xbf16>, vector<8x3xbf16>, vector<8x3xbf16>, vector<8x3xbf16>, vector<8x3xbf16>, vector<8x3xbf16> -> vector<72x3xbf16>
    %c0_2 = arith.constant 0 : index
    %c0_3 = arith.constant 0 : index
    %12 = vector.load %arg2[%c0_2, %c0_3] : memref<8x72xbf16, #tpu.memory_space<vmem>>, vector<8x72xbf16>
    %cst = arith.constant dense<0.000000e+00> : vector<8x3xf32>
    %13 = tpu.matmul %12, %11, %cst {dimension_numbers = #tpu.dot_dimension_numbers<[1], [0], [0], [1], [0, 0, 1, 1], [], []>} : vector<8x72xbf16>, vector<72x3xbf16>, vector<8x3xf32> -> vector<8x3xf32>
    %c0_4 = arith.constant 0 : index
    %c0_5 = arith.constant 0 : index
    %14 = vector.load %arg3[%c0_4, %c0_5] : memref<8x1xf32, #tpu.memory_space<vmem>>, vector<8x1xf32>
    %15 = vector.broadcast %14 : vector<8x1xf32> to vector<8x3xf32>
    %16 = arith.addf %13, %15 : vector<8x3xf32>
    %cst_6 = arith.constant 0.000000e+00 : f32
    %17 = vector.broadcast %cst_6 : f32 to vector<8x3xf32>
    %18 = arith.maximumf %16, %17 : vector<8x3xf32>
    %c0_7 = arith.constant 0 : index
    %c0_8 = arith.constant 0 : index
    %c0_9 = arith.constant 0 : index
    %19 = vector.load %arg4[%c0_7, %c0_8, %c0_9] : memref<1x8x3xf32, #tpu.memory_space<vmem>>, vector<1x8x3xf32>
    %20 = vector.shape_cast %19 : vector<1x8x3xf32> to vector<8x3xf32>
    %21 = vector.shape_cast %18 : vector<8x3xf32> to vector<1x8x3xf32>
    tpu.vector_store %arg4[%c0_7, %c0_8, %c0_9], %21 {strides = array<i32>} : memref<1x8x3xf32, #tpu.memory_space<vmem>>, vector<1x8x3xf32>,
    return
  }
  func.func @transform_0(%arg0: i32) -> (i32, i32, i32) {
    %c0_i32 = arith.constant 0 : i32
    %c0_i32_0 = arith.constant 0 : i32
    %c0_i32_1 = arith.constant 0 : i32
    return %arg0, %c0_i32, %c0_i32_0 : i32, i32, i32
  }
  func.func @transform_1(%arg0: i32) -> (i32, i32) {
    %c0_i32 = arith.constant 0 : i32
    %c0_i32_0 = arith.constant 0 : i32
    %c0_i32_1 = arith.constant 0 : i32
    return %c0_i32, %c0_i32_0 : i32, i32
  }
  func.func @transform_2(%arg0: i32) -> (i32, i32) {
    %c0_i32 = arith.constant 0 : i32
    %c0_i32_0 = arith.constant 0 : i32
    %c0_i32_1 = arith.constant 0 : i32
    return %c0_i32, %c0_i32_0 : i32, i32
  }
  func.func @transform_3(%arg0: i32) -> (i32, i32, i32) {
    %c0_i32 = arith.constant 0 : i32
    %c0_i32_0 = arith.constant 0 : i32
    %c0_i32_1 = arith.constant 0 : i32
    return %arg0, %c0_i32, %c0_i32_0 : i32, i32, i32
  }
}

module attributes {stable_mosaic.version = 11 : i64} {
  func.func @_conv3x3_kernel(%arg0: i32, %arg1: memref<1x8x11xbf16, #tpu.memory_space<vmem>>, %arg2: memref<32x72xbf16, #tpu.memory_space<vmem>>, %arg3: memref<32x1xf32, #tpu.memory_space<vmem>>, %arg4: memref<1x32x3xf32, #tpu.memory_space<vmem>>) attributes {dimension_semantics = [#tpu.dimension_semantics<parallel>], iteration_bounds = array<i64: 2>, scalar_prefetch = 0 : i64, scratch_operands = 0 : i64, tpu.core_type = #tpu.core_type<tc>, window_params = [{transform_indices = @transform_0, window_bounds = array<i64: 1, 8, 11>}, {pipeline_mode = #tpu.pipeline_mode<synchronous>, transform_indices = @transform_1, window_bounds = array<i64: 32, 72>}, {pipeline_mode = #tpu.pipeline_mode<synchronous>, transform_indices = @transform_2, window_bounds = array<i64: 32, 1>}, {transform_indices = @transform_3, window_bounds = array<i64: 1, 32, 3>}]} {
    %c0 = arith.constant 0 : index
    %c0_0 = arith.constant 0 : index
    %c0_1 = arith.constant 0 : index
    %0 = vector.load %arg1[%c0, %c0_0, %c0_1] : memref<1x8x11xbf16, #tpu.memory_space<vmem>>, vector<1x8x11xbf16>
    %1 = vector.shape_cast %0 : vector<1x8x11xbf16> to vector<8x11xbf16>
    %2 = vector.extract_strided_slice %1 {offsets = [0, 0], sizes = [8, 3], strides = [1, 1]} : vector<8x11xbf16> to vector<8x3xbf16>
    %3 = vector.extract_strided_slice %1 {offsets = [0, 1], sizes = [8, 3], strides = [1, 1]} : vector<8x11xbf16> to vector<8x3xbf16>
    %4 = vector.extract_strided_slice %1 {offsets = [0, 2], sizes = [8, 3], strides = [1, 1]} : vector<8x11xbf16> to vector<8x3xbf16>
    %5 = vector.extract_strided_slice %1 {offsets = [0, 3], sizes = [8, 3], strides = [1, 1]} : vector<8x11xbf16> to vector<8x3xbf16>
    %6 = vector.extract_strided_slice %1 {offsets = [0, 4], sizes = [8, 3], strides = [1, 1]} : vector<8x11xbf16> to vector<8x3xbf16>
    %7 = vector.extract_strided_slice %1 {offsets = [0, 5], sizes = [8, 3], strides = [1, 1]} : vector<8x11xbf16> to vector<8x3xbf16>
    %8 = vector.extract_strided_slice %1 {offsets = [0, 6], sizes = [8, 3], strides = [1, 1]} : vector<8x11xbf16> to vector<8x3xbf16>
    %9 = vector.extract_strided_slice %1 {offsets = [0, 7], sizes = [8, 3], strides = [1, 1]} : vector<8x11xbf16> to vector<8x3xbf16>
    %10 = vector.extract_strided_slice %1 {offsets = [0, 8], sizes = [8, 3], strides = [1, 1]} : vector<8x11xbf16> to vector<8x3xbf16>
    %11 = tpu.concatenate %2, %3, %4, %5, %6, %7, %8, %9, %10 in 0 : vector<8x3xbf16>, vector<8x3xbf16>, vector<8x3xbf16>, vector<8x3xbf16>, vector<8x3xbf16>, vector<8x3xbf16>, vector<8x3xbf16>, vector<8x3xbf16>, vector<8x3xbf16> -> vector<72x3xbf16>
    %c0_2 = arith.constant 0 : index
    %c0_3 = arith.constant 0 : index
    %12 = vector.load %arg2[%c0_2, %c0_3] : memref<32x72xbf16, #tpu.memory_space<vmem>>, vector<32x72xbf16>
    %cst = arith.constant dense<0.000000e+00> : vector<32x3xf32>
    %13 = tpu.matmul %12, %11, %cst {dimension_numbers = #tpu.dot_dimension_numbers<[1], [0], [0], [1], [0, 0, 1, 1], [], []>} : vector<32x72xbf16>, vector<72x3xbf16>, vector<32x3xf32> -> vector<32x3xf32>
    %c0_4 = arith.constant 0 : index
    %c0_5 = arith.constant 0 : index
    %14 = vector.load %arg3[%c0_4, %c0_5] : memref<32x1xf32, #tpu.memory_space<vmem>>, vector<32x1xf32>
    %15 = vector.broadcast %14 : vector<32x1xf32> to vector<32x3xf32>
    %16 = arith.addf %13, %15 : vector<32x3xf32>
    %17 = vector.extract_strided_slice %16 {offsets = [0, 0], sizes = [16, 3], strides = [1, 1]} : vector<32x3xf32> to vector<16x3xf32>
    %18 = vector.extract_strided_slice %16 {offsets = [16, 0], sizes = [4, 3], strides = [1, 1]} : vector<32x3xf32> to vector<4x3xf32>
    %cst_6 = arith.constant dense<0xFF800000> : vector<3xf32>
    %19 = vector.multi_reduction <maximumf>, %18, %cst_6 [0] : vector<4x3xf32> to vector<3xf32>
    %20 = vector.shape_cast %19 : vector<3xf32> to vector<1x3xf32>
    %21 = vector.broadcast %20 : vector<1x3xf32> to vector<4x3xf32>
    %22 = arith.subf %18, %21 : vector<4x3xf32>
    %23 = math.exp %22 : vector<4x3xf32>
    %cst_7 = arith.constant dense<0.000000e+00> : vector<3xf32>
    %24 = vector.multi_reduction <add>, %23, %cst_7 [0] : vector<4x3xf32> to vector<3xf32>
    %25 = vector.shape_cast %24 : vector<3xf32> to vector<1x3xf32>
    %26 = tpu.reciprocal %25 {approx = true} : vector<1x3xf32> -> vector<1x3xf32>
    %27 = vector.broadcast %26 : vector<1x3xf32> to vector<4x3xf32>
    %28 = arith.mulf %23, %27 : vector<4x3xf32>
    %29 = vector.extract_strided_slice %16 {offsets = [20, 0], sizes = [4, 3], strides = [1, 1]} : vector<32x3xf32> to vector<4x3xf32>
    %cst_8 = arith.constant dense<0xFF800000> : vector<3xf32>
    %30 = vector.multi_reduction <maximumf>, %29, %cst_8 [0] : vector<4x3xf32> to vector<3xf32>
    %31 = vector.shape_cast %30 : vector<3xf32> to vector<1x3xf32>
    %32 = vector.broadcast %31 : vector<1x3xf32> to vector<4x3xf32>
    %33 = arith.subf %29, %32 : vector<4x3xf32>
    %34 = math.exp %33 : vector<4x3xf32>
    %cst_9 = arith.constant dense<0.000000e+00> : vector<3xf32>
    %35 = vector.multi_reduction <add>, %34, %cst_9 [0] : vector<4x3xf32> to vector<3xf32>
    %36 = vector.shape_cast %35 : vector<3xf32> to vector<1x3xf32>
    %37 = tpu.reciprocal %36 {approx = true} : vector<1x3xf32> -> vector<1x3xf32>
    %38 = vector.broadcast %37 : vector<1x3xf32> to vector<4x3xf32>
    %39 = arith.mulf %34, %38 : vector<4x3xf32>
    %40 = vector.extract_strided_slice %16 {offsets = [24, 0], sizes = [4, 3], strides = [1, 1]} : vector<32x3xf32> to vector<4x3xf32>
    %cst_10 = arith.constant dense<0xFF800000> : vector<3xf32>
    %41 = vector.multi_reduction <maximumf>, %40, %cst_10 [0] : vector<4x3xf32> to vector<3xf32>
    %42 = vector.shape_cast %41 : vector<3xf32> to vector<1x3xf32>
    %43 = vector.broadcast %42 : vector<1x3xf32> to vector<4x3xf32>
    %44 = arith.subf %40, %43 : vector<4x3xf32>
    %45 = math.exp %44 : vector<4x3xf32>
    %cst_11 = arith.constant dense<0.000000e+00> : vector<3xf32>
    %46 = vector.multi_reduction <add>, %45, %cst_11 [0] : vector<4x3xf32> to vector<3xf32>
    %47 = vector.shape_cast %46 : vector<3xf32> to vector<1x3xf32>
    %48 = tpu.reciprocal %47 {approx = true} : vector<1x3xf32> -> vector<1x3xf32>
    %49 = vector.broadcast %48 : vector<1x3xf32> to vector<4x3xf32>
    %50 = arith.mulf %45, %49 : vector<4x3xf32>
    %51 = vector.extract_strided_slice %16 {offsets = [28, 0], sizes = [4, 3], strides = [1, 1]} : vector<32x3xf32> to vector<4x3xf32>
    %cst_12 = arith.constant dense<0xFF800000> : vector<3xf32>
    %52 = vector.multi_reduction <maximumf>, %51, %cst_12 [0] : vector<4x3xf32> to vector<3xf32>
    %53 = vector.shape_cast %52 : vector<3xf32> to vector<1x3xf32>
    %54 = vector.broadcast %53 : vector<1x3xf32> to vector<4x3xf32>
    %55 = arith.subf %51, %54 : vector<4x3xf32>
    %56 = math.exp %55 : vector<4x3xf32>
    %cst_13 = arith.constant dense<0.000000e+00> : vector<3xf32>
    %57 = vector.multi_reduction <add>, %56, %cst_13 [0] : vector<4x3xf32> to vector<3xf32>
    %58 = vector.shape_cast %57 : vector<3xf32> to vector<1x3xf32>
    %59 = tpu.reciprocal %58 {approx = true} : vector<1x3xf32> -> vector<1x3xf32>
    %60 = vector.broadcast %59 : vector<1x3xf32> to vector<4x3xf32>
    %61 = arith.mulf %56, %60 : vector<4x3xf32>
    %62 = tpu.concatenate %17, %28, %39, %50, %61 in 0 : vector<16x3xf32>, vector<4x3xf32>, vector<4x3xf32>, vector<4x3xf32>, vector<4x3xf32> -> vector<32x3xf32>
    %c0_14 = arith.constant 0 : index
    %c0_15 = arith.constant 0 : index
    %c0_16 = arith.constant 0 : index
    %63 = vector.load %arg4[%c0_14, %c0_15, %c0_16] : memref<1x32x3xf32, #tpu.memory_space<vmem>>, vector<1x32x3xf32>
    %64 = vector.shape_cast %63 : vector<1x32x3xf32> to vector<32x3xf32>
    %65 = vector.shape_cast %62 : vector<32x3xf32> to vector<1x32x3xf32>
    tpu.vector_store %arg4[%c0_14, %c0_15, %c0_16], %65 {strides = array<i32>} : memref<1x32x3xf32, #tpu.memory_space<vmem>>, vector<1x32x3xf32>,
    return
  }
  func.func @transform_0(%arg0: i32) -> (i32, i32, i32) {
    %c0_i32 = arith.constant 0 : i32
    %c0_i32_0 = arith.constant 0 : i32
    %c0_i32_1 = arith.constant 0 : i32
    return %arg0, %c0_i32, %c0_i32_0 : i32, i32, i32
  }
  func.func @transform_1(%arg0: i32) -> (i32, i32) {
    %c0_i32 = arith.constant 0 : i32
    %c0_i32_0 = arith.constant 0 : i32
    %c0_i32_1 = arith.constant 0 : i32
    return %c0_i32, %c0_i32_0 : i32, i32
  }
  func.func @transform_2(%arg0: i32) -> (i32, i32) {
    %c0_i32 = arith.constant 0 : i32
    %c0_i32_0 = arith.constant 0 : i32
    %c0_i32_1 = arith.constant 0 : i32
    return %c0_i32, %c0_i32_0 : i32, i32
  }
  func.func @transform_3(%arg0: i32) -> (i32, i32, i32) {
    %c0_i32 = arith.constant 0 : i32
    %c0_i32_0 = arith.constant 0 : i32
    %c0_i32_1 = arith.constant 0 : i32
    return %arg0, %c0_i32, %c0_i32_0 : i32, i32, i32
  }
}

module attributes {stable_mosaic.version = 11 : i64} {
  func.func @_conv3x3_kernel(%arg0: i32, %arg1: memref<1x8x18xbf16, #tpu.memory_space<vmem>>, %arg2: memref<48x72xbf16, #tpu.memory_space<vmem>>, %arg3: memref<48x1xf32, #tpu.memory_space<vmem>>, %arg4: memref<1x48x8xf32, #tpu.memory_space<vmem>>) attributes {dimension_semantics = [#tpu.dimension_semantics<parallel>], iteration_bounds = array<i64: 2>, scalar_prefetch = 0 : i64, scratch_operands = 0 : i64, tpu.core_type = #tpu.core_type<tc>, window_params = [{transform_indices = @transform_0, window_bounds = array<i64: 1, 8, 18>}, {pipeline_mode = #tpu.pipeline_mode<synchronous>, transform_indices = @transform_1, window_bounds = array<i64: 48, 72>}, {pipeline_mode = #tpu.pipeline_mode<synchronous>, transform_indices = @transform_2, window_bounds = array<i64: 48, 1>}, {transform_indices = @transform_3, window_bounds = array<i64: 1, 48, 8>}]} {
    %c0 = arith.constant 0 : index
    %c0_0 = arith.constant 0 : index
    %c0_1 = arith.constant 0 : index
    %0 = vector.load %arg1[%c0, %c0_0, %c0_1] : memref<1x8x18xbf16, #tpu.memory_space<vmem>>, vector<1x8x18xbf16>
    %1 = vector.shape_cast %0 : vector<1x8x18xbf16> to vector<8x18xbf16>
    %2 = vector.extract_strided_slice %1 {offsets = [0, 0], sizes = [8, 8], strides = [1, 1]} : vector<8x18xbf16> to vector<8x8xbf16>
    %3 = vector.extract_strided_slice %1 {offsets = [0, 1], sizes = [8, 8], strides = [1, 1]} : vector<8x18xbf16> to vector<8x8xbf16>
    %4 = vector.extract_strided_slice %1 {offsets = [0, 2], sizes = [8, 8], strides = [1, 1]} : vector<8x18xbf16> to vector<8x8xbf16>
    %5 = vector.extract_strided_slice %1 {offsets = [0, 4], sizes = [8, 8], strides = [1, 1]} : vector<8x18xbf16> to vector<8x8xbf16>
    %6 = vector.extract_strided_slice %1 {offsets = [0, 5], sizes = [8, 8], strides = [1, 1]} : vector<8x18xbf16> to vector<8x8xbf16>
    %7 = vector.extract_strided_slice %1 {offsets = [0, 6], sizes = [8, 8], strides = [1, 1]} : vector<8x18xbf16> to vector<8x8xbf16>
    %8 = vector.extract_strided_slice %1 {offsets = [0, 8], sizes = [8, 8], strides = [1, 1]} : vector<8x18xbf16> to vector<8x8xbf16>
    %9 = vector.extract_strided_slice %1 {offsets = [0, 9], sizes = [8, 8], strides = [1, 1]} : vector<8x18xbf16> to vector<8x8xbf16>
    %10 = vector.extract_strided_slice %1 {offsets = [0, 10], sizes = [8, 8], strides = [1, 1]} : vector<8x18xbf16> to vector<8x8xbf16>
    %11 = tpu.concatenate %2, %3, %4, %5, %6, %7, %8, %9, %10 in 0 : vector<8x8xbf16>, vector<8x8xbf16>, vector<8x8xbf16>, vector<8x8xbf16>, vector<8x8xbf16>, vector<8x8xbf16>, vector<8x8xbf16>, vector<8x8xbf16>, vector<8x8xbf16> -> vector<72x8xbf16>
    %c0_2 = arith.constant 0 : index
    %c0_3 = arith.constant 0 : index
    %12 = vector.load %arg2[%c0_2, %c0_3] : memref<48x72xbf16, #tpu.memory_space<vmem>>, vector<48x72xbf16>
    %cst = arith.constant dense<0.000000e+00> : vector<48x8xf32>
    %13 = tpu.matmul %12, %11, %cst {dimension_numbers = #tpu.dot_dimension_numbers<[1], [0], [0], [1], [0, 0, 1, 1], [], []>} : vector<48x72xbf16>, vector<72x8xbf16>, vector<48x8xf32> -> vector<48x8xf32>
    %c0_4 = arith.constant 0 : index
    %c0_5 = arith.constant 0 : index
    %14 = vector.load %arg3[%c0_4, %c0_5] : memref<48x1xf32, #tpu.memory_space<vmem>>, vector<48x1xf32>
    %15 = vector.broadcast %14 : vector<48x1xf32> to vector<48x8xf32>
    %16 = arith.addf %13, %15 : vector<48x8xf32>
    %17 = vector.extract_strided_slice %16 {offsets = [0, 0], sizes = [24, 8], strides = [1, 1]} : vector<48x8xf32> to vector<24x8xf32>
    %18 = vector.extract_strided_slice %16 {offsets = [24, 0], sizes = [4, 8], strides = [1, 1]} : vector<48x8xf32> to vector<4x8xf32>
    %cst_6 = arith.constant dense<0xFF800000> : vector<8xf32>
    %19 = vector.multi_reduction <maximumf>, %18, %cst_6 [0] : vector<4x8xf32> to vector<8xf32>
    %20 = vector.shape_cast %19 : vector<8xf32> to vector<1x8xf32>
    %21 = vector.broadcast %20 : vector<1x8xf32> to vector<4x8xf32>
    %22 = arith.subf %18, %21 : vector<4x8xf32>
    %23 = math.exp %22 : vector<4x8xf32>
    %cst_7 = arith.constant dense<0.000000e+00> : vector<8xf32>
    %24 = vector.multi_reduction <add>, %23, %cst_7 [0] : vector<4x8xf32> to vector<8xf32>
    %25 = vector.shape_cast %24 : vector<8xf32> to vector<1x8xf32>
    %26 = tpu.reciprocal %25 {approx = true} : vector<1x8xf32> -> vector<1x8xf32>
    %27 = vector.broadcast %26 : vector<1x8xf32> to vector<4x8xf32>
    %28 = arith.mulf %23, %27 : vector<4x8xf32>
    %29 = vector.extract_strided_slice %16 {offsets = [28, 0], sizes = [4, 8], strides = [1, 1]} : vector<48x8xf32> to vector<4x8xf32>
    %cst_8 = arith.constant dense<0xFF800000> : vector<8xf32>
    %30 = vector.multi_reduction <maximumf>, %29, %cst_8 [0] : vector<4x8xf32> to vector<8xf32>
    %31 = vector.shape_cast %30 : vector<8xf32> to vector<1x8xf32>
    %32 = vector.broadcast %31 : vector<1x8xf32> to vector<4x8xf32>
    %33 = arith.subf %29, %32 : vector<4x8xf32>
    %34 = math.exp %33 : vector<4x8xf32>
    %cst_9 = arith.constant dense<0.000000e+00> : vector<8xf32>
    %35 = vector.multi_reduction <add>, %34, %cst_9 [0] : vector<4x8xf32> to vector<8xf32>
    %36 = vector.shape_cast %35 : vector<8xf32> to vector<1x8xf32>
    %37 = tpu.reciprocal %36 {approx = true} : vector<1x8xf32> -> vector<1x8xf32>
    %38 = vector.broadcast %37 : vector<1x8xf32> to vector<4x8xf32>
    %39 = arith.mulf %34, %38 : vector<4x8xf32>
    %40 = vector.extract_strided_slice %16 {offsets = [32, 0], sizes = [4, 8], strides = [1, 1]} : vector<48x8xf32> to vector<4x8xf32>
    %cst_10 = arith.constant dense<0xFF800000> : vector<8xf32>
    %41 = vector.multi_reduction <maximumf>, %40, %cst_10 [0] : vector<4x8xf32> to vector<8xf32>
    %42 = vector.shape_cast %41 : vector<8xf32> to vector<1x8xf32>
    %43 = vector.broadcast %42 : vector<1x8xf32> to vector<4x8xf32>
    %44 = arith.subf %40, %43 : vector<4x8xf32>
    %45 = math.exp %44 : vector<4x8xf32>
    %cst_11 = arith.constant dense<0.000000e+00> : vector<8xf32>
    %46 = vector.multi_reduction <add>, %45, %cst_11 [0] : vector<4x8xf32> to vector<8xf32>
    %47 = vector.shape_cast %46 : vector<8xf32> to vector<1x8xf32>
    %48 = tpu.reciprocal %47 {approx = true} : vector<1x8xf32> -> vector<1x8xf32>
    %49 = vector.broadcast %48 : vector<1x8xf32> to vector<4x8xf32>
    %50 = arith.mulf %45, %49 : vector<4x8xf32>
    %51 = vector.extract_strided_slice %16 {offsets = [36, 0], sizes = [4, 8], strides = [1, 1]} : vector<48x8xf32> to vector<4x8xf32>
    %cst_12 = arith.constant dense<0xFF800000> : vector<8xf32>
    %52 = vector.multi_reduction <maximumf>, %51, %cst_12 [0] : vector<4x8xf32> to vector<8xf32>
    %53 = vector.shape_cast %52 : vector<8xf32> to vector<1x8xf32>
    %54 = vector.broadcast %53 : vector<1x8xf32> to vector<4x8xf32>
    %55 = arith.subf %51, %54 : vector<4x8xf32>
    %56 = math.exp %55 : vector<4x8xf32>
    %cst_13 = arith.constant dense<0.000000e+00> : vector<8xf32>
    %57 = vector.multi_reduction <add>, %56, %cst_13 [0] : vector<4x8xf32> to vector<8xf32>
    %58 = vector.shape_cast %57 : vector<8xf32> to vector<1x8xf32>
    %59 = tpu.reciprocal %58 {approx = true} : vector<1x8xf32> -> vector<1x8xf32>
    %60 = vector.broadcast %59 : vector<1x8xf32> to vector<4x8xf32>
    %61 = arith.mulf %56, %60 : vector<4x8xf32>
    %62 = vector.extract_strided_slice %16 {offsets = [40, 0], sizes = [4, 8], strides = [1, 1]} : vector<48x8xf32> to vector<4x8xf32>
    %cst_14 = arith.constant dense<0xFF800000> : vector<8xf32>
    %63 = vector.multi_reduction <maximumf>, %62, %cst_14 [0] : vector<4x8xf32> to vector<8xf32>
    %64 = vector.shape_cast %63 : vector<8xf32> to vector<1x8xf32>
    %65 = vector.broadcast %64 : vector<1x8xf32> to vector<4x8xf32>
    %66 = arith.subf %62, %65 : vector<4x8xf32>
    %67 = math.exp %66 : vector<4x8xf32>
    %cst_15 = arith.constant dense<0.000000e+00> : vector<8xf32>
    %68 = vector.multi_reduction <add>, %67, %cst_15 [0] : vector<4x8xf32> to vector<8xf32>
    %69 = vector.shape_cast %68 : vector<8xf32> to vector<1x8xf32>
    %70 = tpu.reciprocal %69 {approx = true} : vector<1x8xf32> -> vector<1x8xf32>
    %71 = vector.broadcast %70 : vector<1x8xf32> to vector<4x8xf32>
    %72 = arith.mulf %67, %71 : vector<4x8xf32>
    %73 = vector.extract_strided_slice %16 {offsets = [44, 0], sizes = [4, 8], strides = [1, 1]} : vector<48x8xf32> to vector<4x8xf32>
    %cst_16 = arith.constant dense<0xFF800000> : vector<8xf32>
    %74 = vector.multi_reduction <maximumf>, %73, %cst_16 [0] : vector<4x8xf32> to vector<8xf32>
    %75 = vector.shape_cast %74 : vector<8xf32> to vector<1x8xf32>
    %76 = vector.broadcast %75 : vector<1x8xf32> to vector<4x8xf32>
    %77 = arith.subf %73, %76 : vector<4x8xf32>
    %78 = math.exp %77 : vector<4x8xf32>
    %cst_17 = arith.constant dense<0.000000e+00> : vector<8xf32>
    %79 = vector.multi_reduction <add>, %78, %cst_17 [0] : vector<4x8xf32> to vector<8xf32>
    %80 = vector.shape_cast %79 : vector<8xf32> to vector<1x8xf32>
    %81 = tpu.reciprocal %80 {approx = true} : vector<1x8xf32> -> vector<1x8xf32>
    %82 = vector.broadcast %81 : vector<1x8xf32> to vector<4x8xf32>
    %83 = arith.mulf %78, %82 : vector<4x8xf32>
    %84 = tpu.concatenate %17, %28, %39, %50, %61, %72, %83 in 0 : vector<24x8xf32>, vector<4x8xf32>, vector<4x8xf32>, vector<4x8xf32>, vector<4x8xf32>, vector<4x8xf32>, vector<4x8xf32> -> vector<48x8xf32>
    %c0_18 = arith.constant 0 : index
    %c0_19 = arith.constant 0 : index
    %c0_20 = arith.constant 0 : index
    %85 = vector.load %arg4[%c0_18, %c0_19, %c0_20] : memref<1x48x8xf32, #tpu.memory_space<vmem>>, vector<1x48x8xf32>
    %86 = vector.shape_cast %85 : vector<1x48x8xf32> to vector<48x8xf32>
    %87 = vector.shape_cast %84 : vector<48x8xf32> to vector<1x48x8xf32>
    tpu.vector_store %arg4[%c0_18, %c0_19, %c0_20], %87 {strides = array<i32>} : memref<1x48x8xf32, #tpu.memory_space<vmem>>, vector<1x48x8xf32>,
    return
  }
  func.func @transform_0(%arg0: i32) -> (i32, i32, i32) {
    %c0_i32 = arith.constant 0 : i32
    %c0_i32_0 = arith.constant 0 : i32
    %c0_i32_1 = arith.constant 0 : i32
    return %arg0, %c0_i32, %c0_i32_0 : i32, i32, i32
  }
  func.func @transform_1(%arg0: i32) -> (i32, i32) {
    %c0_i32 = arith.constant 0 : i32
    %c0_i32_0 = arith.constant 0 : i32
    %c0_i32_1 = arith.constant 0 : i32
    return %c0_i32, %c0_i32_0 : i32, i32
  }
  func.func @transform_2(%arg0: i32) -> (i32, i32) {
    %c0_i32 = arith.constant 0 : i32
    %c0_i32_0 = arith.constant 0 : i32
    %c0_i32_1 = arith.constant 0 : i32
    return %c0_i32, %c0_i32_0 : i32, i32
  }
  func.func @transform_3(%arg0: i32) -> (i32, i32, i32) {
    %c0_i32 = arith.constant 0 : i32
    %c0_i32_0 = arith.constant 0 : i32
    %c0_i32_1 = arith.constant 0 : i32
    return %arg0, %c0_i32, %c0_i32_0 : i32, i32, i32
  }
}

</mosaic_0001>

<llo_original>
// kernel: rfbnet_forward.12
$region0: #{rfbnet_forward.12}
  #allocation0 [shape = 'u32[]', space=smem, size = 0x4, offset = 0x4, fixed_abs, tag = 'smem constant byte address 0x4 - core index']
  #allocation1 [shape = 'u32[144,128]{1,0:T(1,128)}', space=vmem, size = 0x12000, scoped, tag = 'internal scratch']
  %s0 = inlined_call_operand.vmem [shape: bf16[2,3,1158], index: 0, kind: input, shape index: {}]
  %s1 = inlined_call_operand.vmem [shape: bf16[8,27], index: 1, kind: input, shape index: {}]
  %s2 = inlined_call_operand.vmem [shape: f32[8,1], index: 2, kind: input, shape index: {}]
  %s3 = inlined_call_operand.vmem [shape: f32[2,8,1088], index: 3, kind: output, shape index: {}]
  %s4 = sld [smem:[#allocation0]]
  $region45: #{rfbnet_forward.12} parent=0
    _
  %s6 = ssub.s32 1, %s4
  %s7 = scalar_select 0, %s6, %s4
  loop: start=0, step=1, limit=4
  $region2: #{rfbnet_forward.12} parent=0 // loop_pre_header
    _
  $region3: #{rfbnet_forward.12} parent=0 // loop_header
    %s9 = sphi 0, %s13
    %p10 = scmp.ge.s32.totalorder %s9, 4
    %s19 = sphi 0, %s21
    %s22 = sphi 0, %s19
    %s23 = sphi 0, %s22
    %s39 = sphi 0, %s23
    %s43 = sphi 0, %s43
    %s45 = sphi 0, %s43
    %s46 = sphi 0, %s45
    %s60 = sphi 0, %s46
    %s64 = sphi 0, %s64
    %s66 = sphi 0, %s64
    %s67 = sphi 0, %s66
    %s81 = sphi 0, %s67
    %s87 = sphi 0, %s89
    %s90 = sphi 0, %s87
    %s91 = sphi 0, %s90
    %s107 = sphi 0, %s91
  $region4: #{rfbnet_forward.12} parent=0 // loop_header_branch
    %12 = sbr.rel (%p10) target = $region8
  $region5: #{rfbnet_forward.12} parent=0 // loop_body
    %s14 = ssub.s32 %s9, 1
    %s15 = ssub.s32 %s9, 2
    %s16 = sadd.s32 %s9, 1
    %s17 = ssub.s32 %s9, %s16
    %p18 = scmp.eq.s32.totalorder %s17, 0
    %s20 = sadd.s32 %s19, 1
    %s21 = scalar_select %p18, %s19, %s20
    %p24 = pneg %p18
    %p25 = scmp.eq.s32.totalorder %s9, 1
    %p26 = por %p24, %p25
    %p27 = scmp.ne.s32.totalorder %s19, %s22
    %p28 = scmp.eq.s32.totalorder %s9, 0
    %p29 = por %p27, %p28
    %p30 = scmp.ne.s32.totalorder %s19, %s22
    %p31 = scmp.eq.s32.totalorder %s14, 1
    %p32 = por %p30, %p31
    %p33 = scmp.ne.s32.totalorder %s22, %s23
    %p34 = scmp.eq.s32.totalorder %s14, 0
    %p35 = por %p33, %p34
    %p36 = scmp.ne.s32.totalorder %s22, %s23
    %p37 = scmp.eq.s32.totalorder %s15, 1
    %p38 = por %p36, %p37
    %p40 = scmp.ne.s32.totalorder %s23, %s39
    %p41 = scmp.eq.s32.totalorder %s15, 0
    %p42 = por %p40, %p41
    %s44 = sadd.s32 %s43, 1
    %p47 = scmp.eq.s32.totalorder %s9, 1
    %p48 = scmp.ne.s32.totalorder %s43, %s45
    %p49 = scmp.eq.s32.totalorder %s9, 0
    %p50 = por %p48, %p49
    %p51 = scmp.ne.s32.totalorder %s43, %s45
    %p52 = scmp.eq.s32.totalorder %s14, 1
    %p53 = por %p51, %p52
    %p54 = scmp.ne.s32.totalorder %s45, %s46
    %p55 = scmp.eq.s32.totalorder %s14, 0
    %p56 = por %p54, %p55
    %p57 = scmp.ne.s32.totalorder %s45, %s46
    %p58 = scmp.eq.s32.totalorder %s15, 1
    %p59 = por %p57, %p58
    %p61 = scmp.ne.s32.totalorder %s46, %s60
    %p62 = scmp.eq.s32.totalorder %s15, 0
    %p63 = por %p61, %p62
    %s65 = sadd.s32 %s64, 1
    %p68 = scmp.eq.s32.totalorder %s9, 1
    %p69 = scmp.ne.s32.totalorder %s64, %s66
    %p70 = scmp.eq.s32.totalorder %s9, 0
    %p71 = por %p69, %p70
    %p72 = scmp.ne.s32.totalorder %s64, %s66
    %p73 = scmp.eq.s32.totalorder %s14, 1
    %p74 = por %p72, %p73
    %p75 = scmp.ne.s32.totalorder %s66, %s67
    %p76 = scmp.eq.s32.totalorder %s14, 0
    %p77 = por %p75, %p76
    %p78 = scmp.ne.s32.totalorder %s66, %s67
    %p79 = scmp.eq.s32.totalorder %s15, 1
    %p80 = por %p78, %p79
    %p82 = scmp.ne.s32.totalorder %s67, %s81
    %p83 = scmp.eq.s32.totalorder %s15, 0
    %p84 = por %p82, %p83
    %s85 = ssub.s32 %s9, %s16
    %p86 = scmp.eq.s32.totalorder %s85, 0
    %s88 = sadd.s32 %s87, 1
    %s89 = scalar_select %p86, %s87, %s88
    %p92 = pneg %p86
    %p93 = scmp.eq.s32.totalorder %s9, 1
    %p94 = por %p92, %p93
    %p95 = scmp.ne.s32.totalorder %s87, %s90
    %p96 = scmp.eq.s32.totalorder %s9, 0
    %p97 = por %p95, %p96
    %p98 = scmp.ne.s32.totalorder %s87, %s90
    %p99 = scmp.eq.s32.totalorder %s14, 1
    %p100 = por %p98, %p99
    %p101 = scmp.ne.s32.totalorder %s90, %s91
    %p102 = scmp.eq.s32.totalorder %s14, 0
    %p103 = por %p101, %p102
    %p104 = scmp.ne.s32.totalorder %s90, %s91
    %p105 = scmp.eq.s32.totalorder %s15, 1
    %p106 = por %p104, %p105
    %p108 = scmp.ne.s32.totalorder %s91, %s107
    %p109 = scmp.eq.s32.totalorder %s15, 0
    %p110 = por %p108, %p109
    %p111 = scmp.le.s32.totalorder 1, %s9
    %p112 = scmp.lt.s32.totalorder %s9, 3
    %p113 = pnand %p111, %p112
    %p114 = pneg %p113
    // Predicated region
    $region9: #{rfbnet_forward.12} parent=5 // pred_check
      _
    $region10: #{rfbnet_forward.12} parent=5 // pred_check_branch
      %116 = sbr.rel (%p113) target = $region12
    $region11: #{rfbnet_forward.12} parent=5 // pred_region
      %s117 = ssub.s32 %s9, 1
      // Predicated region
      $region13: #{rfbnet_forward.12} parent=11 // pred_check
        %p118 = pneg %p56
      $region14: #{rfbnet_forward.12} parent=11 // pred_check_branch
        %120 = sbr.rel (%p118) target = $region16
      $region15: #{rfbnet_forward.12} parent=11 // pred_region
        _
      $region16: #{rfbnet_forward.12} parent=11 // pred_fallthru
        _
      // Predicated region
      $region17: #{rfbnet_forward.12} parent=11 // pred_check
        %p121 = pneg %p77
      $region18: #{rfbnet_forward.12} parent=11 // pred_check_branch
        %123 = sbr.rel (%p121) target = $region20
      $region19: #{rfbnet_forward.12} parent=11 // pred_region
        _
      $region20: #{rfbnet_forward.12} parent=11 // pred_fallthru
        _
    $region12: #{rfbnet_forward.12} parent=5 // pred_fallthru
      _
    %p124 = scmp.lt.s32.totalorder %s9, 2
    // Predicated region
    $region21: #{rfbnet_forward.12} parent=5 // pred_check
      %p125 = pneg %p124
    $region22: #{rfbnet_forward.12} parent=5 // pred_check_branch
      %127 = sbr.rel (%p125) target = $region24
    $region23: #{rfbnet_forward.12} parent=5 // pred_region
      // Predicated region
      $region25: #{rfbnet_forward.12} parent=23 // pred_check
        %p128 = pneg %p29
      $region26: #{rfbnet_forward.12} parent=23 // pred_check_branch
        %130 = sbr.rel (%p128) target = $region28
      $region27: #{rfbnet_forward.12} parent=23 // pred_region
        %p131 = scmp.lt.s32.totalorder %s9, 1
        %s132 = scalar_select %p131, %s9, 1
        %s133 = smul.addr %s132, 10
        %s134 = smul.addr %s133, 2
        %s135 = scalar_lea.vmem %s0, %s134
      $region28: #{rfbnet_forward.12} parent=23 // pred_fallthru
        _
    $region24: #{rfbnet_forward.12} parent=5 // pred_fallthru
      _
    %p136 = scmp.le.s32.totalorder 1, %s9
    %p137 = scmp.lt.s32.totalorder %s9, 3
    %p138 = pnand %p136, %p137
    %p139 = pneg %p138
    // Predicated region
    $region29: #{rfbnet_forward.12} parent=5 // pred_check
      _
    $region30: #{rfbnet_forward.12} parent=5 // pred_check_branch
      %141 = sbr.rel (%p138) target = $region32
    $region31: #{rfbnet_forward.12} parent=5 // pred_region
      %s142 = ssub.s32 %s9, 1
      %p143 = scmp.lt.s32.totalorder %s14, 1
      %s144 = scalar_select %p143, %s14, 1
      %s145 = smul.addr %s144, 10
      %s146 = smul.addr %s145, 2
      %s147 = scalar_lea.vmem %s0, %s146
      %p148 = pneg %p35
      %p149 = pneg %p32
      %p150 = pneg %p56
      %p151 = pneg %p53
      %p152 = pneg %p77
      %p153 = pneg %p74
      %p154 = pneg %p103
      %p155 = pneg %p100
      %p156 = scmp.lt.s32.totalorder %s14, 1
      %s157 = scalar_select %p156, %s14, 1
      %s158 = smul.addr %s157, 9
      %s159 = smul.addr %s158, 8
      %s160 = scalar_lea.vmem %s3, %s159
      %p161 = scmp.lt.s32.totalorder %s14, 1
      %s162 = scalar_select %p161, %s14, 1
      %s163 = smul.addr %s162, 10
      %s164 = smul.addr %s163, 2
      %s165 = scalar_lea.vmem %s0, %s164
      %p166 = scmp.lt.s32.totalorder %s14, 1
      %s167 = scalar_select %p166, %s14, 1
      %s168 = smul.addr %s167, 9
      %s169 = smul.addr %s168, 8
      %s170 = scalar_lea.vmem %s3, %s169
      %v172 = vld [vmem:[%s165] sm:$0xff]
      %v173 = vld [vmem:[%s165 + $0x8] sm:$0xff]
      %v174 = vld [vmem:[%s165 + $0x10] sm:$0xf]
      %v178 = vcombine.high %v172, %v172
      %v180 = vunpack.c.l.s4 1983009808
      %v181 = vunpack.c.0.s8 %v180
      %v182 = vlaneseq
      %v183 = vshrl.u32 %v182, 7
      %v184 = vsub.s32 %v181, %v183
      %v185 = vrot.slane %v172, %v184
      %v187 = vunpack.c.l.s4 1983009808
      %v188 = vunpack.c.0.s8 %v187
      %v189 = vlaneseq
      %v190 = vshrl.u32 %v189, 7
      %v191 = vsub.s32 %v188, %v190
      %v192 = vrot.slane %v178, %v191
      %v193 = vcombine.high %v185, %v185
      %v194 = vcombine.high %v192, %v192
      %v195 = vcombine.high %v173, %v173
      %v197 = vunpack.c.l.s4 1983009808
      %v198 = vunpack.c.0.s8 %v197
      %v199 = vlaneseq
      %v200 = vshrl.u32 %v199, 7
      %v201 = vsub.s32 %v198, %v200
      %v202 = vrot.slane %v173, %v201
      %v204 = vunpack.c.l.s4 1983009808
      %v205 = vunpack.c.0.s8 %v204
      %v206 = vlaneseq
      %v207 = vshrl.u32 %v206, 7
      %v208 = vsub.s32 %v205, %v207
      %v209 = vrot.slane %v195, %v208
      %v210 = vcombine.high %v202, %v202
      %v211 = vcombine.high %v209, %v209
      %v213 = vunpack.c.l.s4 1983009808
      %v214 = vunpack.c.0.s8 %v213
      %v215 = vlaneseq
      %v216 = vshrl.u32 %v215, 7
      %v217 = vsub.s32 %v214, %v216
      %v218 = vrot.slane %v174, %v217
      %v229 = vshrl.u32 %v185, 16
      %v231 = vrot.slane %v229, 6
      %v232 = vshll.u32 %v185, 16
      %v234 = vrot.slane %v232, 7
      %v235 = vor.u32 %v231, %v234
      %v237 = vshrl.u32 %v193, 16
      %v239 = vrot.slane %v237, 6
      %v240 = vshll.u32 %v193, 16
      %v242 = vrot.slane %v240, 7
      %v243 = vor.u32 %v239, %v242
      %v245 = vshrl.u32 %v192, 16
      %v247 = vrot.slane %v245, 6
      %v248 = vshll.u32 %v192, 16
      %v250 = vrot.slane %v248, 7
      %v251 = vor.u32 %v247, %v250
      %v253 = vshrl.u32 %v194, 16
      %v255 = vrot.slane %v253, 6
      %v256 = vshll.u32 %v194, 16
      %v258 = vrot.slane %v256, 7
      %v259 = vor.u32 %v255, %v258
      %v261 = vshrl.u32 %v202, 16
      %v263 = vrot.slane %v261, 6
      %v264 = vshll.u32 %v202, 16
      %v266 = vrot.slane %v264, 7
      %v267 = vor.u32 %v263, %v266
      %v269 = vshrl.u32 %v210, 16
      %v271 = vrot.slane %v269, 6
      %v272 = vshll.u32 %v210, 16
      %v274 = vrot.slane %v272, 7
      %v275 = vor.u32 %v271, %v274
      %v277 = vshrl.u32 %v209, 16
      %v279 = vrot.slane %v277, 6
      %v280 = vshll.u32 %v209, 16
      %v282 = vrot.slane %v280, 7
      %v283 = vor.u32 %v279, %v282
      %v285 = vshrl.u32 %v211, 16
      %v287 = vrot.slane %v285, 6
      %v288 = vshll.u32 %v211, 16
      %v290 = vrot.slane %v288, 7
      %v291 = vor.u32 %v287, %v290
      %v293 = vshrl.u32 %v218, 16
      %v295 = vrot.slane %v293, 6
      %v296 = vshll.u32 %v218, 16
      %v298 = vrot.slane %v296, 7
      %v299 = vor.u32 %v295, %v298
      %300 = vrot.lane.b32.xlu0 %v235, 127
      %v301 = vpop.permute.xlu0 %300
      %302 = vrot.lane.b32.xlu0 %v243, 127
      %v303 = vpop.permute.xlu0 %302
      %304 = vrot.lane.b32.xlu0 %v251, 127
      %v305 = vpop.permute.xlu0 %304
      %306 = vrot.lane.b32.xlu0 %v259, 127
      %v307 = vpop.permute.xlu0 %306
      %308 = vrot.lane.b32.xlu0 %v267, 127
      %v309 = vpop.permute.xlu0 %308
      %310 = vrot.lane.b32.xlu0 %v275, 127
      %v311 = vpop.permute.xlu0 %310
      %312 = vrot.lane.b32.xlu0 %v283, 127
      %v313 = vpop.permute.xlu0 %312
      %314 = vrot.lane.b32.xlu0 %v291, 127
      %v315 = vpop.permute.xlu0 %314
      %316 = vrot.lane.b32.xlu0 %v299, 127
      %v317 = vpop.permute.xlu0 %316
      %vm318 = vcmask 1039360
      %v319 = vsel %vm318, %v301, %v303
      %v320 = vsel %vm318, %v303, %v305
      %v321 = vsel %vm318, %v305, %v307
      %v322 = vsel %vm318, %v307, %v309
      %v323 = vsel %vm318, %v309, %v311
      %v324 = vsel %vm318, %v311, %v313
      %v325 = vsel %vm318, %v313, %v315
      %v326 = vsel %vm318, %v315, %v317
      %v336 = vrot.slane %v185, 5
      %v337 = vrot.slane %v193, 5
      %v338 = vrot.slane %v192, 5
      %v339 = vrot.slane %v194, 5
      %v340 = vrot.slane %v202, 5
      %v341 = vrot.slane %v210, 5
      %v342 = vrot.slane %v209, 5
      %v343 = vrot.slane %v211, 5
      %v344 = vrot.slane %v218, 5
      %345 = vrot.lane.b32.xlu0 %v336, 126
      %v346 = vpop.permute.xlu0 %345
      %347 = vrot.lane.b32.xlu0 %v337, 126
      %v348 = vpop.permute.xlu0 %347
      %349 = vrot.lane.b32.xlu0 %v338, 126
      %v350 = vpop.permute.xlu0 %349
      %351 = vrot.lane.b32.xlu0 %v339, 126
      %v352 = vpop.permute.xlu0 %351
      %353 = vrot.lane.b32.xlu0 %v340, 126
      %v354 = vpop.permute.xlu0 %353
      %355 = vrot.lane.b32.xlu0 %v341, 126
      %v356 = vpop.permute.xlu0 %355
      %357 = vrot.lane.b32.xlu0 %v342, 126
      %v358 = vpop.permute.xlu0 %357
      %359 = vrot.lane.b32.xlu0 %v343, 126
      %v360 = vpop.permute.xlu0 %359
      %361 = vrot.lane.b32.xlu0 %v344, 126
      %v362 = vpop.permute.xlu0 %361
      %vm363 = vcmask 1031168
      %v364 = vsel %vm363, %v346, %v348
      %v365 = vsel %vm363, %v348, %v350
      %v366 = vsel %vm363, %v350, %v352
      %v367 = vsel %vm363, %v352, %v354
      %v368 = vsel %vm363, %v354, %v356
      %v369 = vsel %vm363, %v356, %v358
      %v370 = vsel %vm363, %v358, %v360
      %v371 = vsel %vm363, %v360, %v362
      %v372 = vrot.slane %v229, 3
      %v373 = vrot.slane %v232, 4
      %v374 = vor.u32 %v372, %v373
      %v375 = vrot.slane %v237, 3
      %v376 = vrot.slane %v240, 4
      %v377 = vor.u32 %v375, %v376
      %v378 = vrot.slane %v245, 3
      %v379 = vrot.slane %v248, 4
      %v380 = vor.u32 %v378, %v379
      %v381 = vrot.slane %v253, 3
      %v382 = vrot.slane %v256, 4
      %v383 = vor.u32 %v381, %v382
      %v384 = vrot.slane %v261, 3
      %v385 = vrot.slane %v264, 4
      %v386 = vor.u32 %v384, %v385
      %v387 = vrot.slane %v269, 3
      %v388 = vrot.slane %v272, 4
      %v389 = vor.u32 %v387, %v388
      %v390 = vrot.slane %v277, 3
      %v391 = vrot.slane %v280, 4
      %v392 = vor.u32 %v390, %v391
      %v393 = vrot.slane %v285, 3
      %v394 = vrot.slane %v288, 4
      %v395 = vor.u32 %v393, %v394
      %v396 = vrot.slane %v293, 3
      %v397 = vrot.slane %v296, 4
      %v398 = vor.u32 %v396, %v397
      %399 = vrot.lane.b32.xlu0 %v374, 94
      %v400 = vpop.permute.xlu0 %399
      %401 = vrot.lane.b32.xlu0 %v377, 94
      %v402 = vpop.permute.xlu0 %401
      %403 = vrot.lane.b32.xlu0 %v380, 94
      %v404 = vpop.permute.xlu0 %403
      %405 = vrot.lane.b32.xlu0 %v383, 94
      %v406 = vpop.permute.xlu0 %405
      %407 = vrot.lane.b32.xlu0 %v386, 94
      %v408 = vpop.permute.xlu0 %407
      %409 = vrot.lane.b32.xlu0 %v389, 94
      %v410 = vpop.permute.xlu0 %409
      %411 = vrot.lane.b32.xlu0 %v392, 94
      %v412 = vpop.permute.xlu0 %411
      %413 = vrot.lane.b32.xlu0 %v395, 94
      %v414 = vpop.permute.xlu0 %413
      %415 = vrot.lane.b32.xlu0 %v398, 94
      %v416 = vpop.permute.xlu0 %415
      %vm417 = vcmask 769024
      %v418 = vsel %vm417, %v400, %v402
      %v419 = vsel %vm417, %v402, %v404
      %v420 = vsel %vm417, %v404, %v406
      %v421 = vsel %vm417, %v406, %v408
      %v422 = vsel %vm417, %v408, %v410
      %v423 = vsel %vm417, %v410, %v412
      %v424 = vsel %vm417, %v412, %v414
      %v425 = vsel %vm417, %v414, %v416
      %v435 = vcombine.low %v172, %v172
      %v437 = vunpack.c.l.s4 1983009808
      %v438 = vunpack.c.0.s8 %v437
      %v439 = vlaneseq
      %v440 = vshrl.u32 %v439, 7
      %v441 = vsub.s32 %v438, %v440
      %v442 = vrot.slane %v435, %v441
      %v443 = vcombine.low %v442, %v442
      %v444 = vcombine.low %v185, %v185
      %v445 = vcombine.low %v173, %v173
      %v447 = vunpack.c.l.s4 1983009808
      %v448 = vunpack.c.0.s8 %v447
      %v449 = vlaneseq
      %v450 = vshrl.u32 %v449, 7
      %v451 = vsub.s32 %v448, %v450
      %v452 = vrot.slane %v445, %v451
      %v453 = vcombine.low %v452, %v452
      %v454 = vcombine.low %v202, %v202
      %v455 = vcombine.low %v174, %v174
      %v457 = vunpack.c.l.s4 1983009808
      %v458 = vunpack.c.0.s8 %v457
      %v459 = vlaneseq
      %v460 = vshrl.u32 %v459, 7
      %v461 = vsub.s32 %v458, %v460
      %v462 = vrot.slane %v455, %v461
      %v463 = vcombine.low %v462, %v462
      %464 = vrot.lane.b32.xlu0 %v443, 93
      %v465 = vpop.permute.xlu0 %464
      %466 = vrot.lane.b32.xlu0 %v442, 93
      %v467 = vpop.permute.xlu0 %466
      %468 = vrot.lane.b32.xlu0 %v444, 93
      %v469 = vpop.permute.xlu0 %468
      %470 = vrot.lane.b32.xlu0 %v185, 93
      %v471 = vpop.permute.xlu0 %470
      %472 = vrot.lane.b32.xlu0 %v453, 93
      %v473 = vpop.permute.xlu0 %472
      %474 = vrot.lane.b32.xlu0 %v452, 93
      %v475 = vpop.permute.xlu0 %474
      %476 = vrot.lane.b32.xlu0 %v454, 93
      %v477 = vpop.permute.xlu0 %476
      %478 = vrot.lane.b32.xlu0 %v202, 93
      %v479 = vpop.permute.xlu0 %478
      %480 = vrot.lane.b32.xlu0 %v463, 93
      %v481 = vpop.permute.xlu0 %480
      %vm482 = vcmask 760832
      %v483 = vsel %vm482, %v465, %v467
      %v484 = vsel %vm482, %v467, %v469
      %v485 = vsel %vm482, %v469, %v471
      %v486 = vsel %vm482, %v471, %v473
      %v487 = vsel %vm482, %v473, %v475
      %v488 = vsel %vm482, %v475, %v477
      %v489 = vsel %vm482, %v477, %v479
      %v490 = vsel %vm482, %v479, %v481
      %v491 = vrot.slane %v232, 1
      %v492 = vrot.slane %v240, 1
      %v493 = vrot.slane %v248, 1
      %v494 = vrot.slane %v256, 1
      %v495 = vrot.slane %v264, 1
      %v496 = vrot.slane %v272, 1
      %v497 = vrot.slane %v280, 1
      %v498 = vrot.slane %v288, 1
      %v499 = vrot.slane %v296, 1
      %v500 = vor.u32 %v229, %v491
      %v501 = vor.u32 %v237, %v492
      %v502 = vor.u32 %v245, %v493
      %v503 = vor.u32 %v253, %v494
      %v504 = vor.u32 %v261, %v495
      %v505 = vor.u32 %v269, %v496
      %v506 = vor.u32 %v277, %v497
      %v507 = vor.u32 %v285, %v498
      %v508 = vor.u32 %v293, %v499
      %509 = vrot.lane.b32.xlu0 %v491, 92
      %v510 = vpop.permute.xlu0 %509
      %511 = vrot.lane.b32.xlu0 %v492, 92
      %v512 = vpop.permute.xlu0 %511
      %513 = vrot.lane.b32.xlu0 %v493, 92
      %v514 = vpop.permute.xlu0 %513
      %515 = vrot.lane.b32.xlu0 %v494, 92
      %v516 = vpop.permute.xlu0 %515
      %517 = vrot.lane.b32.xlu0 %v495, 92
      %v518 = vpop.permute.xlu0 %517
      %519 = vrot.lane.b32.xlu0 %v496, 92
      %v520 = vpop.permute.xlu0 %519
      %521 = vrot.lane.b32.xlu0 %v497, 92
      %v522 = vpop.permute.xlu0 %521
      %523 = vrot.lane.b32.xlu0 %v498, 92
      %v524 = vpop.permute.xlu0 %523
      %525 = vrot.lane.b32.xlu0 %v499, 92
      %v526 = vpop.permute.xlu0 %525
      %527 = vrot.lane.b32.xlu0 %v500, 92
      %v528 = vpop.permute.xlu0 %527
      %529 = vrot.lane.b32.xlu0 %v501, 92
      %v530 = vpop.permute.xlu0 %529
      %531 = vrot.lane.b32.xlu0 %v502, 92
      %v532 = vpop.permute.xlu0 %531
      %533 = vrot.lane.b32.xlu0 %v503, 92
      %v534 = vpop.permute.xlu0 %533
      %535 = vrot.lane.b32.xlu0 %v504, 92
      %v536 = vpop.permute.xlu0 %535
      %537 = vrot.lane.b32.xlu0 %v505, 92
      %v538 = vpop.permute.xlu0 %537
      %539 = vrot.lane.b32.xlu0 %v506, 92
      %v540 = vpop.permute.xlu0 %539
      %541 = vrot.lane.b32.xlu0 %v507, 92
      %v542 = vpop.permute.xlu0 %541
      %543 = vrot.lane.b32.xlu0 %v508, 92
      %v544 = vpop.permute.xlu0 %543
      %vm545 = vcmask 752640
      %v546 = vsel %vm545, %v510, %v512
      %v547 = vsel %vm545, %v512, %v514
      %v548 = vsel %vm545, %v514, %v516
      %v549 = vsel %vm545, %v516, %v518
      %v550 = vsel %vm545, %v518, %v520
      %v551 = vsel %vm545, %v520, %v522
      %v552 = vsel %vm545, %v522, %v524
      %v553 = vsel %vm545, %v524, %v526
      %v554 = vsel %vm545, %v528, %v530
      %v555 = vsel %vm545, %v530, %v532
      %v556 = vsel %vm545, %v532, %v534
      %v557 = vsel %vm545, %v534, %v536
      %v558 = vsel %vm545, %v536, %v538
      %v559 = vsel %vm545, %v538, %v540
      %v560 = vsel %vm545, %v540, %v542
      %v561 = vsel %vm545, %v542, %v544
      %v571 = vcombine.high %v218, %v218
      %v572 = vrot.slane %v185, 7
      %v573 = vrot.slane %v193, 7
      %v574 = vrot.slane %v192, 7
      %v575 = vrot.slane %v194, 7
      %v576 = vrot.slane %v202, 7
      %v577 = vrot.slane %v210, 7
      %v578 = vrot.slane %v209, 7
      %v579 = vrot.slane %v211, 7
      %v580 = vrot.slane %v218, 7
      %v581 = vrot.slane %v571, 7
      %582 = vrot.lane.b32.xlu0 %v572, 60
      %v583 = vpop.permute.xlu0 %582
      %584 = vrot.lane.b32.xlu0 %v573, 60
      %v585 = vpop.permute.xlu0 %584
      %586 = vrot.lane.b32.xlu0 %v574, 60
      %v587 = vpop.permute.xlu0 %586
      %588 = vrot.lane.b32.xlu0 %v575, 60
      %v589 = vpop.permute.xlu0 %588
      %590 = vrot.lane.b32.xlu0 %v576, 60
      %v591 = vpop.permute.xlu0 %590
      %592 = vrot.lane.b32.xlu0 %v577, 60
      %v593 = vpop.permute.xlu0 %592
      %594 = vrot.lane.b32.xlu0 %v578, 60
      %v595 = vpop.permute.xlu0 %594
      %596 = vrot.lane.b32.xlu0 %v579, 60
      %v597 = vpop.permute.xlu0 %596
      %598 = vrot.lane.b32.xlu0 %v580, 60
      %v599 = vpop.permute.xlu0 %598
      %600 = vrot.lane.b32.xlu0 %v581, 60
      %v601 = vpop.permute.xlu0 %600
      %vm602 = vcmask 490496
      %v603 = vsel %vm602, %v583, %v585
      %v604 = vsel %vm602, %v585, %v587
      %v605 = vsel %vm602, %v587, %v589
      %v606 = vsel %vm602, %v589, %v591
      %v607 = vsel %vm602, %v591, %v593
      %v608 = vsel %vm602, %v593, %v595
      %v609 = vsel %vm602, %v595, %v597
      %v610 = vsel %vm602, %v597, %v599
      %v611 = vsel %vm602, %v599, %v601
      %v612 = vrot.slane %v229, 5
      %v613 = vrot.slane %v232, 6
      %v614 = vor.u32 %v612, %v613
      %v615 = vrot.slane %v237, 5
      %v616 = vrot.slane %v240, 6
      %v617 = vor.u32 %v615, %v616
      %v618 = vrot.slane %v245, 5
      %v619 = vrot.slane %v248, 6
      %v620 = vor.u32 %v618, %v619
      %v621 = vrot.slane %v253, 5
      %v622 = vrot.slane %v256, 6
      %v623 = vor.u32 %v621, %v622
      %v624 = vrot.slane %v261, 5
      %v625 = vrot.slane %v264, 6
      %v626 = vor.u32 %v624, %v625
      %v627 = vrot.slane %v269, 5
      %v628 = vrot.slane %v272, 6
      %v629 = vor.u32 %v627, %v628
      %v630 = vrot.slane %v277, 5
      %v631 = vrot.slane %v280, 6
      %v632 = vor.u32 %v630, %v631
      %v633 = vrot.slane %v285, 5
      %v634 = vrot.slane %v288, 6
      %v635 = vor.u32 %v633, %v634
      %v636 = vrot.slane %v293, 5
      %v637 = vrot.slane %v296, 6
      %v638 = vor.u32 %v636, %v637
      %v640 = vshrl.u32 %v571, 16
      %v642 = vrot.slane %v640, 5
      %v643 = vshll.u32 %v571, 16
      %v645 = vrot.slane %v643, 6
      %v646 = vor.u32 %v642, %v645
      %647 = vrot.lane.b32.xlu0 %v614, 59
      %v648 = vpop.permute.xlu0 %647
      %649 = vrot.lane.b32.xlu0 %v617, 59
      %v650 = vpop.permute.xlu0 %649
      %651 = vrot.lane.b32.xlu0 %v620, 59
      %v652 = vpop.permute.xlu0 %651
      %653 = vrot.lane.b32.xlu0 %v623, 59
      %v654 = vpop.permute.xlu0 %653
      %655 = vrot.lane.b32.xlu0 %v626, 59
      %v656 = vpop.permute.xlu0 %655
      %657 = vrot.lane.b32.xlu0 %v629, 59
      %v658 = vpop.permute.xlu0 %657
      %659 = vrot.lane.b32.xlu0 %v632, 59
      %v660 = vpop.permute.xlu0 %659
      %661 = vrot.lane.b32.xlu0 %v635, 59
      %v662 = vpop.permute.xlu0 %661
      %663 = vrot.lane.b32.xlu0 %v638, 59
      %v664 = vpop.permute.xlu0 %663
      %665 = vrot.lane.b32.xlu0 %v646, 59
      %v666 = vpop.permute.xlu0 %665
      %vm667 = vcmask 482304
      %v668 = vsel %vm667, %v648, %v650
      %v669 = vsel %vm667, %v650, %v652
      %v670 = vsel %vm667, %v652, %v654
      %v671 = vsel %vm667, %v654, %v656
      %v672 = vsel %vm667, %v656, %v658
      %v673 = vsel %vm667, %v658, %v660
      %v674 = vsel %vm667, %v660, %v662
      %v675 = vsel %vm667, %v662, %v664
      %v676 = vsel %vm667, %v664, %v666
      %v686 = vcombine.low %v192, %v192
      %v687 = vcombine.low %v209, %v209
      %v688 = vcombine.low %v218, %v218
      %689 = vrot.lane.b32.xlu0 %v444, 58
      %v690 = vpop.permute.xlu0 %689
      %691 = vrot.lane.b32.xlu0 %v185, 58
      %v692 = vpop.permute.xlu0 %691
      %693 = vrot.lane.b32.xlu0 %v686, 58
      %v694 = vpop.permute.xlu0 %693
      %695 = vrot.lane.b32.xlu0 %v192, 58
      %v696 = vpop.permute.xlu0 %695
      %697 = vrot.lane.b32.xlu0 %v454, 58
      %v698 = vpop.permute.xlu0 %697
      %699 = vrot.lane.b32.xlu0 %v202, 58
      %v700 = vpop.permute.xlu0 %699
      %701 = vrot.lane.b32.xlu0 %v687, 58
      %v702 = vpop.permute.xlu0 %701
      %703 = vrot.lane.b32.xlu0 %v209, 58
      %v704 = vpop.permute.xlu0 %703
      %705 = vrot.lane.b32.xlu0 %v688, 58
      %v706 = vpop.permute.xlu0 %705
      %707 = vrot.lane.b32.xlu0 %v218, 58
      %v708 = vpop.permute.xlu0 %707
      %vm709 = vcmask 474112
      %v710 = vsel %vm709, %v690, %v692
      %v711 = vsel %vm709, %v692, %v694
      %v712 = vsel %vm709, %v694, %v696
      %v713 = vsel %vm709, %v696, %v698
      %v714 = vsel %vm709, %v698, %v700
      %v715 = vsel %vm709, %v700, %v702
      %v716 = vsel %vm709, %v702, %v704
      %v717 = vsel %vm709, %v704, %v706
      %v718 = vsel %vm709, %v706, %v708
      %vm719 = vcmask 1041408
      %vm720 = vsmask.f32 1280
      %vm721 = vmand %vm719, %vm720
      %v722 = vsel %vm721, %v185, %v319
      %v723 = vsel %vm721, %v193, %v320
      %v724 = vsel %vm721, %v192, %v321
      %v725 = vsel %vm721, %v194, %v322
      %v726 = vsel %vm721, %v202, %v323
      %v727 = vsel %vm721, %v210, %v324
      %v728 = vsel %vm721, %v209, %v325
      %v729 = vsel %vm721, %v211, %v326
      %v730 = vsel %vm721, %v218, %v317
      %vm731 = vcmask 1042432
      %v734 = vsel %vm731, %v722, %v364
      %v738 = vsel %vm731, %v723, %v365
      %v742 = vsel %vm731, %v724, %v366
      %v746 = vsel %vm731, %v725, %v367
      %v750 = vsel %vm731, %v726, %v368
      %v754 = vsel %vm731, %v727, %v369
      %v758 = vsel %vm731, %v728, %v370
      %v762 = vsel %vm731, %v729, %v371
      %v766 = vsel %vm731, %v730, %v362
      %vm768 = vcmask 1044480
      %vm769 = vsmask.f32 4352
      %vm770 = vmand %vm768, %vm769
      %v771 = vsel %vm770, %v734, %v418
      %v772 = vsel %vm770, %v738, %v419
      %v773 = vsel %vm770, %v742, %v420
      %v774 = vsel %vm770, %v746, %v421
      %v775 = vsel %vm770, %v750, %v422
      %v776 = vsel %vm770, %v754, %v423
      %v777 = vsel %vm770, %v758, %v424
      %v778 = vsel %vm770, %v762, %v425
      %v779 = vsel %vm770, %v766, %v416
      %vm780 = vcmask 1045504
      %v783 = vsel %vm780, %v771, %v483
      %v787 = vsel %vm780, %v772, %v484
      %v791 = vsel %vm780, %v773, %v485
      %v795 = vsel %vm780, %v774, %v486
      %v799 = vsel %vm780, %v775, %v487
      %v803 = vsel %vm780, %v776, %v488
      %v807 = vsel %vm780, %v777, %v489
      %v811 = vsel %vm780, %v778, %v490
      %v815 = vsel %vm780, %v779, %v481
      %vm817 = vcmask 1047552
      %vm818 = vsmask.f32 7424
      %vm819 = vmand %vm817, %vm818
      %v820 = vsel %vm819, %v783, %v546
      %v821 = vsel %vm819, %v787, %v547
      %v822 = vsel %vm819, %v791, %v548
      %v823 = vsel %vm819, %v795, %v549
      %v824 = vsel %vm819, %v799, %v550
      %v825 = vsel %vm819, %v803, %v551
      %v826 = vsel %vm819, %v807, %v552
      %v827 = vsel %vm819, %v811, %v553
      %v828 = vsel %vm819, %v815, %v526
      %vm829 = vcmask 1040384
      %v832 = vsel %vm829, %v554, %v603
      %v836 = vsel %vm829, %v555, %v604
      %v840 = vsel %vm829, %v556, %v605
      %v844 = vsel %vm829, %v557, %v606
      %v848 = vsel %vm829, %v558, %v607
      %v852 = vsel %vm829, %v559, %v608
      %v856 = vsel %vm829, %v560, %v609
      %v860 = vsel %vm829, %v561, %v610
      %v864 = vsel %vm829, %v544, %v611
      %vm866 = vcmask 1042432
      %vm867 = vsmask.f32 2304
      %vm868 = vmand %vm866, %vm867
      %v869 = vsel %vm868, %v832, %v668
      %v870 = vsel %vm868, %v836, %v669
      %v871 = vsel %vm868, %v840, %v670
      %v872 = vsel %vm868, %v844, %v671
      %v873 = vsel %vm868, %v848, %v672
      %v874 = vsel %vm868, %v852, %v673
      %v875 = vsel %vm868, %v856, %v674
      %v876 = vsel %vm868, %v860, %v675
      %v877 = vsel %vm868, %v864, %v676
      %vm878 = vcmask 1043456
      %v881 = vsel %vm878, %v869, %v710
      %v884 = vsel %vm878, %v870, %v711
      %v887 = vsel %vm878, %v871, %v712
      %v890 = vsel %vm878, %v872, %v713
      %v893 = vsel %vm878, %v873, %v714
      %v896 = vsel %vm878, %v874, %v715
      %v899 = vsel %vm878, %v875, %v716
      %v902 = vsel %vm878, %v876, %v717
      %v905 = vsel %vm878, %v877, %v718
      %v906 = vld [vmem:[%s1] sm:$0xf]
      %v907 = vld [vmem:[%s2] sm:$0xff]
      %909 = vset.pattern.permute.xlu0 0
      %910 = vperm.xlu0 %909, %v907
      %v911 = vpop.permute.xlu0 %910
      %vm913 = vcmask 220160
      %v915 = vsel %vm913, %v906, 0
      %vm917 = vcmask 1044480
      %v918 = vsel %vm917, 4294967295, 65535
      %v919 = vsel %vm780, %v918, 0
      %v920 = vand.u32 %v881, %v919
      %v922 = vand.u32 %v884, %v919
      %v924 = vand.u32 %v887, %v919
      %v926 = vand.u32 %v890, %v919
      %v928 = vand.u32 %v893, %v919
      %v930 = vand.u32 %v896, %v919
      %v932 = vand.u32 %v899, %v919
      %v934 = vand.u32 %v902, %v919
      %v936 = vand.u32 %v905, %v919
      %938 = vmatprep.subr.bf16.mxu0 %v821
      %939 = vmatpush1.bf16.msra.mxu0 %v820
      %940 = vmatprep.subr.bf16.mxu0 %v922
      %941 = vmatpush1.bf16.msra.mxu0 %v920
      %942 = vmatprep.subr.bf16.mxu0 0
      %943 = vmatpush1.bf16.msra.mxu0 0
      %944 = vmatprep.subr.bf16.mxu0 0
      %945 = vmatpush1.bf16.msra.mxu0 0
      %946 = vmatprep.subr.bf16.mxu0 0
      %947 = vmatpush1.bf16.msra.mxu0 0
      %948 = vmatprep.subr.bf16.mxu0 0
      %949 = vmatpush1.bf16.msra.mxu0 0
      %950 = vmatprep.subr.bf16.mxu0 0
      %951 = vmatpush1.bf16.msra.mxu0 0
      %952 = vmatprep.subr.bf16.mxu0 0
      %953 = vmatpush1.bf16.msra.mxu0 0
      %954 = vmatprep.subr.bf16.mxu0 0
      %955 = vmatpush1.bf16.msra.mxu0 0
      %956 = vmatprep.subr.bf16.mxu0 0
      %957 = vmatpush1.bf16.msra.mxu0 0
      %958 = vmatprep.subr.bf16.mxu0 0
      %959 = vmatpush1.bf16.msra.mxu0 0
      %960 = vmatprep.subr.bf16.mxu0 0
      %961 = vmatpush1.bf16.msra.mxu0 0
      %962 = vmatprep.subr.bf16.mxu0 0
      %963 = vmatpush1.bf16.msra.mxu0 0
      %964 = vmatprep.subr.bf16.mxu0 0
      %965 = vmatpush1.bf16.msra.mxu0 0
      %966 = vmatprep.subr.bf16.mxu0 0
      %967 = vmatpush1.bf16.msra.mxu0 0
      %968 = vmatprep.subr.bf16.mxu0 0
      %969 = vmatpush1.bf16.msra.mxu0 0
      %970 = vmatprep.mubr.bf16.mxu0 0
      %971 = vmatmul.mubr.bf16.gmra.mrb[0].mxu0 %v915
      %v972 = vpop.f32.mrb[0].mxu0
      %v973 = vadd.f32 %v911, %v972
      %v974 = vpop.f32.mrb[0].mxu0
      %v975 = vadd.f32 %v911, %v974
      %v976 = vpop.f32.mrb[0].mxu0
      %v977 = vpop.f32.mrb[0].mxu0
      %978 = vdwg.mxu0
      %979 = vmatprep.subr.bf16.mxu0 %v823
      %980 = vmatpush1.bf16.msra.mxu0 %v822
      %981 = vmatprep.subr.bf16.mxu0 %v926
      %982 = vmatpush1.bf16.msra.mxu0 %v924
      %983 = vmatprep.subr.bf16.mxu0 0
      %984 = vmatpush1.bf16.msra.mxu0 0
      %985 = vmatprep.subr.bf16.mxu0 0
      %986 = vmatpush1.bf16.msra.mxu0 0
      %987 = vmatprep.subr.bf16.mxu0 0
      %988 = vmatpush1.bf16.msra.mxu0 0
      %989 = vmatprep.subr.bf16.mxu0 0
      %990 = vmatpush1.bf16.msra.mxu0 0
      %991 = vmatprep.subr.bf16.mxu0 0
      %992 = vmatpush1.bf16.msra.mxu0 0
      %993 = vmatprep.subr.bf16.mxu0 0
      %994 = vmatpush1.bf16.msra.mxu0 0
      %995 = vmatprep.subr.bf16.mxu0 0
      %996 = vmatpush1.bf16.msra.mxu0 0
      %997 = vmatprep.subr.bf16.mxu0 0
      %998 = vmatpush1.bf16.msra.mxu0 0
      %999 = vmatprep.subr.bf16.mxu0 0
      %1000 = vmatpush1.bf16.msra.mxu0 0
      %1001 = vmatprep.subr.bf16.mxu0 0
      %1002 = vmatpush1.bf16.msra.mxu0 0
      %1003 = vmatprep.subr.bf16.mxu0 0
      %1004 = vmatpush1.bf16.msra.mxu0 0
      %1005 = vmatprep.subr.bf16.mxu0 0
      %1006 = vmatpush1.bf16.msra.mxu0 0
      %1007 = vmatprep.subr.bf16.mxu0 0
      %1008 = vmatpush1.bf16.msra.mxu0 0
      %1009 = vmatprep.subr.bf16.mxu0 0
      %1010 = vmatpush1.bf16.msra.mxu0 0
      %1011 = vmatprep.mubr.bf16.mxu0 0
      %1012 = vmatmul.mubr.bf16.gmra.mrb[0].mxu0 %v915
      %v1013 = vpop.f32.mrb[0].mxu0
      %v1014 = vadd.f32 %v911, %v1013
      %v1015 = vpop.f32.mrb[0].mxu0
      %v1016 = vadd.f32 %v911, %v1015
      %v1017 = vpop.f32.mrb[0].mxu0
      %v1018 = vpop.f32.mrb[0].mxu0
      %1019 = vdwg.mxu0
      %1020 = vmatprep.subr.bf16.mxu0 %v825
      %1021 = vmatpush1.bf16.msra.mxu0 %v824
      %1022 = vmatprep.subr.bf16.mxu0 %v930
      %1023 = vmatpush1.bf16.msra.mxu0 %v928
      %1024 = vmatprep.subr.bf16.mxu0 0
      %1025 = vmatpush1.bf16.msra.mxu0 0
      %1026 = vmatprep.subr.bf16.mxu0 0
      %1027 = vmatpush1.bf16.msra.mxu0 0
      %1028 = vmatprep.subr.bf16.mxu0 0
      %1029 = vmatpush1.bf16.msra.mxu0 0
      %1030 = vmatprep.subr.bf16.mxu0 0
      %1031 = vmatpush1.bf16.msra.mxu0 0
      %1032 = vmatprep.subr.bf16.mxu0 0
      %1033 = vmatpush1.bf16.msra.mxu0 0
      %1034 = vmatprep.subr.bf16.mxu0 0
      %1035 = vmatpush1.bf16.msra.mxu0 0
      %1036 = vmatprep.subr.bf16.mxu0 0
      %1037 = vmatpush1.bf16.msra.mxu0 0
      %1038 = vmatprep.subr.bf16.mxu0 0
      %1039 = vmatpush1.bf16.msra.mxu0 0
      %1040 = vmatprep.subr.bf16.mxu0 0
      %1041 = vmatpush1.bf16.msra.mxu0 0
      %1042 = vmatprep.subr.bf16.mxu0 0
      %1043 = vmatpush1.bf16.msra.mxu0 0
      %1044 = vmatprep.subr.bf16.mxu0 0
      %1045 = vmatpush1.bf16.msra.mxu0 0
      %1046 = vmatprep.subr.bf16.mxu0 0
      %1047 = vmatpush1.bf16.msra.mxu0 0
      %1048 = vmatprep.subr.bf16.mxu0 0
      %1049 = vmatpush1.bf16.msra.mxu0 0
      %1050 = vmatprep.subr.bf16.mxu0 0
      %1051 = vmatpush1.bf16.msra.mxu0 0
      %1052 = vmatprep.mubr.bf16.mxu0 0
      %1053 = vmatmul.mubr.bf16.gmra.mrb[0].mxu0 %v915
      %v1054 = vpop.f32.mrb[0].mxu0
      %v1055 = vadd.f32 %v911, %v1054
      %v1056 = vpop.f32.mrb[0].mxu0
      %v1057 = vadd.f32 %v911, %v1056
      %v1058 = vpop.f32.mrb[0].mxu0
      %v1059 = vpop.f32.mrb[0].mxu0
      %1060 = vdwg.mxu0
      %1061 = vmatprep.subr.bf16.mxu0 %v827
      %1062 = vmatpush1.bf16.msra.mxu0 %v826
      %1063 = vmatprep.subr.bf16.mxu0 %v934
      %1064 = vmatpush1.bf16.msra.mxu0 %v932
      %1065 = vmatprep.subr.bf16.mxu0 0
      %1066 = vmatpush1.bf16.msra.mxu0 0
      %1067 = vmatprep.subr.bf16.mxu0 0
      %1068 = vmatpush1.bf16.msra.mxu0 0
      %1069 = vmatprep.subr.bf16.mxu0 0
      %1070 = vmatpush1.bf16.msra.mxu0 0
      %1071 = vmatprep.subr.bf16.mxu0 0
      %1072 = vmatpush1.bf16.msra.mxu0 0
      %1073 = vmatprep.subr.bf16.mxu0 0
      %1074 = vmatpush1.bf16.msra.mxu0 0
      %1075 = vmatprep.subr.bf16.mxu0 0
      %1076 = vmatpush1.bf16.msra.mxu0 0
      %1077 = vmatprep.subr.bf16.mxu0 0
      %1078 = vmatpush1.bf16.msra.mxu0 0
      %1079 = vmatprep.subr.bf16.mxu0 0
      %1080 = vmatpush1.bf16.msra.mxu0 0
      %1081 = vmatprep.subr.bf16.mxu0 0
      %1082 = vmatpush1.bf16.msra.mxu0 0
      %1083 = vmatprep.subr.bf16.mxu0 0
      %1084 = vmatpush1.bf16.msra.mxu0 0
      %1085 = vmatprep.subr.bf16.mxu0 0
      %1086 = vmatpush1.bf16.msra.mxu0 0
      %1087 = vmatprep.subr.bf16.mxu0 0
      %1088 = vmatpush1.bf16.msra.mxu0 0
      %1089 = vmatprep.subr.bf16.mxu0 0
      %1090 = vmatpush1.bf16.msra.mxu0 0
      %1091 = vmatprep.subr.bf16.mxu0 0
      %1092 = vmatpush1.bf16.msra.mxu0 0
      %1093 = vmatprep.mubr.bf16.mxu0 0
      %1094 = vmatmul.mubr.bf16.gmra.mrb[0].mxu0 %v915
      %v1095 = vpop.f32.mrb[0].mxu0
      %v1096 = vadd.f32 %v911, %v1095
      %v1097 = vpop.f32.mrb[0].mxu0
      %v1098 = vadd.f32 %v911, %v1097
      %v1099 = vpop.f32.mrb[0].mxu0
      %v1100 = vpop.f32.mrb[0].mxu0
      %1101 = vdwg.mxu0
      %1102 = vmatprep.subr.bf16.mxu0 0
      %1103 = vmatpush1.bf16.msra.mxu0 %v828
      %1104 = vmatprep.subr.bf16.mxu0 0
      %1105 = vmatpush1.bf16.msra.mxu0 %v936
      %1106 = vmatprep.subr.bf16.mxu0 0
      %1107 = vmatpush1.bf16.msra.mxu0 0
      %1108 = vmatprep.subr.bf16.mxu0 0
      %1109 = vmatpush1.bf16.msra.mxu0 0
      %1110 = vmatprep.subr.bf16.mxu0 0
      %1111 = vmatpush1.bf16.msra.mxu0 0
      %1112 = vmatprep.subr.bf16.mxu0 0
      %1113 = vmatpush1.bf16.msra.mxu0 0
      %1114 = vmatprep.subr.bf16.mxu0 0
      %1115 = vmatpush1.bf16.msra.mxu0 0
      %1116 = vmatprep.subr.bf16.mxu0 0
      %1117 = vmatpush1.bf16.msra.mxu0 0
      %1118 = vmatprep.subr.bf16.mxu0 0
      %1119 = vmatpush1.bf16.msra.mxu0 0
      %1120 = vmatprep.subr.bf16.mxu0 0
      %1121 = vmatpush1.bf16.msra.mxu0 0
      %1122 = vmatprep.subr.bf16.mxu0 0
      %1123 = vmatpush1.bf16.msra.mxu0 0
      %1124 = vmatprep.subr.bf16.mxu0 0
      %1125 = vmatpush1.bf16.msra.mxu0 0
      %1126 = vmatprep.subr.bf16.mxu0 0
      %1127 = vmatpush1.bf16.msra.mxu0 0
      %1128 = vmatprep.subr.bf16.mxu0 0
      %1129 = vmatpush1.bf16.msra.mxu0 0
      %1130 = vmatprep.subr.bf16.mxu0 0
      %1131 = vmatpush1.bf16.msra.mxu0 0
      %1132 = vmatprep.subr.bf16.mxu0 0
      %1133 = vmatpush1.bf16.msra.mxu0 0
      %1134 = vmatprep.mubr.bf16.mxu0 0
      %1135 = vmatmul.mubr.bf16.gmra.mrb[0].mxu0 %v915
      %v1136 = vpop.f32.mrb[0].mxu0
      %v1137 = vadd.f32 %v911, %v1136
      %v1138 = vpop.f32.mrb[0].mxu0
      %v1139 = vpop.f32.mrb[0].mxu0
      %v1140 = vpop.f32.mrb[0].mxu0
      %1141 = vdwg.mxu0
      %v1142 = vmax.f32 %v973, 0.0
      %v1143 = vmax.f32 %v975, 0.0
      %v1144 = vmax.f32 %v1014, 0.0
      %v1145 = vmax.f32 %v1016, 0.0
      %v1146 = vmax.f32 %v1055, 0.0
      %v1147 = vmax.f32 %v1057, 0.0
      %v1148 = vmax.f32 %v1096, 0.0
      %v1149 = vmax.f32 %v1098, 0.0
      %v1150 = vmax.f32 %v1137, 0.0
      %1151 = vst [vmem:[%s170] sm:$0xff] %v1142
      %1152 = vst [vmem:[%s170 + $0x8] sm:$0xff] %v1143
      %1153 = vst [vmem:[%s170 + $0x10] sm:$0xff] %v1144
      %1154 = vst [vmem:[%s170 + $0x18] sm:$0xff] %v1145
      %1155 = vst [vmem:[%s170 + $0x20] sm:$0xff] %v1146
      %1156 = vst [vmem:[%s170 + $0x28] sm:$0xff] %v1147
      %1157 = vst [vmem:[%s170 + $0x30] sm:$0xff] %v1148
      %1158 = vst [vmem:[%s170 + $0x38] sm:$0xff] %v1149
      %vm1159 = vcmask 523264
      %1160 = vst.msk [vmem:[%s170 + $0x40] sm:$0xff] %vm1159, %v1150
      %p1161 = scmp.lt.s32.totalorder %s14, 1
      %s1162 = scalar_select %p1161, %s14, 1
      %s1163 = smul.addr %s1162, 9
      %s1164 = smul.addr %s1163, 8
      %s1165 = scalar_lea.vmem %s3, %s1164
      // Predicated region
      $region33: #{rfbnet_forward.12} parent=31 // pred_check
        %p1166 = pneg %p100
      $region34: #{rfbnet_forward.12} parent=31 // pred_check_branch
        %1168 = sbr.rel (%p1166) target = $region36
      $region35: #{rfbnet_forward.12} parent=31 // pred_region
        _
      $region36: #{rfbnet_forward.12} parent=31 // pred_fallthru
        _
    $region32: #{rfbnet_forward.12} parent=5 // pred_fallthru
      _
    %p1169 = scmp.le.s32.totalorder 2, %s9
    // Predicated region
    $region37: #{rfbnet_forward.12} parent=5 // pred_check
      %p1170 = pneg %p1169
    $region38: #{rfbnet_forward.12} parent=5 // pred_check_branch
      %1172 = sbr.rel (%p1170) target = $region40
    $region39: #{rfbnet_forward.12} parent=5 // pred_region
      %s1173 = ssub.s32 %s9, 2
      // Predicated region
      $region41: #{rfbnet_forward.12} parent=39 // pred_check
        %p1174 = pneg %p106
      $region42: #{rfbnet_forward.12} parent=39 // pred_check_branch
        %1176 = sbr.rel (%p1174) target = $region44
      $region43: #{rfbnet_forward.12} parent=39 // pred_region
        %p1177 = scmp.lt.s32.totalorder %s15, 1
        %s1178 = scalar_select %p1177, %s15, 1
        %s1179 = smul.addr %s1178, 9
        %s1180 = smul.addr %s1179, 8
        %s1181 = scalar_lea.vmem %s3, %s1180
      $region44: #{rfbnet_forward.12} parent=39 // pred_fallthru
        _
    $region40: #{rfbnet_forward.12} parent=5 // pred_fallthru
      _
  $region6: #{rfbnet_forward.12} parent=0 // loop_footer
    %s13 = sadd.s32 1, %s9
  $region7: #{rfbnet_forward.12} parent=0 // loop_footer_branch
    %8 = sbr.rel target = $region3
  $region8: #{rfbnet_forward.12} parent=0 // loop_exit
    _

// kernel: rfbnet_forward.13
$region0: #{rfbnet_forward.13}
  #allocation0 [shape = 'u32[]', space=smem, size = 0x4, offset = 0x4, fixed_abs, tag = 'smem constant byte address 0x4 - core index']
  #allocation1 [shape = 'u32[144,128]{1,0:T(1,128)}', space=vmem, size = 0x12000, scoped, tag = 'internal scratch']
  %s0 = inlined_call_operand.vmem [shape: bf16[2,8,326], index: 0, kind: input, shape index: {}]
  %s1 = inlined_call_operand.vmem [shape: bf16[16,72], index: 1, kind: input, shape index: {}]
  %s2 = inlined_call_operand.vmem [shape: f32[16,1], index: 2, kind: input, shape index: {}]
  %s3 = inlined_call_operand.vmem [shape: f32[2,16,288], index: 3, kind: output, shape index: {}]
  %s4 = sld [smem:[#allocation0]]
  $region45: #{rfbnet_forward.13} parent=0
    _
  %s6 = ssub.s32 1, %s4
  %s7 = scalar_select 0, %s6, %s4
  loop: start=0, step=1, limit=4
  $region2: #{rfbnet_forward.13} parent=0 // loop_pre_header
    _
  $region3: #{rfbnet_forward.13} parent=0 // loop_header
    %s9 = sphi 0, %s13
    %p10 = scmp.ge.s32.totalorder %s9, 4
    %s19 = sphi 0, %s21
    %s22 = sphi 0, %s19
    %s23 = sphi 0, %s22
    %s39 = sphi 0, %s23
    %s43 = sphi 0, %s43
    %s45 = sphi 0, %s43
    %s46 = sphi 0, %s45
    %s60 = sphi 0, %s46
    %s64 = sphi 0, %s64
    %s66 = sphi 0, %s64
    %s67 = sphi 0, %s66
    %s81 = sphi 0, %s67
    %s87 = sphi 0, %s89
    %s90 = sphi 0, %s87
    %s91 = sphi 0, %s90
    %s107 = sphi 0, %s91
  $region4: #{rfbnet_forward.13} parent=0 // loop_header_branch
    %12 = sbr.rel (%p10) target = $region8
  $region5: #{rfbnet_forward.13} parent=0 // loop_body
    %s14 = ssub.s32 %s9, 1
    %s15 = ssub.s32 %s9, 2
    %s16 = sadd.s32 %s9, 1
    %s17 = ssub.s32 %s9, %s16
    %p18 = scmp.eq.s32.totalorder %s17, 0
    %s20 = sadd.s32 %s19, 1
    %s21 = scalar_select %p18, %s19, %s20
    %p24 = pneg %p18
    %p25 = scmp.eq.s32.totalorder %s9, 1
    %p26 = por %p24, %p25
    %p27 = scmp.ne.s32.totalorder %s19, %s22
    %p28 = scmp.eq.s32.totalorder %s9, 0
    %p29 = por %p27, %p28
    %p30 = scmp.ne.s32.totalorder %s19, %s22
    %p31 = scmp.eq.s32.totalorder %s14, 1
    %p32 = por %p30, %p31
    %p33 = scmp.ne.s32.totalorder %s22, %s23
    %p34 = scmp.eq.s32.totalorder %s14, 0
    %p35 = por %p33, %p34
    %p36 = scmp.ne.s32.totalorder %s22, %s23
    %p37 = scmp.eq.s32.totalorder %s15, 1
    %p38 = por %p36, %p37
    %p40 = scmp.ne.s32.totalorder %s23, %s39
    %p41 = scmp.eq.s32.totalorder %s15, 0
    %p42 = por %p40, %p41
    %s44 = sadd.s32 %s43, 1
    %p47 = scmp.eq.s32.totalorder %s9, 1
    %p48 = scmp.ne.s32.totalorder %s43, %s45
    %p49 = scmp.eq.s32.totalorder %s9, 0
    %p50 = por %p48, %p49
    %p51 = scmp.ne.s32.totalorder %s43, %s45
    %p52 = scmp.eq.s32.totalorder %s14, 1
    %p53 = por %p51, %p52
    %p54 = scmp.ne.s32.totalorder %s45, %s46
    %p55 = scmp.eq.s32.totalorder %s14, 0
    %p56 = por %p54, %p55
    %p57 = scmp.ne.s32.totalorder %s45, %s46
    %p58 = scmp.eq.s32.totalorder %s15, 1
    %p59 = por %p57, %p58
    %p61 = scmp.ne.s32.totalorder %s46, %s60
    %p62 = scmp.eq.s32.totalorder %s15, 0
    %p63 = por %p61, %p62
    %s65 = sadd.s32 %s64, 1
    %p68 = scmp.eq.s32.totalorder %s9, 1
    %p69 = scmp.ne.s32.totalorder %s64, %s66
    %p70 = scmp.eq.s32.totalorder %s9, 0
    %p71 = por %p69, %p70
    %p72 = scmp.ne.s32.totalorder %s64, %s66
    %p73 = scmp.eq.s32.totalorder %s14, 1
    %p74 = por %p72, %p73
    %p75 = scmp.ne.s32.totalorder %s66, %s67
    %p76 = scmp.eq.s32.totalorder %s14, 0
    %p77 = por %p75, %p76
    %p78 = scmp.ne.s32.totalorder %s66, %s67
    %p79 = scmp.eq.s32.totalorder %s15, 1
    %p80 = por %p78, %p79
    %p82 = scmp.ne.s32.totalorder %s67, %s81
    %p83 = scmp.eq.s32.totalorder %s15, 0
    %p84 = por %p82, %p83
    %s85 = ssub.s32 %s9, %s16
    %p86 = scmp.eq.s32.totalorder %s85, 0
    %s88 = sadd.s32 %s87, 1
    %s89 = scalar_select %p86, %s87, %s88
    %p92 = pneg %p86
    %p93 = scmp.eq.s32.totalorder %s9, 1
    %p94 = por %p92, %p93
    %p95 = scmp.ne.s32.totalorder %s87, %s90
    %p96 = scmp.eq.s32.totalorder %s9, 0
    %p97 = por %p95, %p96
    %p98 = scmp.ne.s32.totalorder %s87, %s90
    %p99 = scmp.eq.s32.totalorder %s14, 1
    %p100 = por %p98, %p99
    %p101 = scmp.ne.s32.totalorder %s90, %s91
    %p102 = scmp.eq.s32.totalorder %s14, 0
    %p103 = por %p101, %p102
    %p104 = scmp.ne.s32.totalorder %s90, %s91
    %p105 = scmp.eq.s32.totalorder %s15, 1
    %p106 = por %p104, %p105
    %p108 = scmp.ne.s32.totalorder %s91, %s107
    %p109 = scmp.eq.s32.totalorder %s15, 0
    %p110 = por %p108, %p109
    %p111 = scmp.le.s32.totalorder 1, %s9
    %p112 = scmp.lt.s32.totalorder %s9, 3
    %p113 = pnand %p111, %p112
    %p114 = pneg %p113
    // Predicated region
    $region9: #{rfbnet_forward.13} parent=5 // pred_check
      _
    $region10: #{rfbnet_forward.13} parent=5 // pred_check_branch
      %116 = sbr.rel (%p113) target = $region12
    $region11: #{rfbnet_forward.13} parent=5 // pred_region
      %s117 = ssub.s32 %s9, 1
      // Predicated region
      $region13: #{rfbnet_forward.13} parent=11 // pred_check
        %p118 = pneg %p56
      $region14: #{rfbnet_forward.13} parent=11 // pred_check_branch
        %120 = sbr.rel (%p118) target = $region16
      $region15: #{rfbnet_forward.13} parent=11 // pred_region
        _
      $region16: #{rfbnet_forward.13} parent=11 // pred_fallthru
        _
      // Predicated region
      $region17: #{rfbnet_forward.13} parent=11 // pred_check
        %p121 = pneg %p77
      $region18: #{rfbnet_forward.13} parent=11 // pred_check_branch
        %123 = sbr.rel (%p121) target = $region20
      $region19: #{rfbnet_forward.13} parent=11 // pred_region
        _
      $region20: #{rfbnet_forward.13} parent=11 // pred_fallthru
        _
    $region12: #{rfbnet_forward.13} parent=5 // pred_fallthru
      _
    %p124 = scmp.lt.s32.totalorder %s9, 2
    // Predicated region
    $region21: #{rfbnet_forward.13} parent=5 // pred_check
      %p125 = pneg %p124
    $region22: #{rfbnet_forward.13} parent=5 // pred_check_branch
      %127 = sbr.rel (%p125) target = $region24
    $region23: #{rfbnet_forward.13} parent=5 // pred_region
      // Predicated region
      $region25: #{rfbnet_forward.13} parent=23 // pred_check
        %p128 = pneg %p29
      $region26: #{rfbnet_forward.13} parent=23 // pred_check_branch
        %130 = sbr.rel (%p128) target = $region28
      $region27: #{rfbnet_forward.13} parent=23 // pred_region
        %p131 = scmp.lt.s32.totalorder %s9, 1
        %s132 = scalar_select %p131, %s9, 1
        %s133 = smul.addr %s132, 3
        %s134 = smul.addr %s133, 4
        %s135 = scalar_lea.vmem %s0, %s134
      $region28: #{rfbnet_forward.13} parent=23 // pred_fallthru
        _
    $region24: #{rfbnet_forward.13} parent=5 // pred_fallthru
      _
    %p136 = scmp.le.s32.totalorder 1, %s9
    %p137 = scmp.lt.s32.totalorder %s9, 3
    %p138 = pnand %p136, %p137
    %p139 = pneg %p138
    // Predicated region
    $region29: #{rfbnet_forward.13} parent=5 // pred_check
      _
    $region30: #{rfbnet_forward.13} parent=5 // pred_check_branch
      %141 = sbr.rel (%p138) target = $region32
    $region31: #{rfbnet_forward.13} parent=5 // pred_region
      %s142 = ssub.s32 %s9, 1
      %p143 = scmp.lt.s32.totalorder %s14, 1
      %s144 = scalar_select %p143, %s14, 1
      %s145 = smul.addr %s144, 3
      %s146 = smul.addr %s145, 4
      %s147 = scalar_lea.vmem %s0, %s146
      %p148 = pneg %p35
      %p149 = pneg %p32
      %p150 = pneg %p56
      %p151 = pneg %p53
      %p152 = pneg %p77
      %p153 = pneg %p74
      %p154 = pneg %p103
      %p155 = pneg %p100
      %p156 = scmp.lt.s32.totalorder %s14, 1
      %s157 = scalar_select %p156, %s14, 1
      %s158 = smul.addr %s157, 6
      %s159 = smul.addr %s158, 8
      %s160 = scalar_lea.vmem %s3, %s159
      %p161 = scmp.lt.s32.totalorder %s14, 1
      %s162 = scalar_select %p161, %s14, 1
      %s163 = smul.addr %s162, 3
      %s164 = smul.addr %s163, 4
      %s165 = scalar_lea.vmem %s0, %s164
      %p166 = scmp.lt.s32.totalorder %s14, 1
      %s167 = scalar_select %p166, %s14, 1
      %s168 = smul.addr %s167, 6
      %s169 = smul.addr %s168, 8
      %s170 = scalar_lea.vmem %s3, %s169
      %v172 = vld [vmem:[%s165] sm:$0xff]
      %v173 = vld [vmem:[%s165 + $0x8] sm:$0xf]
      %v176 = vunpack.c.l.b16 %v172
      %v177 = vunpack.c.h.b16 %v172
      %v178 = vunpack.c.l.b16 %v173
      %v179 = vpack.c.b16 %v176, %v176
      %v180 = vpack.c.b16 %v177, %v177
      %v181 = vpack.c.b16 %v178, %v178
      %182 = vrot.lane.b32.xlu0 %v179, 127
      %v183 = vpop.permute.xlu0 %182
      %184 = vrot.lane.b32.xlu0 %v180, 127
      %v185 = vpop.permute.xlu0 %184
      %186 = vrot.lane.b32.xlu0 %v181, 127
      %v187 = vpop.permute.xlu0 %186
      %vm188 = vcmask 1039360
      %v189 = vsel %vm188, %v183, %v185
      %v190 = vsel %vm188, %v185, %v187
      %191 = vrot.lane.b32.xlu0 %v179, 126
      %v192 = vpop.permute.xlu0 %191
      %193 = vrot.lane.b32.xlu0 %v180, 126
      %v194 = vpop.permute.xlu0 %193
      %195 = vrot.lane.b32.xlu0 %v181, 126
      %v196 = vpop.permute.xlu0 %195
      %vm197 = vcmask 1031168
      %v198 = vsel %vm197, %v192, %v194
      %v199 = vsel %vm197, %v194, %v196
      %200 = vrot.lane.b32.xlu0 %v179, 110
      %v201 = vpop.permute.xlu0 %200
      %202 = vrot.lane.b32.xlu0 %v180, 110
      %v203 = vpop.permute.xlu0 %202
      %204 = vrot.lane.b32.xlu0 %v181, 110
      %v205 = vpop.permute.xlu0 %204
      %vm206 = vcmask 900096
      %v207 = vsel %vm206, %v201, %v203
      %v208 = vsel %vm206, %v203, %v205
      %209 = vrot.lane.b32.xlu0 %v179, 109
      %v210 = vpop.permute.xlu0 %209
      %211 = vrot.lane.b32.xlu0 %v180, 109
      %v212 = vpop.permute.xlu0 %211
      %213 = vrot.lane.b32.xlu0 %v181, 109
      %v214 = vpop.permute.xlu0 %213
      %vm215 = vcmask 891904
      %v216 = vsel %vm215, %v210, %v212
      %v217 = vsel %vm215, %v212, %v214
      %218 = vrot.lane.b32.xlu0 %v179, 108
      %v219 = vpop.permute.xlu0 %218
      %220 = vrot.lane.b32.xlu0 %v180, 108
      %v221 = vpop.permute.xlu0 %220
      %222 = vrot.lane.b32.xlu0 %v181, 108
      %v223 = vpop.permute.xlu0 %222
      %vm224 = vcmask 883712
      %v225 = vsel %vm224, %v219, %v221
      %v226 = vsel %vm224, %v221, %v223
      %227 = vrot.lane.b32.xlu0 %v179, 92
      %v228 = vpop.permute.xlu0 %227
      %229 = vrot.lane.b32.xlu0 %v180, 92
      %v230 = vpop.permute.xlu0 %229
      %231 = vrot.lane.b32.xlu0 %v181, 92
      %v232 = vpop.permute.xlu0 %231
      %vm233 = vcmask 752640
      %v234 = vsel %vm233, %v228, %v230
      %v235 = vsel %vm233, %v230, %v232
      %236 = vrot.lane.b32.xlu0 %v179, 91
      %v237 = vpop.permute.xlu0 %236
      %238 = vrot.lane.b32.xlu0 %v180, 91
      %v239 = vpop.permute.xlu0 %238
      %240 = vrot.lane.b32.xlu0 %v181, 91
      %v241 = vpop.permute.xlu0 %240
      %vm242 = vcmask 744448
      %v243 = vsel %vm242, %v237, %v239
      %v244 = vsel %vm242, %v239, %v241
      %245 = vrot.lane.b32.xlu0 %v179, 90
      %v246 = vpop.permute.xlu0 %245
      %247 = vrot.lane.b32.xlu0 %v180, 90
      %v248 = vpop.permute.xlu0 %247
      %249 = vrot.lane.b32.xlu0 %v181, 90
      %v250 = vpop.permute.xlu0 %249
      %vm251 = vcmask 736256
      %v252 = vsel %vm251, %v246, %v248
      %v253 = vsel %vm251, %v248, %v250
      %vm254 = vcmask 1043456
      %v257 = vsel %vm254, %v179, %v189
      %v261 = vsel %vm254, %v180, %v190
      %v265 = vsel %vm254, %v181, %v187
      %v269 = vsel %vm254, %v198, %v207
      %v273 = vsel %vm254, %v199, %v208
      %v277 = vsel %vm254, %v196, %v205
      %v281 = vsel %vm254, %v216, %v225
      %v285 = vsel %vm254, %v217, %v226
      %v289 = vsel %vm254, %v214, %v223
      %v293 = vsel %vm254, %v234, %v243
      %v297 = vsel %vm254, %v235, %v244
      %v301 = vsel %vm254, %v232, %v241
      %v303 = vld [vmem:[%s1] sm:$0xf]
      %v304 = vld [vmem:[%s1 + $0x4] sm:$0xf]
      %v305 = vld [vmem:[%s2] sm:$0xff]
      %v306 = vld [vmem:[%s2 + $0x8] sm:$0xff]
      %308 = vset.pattern.permute.xlu0 0
      %309 = vperm.xlu0 %308, %v305
      %v310 = vpop.permute.xlu0 %309
      %313 = vset.pattern.permute.xlu0 0
      %314 = vperm.xlu0 %313, %v306
      %v315 = vpop.permute.xlu0 %314
      %v319 = vunpack.c.l.b16 %v303
      %v320 = vunpack.c.l.b16 %v304
      %v321 = vpack.c.b16 %v320, %v319
      %vm322 = vcmask 588800
      %v324 = vsel %vm322, %v321, 0
      %v327 = vsel %vm254, %v252, 0
      %v330 = vsel %vm254, %v253, 0
      %v333 = vsel %vm254, %v250, 0
      %335 = vmatprep.subr.bf16.mxu0 %v261
      %336 = vmatpush1.bf16.msra.mxu0 %v257
      %337 = vmatprep.subr.bf16.mxu0 %v273
      %338 = vmatpush1.bf16.msra.mxu0 %v269
      %339 = vmatprep.subr.bf16.mxu0 %v285
      %340 = vmatpush1.bf16.msra.mxu0 %v281
      %341 = vmatprep.subr.bf16.mxu0 %v297
      %342 = vmatpush1.bf16.msra.mxu0 %v293
      %343 = vmatprep.subr.bf16.mxu0 %v330
      %344 = vmatpush1.bf16.msra.mxu0 %v327
      %345 = vmatprep.subr.bf16.mxu0 0
      %346 = vmatpush1.bf16.msra.mxu0 0
      %347 = vmatprep.subr.bf16.mxu0 0
      %348 = vmatpush1.bf16.msra.mxu0 0
      %349 = vmatprep.subr.bf16.mxu0 0
      %350 = vmatpush1.bf16.msra.mxu0 0
      %351 = vmatprep.subr.bf16.mxu0 0
      %352 = vmatpush1.bf16.msra.mxu0 0
      %353 = vmatprep.subr.bf16.mxu0 0
      %354 = vmatpush1.bf16.msra.mxu0 0
      %355 = vmatprep.subr.bf16.mxu0 0
      %356 = vmatpush1.bf16.msra.mxu0 0
      %357 = vmatprep.subr.bf16.mxu0 0
      %358 = vmatpush1.bf16.msra.mxu0 0
      %359 = vmatprep.subr.bf16.mxu0 0
      %360 = vmatpush1.bf16.msra.mxu0 0
      %361 = vmatprep.subr.bf16.mxu0 0
      %362 = vmatpush1.bf16.msra.mxu0 0
      %363 = vmatprep.subr.bf16.mxu0 0
      %364 = vmatpush1.bf16.msra.mxu0 0
      %365 = vmatprep.subr.bf16.mxu0 0
      %366 = vmatpush1.bf16.msra.mxu0 0
      %367 = vmatprep.mubr.bf16.mxu0 0
      %368 = vmatmul.mubr.bf16.gmra.mrb[0].mxu0 %v324
      %v369 = vpop.f32.mrb[0].mxu0
      %v370 = vadd.f32 %v310, %v369
      %v371 = vpop.f32.mrb[0].mxu0
      %v372 = vadd.f32 %v310, %v371
      %v373 = vpop.f32.mrb[0].mxu0
      %v374 = vadd.f32 %v315, %v373
      %v375 = vpop.f32.mrb[0].mxu0
      %v376 = vadd.f32 %v315, %v375
      %377 = vdwg.mxu0
      %378 = vmatprep.subr.bf16.mxu0 0
      %379 = vmatpush1.bf16.msra.mxu0 %v265
      %380 = vmatprep.subr.bf16.mxu0 0
      %381 = vmatpush1.bf16.msra.mxu0 %v277
      %382 = vmatprep.subr.bf16.mxu0 0
      %383 = vmatpush1.bf16.msra.mxu0 %v289
      %384 = vmatprep.subr.bf16.mxu0 0
      %385 = vmatpush1.bf16.msra.mxu0 %v301
      %386 = vmatprep.subr.bf16.mxu0 0
      %387 = vmatpush1.bf16.msra.mxu0 %v333
      %388 = vmatprep.subr.bf16.mxu0 0
      %389 = vmatpush1.bf16.msra.mxu0 0
      %390 = vmatprep.subr.bf16.mxu0 0
      %391 = vmatpush1.bf16.msra.mxu0 0
      %392 = vmatprep.subr.bf16.mxu0 0
      %393 = vmatpush1.bf16.msra.mxu0 0
      %394 = vmatprep.subr.bf16.mxu0 0
      %395 = vmatpush1.bf16.msra.mxu0 0
      %396 = vmatprep.subr.bf16.mxu0 0
      %397 = vmatpush1.bf16.msra.mxu0 0
      %398 = vmatprep.subr.bf16.mxu0 0
      %399 = vmatpush1.bf16.msra.mxu0 0
      %400 = vmatprep.subr.bf16.mxu0 0
      %401 = vmatpush1.bf16.msra.mxu0 0
      %402 = vmatprep.subr.bf16.mxu0 0
      %403 = vmatpush1.bf16.msra.mxu0 0
      %404 = vmatprep.subr.bf16.mxu0 0
      %405 = vmatpush1.bf16.msra.mxu0 0
      %406 = vmatprep.subr.bf16.mxu0 0
      %407 = vmatpush1.bf16.msra.mxu0 0
      %408 = vmatprep.subr.bf16.mxu0 0
      %409 = vmatpush1.bf16.msra.mxu0 0
      %410 = vmatprep.mubr.bf16.mxu0 0
      %411 = vmatmul.mubr.bf16.gmra.mrb[0].mxu0 %v324
      %v412 = vpop.f32.mrb[0].mxu0
      %v413 = vadd.f32 %v310, %v412
      %v414 = vpop.f32.mrb[0].mxu0
      %v415 = vpop.f32.mrb[0].mxu0
      %v416 = vadd.f32 %v315, %v415
      %v417 = vpop.f32.mrb[0].mxu0
      %418 = vdwg.mxu0
      %v419 = vmax.f32 %v370, 0.0
      %v420 = vmax.f32 %v372, 0.0
      %v421 = vmax.f32 %v413, 0.0
      %v422 = vmax.f32 %v374, 0.0
      %v423 = vmax.f32 %v376, 0.0
      %v424 = vmax.f32 %v416, 0.0
      %425 = vst [vmem:[%s170] sm:$0xff] %v419
      %426 = vst [vmem:[%s170 + $0x8] sm:$0xff] %v420
      %vm427 = vcmask 261120
      %428 = vst.msk [vmem:[%s170 + $0x10] sm:$0xff] %vm427, %v421
      %429 = vst [vmem:[%s170 + $0x18] sm:$0xff] %v422
      %430 = vst [vmem:[%s170 + $0x20] sm:$0xff] %v423
      %431 = vst.msk [vmem:[%s170 + $0x28] sm:$0xff] %vm427, %v424
      %p432 = scmp.lt.s32.totalorder %s14, 1
      %s433 = scalar_select %p432, %s14, 1
      %s434 = smul.addr %s433, 6
      %s435 = smul.addr %s434, 8
      %s436 = scalar_lea.vmem %s3, %s435
      // Predicated region
      $region33: #{rfbnet_forward.13} parent=31 // pred_check
        %p437 = pneg %p100
      $region34: #{rfbnet_forward.13} parent=31 // pred_check_branch
        %439 = sbr.rel (%p437) target = $region36
      $region35: #{rfbnet_forward.13} parent=31 // pred_region
        _
      $region36: #{rfbnet_forward.13} parent=31 // pred_fallthru
        _
    $region32: #{rfbnet_forward.13} parent=5 // pred_fallthru
      _
    %p440 = scmp.le.s32.totalorder 2, %s9
    // Predicated region
    $region37: #{rfbnet_forward.13} parent=5 // pred_check
      %p441 = pneg %p440
    $region38: #{rfbnet_forward.13} parent=5 // pred_check_branch
      %443 = sbr.rel (%p441) target = $region40
    $region39: #{rfbnet_forward.13} parent=5 // pred_region
      %s444 = ssub.s32 %s9, 2
      // Predicated region
      $region41: #{rfbnet_forward.13} parent=39 // pred_check
        %p445 = pneg %p106
      $region42: #{rfbnet_forward.13} parent=39 // pred_check_branch
        %447 = sbr.rel (%p445) target = $region44
      $region43: #{rfbnet_forward.13} parent=39 // pred_region
        %p448 = scmp.lt.s32.totalorder %s15, 1
        %s449 = scalar_select %p448, %s15, 1
        %s450 = smul.addr %s449, 6
        %s451 = smul.addr %s450, 8
        %s452 = scalar_lea.vmem %s3, %s451
      $region44: #{rfbnet_forward.13} parent=39 // pred_fallthru
        _
    $region40: #{rfbnet_forward.13} parent=5 // pred_fallthru
      _
  $region6: #{rfbnet_forward.13} parent=0 // loop_footer
    %s13 = sadd.s32 1, %s9
  $region7: #{rfbnet_forward.13} parent=0 // loop_footer_branch
    %8 = sbr.rel target = $region3
  $region8: #{rfbnet_forward.13} parent=0 // loop_exit
    _

// kernel: rfbnet_forward.18
$region0: #{rfbnet_forward.18}
  #allocation0 [shape = 'u32[]', space=smem, size = 0x4, offset = 0x4, fixed_abs, tag = 'smem constant byte address 0x4 - core index']
  #allocation1 [shape = 'u32[144,128]{1,0:T(1,128)}', space=vmem, size = 0x12000, scoped, tag = 'internal scratch']
  %s0 = inlined_call_operand.vmem [shape: bf16[2,8,326], index: 0, kind: input, shape index: {}]
  %s1 = inlined_call_operand.vmem [shape: bf16[48,72], index: 1, kind: input, shape index: {}]
  %s2 = inlined_call_operand.vmem [shape: f32[48,1], index: 2, kind: input, shape index: {}]
  %s3 = inlined_call_operand.vmem [shape: f32[2,48,288], index: 3, kind: output, shape index: {}]
  %s4 = sld [smem:[#allocation0]]
  $region45: #{rfbnet_forward.18} parent=0
    _
  %s6 = ssub.s32 1, %s4
  %s7 = scalar_select 0, %s6, %s4
  loop: start=0, step=1, limit=4
  $region2: #{rfbnet_forward.18} parent=0 // loop_pre_header
    _
  $region3: #{rfbnet_forward.18} parent=0 // loop_header
    %s9 = sphi 0, %s13
    %p10 = scmp.ge.s32.totalorder %s9, 4
    %s19 = sphi 0, %s21
    %s22 = sphi 0, %s19
    %s23 = sphi 0, %s22
    %s39 = sphi 0, %s23
    %s43 = sphi 0, %s43
    %s45 = sphi 0, %s43
    %s46 = sphi 0, %s45
    %s60 = sphi 0, %s46
    %s64 = sphi 0, %s64
    %s66 = sphi 0, %s64
    %s67 = sphi 0, %s66
    %s81 = sphi 0, %s67
    %s87 = sphi 0, %s89
    %s90 = sphi 0, %s87
    %s91 = sphi 0, %s90
    %s107 = sphi 0, %s91
  $region4: #{rfbnet_forward.18} parent=0 // loop_header_branch
    %12 = sbr.rel (%p10) target = $region8
  $region5: #{rfbnet_forward.18} parent=0 // loop_body
    %s14 = ssub.s32 %s9, 1
    %s15 = ssub.s32 %s9, 2
    %s16 = sadd.s32 %s9, 1
    %s17 = ssub.s32 %s9, %s16
    %p18 = scmp.eq.s32.totalorder %s17, 0
    %s20 = sadd.s32 %s19, 1
    %s21 = scalar_select %p18, %s19, %s20
    %p24 = pneg %p18
    %p25 = scmp.eq.s32.totalorder %s9, 1
    %p26 = por %p24, %p25
    %p27 = scmp.ne.s32.totalorder %s19, %s22
    %p28 = scmp.eq.s32.totalorder %s9, 0
    %p29 = por %p27, %p28
    %p30 = scmp.ne.s32.totalorder %s19, %s22
    %p31 = scmp.eq.s32.totalorder %s14, 1
    %p32 = por %p30, %p31
    %p33 = scmp.ne.s32.totalorder %s22, %s23
    %p34 = scmp.eq.s32.totalorder %s14, 0
    %p35 = por %p33, %p34
    %p36 = scmp.ne.s32.totalorder %s22, %s23
    %p37 = scmp.eq.s32.totalorder %s15, 1
    %p38 = por %p36, %p37
    %p40 = scmp.ne.s32.totalorder %s23, %s39
    %p41 = scmp.eq.s32.totalorder %s15, 0
    %p42 = por %p40, %p41
    %s44 = sadd.s32 %s43, 1
    %p47 = scmp.eq.s32.totalorder %s9, 1
    %p48 = scmp.ne.s32.totalorder %s43, %s45
    %p49 = scmp.eq.s32.totalorder %s9, 0
    %p50 = por %p48, %p49
    %p51 = scmp.ne.s32.totalorder %s43, %s45
    %p52 = scmp.eq.s32.totalorder %s14, 1
    %p53 = por %p51, %p52
    %p54 = scmp.ne.s32.totalorder %s45, %s46
    %p55 = scmp.eq.s32.totalorder %s14, 0
    %p56 = por %p54, %p55
    %p57 = scmp.ne.s32.totalorder %s45, %s46
    %p58 = scmp.eq.s32.totalorder %s15, 1
    %p59 = por %p57, %p58
    %p61 = scmp.ne.s32.totalorder %s46, %s60
    %p62 = scmp.eq.s32.totalorder %s15, 0
    %p63 = por %p61, %p62
    %s65 = sadd.s32 %s64, 1
    %p68 = scmp.eq.s32.totalorder %s9, 1
    %p69 = scmp.ne.s32.totalorder %s64, %s66
    %p70 = scmp.eq.s32.totalorder %s9, 0
    %p71 = por %p69, %p70
    %p72 = scmp.ne.s32.totalorder %s64, %s66
    %p73 = scmp.eq.s32.totalorder %s14, 1
    %p74 = por %p72, %p73
    %p75 = scmp.ne.s32.totalorder %s66, %s67
    %p76 = scmp.eq.s32.totalorder %s14, 0
    %p77 = por %p75, %p76
    %p78 = scmp.ne.s32.totalorder %s66, %s67
    %p79 = scmp.eq.s32.totalorder %s15, 1
    %p80 = por %p78, %p79
    %p82 = scmp.ne.s32.totalorder %s67, %s81
    %p83 = scmp.eq.s32.totalorder %s15, 0
    %p84 = por %p82, %p83
    %s85 = ssub.s32 %s9, %s16
    %p86 = scmp.eq.s32.totalorder %s85, 0
    %s88 = sadd.s32 %s87, 1
    %s89 = scalar_select %p86, %s87, %s88
    %p92 = pneg %p86
    %p93 = scmp.eq.s32.totalorder %s9, 1
    %p94 = por %p92, %p93
    %p95 = scmp.ne.s32.totalorder %s87, %s90
    %p96 = scmp.eq.s32.totalorder %s9, 0
    %p97 = por %p95, %p96
    %p98 = scmp.ne.s32.totalorder %s87, %s90
    %p99 = scmp.eq.s32.totalorder %s14, 1
    %p100 = por %p98, %p99
    %p101 = scmp.ne.s32.totalorder %s90, %s91
    %p102 = scmp.eq.s32.totalorder %s14, 0
    %p103 = por %p101, %p102
    %p104 = scmp.ne.s32.totalorder %s90, %s91
    %p105 = scmp.eq.s32.totalorder %s15, 1
    %p106 = por %p104, %p105
    %p108 = scmp.ne.s32.totalorder %s91, %s107
    %p109 = scmp.eq.s32.totalorder %s15, 0
    %p110 = por %p108, %p109
    %p111 = scmp.le.s32.totalorder 1, %s9
    %p112 = scmp.lt.s32.totalorder %s9, 3
    %p113 = pnand %p111, %p112
    %p114 = pneg %p113
    // Predicated region
    $region9: #{rfbnet_forward.18} parent=5 // pred_check
      _
    $region10: #{rfbnet_forward.18} parent=5 // pred_check_branch
      %116 = sbr.rel (%p113) target = $region12
    $region11: #{rfbnet_forward.18} parent=5 // pred_region
      %s117 = ssub.s32 %s9, 1
      // Predicated region
      $region13: #{rfbnet_forward.18} parent=11 // pred_check
        %p118 = pneg %p56
      $region14: #{rfbnet_forward.18} parent=11 // pred_check_branch
        %120 = sbr.rel (%p118) target = $region16
      $region15: #{rfbnet_forward.18} parent=11 // pred_region
        _
      $region16: #{rfbnet_forward.18} parent=11 // pred_fallthru
        _
      // Predicated region
      $region17: #{rfbnet_forward.18} parent=11 // pred_check
        %p121 = pneg %p77
      $region18: #{rfbnet_forward.18} parent=11 // pred_check_branch
        %123 = sbr.rel (%p121) target = $region20
      $region19: #{rfbnet_forward.18} parent=11 // pred_region
        _
      $region20: #{rfbnet_forward.18} parent=11 // pred_fallthru
        _
    $region12: #{rfbnet_forward.18} parent=5 // pred_fallthru
      _
    %p124 = scmp.lt.s32.totalorder %s9, 2
    // Predicated region
    $region21: #{rfbnet_forward.18} parent=5 // pred_check
      %p125 = pneg %p124
    $region22: #{rfbnet_forward.18} parent=5 // pred_check_branch
      %127 = sbr.rel (%p125) target = $region24
    $region23: #{rfbnet_forward.18} parent=5 // pred_region
      // Predicated region
      $region25: #{rfbnet_forward.18} parent=23 // pred_check
        %p128 = pneg %p29
      $region26: #{rfbnet_forward.18} parent=23 // pred_check_branch
        %130 = sbr.rel (%p128) target = $region28
      $region27: #{rfbnet_forward.18} parent=23 // pred_region
        %p131 = scmp.lt.s32.totalorder %s9, 1
        %s132 = scalar_select %p131, %s9, 1
        %s133 = smul.addr %s132, 3
        %s134 = smul.addr %s133, 4
        %s135 = scalar_lea.vmem %s0, %s134
      $region28: #{rfbnet_forward.18} parent=23 // pred_fallthru
        _
    $region24: #{rfbnet_forward.18} parent=5 // pred_fallthru
      _
    %p136 = scmp.le.s32.totalorder 1, %s9
    %p137 = scmp.lt.s32.totalorder %s9, 3
    %p138 = pnand %p136, %p137
    %p139 = pneg %p138
    // Predicated region
    $region29: #{rfbnet_forward.18} parent=5 // pred_check
      _
    $region30: #{rfbnet_forward.18} parent=5 // pred_check_branch
      %141 = sbr.rel (%p138) target = $region32
    $region31: #{rfbnet_forward.18} parent=5 // pred_region
      %s142 = ssub.s32 %s9, 1
      %p143 = scmp.lt.s32.totalorder %s14, 1
      %s144 = scalar_select %p143, %s14, 1
      %s145 = smul.addr %s144, 3
      %s146 = smul.addr %s145, 4
      %s147 = scalar_lea.vmem %s0, %s146
      %p148 = pneg %p35
      %p149 = pneg %p32
      %p150 = pneg %p56
      %p151 = pneg %p53
      %p152 = pneg %p77
      %p153 = pneg %p74
      %p154 = pneg %p103
      %p155 = pneg %p100
      %p156 = scmp.lt.s32.totalorder %s14, 1
      %s157 = scalar_select %p156, %s14, 1
      %s158 = smul.addr %s157, 18
      %s159 = smul.addr %s158, 8
      %s160 = scalar_lea.vmem %s3, %s159
      %p161 = scmp.lt.s32.totalorder %s14, 1
      %s162 = scalar_select %p161, %s14, 1
      %s163 = smul.addr %s162, 3
      %s164 = smul.addr %s163, 4
      %s165 = scalar_lea.vmem %s0, %s164
      %p166 = scmp.lt.s32.totalorder %s14, 1
      %s167 = scalar_select %p166, %s14, 1
      %s168 = smul.addr %s167, 18
      %s169 = smul.addr %s168, 8
      %s170 = scalar_lea.vmem %s3, %s169
      %v172 = vld [vmem:[%s165] sm:$0xff]
      %v173 = vld [vmem:[%s165 + $0x8] sm:$0xf]
      %v176 = vunpack.c.l.b16 %v172
      %v177 = vunpack.c.h.b16 %v172
      %v178 = vunpack.c.l.b16 %v173
      %v179 = vpack.c.b16 %v176, %v176
      %v180 = vpack.c.b16 %v177, %v177
      %v181 = vpack.c.b16 %v178, %v178
      %182 = vrot.lane.b32.xlu0 %v179, 127
      %v183 = vpop.permute.xlu0 %182
      %184 = vrot.lane.b32.xlu0 %v180, 127
      %v185 = vpop.permute.xlu0 %184
      %186 = vrot.lane.b32.xlu0 %v181, 127
      %v187 = vpop.permute.xlu0 %186
      %vm188 = vcmask 1039360
      %v189 = vsel %vm188, %v183, %v185
      %v190 = vsel %vm188, %v185, %v187
      %191 = vrot.lane.b32.xlu0 %v179, 126
      %v192 = vpop.permute.xlu0 %191
      %193 = vrot.lane.b32.xlu0 %v180, 126
      %v194 = vpop.permute.xlu0 %193
      %195 = vrot.lane.b32.xlu0 %v181, 126
      %v196 = vpop.permute.xlu0 %195
      %vm197 = vcmask 1031168
      %v198 = vsel %vm197, %v192, %v194
      %v199 = vsel %vm197, %v194, %v196
      %200 = vrot.lane.b32.xlu0 %v179, 110
      %v201 = vpop.permute.xlu0 %200
      %202 = vrot.lane.b32.xlu0 %v180, 110
      %v203 = vpop.permute.xlu0 %202
      %204 = vrot.lane.b32.xlu0 %v181, 110
      %v205 = vpop.permute.xlu0 %204
      %vm206 = vcmask 900096
      %v207 = vsel %vm206, %v201, %v203
      %v208 = vsel %vm206, %v203, %v205
      %209 = vrot.lane.b32.xlu0 %v179, 109
      %v210 = vpop.permute.xlu0 %209
      %211 = vrot.lane.b32.xlu0 %v180, 109
      %v212 = vpop.permute.xlu0 %211
      %213 = vrot.lane.b32.xlu0 %v181, 109
      %v214 = vpop.permute.xlu0 %213
      %vm215 = vcmask 891904
      %v216 = vsel %vm215, %v210, %v212
      %v217 = vsel %vm215, %v212, %v214
      %218 = vrot.lane.b32.xlu0 %v179, 108
      %v219 = vpop.permute.xlu0 %218
      %220 = vrot.lane.b32.xlu0 %v180, 108
      %v221 = vpop.permute.xlu0 %220
      %222 = vrot.lane.b32.xlu0 %v181, 108
      %v223 = vpop.permute.xlu0 %222
      %vm224 = vcmask 883712
      %v225 = vsel %vm224, %v219, %v221
      %v226 = vsel %vm224, %v221, %v223
      %227 = vrot.lane.b32.xlu0 %v179, 92
      %v228 = vpop.permute.xlu0 %227
      %229 = vrot.lane.b32.xlu0 %v180, 92
      %v230 = vpop.permute.xlu0 %229
      %231 = vrot.lane.b32.xlu0 %v181, 92
      %v232 = vpop.permute.xlu0 %231
      %vm233 = vcmask 752640
      %v234 = vsel %vm233, %v228, %v230
      %v235 = vsel %vm233, %v230, %v232
      %236 = vrot.lane.b32.xlu0 %v179, 91
      %v237 = vpop.permute.xlu0 %236
      %238 = vrot.lane.b32.xlu0 %v180, 91
      %v239 = vpop.permute.xlu0 %238
      %240 = vrot.lane.b32.xlu0 %v181, 91
      %v241 = vpop.permute.xlu0 %240
      %vm242 = vcmask 744448
      %v243 = vsel %vm242, %v237, %v239
      %v244 = vsel %vm242, %v239, %v241
      %245 = vrot.lane.b32.xlu0 %v179, 90
      %v246 = vpop.permute.xlu0 %245
      %247 = vrot.lane.b32.xlu0 %v180, 90
      %v248 = vpop.permute.xlu0 %247
      %249 = vrot.lane.b32.xlu0 %v181, 90
      %v250 = vpop.permute.xlu0 %249
      %vm251 = vcmask 736256
      %v252 = vsel %vm251, %v246, %v248
      %v253 = vsel %vm251, %v248, %v250
      %vm254 = vcmask 1043456
      %v257 = vsel %vm254, %v179, %v189
      %v261 = vsel %vm254, %v180, %v190
      %v265 = vsel %vm254, %v181, %v187
      %v269 = vsel %vm254, %v198, %v207
      %v273 = vsel %vm254, %v199, %v208
      %v277 = vsel %vm254, %v196, %v205
      %v281 = vsel %vm254, %v216, %v225
      %v285 = vsel %vm254, %v217, %v226
      %v289 = vsel %vm254, %v214, %v223
      %v293 = vsel %vm254, %v234, %v243
      %v297 = vsel %vm254, %v235, %v244
      %v301 = vsel %vm254, %v232, %v241
      %v303 = vld [vmem:[%s1] sm:$0xf]
      %v304 = vld [vmem:[%s1 + $0x4] sm:$0xf]
      %v305 = vld [vmem:[%s1 + $0x8] sm:$0xf]
      %v306 = vld [vmem:[%s1 + $0xc] sm:$0xf]
      %v307 = vld [vmem:[%s1 + $0x10] sm:$0xf]
      %v308 = vld [vmem:[%s1 + $0x14] sm:$0xf]
      %v309 = vld [vmem:[%s2] sm:$0xff]
      %v310 = vld [vmem:[%s2 + $0x8] sm:$0xff]
      %v311 = vld [vmem:[%s2 + $0x10] sm:$0xff]
      %v312 = vld [vmem:[%s2 + $0x18] sm:$0xff]
      %v313 = vld [vmem:[%s2 + $0x20] sm:$0xff]
      %v314 = vld [vmem:[%s2 + $0x28] sm:$0xff]
      %316 = vset.pattern.permute.xlu0 0
      %317 = vperm.xlu0 %316, %v309
      %v318 = vpop.permute.xlu0 %317
      %321 = vset.pattern.permute.xlu0 0
      %322 = vperm.xlu0 %321, %v310
      %v323 = vpop.permute.xlu0 %322
      %326 = vset.pattern.permute.xlu0 0
      %327 = vperm.xlu0 %326, %v311
      %v328 = vpop.permute.xlu0 %327
      %331 = vset.pattern.permute.xlu0 0
      %332 = vperm.xlu0 %331, %v312
      %v333 = vpop.permute.xlu0 %332
      %336 = vset.pattern.permute.xlu0 0
      %337 = vperm.xlu0 %336, %v313
      %v338 = vpop.permute.xlu0 %337
      %341 = vset.pattern.permute.xlu0 0
      %342 = vperm.xlu0 %341, %v314
      %v343 = vpop.permute.xlu0 %342
      %v351 = vunpack.c.l.b16 %v303
      %v352 = vunpack.c.l.b16 %v304
      %v353 = vunpack.c.l.b16 %v305
      %v354 = vunpack.c.l.b16 %v306
      %v355 = vunpack.c.l.b16 %v307
      %v356 = vunpack.c.l.b16 %v308
      %v357 = vpack.c.b16 %v352, %v351
      %v358 = vpack.c.b16 %v354, %v353
      %v359 = vpack.c.b16 %v356, %v355
      %vm360 = vcmask 588800
      %v362 = vsel %vm360, %v357, 0
      %v365 = vsel %vm360, %v358, 0
      %v368 = vsel %vm360, %v359, 0
      %v371 = vsel %vm254, %v252, 0
      %v374 = vsel %vm254, %v253, 0
      %v377 = vsel %vm254, %v250, 0
      %379 = vmatprep.subr.bf16.mxu0 %v261
      %380 = vmatpush1.bf16.msra.mxu0 %v257
      %381 = vmatprep.subr.bf16.mxu0 %v273
      %382 = vmatpush1.bf16.msra.mxu0 %v269
      %383 = vmatprep.subr.bf16.mxu0 %v285
      %384 = vmatpush1.bf16.msra.mxu0 %v281
      %385 = vmatprep.subr.bf16.mxu0 %v297
      %386 = vmatpush1.bf16.msra.mxu0 %v293
      %387 = vmatprep.subr.bf16.mxu0 %v374
      %388 = vmatpush1.bf16.msra.mxu0 %v371
      %389 = vmatprep.subr.bf16.mxu0 0
      %390 = vmatpush1.bf16.msra.mxu0 0
      %391 = vmatprep.subr.bf16.mxu0 0
      %392 = vmatpush1.bf16.msra.mxu0 0
      %393 = vmatprep.subr.bf16.mxu0 0
      %394 = vmatpush1.bf16.msra.mxu0 0
      %395 = vmatprep.subr.bf16.mxu0 0
      %396 = vmatpush1.bf16.msra.mxu0 0
      %397 = vmatprep.subr.bf16.mxu0 0
      %398 = vmatpush1.bf16.msra.mxu0 0
      %399 = vmatprep.subr.bf16.mxu0 0
      %400 = vmatpush1.bf16.msra.mxu0 0
      %401 = vmatprep.subr.bf16.mxu0 0
      %402 = vmatpush1.bf16.msra.mxu0 0
      %403 = vmatprep.subr.bf16.mxu0 0
      %404 = vmatpush1.bf16.msra.mxu0 0
      %405 = vmatprep.subr.bf16.mxu0 0
      %406 = vmatpush1.bf16.msra.mxu0 0
      %407 = vmatprep.subr.bf16.mxu0 0
      %408 = vmatpush1.bf16.msra.mxu0 0
      %409 = vmatprep.subr.bf16.mxu0 0
      %410 = vmatpush1.bf16.msra.mxu0 0
      %411 = vmatprep.mubr.bf16.mxu0 0
      %412 = vmatmul.mubr.bf16.gmra.mrb[0].mxu0 %v362
      %v413 = vpop.f32.mrb[0].mxu0
      %v414 = vadd.f32 %v318, %v413
      %v415 = vpop.f32.mrb[0].mxu0
      %v416 = vadd.f32 %v318, %v415
      %v417 = vpop.f32.mrb[0].mxu0
      %v418 = vadd.f32 %v323, %v417
      %v419 = vpop.f32.mrb[0].mxu0
      %v420 = vadd.f32 %v323, %v419
      %421 = vmatprep.mubr.bf16.mxu0 0
      %422 = vmatmul.mubr.bf16.gmra.mrb[0].mxu0 %v365
      %v423 = vpop.f32.mrb[0].mxu0
      %v424 = vadd.f32 %v328, %v423
      %v425 = vpop.f32.mrb[0].mxu0
      %v426 = vadd.f32 %v328, %v425
      %v427 = vpop.f32.mrb[0].mxu0
      %v428 = vadd.f32 %v333, %v427
      %v429 = vpop.f32.mrb[0].mxu0
      %v430 = vadd.f32 %v333, %v429
      %431 = vmatprep.mubr.bf16.mxu0 0
      %432 = vmatmul.mubr.bf16.gmra.mrb[0].mxu0 %v368
      %v433 = vpop.f32.mrb[0].mxu0
      %v434 = vadd.f32 %v338, %v433
      %v435 = vpop.f32.mrb[0].mxu0
      %v436 = vadd.f32 %v338, %v435
      %v437 = vpop.f32.mrb[0].mxu0
      %v438 = vadd.f32 %v343, %v437
      %v439 = vpop.f32.mrb[0].mxu0
      %v440 = vadd.f32 %v343, %v439
      %441 = vdwg.mxu0
      %442 = vmatprep.subr.bf16.mxu0 0
      %443 = vmatpush1.bf16.msra.mxu0 %v265
      %444 = vmatprep.subr.bf16.mxu0 0
      %445 = vmatpush1.bf16.msra.mxu0 %v277
      %446 = vmatprep.subr.bf16.mxu0 0
      %447 = vmatpush1.bf16.msra.mxu0 %v289
      %448 = vmatprep.subr.bf16.mxu0 0
      %449 = vmatpush1.bf16.msra.mxu0 %v301
      %450 = vmatprep.subr.bf16.mxu0 0
      %451 = vmatpush1.bf16.msra.mxu0 %v377
      %452 = vmatprep.subr.bf16.mxu0 0
      %453 = vmatpush1.bf16.msra.mxu0 0
      %454 = vmatprep.subr.bf16.mxu0 0
      %455 = vmatpush1.bf16.msra.mxu0 0
      %456 = vmatprep.subr.bf16.mxu0 0
      %457 = vmatpush1.bf16.msra.mxu0 0
      %458 = vmatprep.subr.bf16.mxu0 0
      %459 = vmatpush1.bf16.msra.mxu0 0
      %460 = vmatprep.subr.bf16.mxu0 0
      %461 = vmatpush1.bf16.msra.mxu0 0
      %462 = vmatprep.subr.bf16.mxu0 0
      %463 = vmatpush1.bf16.msra.mxu0 0
      %464 = vmatprep.subr.bf16.mxu0 0
      %465 = vmatpush1.bf16.msra.mxu0 0
      %466 = vmatprep.subr.bf16.mxu0 0
      %467 = vmatpush1.bf16.msra.mxu0 0
      %468 = vmatprep.subr.bf16.mxu0 0
      %469 = vmatpush1.bf16.msra.mxu0 0
      %470 = vmatprep.subr.bf16.mxu0 0
      %471 = vmatpush1.bf16.msra.mxu0 0
      %472 = vmatprep.subr.bf16.mxu0 0
      %473 = vmatpush1.bf16.msra.mxu0 0
      %474 = vmatprep.mubr.bf16.mxu0 0
      %475 = vmatmul.mubr.bf16.gmra.mrb[0].mxu0 %v362
      %v476 = vpop.f32.mrb[0].mxu0
      %v477 = vadd.f32 %v318, %v476
      %v478 = vpop.f32.mrb[0].mxu0
      %v479 = vpop.f32.mrb[0].mxu0
      %v480 = vadd.f32 %v323, %v479
      %v481 = vpop.f32.mrb[0].mxu0
      %482 = vmatprep.mubr.bf16.mxu0 0
      %483 = vmatmul.mubr.bf16.gmra.mrb[0].mxu0 %v365
      %v484 = vpop.f32.mrb[0].mxu0
      %v485 = vadd.f32 %v328, %v484
      %v486 = vpop.f32.mrb[0].mxu0
      %v487 = vpop.f32.mrb[0].mxu0
      %v488 = vadd.f32 %v333, %v487
      %v489 = vpop.f32.mrb[0].mxu0
      %490 = vmatprep.mubr.bf16.mxu0 0
      %491 = vmatmul.mubr.bf16.gmra.mrb[0].mxu0 %v368
      %v492 = vpop.f32.mrb[0].mxu0
      %v493 = vadd.f32 %v338, %v492
      %v494 = vpop.f32.mrb[0].mxu0
      %v495 = vpop.f32.mrb[0].mxu0
      %v496 = vadd.f32 %v343, %v495
      %v497 = vpop.f32.mrb[0].mxu0
      %498 = vdwg.mxu0
      %v499 = vsel %vm254, %v428, -inf
      %v500 = vrot.slane %v499, 4
      %v501 = vmax.f32 %v499, %v500
      %v502 = vrot.slane %v501, 2
      %v503 = vmax.f32 %v501, %v502
      %v504 = vrot.slane %v503, 1
      %v505 = vmax.f32 %v503, %v504
      %v506 = vsel %vm254, %v430, -inf
      %v507 = vrot.slane %v506, 4
      %v508 = vmax.f32 %v506, %v507
      %v509 = vrot.slane %v508, 2
      %v510 = vmax.f32 %v508, %v509
      %v511 = vrot.slane %v510, 1
      %v512 = vmax.f32 %v510, %v511
      %vm513 = vcmask 257024
      %v514 = vsel %vm513, %v488, -inf
      %v515 = vrot.slane %v514, 4
      %v516 = vmax.f32 %v514, %v515
      %v517 = vrot.slane %v516, 2
      %v518 = vmax.f32 %v516, %v517
      %v519 = vrot.slane %v518, 1
      %v520 = vmax.f32 %v518, %v519
      %v521 = vsub.f32 %v428, %v505
      %v522 = vsub.f32 %v430, %v512
      %v523 = vsub.f32 %v488, %v520
      %v524 = vmul.f32 %v521, 1.442695
      %v525 = vpow.pop %v524
      %v526 = vmul.f32 %v522, 1.442695
      %v527 = vpow.pop %v526
      %v528 = vmul.f32 %v523, 1.442695
      %v529 = vpow.pop %v528
      %v530 = vsel %vm254, %v525, 0.0
      %v531 = vrot.slane %v530, 4
      %v532 = vadd.f32 %v530, %v531
      %v533 = vrot.slane %v532, 2
      %v534 = vadd.f32 %v532, %v533
      %v535 = vrot.slane %v534, 1
      %v536 = vadd.f32 %v534, %v535
      %v537 = vsel %vm254, %v527, 0.0
      %v538 = vrot.slane %v537, 4
      %v539 = vadd.f32 %v537, %v538
      %v540 = vrot.slane %v539, 2
      %v541 = vadd.f32 %v539, %v540
      %v542 = vrot.slane %v541, 1
      %v543 = vadd.f32 %v541, %v542
      %v544 = vsel %vm513, %v529, 0.0
      %v545 = vrot.slane %v544, 4
      %v546 = vadd.f32 %v544, %v545
      %v547 = vrot.slane %v546, 2
      %v548 = vadd.f32 %v546, %v547
      %v549 = vrot.slane %v548, 1
      %v550 = vadd.f32 %v548, %v549
      %v551 = vrcp.pop %v536
      %v552 = vrcp.pop %v543
      %v553 = vrcp.pop %v550
      %v554 = vmul.f32 %v525, %v551
      %v555 = vmul.f32 %v527, %v552
      %v556 = vmul.f32 %v529, %v553
      %vm557 = vcmask 1047556
      %v558 = vsel %vm557, %v428, -inf
      %v559 = vrot.slane %v558, 4
      %v560 = vmax.f32 %v558, %v559
      %v561 = vrot.slane %v560, 2
      %v562 = vmax.f32 %v560, %v561
      %v563 = vrot.slane %v562, 1
      %v564 = vmax.f32 %v562, %v563
      %v565 = vsel %vm557, %v430, -inf
      %v566 = vrot.slane %v565, 4
      %v567 = vmax.f32 %v565, %v566
      %v568 = vrot.slane %v567, 2
      %v569 = vmax.f32 %v567, %v568
      %v570 = vrot.slane %v569, 1
      %v571 = vmax.f32 %v569, %v570
      %vm572 = vcmask 261124
      %v573 = vsel %vm572, %v488, -inf
      %v574 = vrot.slane %v573, 4
      %v575 = vmax.f32 %v573, %v574
      %v576 = vrot.slane %v575, 2
      %v577 = vmax.f32 %v575, %v576
      %v578 = vrot.slane %v577, 1
      %v579 = vmax.f32 %v577, %v578
      %v580 = vsub.f32 %v428, %v564
      %v581 = vsub.f32 %v430, %v571
      %v582 = vsub.f32 %v488, %v579
      %v583 = vmul.f32 %v580, 1.442695
      %v584 = vpow.pop %v583
      %v585 = vmul.f32 %v581, 1.442695
      %v586 = vpow.pop %v585
      %v587 = vmul.f32 %v582, 1.442695
      %v588 = vpow.pop %v587
      %v592 = vrot.slane %v584, 4
      %v593 = vrot.slane %v586, 4
      %v594 = vrot.slane %v588, 4
      %v598 = vsel %vm254, %v592, 0.0
      %v599 = vrot.slane %v598, 4
      %v600 = vadd.f32 %v598, %v599
      %v601 = vrot.slane %v600, 2
      %v602 = vadd.f32 %v600, %v601
      %v603 = vrot.slane %v602, 1
      %v604 = vadd.f32 %v602, %v603
      %v605 = vsel %vm254, %v593, 0.0
      %v606 = vrot.slane %v605, 4
      %v607 = vadd.f32 %v605, %v606
      %v608 = vrot.slane %v607, 2
      %v609 = vadd.f32 %v607, %v608
      %v610 = vrot.slane %v609, 1
      %v611 = vadd.f32 %v609, %v610
      %v612 = vsel %vm513, %v594, 0.0
      %v613 = vrot.slane %v612, 4
      %v614 = vadd.f32 %v612, %v613
      %v615 = vrot.slane %v614, 2
      %v616 = vadd.f32 %v614, %v615
      %v617 = vrot.slane %v616, 1
      %v618 = vadd.f32 %v616, %v617
      %v619 = vrcp.pop %v604
      %v620 = vrcp.pop %v611
      %v621 = vrcp.pop %v618
      %v622 = vmul.f32 %v584, %v619
      %v623 = vmul.f32 %v586, %v620
      %v624 = vmul.f32 %v588, %v621
      %v625 = vsel %vm254, %v434, -inf
      %v626 = vrot.slane %v625, 4
      %v627 = vmax.f32 %v625, %v626
      %v628 = vrot.slane %v627, 2
      %v629 = vmax.f32 %v627, %v628
      %v630 = vrot.slane %v629, 1
      %v631 = vmax.f32 %v629, %v630
      %v632 = vsel %vm254, %v436, -inf
      %v633 = vrot.slane %v632, 4
      %v634 = vmax.f32 %v632, %v633
      %v635 = vrot.slane %v634, 2
      %v636 = vmax.f32 %v634, %v635
      %v637 = vrot.slane %v636, 1
      %v638 = vmax.f32 %v636, %v637
      %v639 = vsel %vm513, %v493, -inf
      %v640 = vrot.slane %v639, 4
      %v641 = vmax.f32 %v639, %v640
      %v642 = vrot.slane %v641, 2
      %v643 = vmax.f32 %v641, %v642
      %v644 = vrot.slane %v643, 1
      %v645 = vmax.f32 %v643, %v644
      %v646 = vsub.f32 %v434, %v631
      %v647 = vsub.f32 %v436, %v638
      %v648 = vsub.f32 %v493, %v645
      %v649 = vmul.f32 %v646, 1.442695
      %v650 = vpow.pop %v649
      %v651 = vmul.f32 %v647, 1.442695
      %v652 = vpow.pop %v651
      %v653 = vmul.f32 %v648, 1.442695
      %v654 = vpow.pop %v653
      %v655 = vsel %vm254, %v650, 0.0
      %v656 = vrot.slane %v655, 4
      %v657 = vadd.f32 %v655, %v656
      %v658 = vrot.slane %v657, 2
      %v659 = vadd.f32 %v657, %v658
      %v660 = vrot.slane %v659, 1
      %v661 = vadd.f32 %v659, %v660
      %v662 = vsel %vm254, %v652, 0.0
      %v663 = vrot.slane %v662, 4
      %v664 = vadd.f32 %v662, %v663
      %v665 = vrot.slane %v664, 2
      %v666 = vadd.f32 %v664, %v665
      %v667 = vrot.slane %v666, 1
      %v668 = vadd.f32 %v666, %v667
      %v669 = vsel %vm513, %v654, 0.0
      %v670 = vrot.slane %v669, 4
      %v671 = vadd.f32 %v669, %v670
      %v672 = vrot.slane %v671, 2
      %v673 = vadd.f32 %v671, %v672
      %v674 = vrot.slane %v673, 1
      %v675 = vadd.f32 %v673, %v674
      %v676 = vrcp.pop %v661
      %v677 = vrcp.pop %v668
      %v678 = vrcp.pop %v675
      %v679 = vmul.f32 %v650, %v676
      %v680 = vmul.f32 %v652, %v677
      %v681 = vmul.f32 %v654, %v678
      %v682 = vsel %vm557, %v434, -inf
      %v683 = vrot.slane %v682, 4
      %v684 = vmax.f32 %v682, %v683
      %v685 = vrot.slane %v684, 2
      %v686 = vmax.f32 %v684, %v685
      %v687 = vrot.slane %v686, 1
      %v688 = vmax.f32 %v686, %v687
      %v689 = vsel %vm557, %v436, -inf
      %v690 = vrot.slane %v689, 4
      %v691 = vmax.f32 %v689, %v690
      %v692 = vrot.slane %v691, 2
      %v693 = vmax.f32 %v691, %v692
      %v694 = vrot.slane %v693, 1
      %v695 = vmax.f32 %v693, %v694
      %v696 = vsel %vm572, %v493, -inf
      %v697 = vrot.slane %v696, 4
      %v698 = vmax.f32 %v696, %v697
      %v699 = vrot.slane %v698, 2
      %v700 = vmax.f32 %v698, %v699
      %v701 = vrot.slane %v700, 1
      %v702 = vmax.f32 %v700, %v701
      %v703 = vsub.f32 %v434, %v688
      %v704 = vsub.f32 %v436, %v695
      %v705 = vsub.f32 %v493, %v702
      %v706 = vmul.f32 %v703, 1.442695
      %v707 = vpow.pop %v706
      %v708 = vmul.f32 %v704, 1.442695
      %v709 = vpow.pop %v708
      %v710 = vmul.f32 %v705, 1.442695
      %v711 = vpow.pop %v710
      %v715 = vrot.slane %v707, 4
      %v716 = vrot.slane %v709, 4
      %v717 = vrot.slane %v711, 4
      %v721 = vsel %vm254, %v715, 0.0
      %v722 = vrot.slane %v721, 4
      %v723 = vadd.f32 %v721, %v722
      %v724 = vrot.slane %v723, 2
      %v725 = vadd.f32 %v723, %v724
      %v726 = vrot.slane %v725, 1
      %v727 = vadd.f32 %v725, %v726
      %v728 = vsel %vm254, %v716, 0.0
      %v729 = vrot.slane %v728, 4
      %v730 = vadd.f32 %v728, %v729
      %v731 = vrot.slane %v730, 2
      %v732 = vadd.f32 %v730, %v731
      %v733 = vrot.slane %v732, 1
      %v734 = vadd.f32 %v732, %v733
      %v735 = vsel %vm513, %v717, 0.0
      %v736 = vrot.slane %v735, 4
      %v737 = vadd.f32 %v735, %v736
      %v738 = vrot.slane %v737, 2
      %v739 = vadd.f32 %v737, %v738
      %v740 = vrot.slane %v739, 1
      %v741 = vadd.f32 %v739, %v740
      %v742 = vrcp.pop %v727
      %v743 = vrcp.pop %v734
      %v744 = vrcp.pop %v741
      %v745 = vmul.f32 %v707, %v742
      %v746 = vmul.f32 %v709, %v743
      %v747 = vmul.f32 %v711, %v744
      %v748 = vsel %vm254, %v438, -inf
      %v749 = vrot.slane %v748, 4
      %v750 = vmax.f32 %v748, %v749
      %v751 = vrot.slane %v750, 2
      %v752 = vmax.f32 %v750, %v751
      %v753 = vrot.slane %v752, 1
      %v754 = vmax.f32 %v752, %v753
      %v755 = vsel %vm254, %v440, -inf
      %v756 = vrot.slane %v755, 4
      %v757 = vmax.f32 %v755, %v756
      %v758 = vrot.slane %v757, 2
      %v759 = vmax.f32 %v757, %v758
      %v760 = vrot.slane %v759, 1
      %v761 = vmax.f32 %v759, %v760
      %v762 = vsel %vm513, %v496, -inf
      %v763 = vrot.slane %v762, 4
      %v764 = vmax.f32 %v762, %v763
      %v765 = vrot.slane %v764, 2
      %v766 = vmax.f32 %v764, %v765
      %v767 = vrot.slane %v766, 1
      %v768 = vmax.f32 %v766, %v767
      %v769 = vsub.f32 %v438, %v754
      %v770 = vsub.f32 %v440, %v761
      %v771 = vsub.f32 %v496, %v768
      %v772 = vmul.f32 %v769, 1.442695
      %v773 = vpow.pop %v772
      %v774 = vmul.f32 %v770, 1.442695
      %v775 = vpow.pop %v774
      %v776 = vmul.f32 %v771, 1.442695
      %v777 = vpow.pop %v776
      %v778 = vsel %vm254, %v773, 0.0
      %v779 = vrot.slane %v778, 4
      %v780 = vadd.f32 %v778, %v779
      %v781 = vrot.slane %v780, 2
      %v782 = vadd.f32 %v780, %v781
      %v783 = vrot.slane %v782, 1
      %v784 = vadd.f32 %v782, %v783
      %v785 = vsel %vm254, %v775, 0.0
      %v786 = vrot.slane %v785, 4
      %v787 = vadd.f32 %v785, %v786
      %v788 = vrot.slane %v787, 2
      %v789 = vadd.f32 %v787, %v788
      %v790 = vrot.slane %v789, 1
      %v791 = vadd.f32 %v789, %v790
      %v792 = vsel %vm513, %v777, 0.0
      %v793 = vrot.slane %v792, 4
      %v794 = vadd.f32 %v792, %v793
      %v795 = vrot.slane %v794, 2
      %v796 = vadd.f32 %v794, %v795
      %v797 = vrot.slane %v796, 1
      %v798 = vadd.f32 %v796, %v797
      %v799 = vrcp.pop %v784
      %v800 = vrcp.pop %v791
      %v801 = vrcp.pop %v798
      %v802 = vmul.f32 %v773, %v799
      %v803 = vmul.f32 %v775, %v800
      %v804 = vmul.f32 %v777, %v801
      %v805 = vsel %vm557, %v438, -inf
      %v806 = vrot.slane %v805, 4
      %v807 = vmax.f32 %v805, %v806
      %v808 = vrot.slane %v807, 2
      %v809 = vmax.f32 %v807, %v808
      %v810 = vrot.slane %v809, 1
      %v811 = vmax.f32 %v809, %v810
      %v812 = vsel %vm557, %v440, -inf
      %v813 = vrot.slane %v812, 4
      %v814 = vmax.f32 %v812, %v813
      %v815 = vrot.slane %v814, 2
      %v816 = vmax.f32 %v814, %v815
      %v817 = vrot.slane %v816, 1
      %v818 = vmax.f32 %v816, %v817
      %v819 = vsel %vm572, %v496, -inf
      %v820 = vrot.slane %v819, 4
      %v821 = vmax.f32 %v819, %v820
      %v822 = vrot.slane %v821, 2
      %v823 = vmax.f32 %v821, %v822
      %v824 = vrot.slane %v823, 1
      %v825 = vmax.f32 %v823, %v824
      %v826 = vsub.f32 %v438, %v811
      %v827 = vsub.f32 %v440, %v818
      %v828 = vsub.f32 %v496, %v825
      %v829 = vmul.f32 %v826, 1.442695
      %v830 = vpow.pop %v829
      %v831 = vmul.f32 %v827, 1.442695
      %v832 = vpow.pop %v831
      %v833 = vmul.f32 %v828, 1.442695
      %v834 = vpow.pop %v833
      %v838 = vrot.slane %v830, 4
      %v839 = vrot.slane %v832, 4
      %v840 = vrot.slane %v834, 4
      %v844 = vsel %vm254, %v838, 0.0
      %v845 = vrot.slane %v844, 4
      %v846 = vadd.f32 %v844, %v845
      %v847 = vrot.slane %v846, 2
      %v848 = vadd.f32 %v846, %v847
      %v849 = vrot.slane %v848, 1
      %v850 = vadd.f32 %v848, %v849
      %v851 = vsel %vm254, %v839, 0.0
      %v852 = vrot.slane %v851, 4
      %v853 = vadd.f32 %v851, %v852
      %v854 = vrot.slane %v853, 2
      %v855 = vadd.f32 %v853, %v854
      %v856 = vrot.slane %v855, 1
      %v857 = vadd.f32 %v855, %v856
      %v858 = vsel %vm513, %v840, 0.0
      %v859 = vrot.slane %v858, 4
      %v860 = vadd.f32 %v858, %v859
      %v861 = vrot.slane %v860, 2
      %v862 = vadd.f32 %v860, %v861
      %v863 = vrot.slane %v862, 1
      %v864 = vadd.f32 %v862, %v863
      %v865 = vrcp.pop %v850
      %v866 = vrcp.pop %v857
      %v867 = vrcp.pop %v864
      %v868 = vmul.f32 %v830, %v865
      %v869 = vmul.f32 %v832, %v866
      %v870 = vmul.f32 %v834, %v867
      %v871 = vsel %vm254, %v554, %v622
      %v872 = vsel %vm254, %v555, %v623
      %v873 = vsel %vm254, %v556, %v624
      %v874 = vsel %vm254, %v679, %v745
      %v875 = vsel %vm254, %v680, %v746
      %v876 = vsel %vm254, %v681, %v747
      %v877 = vsel %vm254, %v802, %v868
      %v878 = vsel %vm254, %v803, %v869
      %v879 = vsel %vm254, %v804, %v870
      %880 = vst [vmem:[%s170] sm:$0xff] %v414
      %881 = vst [vmem:[%s170 + $0x8] sm:$0xff] %v416
      %vm882 = vcmask 261120
      %883 = vst.msk [vmem:[%s170 + $0x10] sm:$0xff] %vm882, %v477
      %884 = vst [vmem:[%s170 + $0x18] sm:$0xff] %v418
      %885 = vst [vmem:[%s170 + $0x20] sm:$0xff] %v420
      %886 = vst.msk [vmem:[%s170 + $0x28] sm:$0xff] %vm882, %v480
      %887 = vst [vmem:[%s170 + $0x30] sm:$0xff] %v424
      %888 = vst [vmem:[%s170 + $0x38] sm:$0xff] %v426
      %889 = vst.msk [vmem:[%s170 + $0x40] sm:$0xff] %vm882, %v485
      %890 = vst [vmem:[%s170 + $0x48] sm:$0xff] %v871
      %891 = vst [vmem:[%s170 + $0x50] sm:$0xff] %v872
      %892 = vst.msk [vmem:[%s170 + $0x58] sm:$0xff] %vm882, %v873
      %893 = vst [vmem:[%s170 + $0x60] sm:$0xff] %v874
      %894 = vst [vmem:[%s170 + $0x68] sm:$0xff] %v875
      %895 = vst.msk [vmem:[%s170 + $0x70] sm:$0xff] %vm882, %v876
      %896 = vst [vmem:[%s170 + $0x78] sm:$0xff] %v877
      %897 = vst [vmem:[%s170 + $0x80] sm:$0xff] %v878
      %898 = vst.msk [vmem:[%s170 + $0x88] sm:$0xff] %vm882, %v879
      %p899 = scmp.lt.s32.totalorder %s14, 1
      %s900 = scalar_select %p899, %s14, 1
      %s901 = smul.addr %s900, 18
      %s902 = smul.addr %s901, 8
      %s903 = scalar_lea.vmem %s3, %s902
      // Predicated region
      $region33: #{rfbnet_forward.18} parent=31 // pred_check
        %p904 = pneg %p100
      $region34: #{rfbnet_forward.18} parent=31 // pred_check_branch
        %906 = sbr.rel (%p904) target = $region36
      $region35: #{rfbnet_forward.18} parent=31 // pred_region
        _
      $region36: #{rfbnet_forward.18} parent=31 // pred_fallthru
        _
    $region32: #{rfbnet_forward.18} parent=5 // pred_fallthru
      _
    %p907 = scmp.le.s32.totalorder 2, %s9
    // Predicated region
    $region37: #{rfbnet_forward.18} parent=5 // pred_check
      %p908 = pneg %p907
    $region38: #{rfbnet_forward.18} parent=5 // pred_check_branch
      %910 = sbr.rel (%p908) target = $region40
    $region39: #{rfbnet_forward.18} parent=5 // pred_region
      %s911 = ssub.s32 %s9, 2
      // Predicated region
      $region41: #{rfbnet_forward.18} parent=39 // pred_check
        %p912 = pneg %p106
      $region42: #{rfbnet_forward.18} parent=39 // pred_check_branch
        %914 = sbr.rel (%p912) target = $region44
      $region43: #{rfbnet_forward.18} parent=39 // pred_region
        %p915 = scmp.lt.s32.totalorder %s15, 1
        %s916 = scalar_select %p915, %s15, 1
        %s917 = smul.addr %s916, 18
        %s918 = smul.addr %s917, 8
        %s919 = scalar_lea.vmem %s3, %s918
      $region44: #{rfbnet_forward.18} parent=39 // pred_fallthru
        _
    $region40: #{rfbnet_forward.18} parent=5 // pred_fallthru
      _
  $region6: #{rfbnet_forward.18} parent=0 // loop_footer
    %s13 = sadd.s32 1, %s9
  $region7: #{rfbnet_forward.18} parent=0 // loop_footer_branch
    %8 = sbr.rel target = $region3
  $region8: #{rfbnet_forward.18} parent=0 // loop_exit
    _

// kernel: rfbnet_forward.14
$region0: #{rfbnet_forward.14}
  #allocation0 [shape = 'u32[]', space=smem, size = 0x4, offset = 0x4, fixed_abs, tag = 'smem constant byte address 0x4 - core index']
  #allocation1 [shape = 'u32[144,128]{1,0:T(1,128)}', space=vmem, size = 0x12000, scoped, tag = 'internal scratch']
  %s0 = inlined_call_operand.vmem [shape: bf16[2,16,102], index: 0, kind: input, shape index: {}]
  %s1 = inlined_call_operand.vmem [shape: bf16[8,144], index: 1, kind: input, shape index: {}]
  %s2 = inlined_call_operand.vmem [shape: f32[8,1], index: 2, kind: input, shape index: {}]
  %s3 = inlined_call_operand.vmem [shape: f32[2,8,80], index: 3, kind: output, shape index: {}]
  %s4 = sld [smem:[#allocation0]]
  $region45: #{rfbnet_forward.14} parent=0
    _
  %s6 = ssub.s32 1, %s4
  %s7 = scalar_select 0, %s6, %s4
  loop: start=0, step=1, limit=4
  $region2: #{rfbnet_forward.14} parent=0 // loop_pre_header
    _
  $region3: #{rfbnet_forward.14} parent=0 // loop_header
    %s9 = sphi 0, %s13
    %p10 = scmp.ge.s32.totalorder %s9, 4
    %s19 = sphi 0, %s21
    %s22 = sphi 0, %s19
    %s23 = sphi 0, %s22
    %s39 = sphi 0, %s23
    %s43 = sphi 0, %s43
    %s45 = sphi 0, %s43
    %s46 = sphi 0, %s45
    %s60 = sphi 0, %s46
    %s64 = sphi 0, %s64
    %s66 = sphi 0, %s64
    %s67 = sphi 0, %s66
    %s81 = sphi 0, %s67
    %s87 = sphi 0, %s89
    %s90 = sphi 0, %s87
    %s91 = sphi 0, %s90
    %s107 = sphi 0, %s91
  $region4: #{rfbnet_forward.14} parent=0 // loop_header_branch
    %12 = sbr.rel (%p10) target = $region8
  $region5: #{rfbnet_forward.14} parent=0 // loop_body
    %s14 = ssub.s32 %s9, 1
    %s15 = ssub.s32 %s9, 2
    %s16 = sadd.s32 %s9, 1
    %s17 = ssub.s32 %s9, %s16
    %p18 = scmp.eq.s32.totalorder %s17, 0
    %s20 = sadd.s32 %s19, 1
    %s21 = scalar_select %p18, %s19, %s20
    %p24 = pneg %p18
    %p25 = scmp.eq.s32.totalorder %s9, 1
    %p26 = por %p24, %p25
    %p27 = scmp.ne.s32.totalorder %s19, %s22
    %p28 = scmp.eq.s32.totalorder %s9, 0
    %p29 = por %p27, %p28
    %p30 = scmp.ne.s32.totalorder %s19, %s22
    %p31 = scmp.eq.s32.totalorder %s14, 1
    %p32 = por %p30, %p31
    %p33 = scmp.ne.s32.totalorder %s22, %s23
    %p34 = scmp.eq.s32.totalorder %s14, 0
    %p35 = por %p33, %p34
    %p36 = scmp.ne.s32.totalorder %s22, %s23
    %p37 = scmp.eq.s32.totalorder %s15, 1
    %p38 = por %p36, %p37
    %p40 = scmp.ne.s32.totalorder %s23, %s39
    %p41 = scmp.eq.s32.totalorder %s15, 0
    %p42 = por %p40, %p41
    %s44 = sadd.s32 %s43, 1
    %p47 = scmp.eq.s32.totalorder %s9, 1
    %p48 = scmp.ne.s32.totalorder %s43, %s45
    %p49 = scmp.eq.s32.totalorder %s9, 0
    %p50 = por %p48, %p49
    %p51 = scmp.ne.s32.totalorder %s43, %s45
    %p52 = scmp.eq.s32.totalorder %s14, 1
    %p53 = por %p51, %p52
    %p54 = scmp.ne.s32.totalorder %s45, %s46
    %p55 = scmp.eq.s32.totalorder %s14, 0
    %p56 = por %p54, %p55
    %p57 = scmp.ne.s32.totalorder %s45, %s46
    %p58 = scmp.eq.s32.totalorder %s15, 1
    %p59 = por %p57, %p58
    %p61 = scmp.ne.s32.totalorder %s46, %s60
    %p62 = scmp.eq.s32.totalorder %s15, 0
    %p63 = por %p61, %p62
    %s65 = sadd.s32 %s64, 1
    %p68 = scmp.eq.s32.totalorder %s9, 1
    %p69 = scmp.ne.s32.totalorder %s64, %s66
    %p70 = scmp.eq.s32.totalorder %s9, 0
    %p71 = por %p69, %p70
    %p72 = scmp.ne.s32.totalorder %s64, %s66
    %p73 = scmp.eq.s32.totalorder %s14, 1
    %p74 = por %p72, %p73
    %p75 = scmp.ne.s32.totalorder %s66, %s67
    %p76 = scmp.eq.s32.totalorder %s14, 0
    %p77 = por %p75, %p76
    %p78 = scmp.ne.s32.totalorder %s66, %s67
    %p79 = scmp.eq.s32.totalorder %s15, 1
    %p80 = por %p78, %p79
    %p82 = scmp.ne.s32.totalorder %s67, %s81
    %p83 = scmp.eq.s32.totalorder %s15, 0
    %p84 = por %p82, %p83
    %s85 = ssub.s32 %s9, %s16
    %p86 = scmp.eq.s32.totalorder %s85, 0
    %s88 = sadd.s32 %s87, 1
    %s89 = scalar_select %p86, %s87, %s88
    %p92 = pneg %p86
    %p93 = scmp.eq.s32.totalorder %s9, 1
    %p94 = por %p92, %p93
    %p95 = scmp.ne.s32.totalorder %s87, %s90
    %p96 = scmp.eq.s32.totalorder %s9, 0
    %p97 = por %p95, %p96
    %p98 = scmp.ne.s32.totalorder %s87, %s90
    %p99 = scmp.eq.s32.totalorder %s14, 1
    %p100 = por %p98, %p99
    %p101 = scmp.ne.s32.totalorder %s90, %s91
    %p102 = scmp.eq.s32.totalorder %s14, 0
    %p103 = por %p101, %p102
    %p104 = scmp.ne.s32.totalorder %s90, %s91
    %p105 = scmp.eq.s32.totalorder %s15, 1
    %p106 = por %p104, %p105
    %p108 = scmp.ne.s32.totalorder %s91, %s107
    %p109 = scmp.eq.s32.totalorder %s15, 0
    %p110 = por %p108, %p109
    %p111 = scmp.le.s32.totalorder 1, %s9
    %p112 = scmp.lt.s32.totalorder %s9, 3
    %p113 = pnand %p111, %p112
    %p114 = pneg %p113
    // Predicated region
    $region9: #{rfbnet_forward.14} parent=5 // pred_check
      _
    $region10: #{rfbnet_forward.14} parent=5 // pred_check_branch
      %116 = sbr.rel (%p113) target = $region12
    $region11: #{rfbnet_forward.14} parent=5 // pred_region
      %s117 = ssub.s32 %s9, 1
      // Predicated region
      $region13: #{rfbnet_forward.14} parent=11 // pred_check
        %p118 = pneg %p56
      $region14: #{rfbnet_forward.14} parent=11 // pred_check_branch
        %120 = sbr.rel (%p118) target = $region16
      $region15: #{rfbnet_forward.14} parent=11 // pred_region
        _
      $region16: #{rfbnet_forward.14} parent=11 // pred_fallthru
        _
      // Predicated region
      $region17: #{rfbnet_forward.14} parent=11 // pred_check
        %p121 = pneg %p77
      $region18: #{rfbnet_forward.14} parent=11 // pred_check_branch
        %123 = sbr.rel (%p121) target = $region20
      $region19: #{rfbnet_forward.14} parent=11 // pred_region
        _
      $region20: #{rfbnet_forward.14} parent=11 // pred_fallthru
        _
    $region12: #{rfbnet_forward.14} parent=5 // pred_fallthru
      _
    %p124 = scmp.lt.s32.totalorder %s9, 2
    // Predicated region
    $region21: #{rfbnet_forward.14} parent=5 // pred_check
      %p125 = pneg %p124
    $region22: #{rfbnet_forward.14} parent=5 // pred_check_branch
      %127 = sbr.rel (%p125) target = $region24
    $region23: #{rfbnet_forward.14} parent=5 // pred_region
      // Predicated region
      $region25: #{rfbnet_forward.14} parent=23 // pred_check
        %p128 = pneg %p29
      $region26: #{rfbnet_forward.14} parent=23 // pred_check_branch
        %130 = sbr.rel (%p128) target = $region28
      $region27: #{rfbnet_forward.14} parent=23 // pred_region
        %p131 = scmp.lt.s32.totalorder %s9, 1
        %s132 = scalar_select %p131, %s9, 1
        %s133 = smul.addr %s132, 2
        %s134 = smul.addr %s133, 4
        %s135 = scalar_lea.vmem %s0, %s134
      $region28: #{rfbnet_forward.14} parent=23 // pred_fallthru
        _
    $region24: #{rfbnet_forward.14} parent=5 // pred_fallthru
      _
    %p136 = scmp.le.s32.totalorder 1, %s9
    %p137 = scmp.lt.s32.totalorder %s9, 3
    %p138 = pnand %p136, %p137
    %p139 = pneg %p138
    // Predicated region
    $region29: #{rfbnet_forward.14} parent=5 // pred_check
      _
    $region30: #{rfbnet_forward.14} parent=5 // pred_check_branch
      %141 = sbr.rel (%p138) target = $region32
    $region31: #{rfbnet_forward.14} parent=5 // pred_region
      %s142 = ssub.s32 %s9, 1
      %p143 = scmp.lt.s32.totalorder %s14, 1
      %s144 = scalar_select %p143, %s14, 1
      %s145 = smul.addr %s144, 2
      %s146 = smul.addr %s145, 4
      %s147 = scalar_lea.vmem %s0, %s146
      %p148 = pneg %p35
      %p149 = pneg %p32
      %p150 = pneg %p56
      %p151 = pneg %p53
      %p152 = pneg %p77
      %p153 = pneg %p74
      %p154 = pneg %p103
      %p155 = pneg %p100
      %p156 = scmp.lt.s32.totalorder %s14, 1
      %s157 = scalar_select %p156, %s14, 1
      %s158 = smul.addr %s157, 8
      %s159 = scalar_lea.vmem %s3, %s158
      %p160 = scmp.lt.s32.totalorder %s14, 1
      %s161 = scalar_select %p160, %s14, 1
      %s162 = smul.addr %s161, 2
      %s163 = smul.addr %s162, 4
      %s164 = scalar_lea.vmem %s0, %s163
      %p165 = scmp.lt.s32.totalorder %s14, 1
      %s166 = scalar_select %p165, %s14, 1
      %s167 = smul.addr %s166, 8
      %s168 = scalar_lea.vmem %s3, %s167
      %v170 = vld [vmem:[%s164] sm:$0xf]
      %v171 = vld [vmem:[%s164 + $0x4] sm:$0xf]
      %v174 = vunpack.c.l.b16 %v170
      %v175 = vunpack.c.l.b16 %v171
      %v176 = vpack.c.b16 %v175, %v174
      %178 = vrot.lane.b32.xlu0 %v176, 127
      %v179 = vpop.permute.xlu0 %178
      %181 = vrot.lane.b32.xlu0 %v176, 126
      %v182 = vpop.permute.xlu0 %181
      %184 = vrot.lane.b32.xlu0 %v176, 118
      %v185 = vpop.permute.xlu0 %184
      %187 = vrot.lane.b32.xlu0 %v176, 117
      %v188 = vpop.permute.xlu0 %187
      %190 = vrot.lane.b32.xlu0 %v176, 116
      %v191 = vpop.permute.xlu0 %190
      %193 = vrot.lane.b32.xlu0 %v176, 108
      %v194 = vpop.permute.xlu0 %193
      %196 = vrot.lane.b32.xlu0 %v176, 107
      %v197 = vpop.permute.xlu0 %196
      %199 = vrot.lane.b32.xlu0 %v176, 106
      %v200 = vpop.permute.xlu0 %199
      %v202 = vld [vmem:[%s1] sm:$0xff]
      %v203 = vld [vmem:[%s2] sm:$0xff]
      %205 = vset.pattern.permute.xlu0 0
      %206 = vperm.xlu0 %205, %v203
      %v207 = vpop.permute.xlu0 %206
      %v210 = vunpack.c.l.b16 %v202
      %v211 = vunpack.c.h.b16 %v202
      %v212 = vpack.c.b16 %v210, %v210
      %v213 = vpack.c.b16 %v211, %v211
      %vm215 = vcmask 130048
      %v217 = vsel %vm215, %v213, 0
      %219 = vmatprep.subr.bf16.mxu0 0
      %220 = vmatpush1.bf16.msra.mxu0 %v176
      %221 = vmatprep.subr.bf16.mxu0 0
      %222 = vmatpush1.bf16.msra.mxu0 %v179
      %223 = vmatprep.subr.bf16.mxu0 0
      %224 = vmatpush1.bf16.msra.mxu0 %v182
      %225 = vmatprep.subr.bf16.mxu0 0
      %226 = vmatpush1.bf16.msra.mxu0 %v185
      %227 = vmatprep.subr.bf16.mxu0 0
      %228 = vmatpush1.bf16.msra.mxu0 %v188
      %229 = vmatprep.subr.bf16.mxu0 0
      %230 = vmatpush1.bf16.msra.mxu0 %v191
      %231 = vmatprep.subr.bf16.mxu0 0
      %232 = vmatpush1.bf16.msra.mxu0 %v194
      %233 = vmatprep.subr.bf16.mxu0 0
      %234 = vmatpush1.bf16.msra.mxu0 %v197
      %235 = vmatprep.subr.bf16.mxu0 0
      %236 = vmatpush1.bf16.msra.mxu0 %v200
      %237 = vmatprep.subr.bf16.mxu0 0
      %238 = vmatpush1.bf16.msra.mxu0 0
      %239 = vmatprep.subr.bf16.mxu0 0
      %240 = vmatpush1.bf16.msra.mxu0 0
      %241 = vmatprep.subr.bf16.mxu0 0
      %242 = vmatpush1.bf16.msra.mxu0 0
      %243 = vmatprep.subr.bf16.mxu0 0
      %244 = vmatpush1.bf16.msra.mxu0 0
      %245 = vmatprep.subr.bf16.mxu0 0
      %246 = vmatpush1.bf16.msra.mxu0 0
      %247 = vmatprep.subr.bf16.mxu0 0
      %248 = vmatpush1.bf16.msra.mxu0 0
      %249 = vmatprep.subr.bf16.mxu0 0
      %250 = vmatpush1.bf16.msra.mxu0 0
      %251 = vmatprep.mubr.bf16.mxu0 %v217
      %252 = vmatmul.mubr.bf16.gmra.mrb[0].mxu0 %v212
      %v253 = vpop.f32.mrb[0].mxu0
      %v254 = vadd.f32 %v207, %v253
      %v255 = vpop.f32.mrb[0].mxu0
      %v256 = vpop.f32.mrb[0].mxu0
      %v257 = vpop.f32.mrb[0].mxu0
      %258 = vdwg.mxu0
      %v259 = vmax.f32 %v254, 0.0
      %vm260 = vcmask 654336
      %261 = vst.msk [vmem:[%s168] sm:$0xff] %vm260, %v259
      %p262 = scmp.lt.s32.totalorder %s14, 1
      %s263 = scalar_select %p262, %s14, 1
      %s264 = smul.addr %s263, 8
      %s265 = scalar_lea.vmem %s3, %s264
      // Predicated region
      $region33: #{rfbnet_forward.14} parent=31 // pred_check
        %p266 = pneg %p100
      $region34: #{rfbnet_forward.14} parent=31 // pred_check_branch
        %268 = sbr.rel (%p266) target = $region36
      $region35: #{rfbnet_forward.14} parent=31 // pred_region
        _
      $region36: #{rfbnet_forward.14} parent=31 // pred_fallthru
        _
    $region32: #{rfbnet_forward.14} parent=5 // pred_fallthru
      _
    %p269 = scmp.le.s32.totalorder 2, %s9
    // Predicated region
    $region37: #{rfbnet_forward.14} parent=5 // pred_check
      %p270 = pneg %p269
    $region38: #{rfbnet_forward.14} parent=5 // pred_check_branch
      %272 = sbr.rel (%p270) target = $region40
    $region39: #{rfbnet_forward.14} parent=5 // pred_region
      %s273 = ssub.s32 %s9, 2
      // Predicated region
      $region41: #{rfbnet_forward.14} parent=39 // pred_check
        %p274 = pneg %p106
      $region42: #{rfbnet_forward.14} parent=39 // pred_check_branch
        %276 = sbr.rel (%p274) target = $region44
      $region43: #{rfbnet_forward.14} parent=39 // pred_region
        %p277 = scmp.lt.s32.totalorder %s15, 1
        %s278 = scalar_select %p277, %s15, 1
        %s279 = smul.addr %s278, 8
        %s280 = scalar_lea.vmem %s3, %s279
      $region44: #{rfbnet_forward.14} parent=39 // pred_fallthru
        _
    $region40: #{rfbnet_forward.14} parent=5 // pred_fallthru
      _
  $region6: #{rfbnet_forward.14} parent=0 // loop_footer
    %s13 = sadd.s32 1, %s9
  $region7: #{rfbnet_forward.14} parent=0 // loop_footer_branch
    %8 = sbr.rel target = $region3
  $region8: #{rfbnet_forward.14} parent=0 // loop_exit
    _

// kernel: rfbnet_forward.19
$region0: #{rfbnet_forward.19}
  #allocation0 [shape = 'u32[]', space=smem, size = 0x4, offset = 0x4, fixed_abs, tag = 'smem constant byte address 0x4 - core index']
  #allocation1 [shape = 'u32[144,128]{1,0:T(1,128)}', space=vmem, size = 0x12000, scoped, tag = 'internal scratch']
  %s0 = inlined_call_operand.vmem [shape: bf16[2,16,102], index: 0, kind: input, shape index: {}]
  %s1 = inlined_call_operand.vmem [shape: bf16[48,144], index: 1, kind: input, shape index: {}]
  %s2 = inlined_call_operand.vmem [shape: f32[48,1], index: 2, kind: input, shape index: {}]
  %s3 = inlined_call_operand.vmem [shape: f32[2,48,80], index: 3, kind: output, shape index: {}]
  %s4 = sld [smem:[#allocation0]]
  $region45: #{rfbnet_forward.19} parent=0
    _
  %s6 = ssub.s32 1, %s4
  %s7 = scalar_select 0, %s6, %s4
  loop: start=0, step=1, limit=4
  $region2: #{rfbnet_forward.19} parent=0 // loop_pre_header
    _
  $region3: #{rfbnet_forward.19} parent=0 // loop_header
    %s9 = sphi 0, %s13
    %p10 = scmp.ge.s32.totalorder %s9, 4
    %s19 = sphi 0, %s21
    %s22 = sphi 0, %s19
    %s23 = sphi 0, %s22
    %s39 = sphi 0, %s23
    %s43 = sphi 0, %s43
    %s45 = sphi 0, %s43
    %s46 = sphi 0, %s45
    %s60 = sphi 0, %s46
    %s64 = sphi 0, %s64
    %s66 = sphi 0, %s64
    %s67 = sphi 0, %s66
    %s81 = sphi 0, %s67
    %s87 = sphi 0, %s89
    %s90 = sphi 0, %s87
    %s91 = sphi 0, %s90
    %s107 = sphi 0, %s91
  $region4: #{rfbnet_forward.19} parent=0 // loop_header_branch
    %12 = sbr.rel (%p10) target = $region8
  $region5: #{rfbnet_forward.19} parent=0 // loop_body
    %s14 = ssub.s32 %s9, 1
    %s15 = ssub.s32 %s9, 2
    %s16 = sadd.s32 %s9, 1
    %s17 = ssub.s32 %s9, %s16
    %p18 = scmp.eq.s32.totalorder %s17, 0
    %s20 = sadd.s32 %s19, 1
    %s21 = scalar_select %p18, %s19, %s20
    %p24 = pneg %p18
    %p25 = scmp.eq.s32.totalorder %s9, 1
    %p26 = por %p24, %p25
    %p27 = scmp.ne.s32.totalorder %s19, %s22
    %p28 = scmp.eq.s32.totalorder %s9, 0
    %p29 = por %p27, %p28
    %p30 = scmp.ne.s32.totalorder %s19, %s22
    %p31 = scmp.eq.s32.totalorder %s14, 1
    %p32 = por %p30, %p31
    %p33 = scmp.ne.s32.totalorder %s22, %s23
    %p34 = scmp.eq.s32.totalorder %s14, 0
    %p35 = por %p33, %p34
    %p36 = scmp.ne.s32.totalorder %s22, %s23
    %p37 = scmp.eq.s32.totalorder %s15, 1
    %p38 = por %p36, %p37
    %p40 = scmp.ne.s32.totalorder %s23, %s39
    %p41 = scmp.eq.s32.totalorder %s15, 0
    %p42 = por %p40, %p41
    %s44 = sadd.s32 %s43, 1
    %p47 = scmp.eq.s32.totalorder %s9, 1
    %p48 = scmp.ne.s32.totalorder %s43, %s45
    %p49 = scmp.eq.s32.totalorder %s9, 0
    %p50 = por %p48, %p49
    %p51 = scmp.ne.s32.totalorder %s43, %s45
    %p52 = scmp.eq.s32.totalorder %s14, 1
    %p53 = por %p51, %p52
    %p54 = scmp.ne.s32.totalorder %s45, %s46
    %p55 = scmp.eq.s32.totalorder %s14, 0
    %p56 = por %p54, %p55
    %p57 = scmp.ne.s32.totalorder %s45, %s46
    %p58 = scmp.eq.s32.totalorder %s15, 1
    %p59 = por %p57, %p58
    %p61 = scmp.ne.s32.totalorder %s46, %s60
    %p62 = scmp.eq.s32.totalorder %s15, 0
    %p63 = por %p61, %p62
    %s65 = sadd.s32 %s64, 1
    %p68 = scmp.eq.s32.totalorder %s9, 1
    %p69 = scmp.ne.s32.totalorder %s64, %s66
    %p70 = scmp.eq.s32.totalorder %s9, 0
    %p71 = por %p69, %p70
    %p72 = scmp.ne.s32.totalorder %s64, %s66
    %p73 = scmp.eq.s32.totalorder %s14, 1
    %p74 = por %p72, %p73
    %p75 = scmp.ne.s32.totalorder %s66, %s67
    %p76 = scmp.eq.s32.totalorder %s14, 0
    %p77 = por %p75, %p76
    %p78 = scmp.ne.s32.totalorder %s66, %s67
    %p79 = scmp.eq.s32.totalorder %s15, 1
    %p80 = por %p78, %p79
    %p82 = scmp.ne.s32.totalorder %s67, %s81
    %p83 = scmp.eq.s32.totalorder %s15, 0
    %p84 = por %p82, %p83
    %s85 = ssub.s32 %s9, %s16
    %p86 = scmp.eq.s32.totalorder %s85, 0
    %s88 = sadd.s32 %s87, 1
    %s89 = scalar_select %p86, %s87, %s88
    %p92 = pneg %p86
    %p93 = scmp.eq.s32.totalorder %s9, 1
    %p94 = por %p92, %p93
    %p95 = scmp.ne.s32.totalorder %s87, %s90
    %p96 = scmp.eq.s32.totalorder %s9, 0
    %p97 = por %p95, %p96
    %p98 = scmp.ne.s32.totalorder %s87, %s90
    %p99 = scmp.eq.s32.totalorder %s14, 1
    %p100 = por %p98, %p99
    %p101 = scmp.ne.s32.totalorder %s90, %s91
    %p102 = scmp.eq.s32.totalorder %s14, 0
    %p103 = por %p101, %p102
    %p104 = scmp.ne.s32.totalorder %s90, %s91
    %p105 = scmp.eq.s32.totalorder %s15, 1
    %p106 = por %p104, %p105
    %p108 = scmp.ne.s32.totalorder %s91, %s107
    %p109 = scmp.eq.s32.totalorder %s15, 0
    %p110 = por %p108, %p109
    %p111 = scmp.le.s32.totalorder 1, %s9
    %p112 = scmp.lt.s32.totalorder %s9, 3
    %p113 = pnand %p111, %p112
    %p114 = pneg %p113
    // Predicated region
    $region9: #{rfbnet_forward.19} parent=5 // pred_check
      _
    $region10: #{rfbnet_forward.19} parent=5 // pred_check_branch
      %116 = sbr.rel (%p113) target = $region12
    $region11: #{rfbnet_forward.19} parent=5 // pred_region
      %s117 = ssub.s32 %s9, 1
      // Predicated region
      $region13: #{rfbnet_forward.19} parent=11 // pred_check
        %p118 = pneg %p56
      $region14: #{rfbnet_forward.19} parent=11 // pred_check_branch
        %120 = sbr.rel (%p118) target = $region16
      $region15: #{rfbnet_forward.19} parent=11 // pred_region
        _
      $region16: #{rfbnet_forward.19} parent=11 // pred_fallthru
        _
      // Predicated region
      $region17: #{rfbnet_forward.19} parent=11 // pred_check
        %p121 = pneg %p77
      $region18: #{rfbnet_forward.19} parent=11 // pred_check_branch
        %123 = sbr.rel (%p121) target = $region20
      $region19: #{rfbnet_forward.19} parent=11 // pred_region
        _
      $region20: #{rfbnet_forward.19} parent=11 // pred_fallthru
        _
    $region12: #{rfbnet_forward.19} parent=5 // pred_fallthru
      _
    %p124 = scmp.lt.s32.totalorder %s9, 2
    // Predicated region
    $region21: #{rfbnet_forward.19} parent=5 // pred_check
      %p125 = pneg %p124
    $region22: #{rfbnet_forward.19} parent=5 // pred_check_branch
      %127 = sbr.rel (%p125) target = $region24
    $region23: #{rfbnet_forward.19} parent=5 // pred_region
      // Predicated region
      $region25: #{rfbnet_forward.19} parent=23 // pred_check
        %p128 = pneg %p29
      $region26: #{rfbnet_forward.19} parent=23 // pred_check_branch
        %130 = sbr.rel (%p128) target = $region28
      $region27: #{rfbnet_forward.19} parent=23 // pred_region
        %p131 = scmp.lt.s32.totalorder %s9, 1
        %s132 = scalar_select %p131, %s9, 1
        %s133 = smul.addr %s132, 2
        %s134 = smul.addr %s133, 4
        %s135 = scalar_lea.vmem %s0, %s134
      $region28: #{rfbnet_forward.19} parent=23 // pred_fallthru
        _
    $region24: #{rfbnet_forward.19} parent=5 // pred_fallthru
      _
    %p136 = scmp.le.s32.totalorder 1, %s9
    %p137 = scmp.lt.s32.totalorder %s9, 3
    %p138 = pnand %p136, %p137
    %p139 = pneg %p138
    // Predicated region
    $region29: #{rfbnet_forward.19} parent=5 // pred_check
      _
    $region30: #{rfbnet_forward.19} parent=5 // pred_check_branch
      %141 = sbr.rel (%p138) target = $region32
    $region31: #{rfbnet_forward.19} parent=5 // pred_region
      %s142 = ssub.s32 %s9, 1
      %p143 = scmp.lt.s32.totalorder %s14, 1
      %s144 = scalar_select %p143, %s14, 1
      %s145 = smul.addr %s144, 2
      %s146 = smul.addr %s145, 4
      %s147 = scalar_lea.vmem %s0, %s146
      %p148 = pneg %p35
      %p149 = pneg %p32
      %p150 = pneg %p56
      %p151 = pneg %p53
      %p152 = pneg %p77
      %p153 = pneg %p74
      %p154 = pneg %p103
      %p155 = pneg %p100
      %p156 = scmp.lt.s32.totalorder %s14, 1
      %s157 = scalar_select %p156, %s14, 1
      %s158 = smul.addr %s157, 6
      %s159 = smul.addr %s158, 8
      %s160 = scalar_lea.vmem %s3, %s159
      %p161 = scmp.lt.s32.totalorder %s14, 1
      %s162 = scalar_select %p161, %s14, 1
      %s163 = smul.addr %s162, 2
      %s164 = smul.addr %s163, 4
      %s165 = scalar_lea.vmem %s0, %s164
      %p166 = scmp.lt.s32.totalorder %s14, 1
      %s167 = scalar_select %p166, %s14, 1
      %s168 = smul.addr %s167, 6
      %s169 = smul.addr %s168, 8
      %s170 = scalar_lea.vmem %s3, %s169
      %v172 = vld [vmem:[%s165] sm:$0xf]
      %v173 = vld [vmem:[%s165 + $0x4] sm:$0xf]
      %v176 = vunpack.c.l.b16 %v172
      %v177 = vunpack.c.l.b16 %v173
      %v178 = vpack.c.b16 %v177, %v176
      %180 = vrot.lane.b32.xlu0 %v178, 127
      %v181 = vpop.permute.xlu0 %180
      %183 = vrot.lane.b32.xlu0 %v178, 126
      %v184 = vpop.permute.xlu0 %183
      %186 = vrot.lane.b32.xlu0 %v178, 118
      %v187 = vpop.permute.xlu0 %186
      %189 = vrot.lane.b32.xlu0 %v178, 117
      %v190 = vpop.permute.xlu0 %189
      %192 = vrot.lane.b32.xlu0 %v178, 116
      %v193 = vpop.permute.xlu0 %192
      %195 = vrot.lane.b32.xlu0 %v178, 108
      %v196 = vpop.permute.xlu0 %195
      %198 = vrot.lane.b32.xlu0 %v178, 107
      %v199 = vpop.permute.xlu0 %198
      %201 = vrot.lane.b32.xlu0 %v178, 106
      %v202 = vpop.permute.xlu0 %201
      %v204 = vld [vmem:[%s1] sm:$0xff]
      %v205 = vld [vmem:[%s1 + $0x8] sm:$0xff]
      %v206 = vld [vmem:[%s1 + $0x10] sm:$0xff]
      %v207 = vld [vmem:[%s1 + $0x18] sm:$0xff]
      %v208 = vld [vmem:[%s1 + $0x20] sm:$0xff]
      %v209 = vld [vmem:[%s1 + $0x28] sm:$0xff]
      %v210 = vld [vmem:[%s2] sm:$0xff]
      %v211 = vld [vmem:[%s2 + $0x8] sm:$0xff]
      %v212 = vld [vmem:[%s2 + $0x10] sm:$0xff]
      %v213 = vld [vmem:[%s2 + $0x18] sm:$0xff]
      %v214 = vld [vmem:[%s2 + $0x20] sm:$0xff]
      %v215 = vld [vmem:[%s2 + $0x28] sm:$0xff]
      %217 = vset.pattern.permute.xlu0 0
      %218 = vperm.xlu0 %217, %v210
      %v219 = vpop.permute.xlu0 %218
      %222 = vset.pattern.permute.xlu0 0
      %223 = vperm.xlu0 %222, %v211
      %v224 = vpop.permute.xlu0 %223
      %227 = vset.pattern.permute.xlu0 0
      %228 = vperm.xlu0 %227, %v212
      %v229 = vpop.permute.xlu0 %228
      %232 = vset.pattern.permute.xlu0 0
      %233 = vperm.xlu0 %232, %v213
      %v234 = vpop.permute.xlu0 %233
      %237 = vset.pattern.permute.xlu0 0
      %238 = vperm.xlu0 %237, %v214
      %v239 = vpop.permute.xlu0 %238
      %242 = vset.pattern.permute.xlu0 0
      %243 = vperm.xlu0 %242, %v215
      %v244 = vpop.permute.xlu0 %243
      %v252 = vunpack.c.l.b16 %v204
      %v253 = vunpack.c.h.b16 %v204
      %v254 = vunpack.c.l.b16 %v205
      %v255 = vunpack.c.h.b16 %v205
      %v256 = vunpack.c.l.b16 %v206
      %v257 = vunpack.c.h.b16 %v206
      %v258 = vunpack.c.l.b16 %v207
      %v259 = vunpack.c.h.b16 %v207
      %v260 = vunpack.c.l.b16 %v208
      %v261 = vunpack.c.h.b16 %v208
      %v262 = vunpack.c.l.b16 %v209
      %v263 = vunpack.c.h.b16 %v209
      %v264 = vpack.c.b16 %v254, %v252
      %v265 = vpack.c.b16 %v255, %v253
      %v266 = vpack.c.b16 %v258, %v256
      %v267 = vpack.c.b16 %v259, %v257
      %v268 = vpack.c.b16 %v262, %v260
      %v269 = vpack.c.b16 %v263, %v261
      %vm273 = vcmask 130048
      %v275 = vsel %vm273, %v265, 0
      %v278 = vsel %vm273, %v267, 0
      %v281 = vsel %vm273, %v269, 0
      %283 = vmatprep.subr.bf16.mxu0 0
      %284 = vmatpush1.bf16.msra.mxu0 %v178
      %285 = vmatprep.subr.bf16.mxu0 0
      %286 = vmatpush1.bf16.msra.mxu0 %v181
      %287 = vmatprep.subr.bf16.mxu0 0
      %288 = vmatpush1.bf16.msra.mxu0 %v184
      %289 = vmatprep.subr.bf16.mxu0 0
      %290 = vmatpush1.bf16.msra.mxu0 %v187
      %291 = vmatprep.subr.bf16.mxu0 0
      %292 = vmatpush1.bf16.msra.mxu0 %v190
      %293 = vmatprep.subr.bf16.mxu0 0
      %294 = vmatpush1.bf16.msra.mxu0 %v193
      %295 = vmatprep.subr.bf16.mxu0 0
      %296 = vmatpush1.bf16.msra.mxu0 %v196
      %297 = vmatprep.subr.bf16.mxu0 0
      %298 = vmatpush1.bf16.msra.mxu0 %v199
      %299 = vmatprep.subr.bf16.mxu0 0
      %300 = vmatpush1.bf16.msra.mxu0 %v202
      %301 = vmatprep.subr.bf16.mxu0 0
      %302 = vmatpush1.bf16.msra.mxu0 0
      %303 = vmatprep.subr.bf16.mxu0 0
      %304 = vmatpush1.bf16.msra.mxu0 0
      %305 = vmatprep.subr.bf16.mxu0 0
      %306 = vmatpush1.bf16.msra.mxu0 0
      %307 = vmatprep.subr.bf16.mxu0 0
      %308 = vmatpush1.bf16.msra.mxu0 0
      %309 = vmatprep.subr.bf16.mxu0 0
      %310 = vmatpush1.bf16.msra.mxu0 0
      %311 = vmatprep.subr.bf16.mxu0 0
      %312 = vmatpush1.bf16.msra.mxu0 0
      %313 = vmatprep.subr.bf16.mxu0 0
      %314 = vmatpush1.bf16.msra.mxu0 0
      %315 = vmatprep.mubr.bf16.mxu0 %v275
      %316 = vmatmul.mubr.bf16.gmra.mrb[0].mxu0 %v264
      %v317 = vpop.f32.mrb[0].mxu0
      %v318 = vadd.f32 %v219, %v317
      %v319 = vpop.f32.mrb[0].mxu0
      %v320 = vpop.f32.mrb[0].mxu0
      %v321 = vadd.f32 %v224, %v320
      %v322 = vpop.f32.mrb[0].mxu0
      %323 = vmatprep.mubr.bf16.mxu0 %v278
      %324 = vmatmul.mubr.bf16.gmra.mrb[0].mxu0 %v266
      %v325 = vpop.f32.mrb[0].mxu0
      %v326 = vadd.f32 %v229, %v325
      %v327 = vpop.f32.mrb[0].mxu0
      %v328 = vpop.f32.mrb[0].mxu0
      %v329 = vadd.f32 %v234, %v328
      %v330 = vpop.f32.mrb[0].mxu0
      %331 = vmatprep.mubr.bf16.mxu0 %v281
      %332 = vmatmul.mubr.bf16.gmra.mrb[0].mxu0 %v268
      %v333 = vpop.f32.mrb[0].mxu0
      %v334 = vadd.f32 %v239, %v333
      %v335 = vpop.f32.mrb[0].mxu0
      %v336 = vpop.f32.mrb[0].mxu0
      %v337 = vadd.f32 %v244, %v336
      %v338 = vpop.f32.mrb[0].mxu0
      %339 = vdwg.mxu0
      %vm340 = vcmask 650240
      %v341 = vsel %vm340, %v329, -inf
      %v342 = vrot.slane %v341, 4
      %v343 = vmax.f32 %v341, %v342
      %v344 = vrot.slane %v343, 2
      %v345 = vmax.f32 %v343, %v344
      %v346 = vrot.slane %v345, 1
      %v347 = vmax.f32 %v345, %v346
      %v348 = vsub.f32 %v329, %v347
      %v349 = vmul.f32 %v348, 1.442695
      %v350 = vpow.pop %v349
      %v351 = vsel %vm340, %v350, 0.0
      %v352 = vrot.slane %v351, 4
      %v353 = vadd.f32 %v351, %v352
      %v354 = vrot.slane %v353, 2
      %v355 = vadd.f32 %v353, %v354
      %v356 = vrot.slane %v355, 1
      %v357 = vadd.f32 %v355, %v356
      %v358 = vrcp.pop %v357
      %v359 = vmul.f32 %v350, %v358
      %vm360 = vcmask 654340
      %v361 = vsel %vm360, %v329, -inf
      %v362 = vrot.slane %v361, 4
      %v363 = vmax.f32 %v361, %v362
      %v364 = vrot.slane %v363, 2
      %v365 = vmax.f32 %v363, %v364
      %v366 = vrot.slane %v365, 1
      %v367 = vmax.f32 %v365, %v366
      %v368 = vsub.f32 %v329, %v367
      %v369 = vmul.f32 %v368, 1.442695
      %v370 = vpow.pop %v369
      %v372 = vrot.slane %v370, 4
      %v374 = vsel %vm340, %v372, 0.0
      %v375 = vrot.slane %v374, 4
      %v376 = vadd.f32 %v374, %v375
      %v377 = vrot.slane %v376, 2
      %v378 = vadd.f32 %v376, %v377
      %v379 = vrot.slane %v378, 1
      %v380 = vadd.f32 %v378, %v379
      %v381 = vrcp.pop %v380
      %v382 = vmul.f32 %v370, %v381
      %v383 = vsel %vm340, %v334, -inf
      %v384 = vrot.slane %v383, 4
      %v385 = vmax.f32 %v383, %v384
      %v386 = vrot.slane %v385, 2
      %v387 = vmax.f32 %v385, %v386
      %v388 = vrot.slane %v387, 1
      %v389 = vmax.f32 %v387, %v388
      %v390 = vsub.f32 %v334, %v389
      %v391 = vmul.f32 %v390, 1.442695
      %v392 = vpow.pop %v391
      %v393 = vsel %vm340, %v392, 0.0
      %v394 = vrot.slane %v393, 4
      %v395 = vadd.f32 %v393, %v394
      %v396 = vrot.slane %v395, 2
      %v397 = vadd.f32 %v395, %v396
      %v398 = vrot.slane %v397, 1
      %v399 = vadd.f32 %v397, %v398
      %v400 = vrcp.pop %v399
      %v401 = vmul.f32 %v392, %v400
      %v402 = vsel %vm360, %v334, -inf
      %v403 = vrot.slane %v402, 4
      %v404 = vmax.f32 %v402, %v403
      %v405 = vrot.slane %v404, 2
      %v406 = vmax.f32 %v404, %v405
      %v407 = vrot.slane %v406, 1
      %v408 = vmax.f32 %v406, %v407
      %v409 = vsub.f32 %v334, %v408
      %v410 = vmul.f32 %v409, 1.442695
      %v411 = vpow.pop %v410
      %v413 = vrot.slane %v411, 4
      %v415 = vsel %vm340, %v413, 0.0
      %v416 = vrot.slane %v415, 4
      %v417 = vadd.f32 %v415, %v416
      %v418 = vrot.slane %v417, 2
      %v419 = vadd.f32 %v417, %v418
      %v420 = vrot.slane %v419, 1
      %v421 = vadd.f32 %v419, %v420
      %v422 = vrcp.pop %v421
      %v423 = vmul.f32 %v411, %v422
      %v424 = vsel %vm340, %v337, -inf
      %v425 = vrot.slane %v424, 4
      %v426 = vmax.f32 %v424, %v425
      %v427 = vrot.slane %v426, 2
      %v428 = vmax.f32 %v426, %v427
      %v429 = vrot.slane %v428, 1
      %v430 = vmax.f32 %v428, %v429
      %v431 = vsub.f32 %v337, %v430
      %v432 = vmul.f32 %v431, 1.442695
      %v433 = vpow.pop %v432
      %v434 = vsel %vm340, %v433, 0.0
      %v435 = vrot.slane %v434, 4
      %v436 = vadd.f32 %v434, %v435
      %v437 = vrot.slane %v436, 2
      %v438 = vadd.f32 %v436, %v437
      %v439 = vrot.slane %v438, 1
      %v440 = vadd.f32 %v438, %v439
      %v441 = vrcp.pop %v440
      %v442 = vmul.f32 %v433, %v441
      %v443 = vsel %vm360, %v337, -inf
      %v444 = vrot.slane %v443, 4
      %v445 = vmax.f32 %v443, %v444
      %v446 = vrot.slane %v445, 2
      %v447 = vmax.f32 %v445, %v446
      %v448 = vrot.slane %v447, 1
      %v449 = vmax.f32 %v447, %v448
      %v450 = vsub.f32 %v337, %v449
      %v451 = vmul.f32 %v450, 1.442695
      %v452 = vpow.pop %v451
      %v454 = vrot.slane %v452, 4
      %v456 = vsel %vm340, %v454, 0.0
      %v457 = vrot.slane %v456, 4
      %v458 = vadd.f32 %v456, %v457
      %v459 = vrot.slane %v458, 2
      %v460 = vadd.f32 %v458, %v459
      %v461 = vrot.slane %v460, 1
      %v462 = vadd.f32 %v460, %v461
      %v463 = vrcp.pop %v462
      %v464 = vmul.f32 %v452, %v463
      %vm465 = vcmask 1043456
      %v466 = vsel %vm465, %v359, %v382
      %v467 = vsel %vm465, %v401, %v423
      %v468 = vsel %vm465, %v442, %v464
      %vm469 = vcmask 654336
      %470 = vst.msk [vmem:[%s170] sm:$0xff] %vm469, %v318
      %471 = vst.msk [vmem:[%s170 + $0x8] sm:$0xff] %vm469, %v321
      %472 = vst.msk [vmem:[%s170 + $0x10] sm:$0xff] %vm469, %v326
      %473 = vst.msk [vmem:[%s170 + $0x18] sm:$0xff] %vm469, %v466
      %474 = vst.msk [vmem:[%s170 + $0x20] sm:$0xff] %vm469, %v467
      %475 = vst.msk [vmem:[%s170 + $0x28] sm:$0xff] %vm469, %v468
      %p476 = scmp.lt.s32.totalorder %s14, 1
      %s477 = scalar_select %p476, %s14, 1
      %s478 = smul.addr %s477, 6
      %s479 = smul.addr %s478, 8
      %s480 = scalar_lea.vmem %s3, %s479
      // Predicated region
      $region33: #{rfbnet_forward.19} parent=31 // pred_check
        %p481 = pneg %p100
      $region34: #{rfbnet_forward.19} parent=31 // pred_check_branch
        %483 = sbr.rel (%p481) target = $region36
      $region35: #{rfbnet_forward.19} parent=31 // pred_region
        _
      $region36: #{rfbnet_forward.19} parent=31 // pred_fallthru
        _
    $region32: #{rfbnet_forward.19} parent=5 // pred_fallthru
      _
    %p484 = scmp.le.s32.totalorder 2, %s9
    // Predicated region
    $region37: #{rfbnet_forward.19} parent=5 // pred_check
      %p485 = pneg %p484
    $region38: #{rfbnet_forward.19} parent=5 // pred_check_branch
      %487 = sbr.rel (%p485) target = $region40
    $region39: #{rfbnet_forward.19} parent=5 // pred_region
      %s488 = ssub.s32 %s9, 2
      // Predicated region
      $region41: #{rfbnet_forward.19} parent=39 // pred_check
        %p489 = pneg %p106
      $region42: #{rfbnet_forward.19} parent=39 // pred_check_branch
        %491 = sbr.rel (%p489) target = $region44
      $region43: #{rfbnet_forward.19} parent=39 // pred_region
        %p492 = scmp.lt.s32.totalorder %s15, 1
        %s493 = scalar_select %p492, %s15, 1
        %s494 = smul.addr %s493, 6
        %s495 = smul.addr %s494, 8
        %s496 = scalar_lea.vmem %s3, %s495
      $region44: #{rfbnet_forward.19} parent=39 // pred_fallthru
        _
    $region40: #{rfbnet_forward.19} parent=5 // pred_fallthru
      _
  $region6: #{rfbnet_forward.19} parent=0 // loop_footer
    %s13 = sadd.s32 1, %s9
  $region7: #{rfbnet_forward.19} parent=0 // loop_footer_branch
    %8 = sbr.rel target = $region3
  $region8: #{rfbnet_forward.19} parent=0 // loop_exit
    _

// kernel: rfbnet_forward.15
$region0: #{rfbnet_forward.15}
  #allocation0 [shape = 'u32[]', space=smem, size = 0x4, offset = 0x4, fixed_abs, tag = 'smem constant byte address 0x4 - core index']
  #allocation1 [shape = 'u32[144,128]{1,0:T(1,128)}', space=vmem, size = 0x12000, scoped, tag = 'internal scratch']
  %s0 = inlined_call_operand.vmem [shape: bf16[2,8,38], index: 0, kind: input, shape index: {}]
  %s1 = inlined_call_operand.vmem [shape: bf16[8,72], index: 1, kind: input, shape index: {}]
  %s2 = inlined_call_operand.vmem [shape: f32[8,1], index: 2, kind: input, shape index: {}]
  %s3 = inlined_call_operand.vmem [shape: f32[2,8,24], index: 3, kind: output, shape index: {}]
  %s4 = sld [smem:[#allocation0]]
  $region45: #{rfbnet_forward.15} parent=0
    _
  %s6 = ssub.s32 1, %s4
  %s7 = scalar_select 0, %s6, %s4
  loop: start=0, step=1, limit=4
  $region2: #{rfbnet_forward.15} parent=0 // loop_pre_header
    _
  $region3: #{rfbnet_forward.15} parent=0 // loop_header
    %s9 = sphi 0, %s13
    %p10 = scmp.ge.s32.totalorder %s9, 4
    %s19 = sphi 0, %s21
    %s22 = sphi 0, %s19
    %s23 = sphi 0, %s22
    %s39 = sphi 0, %s23
    %s43 = sphi 0, %s43
    %s45 = sphi 0, %s43
    %s46 = sphi 0, %s45
    %s60 = sphi 0, %s46
    %s64 = sphi 0, %s64
    %s66 = sphi 0, %s64
    %s67 = sphi 0, %s66
    %s81 = sphi 0, %s67
    %s87 = sphi 0, %s89
    %s90 = sphi 0, %s87
    %s91 = sphi 0, %s90
    %s107 = sphi 0, %s91
  $region4: #{rfbnet_forward.15} parent=0 // loop_header_branch
    %12 = sbr.rel (%p10) target = $region8
  $region5: #{rfbnet_forward.15} parent=0 // loop_body
    %s14 = ssub.s32 %s9, 1
    %s15 = ssub.s32 %s9, 2
    %s16 = sadd.s32 %s9, 1
    %s17 = ssub.s32 %s9, %s16
    %p18 = scmp.eq.s32.totalorder %s17, 0
    %s20 = sadd.s32 %s19, 1
    %s21 = scalar_select %p18, %s19, %s20
    %p24 = pneg %p18
    %p25 = scmp.eq.s32.totalorder %s9, 1
    %p26 = por %p24, %p25
    %p27 = scmp.ne.s32.totalorder %s19, %s22
    %p28 = scmp.eq.s32.totalorder %s9, 0
    %p29 = por %p27, %p28
    %p30 = scmp.ne.s32.totalorder %s19, %s22
    %p31 = scmp.eq.s32.totalorder %s14, 1
    %p32 = por %p30, %p31
    %p33 = scmp.ne.s32.totalorder %s22, %s23
    %p34 = scmp.eq.s32.totalorder %s14, 0
    %p35 = por %p33, %p34
    %p36 = scmp.ne.s32.totalorder %s22, %s23
    %p37 = scmp.eq.s32.totalorder %s15, 1
    %p38 = por %p36, %p37
    %p40 = scmp.ne.s32.totalorder %s23, %s39
    %p41 = scmp.eq.s32.totalorder %s15, 0
    %p42 = por %p40, %p41
    %s44 = sadd.s32 %s43, 1
    %p47 = scmp.eq.s32.totalorder %s9, 1
    %p48 = scmp.ne.s32.totalorder %s43, %s45
    %p49 = scmp.eq.s32.totalorder %s9, 0
    %p50 = por %p48, %p49
    %p51 = scmp.ne.s32.totalorder %s43, %s45
    %p52 = scmp.eq.s32.totalorder %s14, 1
    %p53 = por %p51, %p52
    %p54 = scmp.ne.s32.totalorder %s45, %s46
    %p55 = scmp.eq.s32.totalorder %s14, 0
    %p56 = por %p54, %p55
    %p57 = scmp.ne.s32.totalorder %s45, %s46
    %p58 = scmp.eq.s32.totalorder %s15, 1
    %p59 = por %p57, %p58
    %p61 = scmp.ne.s32.totalorder %s46, %s60
    %p62 = scmp.eq.s32.totalorder %s15, 0
    %p63 = por %p61, %p62
    %s65 = sadd.s32 %s64, 1
    %p68 = scmp.eq.s32.totalorder %s9, 1
    %p69 = scmp.ne.s32.totalorder %s64, %s66
    %p70 = scmp.eq.s32.totalorder %s9, 0
    %p71 = por %p69, %p70
    %p72 = scmp.ne.s32.totalorder %s64, %s66
    %p73 = scmp.eq.s32.totalorder %s14, 1
    %p74 = por %p72, %p73
    %p75 = scmp.ne.s32.totalorder %s66, %s67
    %p76 = scmp.eq.s32.totalorder %s14, 0
    %p77 = por %p75, %p76
    %p78 = scmp.ne.s32.totalorder %s66, %s67
    %p79 = scmp.eq.s32.totalorder %s15, 1
    %p80 = por %p78, %p79
    %p82 = scmp.ne.s32.totalorder %s67, %s81
    %p83 = scmp.eq.s32.totalorder %s15, 0
    %p84 = por %p82, %p83
    %s85 = ssub.s32 %s9, %s16
    %p86 = scmp.eq.s32.totalorder %s85, 0
    %s88 = sadd.s32 %s87, 1
    %s89 = scalar_select %p86, %s87, %s88
    %p92 = pneg %p86
    %p93 = scmp.eq.s32.totalorder %s9, 1
    %p94 = por %p92, %p93
    %p95 = scmp.ne.s32.totalorder %s87, %s90
    %p96 = scmp.eq.s32.totalorder %s9, 0
    %p97 = por %p95, %p96
    %p98 = scmp.ne.s32.totalorder %s87, %s90
    %p99 = scmp.eq.s32.totalorder %s14, 1
    %p100 = por %p98, %p99
    %p101 = scmp.ne.s32.totalorder %s90, %s91
    %p102 = scmp.eq.s32.totalorder %s14, 0
    %p103 = por %p101, %p102
    %p104 = scmp.ne.s32.totalorder %s90, %s91
    %p105 = scmp.eq.s32.totalorder %s15, 1
    %p106 = por %p104, %p105
    %p108 = scmp.ne.s32.totalorder %s91, %s107
    %p109 = scmp.eq.s32.totalorder %s15, 0
    %p110 = por %p108, %p109
    %p111 = scmp.le.s32.totalorder 1, %s9
    %p112 = scmp.lt.s32.totalorder %s9, 3
    %p113 = pnand %p111, %p112
    %p114 = pneg %p113
    // Predicated region
    $region9: #{rfbnet_forward.15} parent=5 // pred_check
      _
    $region10: #{rfbnet_forward.15} parent=5 // pred_check_branch
      %116 = sbr.rel (%p113) target = $region12
    $region11: #{rfbnet_forward.15} parent=5 // pred_region
      %s117 = ssub.s32 %s9, 1
      // Predicated region
      $region13: #{rfbnet_forward.15} parent=11 // pred_check
        %p118 = pneg %p56
      $region14: #{rfbnet_forward.15} parent=11 // pred_check_branch
        %120 = sbr.rel (%p118) target = $region16
      $region15: #{rfbnet_forward.15} parent=11 // pred_region
        _
      $region16: #{rfbnet_forward.15} parent=11 // pred_fallthru
        _
      // Predicated region
      $region17: #{rfbnet_forward.15} parent=11 // pred_check
        %p121 = pneg %p77
      $region18: #{rfbnet_forward.15} parent=11 // pred_check_branch
        %123 = sbr.rel (%p121) target = $region20
      $region19: #{rfbnet_forward.15} parent=11 // pred_region
        _
      $region20: #{rfbnet_forward.15} parent=11 // pred_fallthru
        _
    $region12: #{rfbnet_forward.15} parent=5 // pred_fallthru
      _
    %p124 = scmp.lt.s32.totalorder %s9, 2
    // Predicated region
    $region21: #{rfbnet_forward.15} parent=5 // pred_check
      %p125 = pneg %p124
    $region22: #{rfbnet_forward.15} parent=5 // pred_check_branch
      %127 = sbr.rel (%p125) target = $region24
    $region23: #{rfbnet_forward.15} parent=5 // pred_region
      // Predicated region
      $region25: #{rfbnet_forward.15} parent=23 // pred_check
        %p128 = pneg %p29
      $region26: #{rfbnet_forward.15} parent=23 // pred_check_branch
        %130 = sbr.rel (%p128) target = $region28
      $region27: #{rfbnet_forward.15} parent=23 // pred_region
        %p131 = scmp.lt.s32.totalorder %s9, 1
        %s132 = scalar_select %p131, %s9, 1
        %s133 = smul.addr %s132, 4
        %s134 = scalar_lea.vmem %s0, %s133
      $region28: #{rfbnet_forward.15} parent=23 // pred_fallthru
        _
    $region24: #{rfbnet_forward.15} parent=5 // pred_fallthru
      _
    %p135 = scmp.le.s32.totalorder 1, %s9
    %p136 = scmp.lt.s32.totalorder %s9, 3
    %p137 = pnand %p135, %p136
    %p138 = pneg %p137
    // Predicated region
    $region29: #{rfbnet_forward.15} parent=5 // pred_check
      _
    $region30: #{rfbnet_forward.15} parent=5 // pred_check_branch
      %140 = sbr.rel (%p137) target = $region32
    $region31: #{rfbnet_forward.15} parent=5 // pred_region
      %s141 = ssub.s32 %s9, 1
      %p142 = scmp.lt.s32.totalorder %s14, 1
      %s143 = scalar_select %p142, %s14, 1
      %s144 = smul.addr %s143, 4
      %s145 = scalar_lea.vmem %s0, %s144
      %p146 = pneg %p35
      %p147 = pneg %p32
      %p148 = pneg %p56
      %p149 = pneg %p53
      %p150 = pneg %p77
      %p151 = pneg %p74
      %p152 = pneg %p103
      %p153 = pneg %p100
      %p154 = scmp.lt.s32.totalorder %s14, 1
      %s155 = scalar_select %p154, %s14, 1
      %s156 = smul.addr %s155, 8
      %s157 = scalar_lea.vmem %s3, %s156
      %p158 = scmp.lt.s32.totalorder %s14, 1
      %s159 = scalar_select %p158, %s14, 1
      %s160 = smul.addr %s159, 4
      %s161 = scalar_lea.vmem %s0, %s160
      %p162 = scmp.lt.s32.totalorder %s14, 1
      %s163 = scalar_select %p162, %s14, 1
      %s164 = smul.addr %s163, 8
      %s165 = scalar_lea.vmem %s3, %s164
      %v167 = vld [vmem:[%s161] sm:$0xf]
      %v169 = vunpack.c.l.b16 %v167
      %v170 = vpack.c.b16 %v169, %v169
      %171 = vrot.lane.b32.xlu0 %v170, 127
      %v172 = vpop.permute.xlu0 %171
      %173 = vrot.lane.b32.xlu0 %v170, 126
      %v174 = vpop.permute.xlu0 %173
      %175 = vrot.lane.b32.xlu0 %v170, 122
      %v176 = vpop.permute.xlu0 %175
      %177 = vrot.lane.b32.xlu0 %v170, 121
      %v178 = vpop.permute.xlu0 %177
      %179 = vrot.lane.b32.xlu0 %v170, 120
      %v180 = vpop.permute.xlu0 %179
      %181 = vrot.lane.b32.xlu0 %v170, 116
      %v182 = vpop.permute.xlu0 %181
      %183 = vrot.lane.b32.xlu0 %v170, 115
      %v184 = vpop.permute.xlu0 %183
      %185 = vrot.lane.b32.xlu0 %v170, 114
      %v186 = vpop.permute.xlu0 %185
      %vm187 = vcmask 1043456
      %v190 = vsel %vm187, %v167, %v172
      %v194 = vsel %vm187, %v174, %v176
      %v198 = vsel %vm187, %v178, %v180
      %v202 = vsel %vm187, %v182, %v184
      %v204 = vld [vmem:[%s1] sm:$0xf]
      %v205 = vld [vmem:[%s2] sm:$0xff]
      %207 = vset.pattern.permute.xlu0 0
      %208 = vperm.xlu0 %207, %v205
      %v209 = vpop.permute.xlu0 %208
      %vm211 = vcmask 588800
      %v213 = vsel %vm211, %v204, 0
      %v216 = vsel %vm187, %v186, 0
      %218 = vmatprep.subr.bf16.mxu0 0
      %219 = vmatpush1.bf16.msra.mxu0 %v190
      %220 = vmatprep.subr.bf16.mxu0 0
      %221 = vmatpush1.bf16.msra.mxu0 %v194
      %222 = vmatprep.subr.bf16.mxu0 0
      %223 = vmatpush1.bf16.msra.mxu0 %v198
      %224 = vmatprep.subr.bf16.mxu0 0
      %225 = vmatpush1.bf16.msra.mxu0 %v202
      %226 = vmatprep.subr.bf16.mxu0 0
      %227 = vmatpush1.bf16.msra.mxu0 %v216
      %228 = vmatprep.subr.bf16.mxu0 0
      %229 = vmatpush1.bf16.msra.mxu0 0
      %230 = vmatprep.subr.bf16.mxu0 0
      %231 = vmatpush1.bf16.msra.mxu0 0
      %232 = vmatprep.subr.bf16.mxu0 0
      %233 = vmatpush1.bf16.msra.mxu0 0
      %234 = vmatprep.subr.bf16.mxu0 0
      %235 = vmatpush1.bf16.msra.mxu0 0
      %236 = vmatprep.subr.bf16.mxu0 0
      %237 = vmatpush1.bf16.msra.mxu0 0
      %238 = vmatprep.subr.bf16.mxu0 0
      %239 = vmatpush1.bf16.msra.mxu0 0
      %240 = vmatprep.subr.bf16.mxu0 0
      %241 = vmatpush1.bf16.msra.mxu0 0
      %242 = vmatprep.subr.bf16.mxu0 0
      %243 = vmatpush1.bf16.msra.mxu0 0
      %244 = vmatprep.subr.bf16.mxu0 0
      %245 = vmatpush1.bf16.msra.mxu0 0
      %246 = vmatprep.subr.bf16.mxu0 0
      %247 = vmatpush1.bf16.msra.mxu0 0
      %248 = vmatprep.subr.bf16.mxu0 0
      %249 = vmatpush1.bf16.msra.mxu0 0
      %250 = vmatprep.mubr.bf16.mxu0 0
      %251 = vmatmul.mubr.bf16.gmra.mrb[0].mxu0 %v213
      %v252 = vpop.f32.mrb[0].mxu0
      %v253 = vadd.f32 %v209, %v252
      %v254 = vpop.f32.mrb[0].mxu0
      %v255 = vpop.f32.mrb[0].mxu0
      %v256 = vpop.f32.mrb[0].mxu0
      %257 = vdwg.mxu0
      %v258 = vmax.f32 %v253, 0.0
      %vm259 = vcmask 195584
      %260 = vst.msk [vmem:[%s165] sm:$0xff] %vm259, %v258
      %p261 = scmp.lt.s32.totalorder %s14, 1
      %s262 = scalar_select %p261, %s14, 1
      %s263 = smul.addr %s262, 8
      %s264 = scalar_lea.vmem %s3, %s263
      // Predicated region
      $region33: #{rfbnet_forward.15} parent=31 // pred_check
        %p265 = pneg %p100
      $region34: #{rfbnet_forward.15} parent=31 // pred_check_branch
        %267 = sbr.rel (%p265) target = $region36
      $region35: #{rfbnet_forward.15} parent=31 // pred_region
        _
      $region36: #{rfbnet_forward.15} parent=31 // pred_fallthru
        _
    $region32: #{rfbnet_forward.15} parent=5 // pred_fallthru
      _
    %p268 = scmp.le.s32.totalorder 2, %s9
    // Predicated region
    $region37: #{rfbnet_forward.15} parent=5 // pred_check
      %p269 = pneg %p268
    $region38: #{rfbnet_forward.15} parent=5 // pred_check_branch
      %271 = sbr.rel (%p269) target = $region40
    $region39: #{rfbnet_forward.15} parent=5 // pred_region
      %s272 = ssub.s32 %s9, 2
      // Predicated region
      $region41: #{rfbnet_forward.15} parent=39 // pred_check
        %p273 = pneg %p106
      $region42: #{rfbnet_forward.15} parent=39 // pred_check_branch
        %275 = sbr.rel (%p273) target = $region44
      $region43: #{rfbnet_forward.15} parent=39 // pred_region
        %p276 = scmp.lt.s32.totalorder %s15, 1
        %s277 = scalar_select %p276, %s15, 1
        %s278 = smul.addr %s277, 8
        %s279 = scalar_lea.vmem %s3, %s278
      $region44: #{rfbnet_forward.15} parent=39 // pred_fallthru
        _
    $region40: #{rfbnet_forward.15} parent=5 // pred_fallthru
      _
  $region6: #{rfbnet_forward.15} parent=0 // loop_footer
    %s13 = sadd.s32 1, %s9
  $region7: #{rfbnet_forward.15} parent=0 // loop_footer_branch
    %8 = sbr.rel target = $region3
  $region8: #{rfbnet_forward.15} parent=0 // loop_exit
    _

// kernel: rfbnet_forward.20
$region0: #{rfbnet_forward.20}
  #allocation0 [shape = 'u32[]', space=smem, size = 0x4, offset = 0x4, fixed_abs, tag = 'smem constant byte address 0x4 - core index']
  #allocation1 [shape = 'u32[144,128]{1,0:T(1,128)}', space=vmem, size = 0x12000, scoped, tag = 'internal scratch']
  %s0 = inlined_call_operand.vmem [shape: bf16[2,8,38], index: 0, kind: input, shape index: {}]
  %s1 = inlined_call_operand.vmem [shape: bf16[48,72], index: 1, kind: input, shape index: {}]
  %s2 = inlined_call_operand.vmem [shape: f32[48,1], index: 2, kind: input, shape index: {}]
  %s3 = inlined_call_operand.vmem [shape: f32[2,48,24], index: 3, kind: output, shape index: {}]
  %s4 = sld [smem:[#allocation0]]
  $region45: #{rfbnet_forward.20} parent=0
    _
  %s6 = ssub.s32 1, %s4
  %s7 = scalar_select 0, %s6, %s4
  loop: start=0, step=1, limit=4
  $region2: #{rfbnet_forward.20} parent=0 // loop_pre_header
    _
  $region3: #{rfbnet_forward.20} parent=0 // loop_header
    %s9 = sphi 0, %s13
    %p10 = scmp.ge.s32.totalorder %s9, 4
    %s19 = sphi 0, %s21
    %s22 = sphi 0, %s19
    %s23 = sphi 0, %s22
    %s39 = sphi 0, %s23
    %s43 = sphi 0, %s43
    %s45 = sphi 0, %s43
    %s46 = sphi 0, %s45
    %s60 = sphi 0, %s46
    %s64 = sphi 0, %s64
    %s66 = sphi 0, %s64
    %s67 = sphi 0, %s66
    %s81 = sphi 0, %s67
    %s87 = sphi 0, %s89
    %s90 = sphi 0, %s87
    %s91 = sphi 0, %s90
    %s107 = sphi 0, %s91
  $region4: #{rfbnet_forward.20} parent=0 // loop_header_branch
    %12 = sbr.rel (%p10) target = $region8
  $region5: #{rfbnet_forward.20} parent=0 // loop_body
    %s14 = ssub.s32 %s9, 1
    %s15 = ssub.s32 %s9, 2
    %s16 = sadd.s32 %s9, 1
    %s17 = ssub.s32 %s9, %s16
    %p18 = scmp.eq.s32.totalorder %s17, 0
    %s20 = sadd.s32 %s19, 1
    %s21 = scalar_select %p18, %s19, %s20
    %p24 = pneg %p18
    %p25 = scmp.eq.s32.totalorder %s9, 1
    %p26 = por %p24, %p25
    %p27 = scmp.ne.s32.totalorder %s19, %s22
    %p28 = scmp.eq.s32.totalorder %s9, 0
    %p29 = por %p27, %p28
    %p30 = scmp.ne.s32.totalorder %s19, %s22
    %p31 = scmp.eq.s32.totalorder %s14, 1
    %p32 = por %p30, %p31
    %p33 = scmp.ne.s32.totalorder %s22, %s23
    %p34 = scmp.eq.s32.totalorder %s14, 0
    %p35 = por %p33, %p34
    %p36 = scmp.ne.s32.totalorder %s22, %s23
    %p37 = scmp.eq.s32.totalorder %s15, 1
    %p38 = por %p36, %p37
    %p40 = scmp.ne.s32.totalorder %s23, %s39
    %p41 = scmp.eq.s32.totalorder %s15, 0
    %p42 = por %p40, %p41
    %s44 = sadd.s32 %s43, 1
    %p47 = scmp.eq.s32.totalorder %s9, 1
    %p48 = scmp.ne.s32.totalorder %s43, %s45
    %p49 = scmp.eq.s32.totalorder %s9, 0
    %p50 = por %p48, %p49
    %p51 = scmp.ne.s32.totalorder %s43, %s45
    %p52 = scmp.eq.s32.totalorder %s14, 1
    %p53 = por %p51, %p52
    %p54 = scmp.ne.s32.totalorder %s45, %s46
    %p55 = scmp.eq.s32.totalorder %s14, 0
    %p56 = por %p54, %p55
    %p57 = scmp.ne.s32.totalorder %s45, %s46
    %p58 = scmp.eq.s32.totalorder %s15, 1
    %p59 = por %p57, %p58
    %p61 = scmp.ne.s32.totalorder %s46, %s60
    %p62 = scmp.eq.s32.totalorder %s15, 0
    %p63 = por %p61, %p62
    %s65 = sadd.s32 %s64, 1
    %p68 = scmp.eq.s32.totalorder %s9, 1
    %p69 = scmp.ne.s32.totalorder %s64, %s66
    %p70 = scmp.eq.s32.totalorder %s9, 0
    %p71 = por %p69, %p70
    %p72 = scmp.ne.s32.totalorder %s64, %s66
    %p73 = scmp.eq.s32.totalorder %s14, 1
    %p74 = por %p72, %p73
    %p75 = scmp.ne.s32.totalorder %s66, %s67
    %p76 = scmp.eq.s32.totalorder %s14, 0
    %p77 = por %p75, %p76
    %p78 = scmp.ne.s32.totalorder %s66, %s67
    %p79 = scmp.eq.s32.totalorder %s15, 1
    %p80 = por %p78, %p79
    %p82 = scmp.ne.s32.totalorder %s67, %s81
    %p83 = scmp.eq.s32.totalorder %s15, 0
    %p84 = por %p82, %p83
    %s85 = ssub.s32 %s9, %s16
    %p86 = scmp.eq.s32.totalorder %s85, 0
    %s88 = sadd.s32 %s87, 1
    %s89 = scalar_select %p86, %s87, %s88
    %p92 = pneg %p86
    %p93 = scmp.eq.s32.totalorder %s9, 1
    %p94 = por %p92, %p93
    %p95 = scmp.ne.s32.totalorder %s87, %s90
    %p96 = scmp.eq.s32.totalorder %s9, 0
    %p97 = por %p95, %p96
    %p98 = scmp.ne.s32.totalorder %s87, %s90
    %p99 = scmp.eq.s32.totalorder %s14, 1
    %p100 = por %p98, %p99
    %p101 = scmp.ne.s32.totalorder %s90, %s91
    %p102 = scmp.eq.s32.totalorder %s14, 0
    %p103 = por %p101, %p102
    %p104 = scmp.ne.s32.totalorder %s90, %s91
    %p105 = scmp.eq.s32.totalorder %s15, 1
    %p106 = por %p104, %p105
    %p108 = scmp.ne.s32.totalorder %s91, %s107
    %p109 = scmp.eq.s32.totalorder %s15, 0
    %p110 = por %p108, %p109
    %p111 = scmp.le.s32.totalorder 1, %s9
    %p112 = scmp.lt.s32.totalorder %s9, 3
    %p113 = pnand %p111, %p112
    %p114 = pneg %p113
    // Predicated region
    $region9: #{rfbnet_forward.20} parent=5 // pred_check
      _
    $region10: #{rfbnet_forward.20} parent=5 // pred_check_branch
      %116 = sbr.rel (%p113) target = $region12
    $region11: #{rfbnet_forward.20} parent=5 // pred_region
      %s117 = ssub.s32 %s9, 1
      // Predicated region
      $region13: #{rfbnet_forward.20} parent=11 // pred_check
        %p118 = pneg %p56
      $region14: #{rfbnet_forward.20} parent=11 // pred_check_branch
        %120 = sbr.rel (%p118) target = $region16
      $region15: #{rfbnet_forward.20} parent=11 // pred_region
        _
      $region16: #{rfbnet_forward.20} parent=11 // pred_fallthru
        _
      // Predicated region
      $region17: #{rfbnet_forward.20} parent=11 // pred_check
        %p121 = pneg %p77
      $region18: #{rfbnet_forward.20} parent=11 // pred_check_branch
        %123 = sbr.rel (%p121) target = $region20
      $region19: #{rfbnet_forward.20} parent=11 // pred_region
        _
      $region20: #{rfbnet_forward.20} parent=11 // pred_fallthru
        _
    $region12: #{rfbnet_forward.20} parent=5 // pred_fallthru
      _
    %p124 = scmp.lt.s32.totalorder %s9, 2
    // Predicated region
    $region21: #{rfbnet_forward.20} parent=5 // pred_check
      %p125 = pneg %p124
    $region22: #{rfbnet_forward.20} parent=5 // pred_check_branch
      %127 = sbr.rel (%p125) target = $region24
    $region23: #{rfbnet_forward.20} parent=5 // pred_region
      // Predicated region
      $region25: #{rfbnet_forward.20} parent=23 // pred_check
        %p128 = pneg %p29
      $region26: #{rfbnet_forward.20} parent=23 // pred_check_branch
        %130 = sbr.rel (%p128) target = $region28
      $region27: #{rfbnet_forward.20} parent=23 // pred_region
        %p131 = scmp.lt.s32.totalorder %s9, 1
        %s132 = scalar_select %p131, %s9, 1
        %s133 = smul.addr %s132, 4
        %s134 = scalar_lea.vmem %s0, %s133
      $region28: #{rfbnet_forward.20} parent=23 // pred_fallthru
        _
    $region24: #{rfbnet_forward.20} parent=5 // pred_fallthru
      _
    %p135 = scmp.le.s32.totalorder 1, %s9
    %p136 = scmp.lt.s32.totalorder %s9, 3
    %p137 = pnand %p135, %p136
    %p138 = pneg %p137
    // Predicated region
    $region29: #{rfbnet_forward.20} parent=5 // pred_check
      _
    $region30: #{rfbnet_forward.20} parent=5 // pred_check_branch
      %140 = sbr.rel (%p137) target = $region32
    $region31: #{rfbnet_forward.20} parent=5 // pred_region
      %s141 = ssub.s32 %s9, 1
      %p142 = scmp.lt.s32.totalorder %s14, 1
      %s143 = scalar_select %p142, %s14, 1
      %s144 = smul.addr %s143, 4
      %s145 = scalar_lea.vmem %s0, %s144
      %p146 = pneg %p35
      %p147 = pneg %p32
      %p148 = pneg %p56
      %p149 = pneg %p53
      %p150 = pneg %p77
      %p151 = pneg %p74
      %p152 = pneg %p103
      %p153 = pneg %p100
      %p154 = scmp.lt.s32.totalorder %s14, 1
      %s155 = scalar_select %p154, %s14, 1
      %s156 = smul.addr %s155, 6
      %s157 = smul.addr %s156, 8
      %s158 = scalar_lea.vmem %s3, %s157
      %p159 = scmp.lt.s32.totalorder %s14, 1
      %s160 = scalar_select %p159, %s14, 1
      %s161 = smul.addr %s160, 4
      %s162 = scalar_lea.vmem %s0, %s161
      %p163 = scmp.lt.s32.totalorder %s14, 1
      %s164 = scalar_select %p163, %s14, 1
      %s165 = smul.addr %s164, 6
      %s166 = smul.addr %s165, 8
      %s167 = scalar_lea.vmem %s3, %s166
      %v169 = vld [vmem:[%s162] sm:$0xf]
      %v171 = vunpack.c.l.b16 %v169
      %v172 = vpack.c.b16 %v171, %v171
      %173 = vrot.lane.b32.xlu0 %v172, 127
      %v174 = vpop.permute.xlu0 %173
      %175 = vrot.lane.b32.xlu0 %v172, 126
      %v176 = vpop.permute.xlu0 %175
      %177 = vrot.lane.b32.xlu0 %v172, 122
      %v178 = vpop.permute.xlu0 %177
      %179 = vrot.lane.b32.xlu0 %v172, 121
      %v180 = vpop.permute.xlu0 %179
      %181 = vrot.lane.b32.xlu0 %v172, 120
      %v182 = vpop.permute.xlu0 %181
      %183 = vrot.lane.b32.xlu0 %v172, 116
      %v184 = vpop.permute.xlu0 %183
      %185 = vrot.lane.b32.xlu0 %v172, 115
      %v186 = vpop.permute.xlu0 %185
      %187 = vrot.lane.b32.xlu0 %v172, 114
      %v188 = vpop.permute.xlu0 %187
      %vm189 = vcmask 1043456
      %v192 = vsel %vm189, %v169, %v174
      %v196 = vsel %vm189, %v176, %v178
      %v200 = vsel %vm189, %v180, %v182
      %v204 = vsel %vm189, %v184, %v186
      %v206 = vld [vmem:[%s1] sm:$0xf]
      %v207 = vld [vmem:[%s1 + $0x4] sm:$0xf]
      %v208 = vld [vmem:[%s1 + $0x8] sm:$0xf]
      %v209 = vld [vmem:[%s1 + $0xc] sm:$0xf]
      %v210 = vld [vmem:[%s1 + $0x10] sm:$0xf]
      %v211 = vld [vmem:[%s1 + $0x14] sm:$0xf]
      %v212 = vld [vmem:[%s2] sm:$0xff]
      %v213 = vld [vmem:[%s2 + $0x8] sm:$0xff]
      %v214 = vld [vmem:[%s2 + $0x10] sm:$0xff]
      %v215 = vld [vmem:[%s2 + $0x18] sm:$0xff]
      %v216 = vld [vmem:[%s2 + $0x20] sm:$0xff]
      %v217 = vld [vmem:[%s2 + $0x28] sm:$0xff]
      %219 = vset.pattern.permute.xlu0 0
      %220 = vperm.xlu0 %219, %v212
      %v221 = vpop.permute.xlu0 %220
      %224 = vset.pattern.permute.xlu0 0
      %225 = vperm.xlu0 %224, %v213
      %v226 = vpop.permute.xlu0 %225
      %229 = vset.pattern.permute.xlu0 0
      %230 = vperm.xlu0 %229, %v214
      %v231 = vpop.permute.xlu0 %230
      %234 = vset.pattern.permute.xlu0 0
      %235 = vperm.xlu0 %234, %v215
      %v236 = vpop.permute.xlu0 %235
      %239 = vset.pattern.permute.xlu0 0
      %240 = vperm.xlu0 %239, %v216
      %v241 = vpop.permute.xlu0 %240
      %244 = vset.pattern.permute.xlu0 0
      %245 = vperm.xlu0 %244, %v217
      %v246 = vpop.permute.xlu0 %245
      %v254 = vunpack.c.l.b16 %v206
      %v255 = vunpack.c.l.b16 %v207
      %v256 = vunpack.c.l.b16 %v208
      %v257 = vunpack.c.l.b16 %v209
      %v258 = vunpack.c.l.b16 %v210
      %v259 = vunpack.c.l.b16 %v211
      %v260 = vpack.c.b16 %v255, %v254
      %v261 = vpack.c.b16 %v257, %v256
      %v262 = vpack.c.b16 %v259, %v258
      %vm263 = vcmask 588800
      %v265 = vsel %vm263, %v260, 0
      %v268 = vsel %vm263, %v261, 0
      %v271 = vsel %vm263, %v262, 0
      %v274 = vsel %vm189, %v188, 0
      %276 = vmatprep.subr.bf16.mxu0 0
      %277 = vmatpush1.bf16.msra.mxu0 %v192
      %278 = vmatprep.subr.bf16.mxu0 0
      %279 = vmatpush1.bf16.msra.mxu0 %v196
      %280 = vmatprep.subr.bf16.mxu0 0
      %281 = vmatpush1.bf16.msra.mxu0 %v200
      %282 = vmatprep.subr.bf16.mxu0 0
      %283 = vmatpush1.bf16.msra.mxu0 %v204
      %284 = vmatprep.subr.bf16.mxu0 0
      %285 = vmatpush1.bf16.msra.mxu0 %v274
      %286 = vmatprep.subr.bf16.mxu0 0
      %287 = vmatpush1.bf16.msra.mxu0 0
      %288 = vmatprep.subr.bf16.mxu0 0
      %289 = vmatpush1.bf16.msra.mxu0 0
      %290 = vmatprep.subr.bf16.mxu0 0
      %291 = vmatpush1.bf16.msra.mxu0 0
      %292 = vmatprep.subr.bf16.mxu0 0
      %293 = vmatpush1.bf16.msra.mxu0 0
      %294 = vmatprep.subr.bf16.mxu0 0
      %295 = vmatpush1.bf16.msra.mxu0 0
      %296 = vmatprep.subr.bf16.mxu0 0
      %297 = vmatpush1.bf16.msra.mxu0 0
      %298 = vmatprep.subr.bf16.mxu0 0
      %299 = vmatpush1.bf16.msra.mxu0 0
      %300 = vmatprep.subr.bf16.mxu0 0
      %301 = vmatpush1.bf16.msra.mxu0 0
      %302 = vmatprep.subr.bf16.mxu0 0
      %303 = vmatpush1.bf16.msra.mxu0 0
      %304 = vmatprep.subr.bf16.mxu0 0
      %305 = vmatpush1.bf16.msra.mxu0 0
      %306 = vmatprep.subr.bf16.mxu0 0
      %307 = vmatpush1.bf16.msra.mxu0 0
      %308 = vmatprep.mubr.bf16.mxu0 0
      %309 = vmatmul.mubr.bf16.gmra.mrb[0].mxu0 %v265
      %v310 = vpop.f32.mrb[0].mxu0
      %v311 = vadd.f32 %v221, %v310
      %v312 = vpop.f32.mrb[0].mxu0
      %v313 = vpop.f32.mrb[0].mxu0
      %v314 = vadd.f32 %v226, %v313
      %v315 = vpop.f32.mrb[0].mxu0
      %316 = vmatprep.mubr.bf16.mxu0 0
      %317 = vmatmul.mubr.bf16.gmra.mrb[0].mxu0 %v268
      %v318 = vpop.f32.mrb[0].mxu0
      %v319 = vadd.f32 %v231, %v318
      %v320 = vpop.f32.mrb[0].mxu0
      %v321 = vpop.f32.mrb[0].mxu0
      %v322 = vadd.f32 %v236, %v321
      %v323 = vpop.f32.mrb[0].mxu0
      %324 = vmatprep.mubr.bf16.mxu0 0
      %325 = vmatmul.mubr.bf16.gmra.mrb[0].mxu0 %v271
      %v326 = vpop.f32.mrb[0].mxu0
      %v327 = vadd.f32 %v241, %v326
      %v328 = vpop.f32.mrb[0].mxu0
      %v329 = vpop.f32.mrb[0].mxu0
      %v330 = vadd.f32 %v246, %v329
      %v331 = vpop.f32.mrb[0].mxu0
      %332 = vdwg.mxu0
      %vm333 = vcmask 191488
      %v334 = vsel %vm333, %v322, -inf
      %v335 = vrot.slane %v334, 4
      %v336 = vmax.f32 %v334, %v335
      %v337 = vrot.slane %v336, 2
      %v338 = vmax.f32 %v336, %v337
      %v339 = vrot.slane %v338, 1
      %v340 = vmax.f32 %v338, %v339
      %v341 = vsub.f32 %v322, %v340
      %v342 = vmul.f32 %v341, 1.442695
      %v343 = vpow.pop %v342
      %v344 = vsel %vm333, %v343, 0.0
      %v345 = vrot.slane %v344, 4
      %v346 = vadd.f32 %v344, %v345
      %v347 = vrot.slane %v346, 2
      %v348 = vadd.f32 %v346, %v347
      %v349 = vrot.slane %v348, 1
      %v350 = vadd.f32 %v348, %v349
      %v351 = vrcp.pop %v350
      %v352 = vmul.f32 %v343, %v351
      %vm353 = vcmask 195588
      %v354 = vsel %vm353, %v322, -inf
      %v355 = vrot.slane %v354, 4
      %v356 = vmax.f32 %v354, %v355
      %v357 = vrot.slane %v356, 2
      %v358 = vmax.f32 %v356, %v357
      %v359 = vrot.slane %v358, 1
      %v360 = vmax.f32 %v358, %v359
      %v361 = vsub.f32 %v322, %v360
      %v362 = vmul.f32 %v361, 1.442695
      %v363 = vpow.pop %v362
      %v365 = vrot.slane %v363, 4
      %v367 = vsel %vm333, %v365, 0.0
      %v368 = vrot.slane %v367, 4
      %v369 = vadd.f32 %v367, %v368
      %v370 = vrot.slane %v369, 2
      %v371 = vadd.f32 %v369, %v370
      %v372 = vrot.slane %v371, 1
      %v373 = vadd.f32 %v371, %v372
      %v374 = vrcp.pop %v373
      %v375 = vmul.f32 %v363, %v374
      %v376 = vsel %vm333, %v327, -inf
      %v377 = vrot.slane %v376, 4
      %v378 = vmax.f32 %v376, %v377
      %v379 = vrot.slane %v378, 2
      %v380 = vmax.f32 %v378, %v379
      %v381 = vrot.slane %v380, 1
      %v382 = vmax.f32 %v380, %v381
      %v383 = vsub.f32 %v327, %v382
      %v384 = vmul.f32 %v383, 1.442695
      %v385 = vpow.pop %v384
      %v386 = vsel %vm333, %v385, 0.0
      %v387 = vrot.slane %v386, 4
      %v388 = vadd.f32 %v386, %v387
      %v389 = vrot.slane %v388, 2
      %v390 = vadd.f32 %v388, %v389
      %v391 = vrot.slane %v390, 1
      %v392 = vadd.f32 %v390, %v391
      %v393 = vrcp.pop %v392
      %v394 = vmul.f32 %v385, %v393
      %v395 = vsel %vm353, %v327, -inf
      %v396 = vrot.slane %v395, 4
      %v397 = vmax.f32 %v395, %v396
      %v398 = vrot.slane %v397, 2
      %v399 = vmax.f32 %v397, %v398
      %v400 = vrot.slane %v399, 1
      %v401 = vmax.f32 %v399, %v400
      %v402 = vsub.f32 %v327, %v401
      %v403 = vmul.f32 %v402, 1.442695
      %v404 = vpow.pop %v403
      %v406 = vrot.slane %v404, 4
      %v408 = vsel %vm333, %v406, 0.0
      %v409 = vrot.slane %v408, 4
      %v410 = vadd.f32 %v408, %v409
      %v411 = vrot.slane %v410, 2
      %v412 = vadd.f32 %v410, %v411
      %v413 = vrot.slane %v412, 1
      %v414 = vadd.f32 %v412, %v413
      %v415 = vrcp.pop %v414
      %v416 = vmul.f32 %v404, %v415
      %v417 = vsel %vm333, %v330, -inf
      %v418 = vrot.slane %v417, 4
      %v419 = vmax.f32 %v417, %v418
      %v420 = vrot.slane %v419, 2
      %v421 = vmax.f32 %v419, %v420
      %v422 = vrot.slane %v421, 1
      %v423 = vmax.f32 %v421, %v422
      %v424 = vsub.f32 %v330, %v423
      %v425 = vmul.f32 %v424, 1.442695
      %v426 = vpow.pop %v425
      %v427 = vsel %vm333, %v426, 0.0
      %v428 = vrot.slane %v427, 4
      %v429 = vadd.f32 %v427, %v428
      %v430 = vrot.slane %v429, 2
      %v431 = vadd.f32 %v429, %v430
      %v432 = vrot.slane %v431, 1
      %v433 = vadd.f32 %v431, %v432
      %v434 = vrcp.pop %v433
      %v435 = vmul.f32 %v426, %v434
      %v436 = vsel %vm353, %v330, -inf
      %v437 = vrot.slane %v436, 4
      %v438 = vmax.f32 %v436, %v437
      %v439 = vrot.slane %v438, 2
      %v440 = vmax.f32 %v438, %v439
      %v441 = vrot.slane %v440, 1
      %v442 = vmax.f32 %v440, %v441
      %v443 = vsub.f32 %v330, %v442
      %v444 = vmul.f32 %v443, 1.442695
      %v445 = vpow.pop %v444
      %v447 = vrot.slane %v445, 4
      %v449 = vsel %vm333, %v447, 0.0
      %v450 = vrot.slane %v449, 4
      %v451 = vadd.f32 %v449, %v450
      %v452 = vrot.slane %v451, 2
      %v453 = vadd.f32 %v451, %v452
      %v454 = vrot.slane %v453, 1
      %v455 = vadd.f32 %v453, %v454
      %v456 = vrcp.pop %v455
      %v457 = vmul.f32 %v445, %v456
      %v458 = vsel %vm189, %v352, %v375
      %v459 = vsel %vm189, %v394, %v416
      %v460 = vsel %vm189, %v435, %v457
      %vm461 = vcmask 195584
      %462 = vst.msk [vmem:[%s167] sm:$0xff] %vm461, %v311
      %463 = vst.msk [vmem:[%s167 + $0x8] sm:$0xff] %vm461, %v314
      %464 = vst.msk [vmem:[%s167 + $0x10] sm:$0xff] %vm461, %v319
      %465 = vst.msk [vmem:[%s167 + $0x18] sm:$0xff] %vm461, %v458
      %466 = vst.msk [vmem:[%s167 + $0x20] sm:$0xff] %vm461, %v459
      %467 = vst.msk [vmem:[%s167 + $0x28] sm:$0xff] %vm461, %v460
      %p468 = scmp.lt.s32.totalorder %s14, 1
      %s469 = scalar_select %p468, %s14, 1
      %s470 = smul.addr %s469, 6
      %s471 = smul.addr %s470, 8
      %s472 = scalar_lea.vmem %s3, %s471
      // Predicated region
      $region33: #{rfbnet_forward.20} parent=31 // pred_check
        %p473 = pneg %p100
      $region34: #{rfbnet_forward.20} parent=31 // pred_check_branch
        %475 = sbr.rel (%p473) target = $region36
      $region35: #{rfbnet_forward.20} parent=31 // pred_region
        _
      $region36: #{rfbnet_forward.20} parent=31 // pred_fallthru
        _
    $region32: #{rfbnet_forward.20} parent=5 // pred_fallthru
      _
    %p476 = scmp.le.s32.totalorder 2, %s9
    // Predicated region
    $region37: #{rfbnet_forward.20} parent=5 // pred_check
      %p477 = pneg %p476
    $region38: #{rfbnet_forward.20} parent=5 // pred_check_branch
      %479 = sbr.rel (%p477) target = $region40
    $region39: #{rfbnet_forward.20} parent=5 // pred_region
      %s480 = ssub.s32 %s9, 2
      // Predicated region
      $region41: #{rfbnet_forward.20} parent=39 // pred_check
        %p481 = pneg %p106
      $region42: #{rfbnet_forward.20} parent=39 // pred_check_branch
        %483 = sbr.rel (%p481) target = $region44
      $region43: #{rfbnet_forward.20} parent=39 // pred_region
        %p484 = scmp.lt.s32.totalorder %s15, 1
        %s485 = scalar_select %p484, %s15, 1
        %s486 = smul.addr %s485, 6
        %s487 = smul.addr %s486, 8
        %s488 = scalar_lea.vmem %s3, %s487
      $region44: #{rfbnet_forward.20} parent=39 // pred_fallthru
        _
    $region40: #{rfbnet_forward.20} parent=5 // pred_fallthru
      _
  $region6: #{rfbnet_forward.20} parent=0 // loop_footer
    %s13 = sadd.s32 1, %s9
  $region7: #{rfbnet_forward.20} parent=0 // loop_footer_branch
    %8 = sbr.rel target = $region3
  $region8: #{rfbnet_forward.20} parent=0 // loop_exit
    _

// kernel: rfbnet_forward.16
$region0: #{rfbnet_forward.16}
  #allocation0 [shape = 'u32[]', space=smem, size = 0x4, offset = 0x4, fixed_abs, tag = 'smem constant byte address 0x4 - core index']
  #allocation1 [shape = 'u32[144,128]{1,0:T(1,128)}', space=vmem, size = 0x12000, scoped, tag = 'internal scratch']
  %s0 = inlined_call_operand.vmem [shape: bf16[2,8,18], index: 0, kind: input, shape index: {}]
  %s1 = inlined_call_operand.vmem [shape: bf16[8,72], index: 1, kind: input, shape index: {}]
  %s2 = inlined_call_operand.vmem [shape: f32[8,1], index: 2, kind: input, shape index: {}]
  %s3 = inlined_call_operand.vmem [shape: f32[2,8,8], index: 3, kind: output, shape index: {}]
  %s4 = sld [smem:[#allocation0]]
  $region45: #{rfbnet_forward.16} parent=0
    _
  %s6 = ssub.s32 1, %s4
  %s7 = scalar_select 0, %s6, %s4
  loop: start=0, step=1, limit=4
  $region2: #{rfbnet_forward.16} parent=0 // loop_pre_header
    _
  $region3: #{rfbnet_forward.16} parent=0 // loop_header
    %s9 = sphi 0, %s13
    %p10 = scmp.ge.s32.totalorder %s9, 4
    %s19 = sphi 0, %s21
    %s22 = sphi 0, %s19
    %s23 = sphi 0, %s22
    %s39 = sphi 0, %s23
    %s43 = sphi 0, %s43
    %s45 = sphi 0, %s43
    %s46 = sphi 0, %s45
    %s60 = sphi 0, %s46
    %s64 = sphi 0, %s64
    %s66 = sphi 0, %s64
    %s67 = sphi 0, %s66
    %s81 = sphi 0, %s67
    %s87 = sphi 0, %s89
    %s90 = sphi 0, %s87
    %s91 = sphi 0, %s90
    %s107 = sphi 0, %s91
  $region4: #{rfbnet_forward.16} parent=0 // loop_header_branch
    %12 = sbr.rel (%p10) target = $region8
  $region5: #{rfbnet_forward.16} parent=0 // loop_body
    %s14 = ssub.s32 %s9, 1
    %s15 = ssub.s32 %s9, 2
    %s16 = sadd.s32 %s9, 1
    %s17 = ssub.s32 %s9, %s16
    %p18 = scmp.eq.s32.totalorder %s17, 0
    %s20 = sadd.s32 %s19, 1
    %s21 = scalar_select %p18, %s19, %s20
    %p24 = pneg %p18
    %p25 = scmp.eq.s32.totalorder %s9, 1
    %p26 = por %p24, %p25
    %p27 = scmp.ne.s32.totalorder %s19, %s22
    %p28 = scmp.eq.s32.totalorder %s9, 0
    %p29 = por %p27, %p28
    %p30 = scmp.ne.s32.totalorder %s19, %s22
    %p31 = scmp.eq.s32.totalorder %s14, 1
    %p32 = por %p30, %p31
    %p33 = scmp.ne.s32.totalorder %s22, %s23
    %p34 = scmp.eq.s32.totalorder %s14, 0
    %p35 = por %p33, %p34
    %p36 = scmp.ne.s32.totalorder %s22, %s23
    %p37 = scmp.eq.s32.totalorder %s15, 1
    %p38 = por %p36, %p37
    %p40 = scmp.ne.s32.totalorder %s23, %s39
    %p41 = scmp.eq.s32.totalorder %s15, 0
    %p42 = por %p40, %p41
    %s44 = sadd.s32 %s43, 1
    %p47 = scmp.eq.s32.totalorder %s9, 1
    %p48 = scmp.ne.s32.totalorder %s43, %s45
    %p49 = scmp.eq.s32.totalorder %s9, 0
    %p50 = por %p48, %p49
    %p51 = scmp.ne.s32.totalorder %s43, %s45
    %p52 = scmp.eq.s32.totalorder %s14, 1
    %p53 = por %p51, %p52
    %p54 = scmp.ne.s32.totalorder %s45, %s46
    %p55 = scmp.eq.s32.totalorder %s14, 0
    %p56 = por %p54, %p55
    %p57 = scmp.ne.s32.totalorder %s45, %s46
    %p58 = scmp.eq.s32.totalorder %s15, 1
    %p59 = por %p57, %p58
    %p61 = scmp.ne.s32.totalorder %s46, %s60
    %p62 = scmp.eq.s32.totalorder %s15, 0
    %p63 = por %p61, %p62
    %s65 = sadd.s32 %s64, 1
    %p68 = scmp.eq.s32.totalorder %s9, 1
    %p69 = scmp.ne.s32.totalorder %s64, %s66
    %p70 = scmp.eq.s32.totalorder %s9, 0
    %p71 = por %p69, %p70
    %p72 = scmp.ne.s32.totalorder %s64, %s66
    %p73 = scmp.eq.s32.totalorder %s14, 1
    %p74 = por %p72, %p73
    %p75 = scmp.ne.s32.totalorder %s66, %s67
    %p76 = scmp.eq.s32.totalorder %s14, 0
    %p77 = por %p75, %p76
    %p78 = scmp.ne.s32.totalorder %s66, %s67
    %p79 = scmp.eq.s32.totalorder %s15, 1
    %p80 = por %p78, %p79
    %p82 = scmp.ne.s32.totalorder %s67, %s81
    %p83 = scmp.eq.s32.totalorder %s15, 0
    %p84 = por %p82, %p83
    %s85 = ssub.s32 %s9, %s16
    %p86 = scmp.eq.s32.totalorder %s85, 0
    %s88 = sadd.s32 %s87, 1
    %s89 = scalar_select %p86, %s87, %s88
    %p92 = pneg %p86
    %p93 = scmp.eq.s32.totalorder %s9, 1
    %p94 = por %p92, %p93
    %p95 = scmp.ne.s32.totalorder %s87, %s90
    %p96 = scmp.eq.s32.totalorder %s9, 0
    %p97 = por %p95, %p96
    %p98 = scmp.ne.s32.totalorder %s87, %s90
    %p99 = scmp.eq.s32.totalorder %s14, 1
    %p100 = por %p98, %p99
    %p101 = scmp.ne.s32.totalorder %s90, %s91
    %p102 = scmp.eq.s32.totalorder %s14, 0
    %p103 = por %p101, %p102
    %p104 = scmp.ne.s32.totalorder %s90, %s91
    %p105 = scmp.eq.s32.totalorder %s15, 1
    %p106 = por %p104, %p105
    %p108 = scmp.ne.s32.totalorder %s91, %s107
    %p109 = scmp.eq.s32.totalorder %s15, 0
    %p110 = por %p108, %p109
    %p111 = scmp.le.s32.totalorder 1, %s9
    %p112 = scmp.lt.s32.totalorder %s9, 3
    %p113 = pnand %p111, %p112
    %p114 = pneg %p113
    // Predicated region
    $region9: #{rfbnet_forward.16} parent=5 // pred_check
      _
    $region10: #{rfbnet_forward.16} parent=5 // pred_check_branch
      %116 = sbr.rel (%p113) target = $region12
    $region11: #{rfbnet_forward.16} parent=5 // pred_region
      %s117 = ssub.s32 %s9, 1
      // Predicated region
      $region13: #{rfbnet_forward.16} parent=11 // pred_check
        %p118 = pneg %p56
      $region14: #{rfbnet_forward.16} parent=11 // pred_check_branch
        %120 = sbr.rel (%p118) target = $region16
      $region15: #{rfbnet_forward.16} parent=11 // pred_region
        _
      $region16: #{rfbnet_forward.16} parent=11 // pred_fallthru
        _
      // Predicated region
      $region17: #{rfbnet_forward.16} parent=11 // pred_check
        %p121 = pneg %p77
      $region18: #{rfbnet_forward.16} parent=11 // pred_check_branch
        %123 = sbr.rel (%p121) target = $region20
      $region19: #{rfbnet_forward.16} parent=11 // pred_region
        _
      $region20: #{rfbnet_forward.16} parent=11 // pred_fallthru
        _
    $region12: #{rfbnet_forward.16} parent=5 // pred_fallthru
      _
    %p124 = scmp.lt.s32.totalorder %s9, 2
    // Predicated region
    $region21: #{rfbnet_forward.16} parent=5 // pred_check
      %p125 = pneg %p124
    $region22: #{rfbnet_forward.16} parent=5 // pred_check_branch
      %127 = sbr.rel (%p125) target = $region24
    $region23: #{rfbnet_forward.16} parent=5 // pred_region
      // Predicated region
      $region25: #{rfbnet_forward.16} parent=23 // pred_check
        %p128 = pneg %p29
      $region26: #{rfbnet_forward.16} parent=23 // pred_check_branch
        %130 = sbr.rel (%p128) target = $region28
      $region27: #{rfbnet_forward.16} parent=23 // pred_region
        %p131 = scmp.lt.s32.totalorder %s9, 1
        %s132 = scalar_select %p131, %s9, 1
        %s133 = smul.addr %s132, 4
        %s134 = scalar_lea.vmem %s0, %s133
      $region28: #{rfbnet_forward.16} parent=23 // pred_fallthru
        _
    $region24: #{rfbnet_forward.16} parent=5 // pred_fallthru
      _
    %p135 = scmp.le.s32.totalorder 1, %s9
    %p136 = scmp.lt.s32.totalorder %s9, 3
    %p137 = pnand %p135, %p136
    %p138 = pneg %p137
    // Predicated region
    $region29: #{rfbnet_forward.16} parent=5 // pred_check
      _
    $region30: #{rfbnet_forward.16} parent=5 // pred_check_branch
      %140 = sbr.rel (%p137) target = $region32
    $region31: #{rfbnet_forward.16} parent=5 // pred_region
      %s141 = ssub.s32 %s9, 1
      %p142 = scmp.lt.s32.totalorder %s14, 1
      %s143 = scalar_select %p142, %s14, 1
      %s144 = smul.addr %s143, 4
      %s145 = scalar_lea.vmem %s0, %s144
      %p146 = pneg %p35
      %p147 = pneg %p32
      %p148 = pneg %p56
      %p149 = pneg %p53
      %p150 = pneg %p77
      %p151 = pneg %p74
      %p152 = pneg %p103
      %p153 = pneg %p100
      %p154 = scmp.lt.s32.totalorder %s14, 1
      %s155 = scalar_select %p154, %s14, 1
      %s156 = smul.addr %s155, 8
      %s157 = scalar_lea.vmem %s3, %s156
      %p158 = scmp.lt.s32.totalorder %s14, 1
      %s159 = scalar_select %p158, %s14, 1
      %s160 = smul.addr %s159, 4
      %s161 = scalar_lea.vmem %s0, %s160
      %p162 = scmp.lt.s32.totalorder %s14, 1
      %s163 = scalar_select %p162, %s14, 1
      %s164 = smul.addr %s163, 8
      %s165 = scalar_lea.vmem %s3, %s164
      %v167 = vld [vmem:[%s161] sm:$0xf]
      %v169 = vunpack.c.l.b16 %v167
      %v170 = vpack.c.b16 %v169, %v169
      %171 = vrot.lane.b32.xlu0 %v170, 127
      %v172 = vpop.permute.xlu0 %171
      %173 = vrot.lane.b32.xlu0 %v170, 126
      %v174 = vpop.permute.xlu0 %173
      %175 = vrot.lane.b32.xlu0 %v170, 124
      %v176 = vpop.permute.xlu0 %175
      %177 = vrot.lane.b32.xlu0 %v170, 123
      %v178 = vpop.permute.xlu0 %177
      %179 = vrot.lane.b32.xlu0 %v170, 122
      %v180 = vpop.permute.xlu0 %179
      %181 = vrot.lane.b32.xlu0 %v170, 120
      %v182 = vpop.permute.xlu0 %181
      %183 = vrot.lane.b32.xlu0 %v170, 119
      %v184 = vpop.permute.xlu0 %183
      %185 = vrot.lane.b32.xlu0 %v170, 118
      %v186 = vpop.permute.xlu0 %185
      %vm187 = vcmask 1043456
      %v190 = vsel %vm187, %v167, %v172
      %v194 = vsel %vm187, %v174, %v176
      %v198 = vsel %vm187, %v178, %v180
      %v202 = vsel %vm187, %v182, %v184
      %v204 = vld [vmem:[%s1] sm:$0xf]
      %v205 = vld [vmem:[%s2] sm:$0xff]
      %207 = vset.pattern.permute.xlu0 0
      %208 = vperm.xlu0 %207, %v205
      %v209 = vpop.permute.xlu0 %208
      %vm211 = vcmask 588800
      %v213 = vsel %vm211, %v204, 0
      %v216 = vsel %vm187, %v186, 0
      %218 = vmatprep.subr.bf16.mxu0 0
      %219 = vmatpush1.bf16.msra.mxu0 %v190
      %220 = vmatprep.subr.bf16.mxu0 0
      %221 = vmatpush1.bf16.msra.mxu0 %v194
      %222 = vmatprep.subr.bf16.mxu0 0
      %223 = vmatpush1.bf16.msra.mxu0 %v198
      %224 = vmatprep.subr.bf16.mxu0 0
      %225 = vmatpush1.bf16.msra.mxu0 %v202
      %226 = vmatprep.subr.bf16.mxu0 0
      %227 = vmatpush1.bf16.msra.mxu0 %v216
      %228 = vmatprep.subr.bf16.mxu0 0
      %229 = vmatpush1.bf16.msra.mxu0 0
      %230 = vmatprep.subr.bf16.mxu0 0
      %231 = vmatpush1.bf16.msra.mxu0 0
      %232 = vmatprep.subr.bf16.mxu0 0
      %233 = vmatpush1.bf16.msra.mxu0 0
      %234 = vmatprep.subr.bf16.mxu0 0
      %235 = vmatpush1.bf16.msra.mxu0 0
      %236 = vmatprep.subr.bf16.mxu0 0
      %237 = vmatpush1.bf16.msra.mxu0 0
      %238 = vmatprep.subr.bf16.mxu0 0
      %239 = vmatpush1.bf16.msra.mxu0 0
      %240 = vmatprep.subr.bf16.mxu0 0
      %241 = vmatpush1.bf16.msra.mxu0 0
      %242 = vmatprep.subr.bf16.mxu0 0
      %243 = vmatpush1.bf16.msra.mxu0 0
      %244 = vmatprep.subr.bf16.mxu0 0
      %245 = vmatpush1.bf16.msra.mxu0 0
      %246 = vmatprep.subr.bf16.mxu0 0
      %247 = vmatpush1.bf16.msra.mxu0 0
      %248 = vmatprep.subr.bf16.mxu0 0
      %249 = vmatpush1.bf16.msra.mxu0 0
      %250 = vmatprep.mubr.bf16.mxu0 0
      %251 = vmatmul.mubr.bf16.gmra.mrb[0].mxu0 %v213
      %v252 = vpop.f32.mrb[0].mxu0
      %v253 = vadd.f32 %v209, %v252
      %v254 = vpop.f32.mrb[0].mxu0
      %v255 = vpop.f32.mrb[0].mxu0
      %v256 = vpop.f32.mrb[0].mxu0
      %257 = vdwg.mxu0
      %v258 = vmax.f32 %v253, 0.0
      %vm259 = vcmask 64512
      %260 = vst.msk [vmem:[%s165] sm:$0xff] %vm259, %v258
      %p261 = scmp.lt.s32.totalorder %s14, 1
      %s262 = scalar_select %p261, %s14, 1
      %s263 = smul.addr %s262, 8
      %s264 = scalar_lea.vmem %s3, %s263
      // Predicated region
      $region33: #{rfbnet_forward.16} parent=31 // pred_check
        %p265 = pneg %p100
      $region34: #{rfbnet_forward.16} parent=31 // pred_check_branch
        %267 = sbr.rel (%p265) target = $region36
      $region35: #{rfbnet_forward.16} parent=31 // pred_region
        _
      $region36: #{rfbnet_forward.16} parent=31 // pred_fallthru
        _
    $region32: #{rfbnet_forward.16} parent=5 // pred_fallthru
      _
    %p268 = scmp.le.s32.totalorder 2, %s9
    // Predicated region
    $region37: #{rfbnet_forward.16} parent=5 // pred_check
      %p269 = pneg %p268
    $region38: #{rfbnet_forward.16} parent=5 // pred_check_branch
      %271 = sbr.rel (%p269) target = $region40
    $region39: #{rfbnet_forward.16} parent=5 // pred_region
      %s272 = ssub.s32 %s9, 2
      // Predicated region
      $region41: #{rfbnet_forward.16} parent=39 // pred_check
        %p273 = pneg %p106
      $region42: #{rfbnet_forward.16} parent=39 // pred_check_branch
        %275 = sbr.rel (%p273) target = $region44
      $region43: #{rfbnet_forward.16} parent=39 // pred_region
        %p276 = scmp.lt.s32.totalorder %s15, 1
        %s277 = scalar_select %p276, %s15, 1
        %s278 = smul.addr %s277, 8
        %s279 = scalar_lea.vmem %s3, %s278
      $region44: #{rfbnet_forward.16} parent=39 // pred_fallthru
        _
    $region40: #{rfbnet_forward.16} parent=5 // pred_fallthru
      _
  $region6: #{rfbnet_forward.16} parent=0 // loop_footer
    %s13 = sadd.s32 1, %s9
  $region7: #{rfbnet_forward.16} parent=0 // loop_footer_branch
    %8 = sbr.rel target = $region3
  $region8: #{rfbnet_forward.16} parent=0 // loop_exit
    _

// kernel: rfbnet_forward.17
$region0: #{rfbnet_forward.17}
  #allocation0 [shape = 'u32[]', space=smem, size = 0x4, offset = 0x4, fixed_abs, tag = 'smem constant byte address 0x4 - core index']
  #allocation1 [shape = 'u32[144,128]{1,0:T(1,128)}', space=vmem, size = 0x12000, scoped, tag = 'internal scratch']
  %s0 = inlined_call_operand.vmem [shape: bf16[2,8,11], index: 0, kind: input, shape index: {}]
  %s1 = inlined_call_operand.vmem [shape: bf16[8,72], index: 1, kind: input, shape index: {}]
  %s2 = inlined_call_operand.vmem [shape: f32[8,1], index: 2, kind: input, shape index: {}]
  %s3 = inlined_call_operand.vmem [shape: f32[2,8,3], index: 3, kind: output, shape index: {}]
  %s4 = sld [smem:[#allocation0]]
  $region45: #{rfbnet_forward.17} parent=0
    _
  %s6 = ssub.s32 1, %s4
  %s7 = scalar_select 0, %s6, %s4
  loop: start=0, step=1, limit=4
  $region2: #{rfbnet_forward.17} parent=0 // loop_pre_header
    _
  $region3: #{rfbnet_forward.17} parent=0 // loop_header
    %s9 = sphi 0, %s13
    %p10 = scmp.ge.s32.totalorder %s9, 4
    %s19 = sphi 0, %s21
    %s22 = sphi 0, %s19
    %s23 = sphi 0, %s22
    %s39 = sphi 0, %s23
    %s43 = sphi 0, %s43
    %s45 = sphi 0, %s43
    %s46 = sphi 0, %s45
    %s60 = sphi 0, %s46
    %s64 = sphi 0, %s64
    %s66 = sphi 0, %s64
    %s67 = sphi 0, %s66
    %s81 = sphi 0, %s67
    %s87 = sphi 0, %s89
    %s90 = sphi 0, %s87
    %s91 = sphi 0, %s90
    %s107 = sphi 0, %s91
  $region4: #{rfbnet_forward.17} parent=0 // loop_header_branch
    %12 = sbr.rel (%p10) target = $region8
  $region5: #{rfbnet_forward.17} parent=0 // loop_body
    %s14 = ssub.s32 %s9, 1
    %s15 = ssub.s32 %s9, 2
    %s16 = sadd.s32 %s9, 1
    %s17 = ssub.s32 %s9, %s16
    %p18 = scmp.eq.s32.totalorder %s17, 0
    %s20 = sadd.s32 %s19, 1
    %s21 = scalar_select %p18, %s19, %s20
    %p24 = pneg %p18
    %p25 = scmp.eq.s32.totalorder %s9, 1
    %p26 = por %p24, %p25
    %p27 = scmp.ne.s32.totalorder %s19, %s22
    %p28 = scmp.eq.s32.totalorder %s9, 0
    %p29 = por %p27, %p28
    %p30 = scmp.ne.s32.totalorder %s19, %s22
    %p31 = scmp.eq.s32.totalorder %s14, 1
    %p32 = por %p30, %p31
    %p33 = scmp.ne.s32.totalorder %s22, %s23
    %p34 = scmp.eq.s32.totalorder %s14, 0
    %p35 = por %p33, %p34
    %p36 = scmp.ne.s32.totalorder %s22, %s23
    %p37 = scmp.eq.s32.totalorder %s15, 1
    %p38 = por %p36, %p37
    %p40 = scmp.ne.s32.totalorder %s23, %s39
    %p41 = scmp.eq.s32.totalorder %s15, 0
    %p42 = por %p40, %p41
    %s44 = sadd.s32 %s43, 1
    %p47 = scmp.eq.s32.totalorder %s9, 1
    %p48 = scmp.ne.s32.totalorder %s43, %s45
    %p49 = scmp.eq.s32.totalorder %s9, 0
    %p50 = por %p48, %p49
    %p51 = scmp.ne.s32.totalorder %s43, %s45
    %p52 = scmp.eq.s32.totalorder %s14, 1
    %p53 = por %p51, %p52
    %p54 = scmp.ne.s32.totalorder %s45, %s46
    %p55 = scmp.eq.s32.totalorder %s14, 0
    %p56 = por %p54, %p55
    %p57 = scmp.ne.s32.totalorder %s45, %s46
    %p58 = scmp.eq.s32.totalorder %s15, 1
    %p59 = por %p57, %p58
    %p61 = scmp.ne.s32.totalorder %s46, %s60
    %p62 = scmp.eq.s32.totalorder %s15, 0
    %p63 = por %p61, %p62
    %s65 = sadd.s32 %s64, 1
    %p68 = scmp.eq.s32.totalorder %s9, 1
    %p69 = scmp.ne.s32.totalorder %s64, %s66
    %p70 = scmp.eq.s32.totalorder %s9, 0
    %p71 = por %p69, %p70
    %p72 = scmp.ne.s32.totalorder %s64, %s66
    %p73 = scmp.eq.s32.totalorder %s14, 1
    %p74 = por %p72, %p73
    %p75 = scmp.ne.s32.totalorder %s66, %s67
    %p76 = scmp.eq.s32.totalorder %s14, 0
    %p77 = por %p75, %p76
    %p78 = scmp.ne.s32.totalorder %s66, %s67
    %p79 = scmp.eq.s32.totalorder %s15, 1
    %p80 = por %p78, %p79
    %p82 = scmp.ne.s32.totalorder %s67, %s81
    %p83 = scmp.eq.s32.totalorder %s15, 0
    %p84 = por %p82, %p83
    %s85 = ssub.s32 %s9, %s16
    %p86 = scmp.eq.s32.totalorder %s85, 0
    %s88 = sadd.s32 %s87, 1
    %s89 = scalar_select %p86, %s87, %s88
    %p92 = pneg %p86
    %p93 = scmp.eq.s32.totalorder %s9, 1
    %p94 = por %p92, %p93
    %p95 = scmp.ne.s32.totalorder %s87, %s90
    %p96 = scmp.eq.s32.totalorder %s9, 0
    %p97 = por %p95, %p96
    %p98 = scmp.ne.s32.totalorder %s87, %s90
    %p99 = scmp.eq.s32.totalorder %s14, 1
    %p100 = por %p98, %p99
    %p101 = scmp.ne.s32.totalorder %s90, %s91
    %p102 = scmp.eq.s32.totalorder %s14, 0
    %p103 = por %p101, %p102
    %p104 = scmp.ne.s32.totalorder %s90, %s91
    %p105 = scmp.eq.s32.totalorder %s15, 1
    %p106 = por %p104, %p105
    %p108 = scmp.ne.s32.totalorder %s91, %s107
    %p109 = scmp.eq.s32.totalorder %s15, 0
    %p110 = por %p108, %p109
    %p111 = scmp.le.s32.totalorder 1, %s9
    %p112 = scmp.lt.s32.totalorder %s9, 3
    %p113 = pnand %p111, %p112
    %p114 = pneg %p113
    // Predicated region
    $region9: #{rfbnet_forward.17} parent=5 // pred_check
      _
    $region10: #{rfbnet_forward.17} parent=5 // pred_check_branch
      %116 = sbr.rel (%p113) target = $region12
    $region11: #{rfbnet_forward.17} parent=5 // pred_region
      %s117 = ssub.s32 %s9, 1
      // Predicated region
      $region13: #{rfbnet_forward.17} parent=11 // pred_check
        %p118 = pneg %p56
      $region14: #{rfbnet_forward.17} parent=11 // pred_check_branch
        %120 = sbr.rel (%p118) target = $region16
      $region15: #{rfbnet_forward.17} parent=11 // pred_region
        _
      $region16: #{rfbnet_forward.17} parent=11 // pred_fallthru
        _
      // Predicated region
      $region17: #{rfbnet_forward.17} parent=11 // pred_check
        %p121 = pneg %p77
      $region18: #{rfbnet_forward.17} parent=11 // pred_check_branch
        %123 = sbr.rel (%p121) target = $region20
      $region19: #{rfbnet_forward.17} parent=11 // pred_region
        _
      $region20: #{rfbnet_forward.17} parent=11 // pred_fallthru
        _
    $region12: #{rfbnet_forward.17} parent=5 // pred_fallthru
      _
    %p124 = scmp.lt.s32.totalorder %s9, 2
    // Predicated region
    $region21: #{rfbnet_forward.17} parent=5 // pred_check
      %p125 = pneg %p124
    $region22: #{rfbnet_forward.17} parent=5 // pred_check_branch
      %127 = sbr.rel (%p125) target = $region24
    $region23: #{rfbnet_forward.17} parent=5 // pred_region
      // Predicated region
      $region25: #{rfbnet_forward.17} parent=23 // pred_check
        %p128 = pneg %p29
      $region26: #{rfbnet_forward.17} parent=23 // pred_check_branch
        %130 = sbr.rel (%p128) target = $region28
      $region27: #{rfbnet_forward.17} parent=23 // pred_region
        %p131 = scmp.lt.s32.totalorder %s9, 1
        %s132 = scalar_select %p131, %s9, 1
        %s133 = smul.addr %s132, 4
        %s134 = scalar_lea.vmem %s0, %s133
      $region28: #{rfbnet_forward.17} parent=23 // pred_fallthru
        _
    $region24: #{rfbnet_forward.17} parent=5 // pred_fallthru
      _
    %p135 = scmp.le.s32.totalorder 1, %s9
    %p136 = scmp.lt.s32.totalorder %s9, 3
    %p137 = pnand %p135, %p136
    %p138 = pneg %p137
    // Predicated region
    $region29: #{rfbnet_forward.17} parent=5 // pred_check
      _
    $region30: #{rfbnet_forward.17} parent=5 // pred_check_branch
      %140 = sbr.rel (%p137) target = $region32
    $region31: #{rfbnet_forward.17} parent=5 // pred_region
      %s141 = ssub.s32 %s9, 1
      %p142 = scmp.lt.s32.totalorder %s14, 1
      %s143 = scalar_select %p142, %s14, 1
      %s144 = smul.addr %s143, 4
      %s145 = scalar_lea.vmem %s0, %s144
      %p146 = pneg %p35
      %p147 = pneg %p32
      %p148 = pneg %p56
      %p149 = pneg %p53
      %p150 = pneg %p77
      %p151 = pneg %p74
      %p152 = pneg %p103
      %p153 = pneg %p100
      %p154 = scmp.lt.s32.totalorder %s14, 1
      %s155 = scalar_select %p154, %s14, 1
      %s156 = smul.addr %s155, 8
      %s157 = scalar_lea.vmem %s3, %s156
      %p158 = scmp.lt.s32.totalorder %s14, 1
      %s159 = scalar_select %p158, %s14, 1
      %s160 = smul.addr %s159, 4
      %s161 = scalar_lea.vmem %s0, %s160
      %p162 = scmp.lt.s32.totalorder %s14, 1
      %s163 = scalar_select %p162, %s14, 1
      %s164 = smul.addr %s163, 8
      %s165 = scalar_lea.vmem %s3, %s164
      %v167 = vld [vmem:[%s161] sm:$0xf]
      %v169 = vunpack.c.l.b16 %v167
      %v170 = vpack.c.b16 %v169, %v169
      %171 = vrot.lane.b32.xlu0 %v170, 127
      %v172 = vpop.permute.xlu0 %171
      %173 = vrot.lane.b32.xlu0 %v170, 126
      %v174 = vpop.permute.xlu0 %173
      %175 = vrot.lane.b32.xlu0 %v170, 125
      %v176 = vpop.permute.xlu0 %175
      %177 = vrot.lane.b32.xlu0 %v170, 124
      %v178 = vpop.permute.xlu0 %177
      %179 = vrot.lane.b32.xlu0 %v170, 123
      %v180 = vpop.permute.xlu0 %179
      %181 = vrot.lane.b32.xlu0 %v170, 122
      %v182 = vpop.permute.xlu0 %181
      %183 = vrot.lane.b32.xlu0 %v170, 121
      %v184 = vpop.permute.xlu0 %183
      %185 = vrot.lane.b32.xlu0 %v170, 120
      %v186 = vpop.permute.xlu0 %185
      %vm187 = vcmask 1043456
      %v190 = vsel %vm187, %v167, %v172
      %v194 = vsel %vm187, %v174, %v176
      %v198 = vsel %vm187, %v178, %v180
      %v202 = vsel %vm187, %v182, %v184
      %v204 = vld [vmem:[%s1] sm:$0xf]
      %v205 = vld [vmem:[%s2] sm:$0xff]
      %207 = vset.pattern.permute.xlu0 0
      %208 = vperm.xlu0 %207, %v205
      %v209 = vpop.permute.xlu0 %208
      %vm211 = vcmask 588800
      %v213 = vsel %vm211, %v204, 0
      %v216 = vsel %vm187, %v186, 0
      %218 = vmatprep.subr.bf16.mxu0 0
      %219 = vmatpush1.bf16.msra.mxu0 %v190
      %220 = vmatprep.subr.bf16.mxu0 0
      %221 = vmatpush1.bf16.msra.mxu0 %v194
      %222 = vmatprep.subr.bf16.mxu0 0
      %223 = vmatpush1.bf16.msra.mxu0 %v198
      %224 = vmatprep.subr.bf16.mxu0 0
      %225 = vmatpush1.bf16.msra.mxu0 %v202
      %226 = vmatprep.subr.bf16.mxu0 0
      %227 = vmatpush1.bf16.msra.mxu0 %v216
      %228 = vmatprep.subr.bf16.mxu0 0
      %229 = vmatpush1.bf16.msra.mxu0 0
      %230 = vmatprep.subr.bf16.mxu0 0
      %231 = vmatpush1.bf16.msra.mxu0 0
      %232 = vmatprep.subr.bf16.mxu0 0
      %233 = vmatpush1.bf16.msra.mxu0 0
      %234 = vmatprep.subr.bf16.mxu0 0
      %235 = vmatpush1.bf16.msra.mxu0 0
      %236 = vmatprep.subr.bf16.mxu0 0
      %237 = vmatpush1.bf16.msra.mxu0 0
      %238 = vmatprep.subr.bf16.mxu0 0
      %239 = vmatpush1.bf16.msra.mxu0 0
      %240 = vmatprep.subr.bf16.mxu0 0
      %241 = vmatpush1.bf16.msra.mxu0 0
      %242 = vmatprep.subr.bf16.mxu0 0
      %243 = vmatpush1.bf16.msra.mxu0 0
      %244 = vmatprep.subr.bf16.mxu0 0
      %245 = vmatpush1.bf16.msra.mxu0 0
      %246 = vmatprep.subr.bf16.mxu0 0
      %247 = vmatpush1.bf16.msra.mxu0 0
      %248 = vmatprep.subr.bf16.mxu0 0
      %249 = vmatpush1.bf16.msra.mxu0 0
      %250 = vmatprep.mubr.bf16.mxu0 0
      %251 = vmatmul.mubr.bf16.gmra.mrb[0].mxu0 %v213
      %v252 = vpop.f32.mrb[0].mxu0
      %v253 = vadd.f32 %v209, %v252
      %v254 = vpop.f32.mrb[0].mxu0
      %v255 = vpop.f32.mrb[0].mxu0
      %v256 = vpop.f32.mrb[0].mxu0
      %257 = vdwg.mxu0
      %v258 = vmax.f32 %v253, 0.0
      %vm259 = vcmask 23552
      %260 = vst.msk [vmem:[%s165] sm:$0xff] %vm259, %v258
      %p261 = scmp.lt.s32.totalorder %s14, 1
      %s262 = scalar_select %p261, %s14, 1
      %s263 = smul.addr %s262, 8
      %s264 = scalar_lea.vmem %s3, %s263
      // Predicated region
      $region33: #{rfbnet_forward.17} parent=31 // pred_check
        %p265 = pneg %p100
      $region34: #{rfbnet_forward.17} parent=31 // pred_check_branch
        %267 = sbr.rel (%p265) target = $region36
      $region35: #{rfbnet_forward.17} parent=31 // pred_region
        _
      $region36: #{rfbnet_forward.17} parent=31 // pred_fallthru
        _
    $region32: #{rfbnet_forward.17} parent=5 // pred_fallthru
      _
    %p268 = scmp.le.s32.totalorder 2, %s9
    // Predicated region
    $region37: #{rfbnet_forward.17} parent=5 // pred_check
      %p269 = pneg %p268
    $region38: #{rfbnet_forward.17} parent=5 // pred_check_branch
      %271 = sbr.rel (%p269) target = $region40
    $region39: #{rfbnet_forward.17} parent=5 // pred_region
      %s272 = ssub.s32 %s9, 2
      // Predicated region
      $region41: #{rfbnet_forward.17} parent=39 // pred_check
        %p273 = pneg %p106
      $region42: #{rfbnet_forward.17} parent=39 // pred_check_branch
        %275 = sbr.rel (%p273) target = $region44
      $region43: #{rfbnet_forward.17} parent=39 // pred_region
        %p276 = scmp.lt.s32.totalorder %s15, 1
        %s277 = scalar_select %p276, %s15, 1
        %s278 = smul.addr %s277, 8
        %s279 = scalar_lea.vmem %s3, %s278
      $region44: #{rfbnet_forward.17} parent=39 // pred_fallthru
        _
    $region40: #{rfbnet_forward.17} parent=5 // pred_fallthru
      _
  $region6: #{rfbnet_forward.17} parent=0 // loop_footer
    %s13 = sadd.s32 1, %s9
  $region7: #{rfbnet_forward.17} parent=0 // loop_footer_branch
    %8 = sbr.rel target = $region3
  $region8: #{rfbnet_forward.17} parent=0 // loop_exit
    _

// kernel: rfbnet_forward.23
$region0: #{rfbnet_forward.23}
  #allocation0 [shape = 'u32[]', space=smem, size = 0x4, offset = 0x4, fixed_abs, tag = 'smem constant byte address 0x4 - core index']
  #allocation1 [shape = 'u32[144,128]{1,0:T(1,128)}', space=vmem, size = 0x12000, scoped, tag = 'internal scratch']
  %s0 = inlined_call_operand.vmem [shape: bf16[2,8,11], index: 0, kind: input, shape index: {}]
  %s1 = inlined_call_operand.vmem [shape: bf16[32,72], index: 1, kind: input, shape index: {}]
  %s2 = inlined_call_operand.vmem [shape: f32[32,1], index: 2, kind: input, shape index: {}]
  %s3 = inlined_call_operand.vmem [shape: f32[2,32,3], index: 3, kind: output, shape index: {}]
  %s4 = sld [smem:[#allocation0]]
  $region45: #{rfbnet_forward.23} parent=0
    _
  %s6 = ssub.s32 1, %s4
  %s7 = scalar_select 0, %s6, %s4
  loop: start=0, step=1, limit=4
  $region2: #{rfbnet_forward.23} parent=0 // loop_pre_header
    _
  $region3: #{rfbnet_forward.23} parent=0 // loop_header
    %s9 = sphi 0, %s13
    %p10 = scmp.ge.s32.totalorder %s9, 4
    %s19 = sphi 0, %s21
    %s22 = sphi 0, %s19
    %s23 = sphi 0, %s22
    %s39 = sphi 0, %s23
    %s43 = sphi 0, %s43
    %s45 = sphi 0, %s43
    %s46 = sphi 0, %s45
    %s60 = sphi 0, %s46
    %s64 = sphi 0, %s64
    %s66 = sphi 0, %s64
    %s67 = sphi 0, %s66
    %s81 = sphi 0, %s67
    %s87 = sphi 0, %s89
    %s90 = sphi 0, %s87
    %s91 = sphi 0, %s90
    %s107 = sphi 0, %s91
  $region4: #{rfbnet_forward.23} parent=0 // loop_header_branch
    %12 = sbr.rel (%p10) target = $region8
  $region5: #{rfbnet_forward.23} parent=0 // loop_body
    %s14 = ssub.s32 %s9, 1
    %s15 = ssub.s32 %s9, 2
    %s16 = sadd.s32 %s9, 1
    %s17 = ssub.s32 %s9, %s16
    %p18 = scmp.eq.s32.totalorder %s17, 0
    %s20 = sadd.s32 %s19, 1
    %s21 = scalar_select %p18, %s19, %s20
    %p24 = pneg %p18
    %p25 = scmp.eq.s32.totalorder %s9, 1
    %p26 = por %p24, %p25
    %p27 = scmp.ne.s32.totalorder %s19, %s22
    %p28 = scmp.eq.s32.totalorder %s9, 0
    %p29 = por %p27, %p28
    %p30 = scmp.ne.s32.totalorder %s19, %s22
    %p31 = scmp.eq.s32.totalorder %s14, 1
    %p32 = por %p30, %p31
    %p33 = scmp.ne.s32.totalorder %s22, %s23
    %p34 = scmp.eq.s32.totalorder %s14, 0
    %p35 = por %p33, %p34
    %p36 = scmp.ne.s32.totalorder %s22, %s23
    %p37 = scmp.eq.s32.totalorder %s15, 1
    %p38 = por %p36, %p37
    %p40 = scmp.ne.s32.totalorder %s23, %s39
    %p41 = scmp.eq.s32.totalorder %s15, 0
    %p42 = por %p40, %p41
    %s44 = sadd.s32 %s43, 1
    %p47 = scmp.eq.s32.totalorder %s9, 1
    %p48 = scmp.ne.s32.totalorder %s43, %s45
    %p49 = scmp.eq.s32.totalorder %s9, 0
    %p50 = por %p48, %p49
    %p51 = scmp.ne.s32.totalorder %s43, %s45
    %p52 = scmp.eq.s32.totalorder %s14, 1
    %p53 = por %p51, %p52
    %p54 = scmp.ne.s32.totalorder %s45, %s46
    %p55 = scmp.eq.s32.totalorder %s14, 0
    %p56 = por %p54, %p55
    %p57 = scmp.ne.s32.totalorder %s45, %s46
    %p58 = scmp.eq.s32.totalorder %s15, 1
    %p59 = por %p57, %p58
    %p61 = scmp.ne.s32.totalorder %s46, %s60
    %p62 = scmp.eq.s32.totalorder %s15, 0
    %p63 = por %p61, %p62
    %s65 = sadd.s32 %s64, 1
    %p68 = scmp.eq.s32.totalorder %s9, 1
    %p69 = scmp.ne.s32.totalorder %s64, %s66
    %p70 = scmp.eq.s32.totalorder %s9, 0
    %p71 = por %p69, %p70
    %p72 = scmp.ne.s32.totalorder %s64, %s66
    %p73 = scmp.eq.s32.totalorder %s14, 1
    %p74 = por %p72, %p73
    %p75 = scmp.ne.s32.totalorder %s66, %s67
    %p76 = scmp.eq.s32.totalorder %s14, 0
    %p77 = por %p75, %p76
    %p78 = scmp.ne.s32.totalorder %s66, %s67
    %p79 = scmp.eq.s32.totalorder %s15, 1
    %p80 = por %p78, %p79
    %p82 = scmp.ne.s32.totalorder %s67, %s81
    %p83 = scmp.eq.s32.totalorder %s15, 0
    %p84 = por %p82, %p83
    %s85 = ssub.s32 %s9, %s16
    %p86 = scmp.eq.s32.totalorder %s85, 0
    %s88 = sadd.s32 %s87, 1
    %s89 = scalar_select %p86, %s87, %s88
    %p92 = pneg %p86
    %p93 = scmp.eq.s32.totalorder %s9, 1
    %p94 = por %p92, %p93
    %p95 = scmp.ne.s32.totalorder %s87, %s90
    %p96 = scmp.eq.s32.totalorder %s9, 0
    %p97 = por %p95, %p96
    %p98 = scmp.ne.s32.totalorder %s87, %s90
    %p99 = scmp.eq.s32.totalorder %s14, 1
    %p100 = por %p98, %p99
    %p101 = scmp.ne.s32.totalorder %s90, %s91
    %p102 = scmp.eq.s32.totalorder %s14, 0
    %p103 = por %p101, %p102
    %p104 = scmp.ne.s32.totalorder %s90, %s91
    %p105 = scmp.eq.s32.totalorder %s15, 1
    %p106 = por %p104, %p105
    %p108 = scmp.ne.s32.totalorder %s91, %s107
    %p109 = scmp.eq.s32.totalorder %s15, 0
    %p110 = por %p108, %p109
    %p111 = scmp.le.s32.totalorder 1, %s9
    %p112 = scmp.lt.s32.totalorder %s9, 3
    %p113 = pnand %p111, %p112
    %p114 = pneg %p113
    // Predicated region
    $region9: #{rfbnet_forward.23} parent=5 // pred_check
      _
    $region10: #{rfbnet_forward.23} parent=5 // pred_check_branch
      %116 = sbr.rel (%p113) target = $region12
    $region11: #{rfbnet_forward.23} parent=5 // pred_region
      %s117 = ssub.s32 %s9, 1
      // Predicated region
      $region13: #{rfbnet_forward.23} parent=11 // pred_check
        %p118 = pneg %p56
      $region14: #{rfbnet_forward.23} parent=11 // pred_check_branch
        %120 = sbr.rel (%p118) target = $region16
      $region15: #{rfbnet_forward.23} parent=11 // pred_region
        _
      $region16: #{rfbnet_forward.23} parent=11 // pred_fallthru
        _
      // Predicated region
      $region17: #{rfbnet_forward.23} parent=11 // pred_check
        %p121 = pneg %p77
      $region18: #{rfbnet_forward.23} parent=11 // pred_check_branch
        %123 = sbr.rel (%p121) target = $region20
      $region19: #{rfbnet_forward.23} parent=11 // pred_region
        _
      $region20: #{rfbnet_forward.23} parent=11 // pred_fallthru
        _
    $region12: #{rfbnet_forward.23} parent=5 // pred_fallthru
      _
    %p124 = scmp.lt.s32.totalorder %s9, 2
    // Predicated region
    $region21: #{rfbnet_forward.23} parent=5 // pred_check
      %p125 = pneg %p124
    $region22: #{rfbnet_forward.23} parent=5 // pred_check_branch
      %127 = sbr.rel (%p125) target = $region24
    $region23: #{rfbnet_forward.23} parent=5 // pred_region
      // Predicated region
      $region25: #{rfbnet_forward.23} parent=23 // pred_check
        %p128 = pneg %p29
      $region26: #{rfbnet_forward.23} parent=23 // pred_check_branch
        %130 = sbr.rel (%p128) target = $region28
      $region27: #{rfbnet_forward.23} parent=23 // pred_region
        %p131 = scmp.lt.s32.totalorder %s9, 1
        %s132 = scalar_select %p131, %s9, 1
        %s133 = smul.addr %s132, 4
        %s134 = scalar_lea.vmem %s0, %s133
      $region28: #{rfbnet_forward.23} parent=23 // pred_fallthru
        _
    $region24: #{rfbnet_forward.23} parent=5 // pred_fallthru
      _
    %p135 = scmp.le.s32.totalorder 1, %s9
    %p136 = scmp.lt.s32.totalorder %s9, 3
    %p137 = pnand %p135, %p136
    %p138 = pneg %p137
    // Predicated region
    $region29: #{rfbnet_forward.23} parent=5 // pred_check
      _
    $region30: #{rfbnet_forward.23} parent=5 // pred_check_branch
      %140 = sbr.rel (%p137) target = $region32
    $region31: #{rfbnet_forward.23} parent=5 // pred_region
      %s141 = ssub.s32 %s9, 1
      %p142 = scmp.lt.s32.totalorder %s14, 1
      %s143 = scalar_select %p142, %s14, 1
      %s144 = smul.addr %s143, 4
      %s145 = scalar_lea.vmem %s0, %s144
      %p146 = pneg %p35
      %p147 = pneg %p32
      %p148 = pneg %p56
      %p149 = pneg %p53
      %p150 = pneg %p77
      %p151 = pneg %p74
      %p152 = pneg %p103
      %p153 = pneg %p100
      %p154 = scmp.lt.s32.totalorder %s14, 1
      %s155 = scalar_select %p154, %s14, 1
      %s156 = smul.addr %s155, 4
      %s157 = smul.addr %s156, 8
      %s158 = scalar_lea.vmem %s3, %s157
      %p159 = scmp.lt.s32.totalorder %s14, 1
      %s160 = scalar_select %p159, %s14, 1
      %s161 = smul.addr %s160, 4
      %s162 = scalar_lea.vmem %s0, %s161
      %p163 = scmp.lt.s32.totalorder %s14, 1
      %s164 = scalar_select %p163, %s14, 1
      %s165 = smul.addr %s164, 4
      %s166 = smul.addr %s165, 8
      %s167 = scalar_lea.vmem %s3, %s166
      %v169 = vld [vmem:[%s162] sm:$0xf]
      %v171 = vunpack.c.l.b16 %v169
      %v172 = vpack.c.b16 %v171, %v171
      %173 = vrot.lane.b32.xlu0 %v172, 127
      %v174 = vpop.permute.xlu0 %173
      %175 = vrot.lane.b32.xlu0 %v172, 126
      %v176 = vpop.permute.xlu0 %175
      %177 = vrot.lane.b32.xlu0 %v172, 125
      %v178 = vpop.permute.xlu0 %177
      %179 = vrot.lane.b32.xlu0 %v172, 124
      %v180 = vpop.permute.xlu0 %179
      %181 = vrot.lane.b32.xlu0 %v172, 123
      %v182 = vpop.permute.xlu0 %181
      %183 = vrot.lane.b32.xlu0 %v172, 122
      %v184 = vpop.permute.xlu0 %183
      %185 = vrot.lane.b32.xlu0 %v172, 121
      %v186 = vpop.permute.xlu0 %185
      %187 = vrot.lane.b32.xlu0 %v172, 120
      %v188 = vpop.permute.xlu0 %187
      %vm189 = vcmask 1043456
      %v192 = vsel %vm189, %v169, %v174
      %v196 = vsel %vm189, %v176, %v178
      %v200 = vsel %vm189, %v180, %v182
      %v204 = vsel %vm189, %v184, %v186
      %v206 = vld [vmem:[%s1] sm:$0xf]
      %v207 = vld [vmem:[%s1 + $0x4] sm:$0xf]
      %v208 = vld [vmem:[%s1 + $0x8] sm:$0xf]
      %v209 = vld [vmem:[%s1 + $0xc] sm:$0xf]
      %v210 = vld [vmem:[%s2] sm:$0xff]
      %v211 = vld [vmem:[%s2 + $0x8] sm:$0xff]
      %v212 = vld [vmem:[%s2 + $0x10] sm:$0xff]
      %v213 = vld [vmem:[%s2 + $0x18] sm:$0xff]
      %215 = vset.pattern.permute.xlu0 0
      %216 = vperm.xlu0 %215, %v210
      %v217 = vpop.permute.xlu0 %216
      %220 = vset.pattern.permute.xlu0 0
      %221 = vperm.xlu0 %220, %v211
      %v222 = vpop.permute.xlu0 %221
      %225 = vset.pattern.permute.xlu0 0
      %226 = vperm.xlu0 %225, %v212
      %v227 = vpop.permute.xlu0 %226
      %230 = vset.pattern.permute.xlu0 0
      %231 = vperm.xlu0 %230, %v213
      %v232 = vpop.permute.xlu0 %231
      %v238 = vunpack.c.l.b16 %v206
      %v239 = vunpack.c.l.b16 %v207
      %v240 = vunpack.c.l.b16 %v208
      %v241 = vunpack.c.l.b16 %v209
      %v242 = vpack.c.b16 %v239, %v238
      %v243 = vpack.c.b16 %v241, %v240
      %vm244 = vcmask 588800
      %v246 = vsel %vm244, %v242, 0
      %v249 = vsel %vm244, %v243, 0
      %v252 = vsel %vm189, %v188, 0
      %254 = vmatprep.subr.bf16.mxu0 0
      %255 = vmatpush1.bf16.msra.mxu0 %v192
      %256 = vmatprep.subr.bf16.mxu0 0
      %257 = vmatpush1.bf16.msra.mxu0 %v196
      %258 = vmatprep.subr.bf16.mxu0 0
      %259 = vmatpush1.bf16.msra.mxu0 %v200
      %260 = vmatprep.subr.bf16.mxu0 0
      %261 = vmatpush1.bf16.msra.mxu0 %v204
      %262 = vmatprep.subr.bf16.mxu0 0
      %263 = vmatpush1.bf16.msra.mxu0 %v252
      %264 = vmatprep.subr.bf16.mxu0 0
      %265 = vmatpush1.bf16.msra.mxu0 0
      %266 = vmatprep.subr.bf16.mxu0 0
      %267 = vmatpush1.bf16.msra.mxu0 0
      %268 = vmatprep.subr.bf16.mxu0 0
      %269 = vmatpush1.bf16.msra.mxu0 0
      %270 = vmatprep.subr.bf16.mxu0 0
      %271 = vmatpush1.bf16.msra.mxu0 0
      %272 = vmatprep.subr.bf16.mxu0 0
      %273 = vmatpush1.bf16.msra.mxu0 0
      %274 = vmatprep.subr.bf16.mxu0 0
      %275 = vmatpush1.bf16.msra.mxu0 0
      %276 = vmatprep.subr.bf16.mxu0 0
      %277 = vmatpush1.bf16.msra.mxu0 0
      %278 = vmatprep.subr.bf16.mxu0 0
      %279 = vmatpush1.bf16.msra.mxu0 0
      %280 = vmatprep.subr.bf16.mxu0 0
      %281 = vmatpush1.bf16.msra.mxu0 0
      %282 = vmatprep.subr.bf16.mxu0 0
      %283 = vmatpush1.bf16.msra.mxu0 0
      %284 = vmatprep.subr.bf16.mxu0 0
      %285 = vmatpush1.bf16.msra.mxu0 0
      %286 = vmatprep.mubr.bf16.mxu0 0
      %287 = vmatmul.mubr.bf16.gmra.mrb[0].mxu0 %v246
      %v288 = vpop.f32.mrb[0].mxu0
      %v289 = vadd.f32 %v217, %v288
      %v290 = vpop.f32.mrb[0].mxu0
      %v291 = vpop.f32.mrb[0].mxu0
      %v292 = vadd.f32 %v222, %v291
      %v293 = vpop.f32.mrb[0].mxu0
      %294 = vmatprep.mubr.bf16.mxu0 0
      %295 = vmatmul.mubr.bf16.gmra.mrb[0].mxu0 %v249
      %v296 = vpop.f32.mrb[0].mxu0
      %v297 = vadd.f32 %v227, %v296
      %v298 = vpop.f32.mrb[0].mxu0
      %v299 = vpop.f32.mrb[0].mxu0
      %v300 = vadd.f32 %v232, %v299
      %v301 = vpop.f32.mrb[0].mxu0
      %302 = vdwg.mxu0
      %vm303 = vcmask 19456
      %v304 = vsel %vm303, %v297, -inf
      %v305 = vrot.slane %v304, 4
      %v306 = vmax.f32 %v304, %v305
      %v307 = vrot.slane %v306, 2
      %v308 = vmax.f32 %v306, %v307
      %v309 = vrot.slane %v308, 1
      %v310 = vmax.f32 %v308, %v309
      %v311 = vsub.f32 %v297, %v310
      %v312 = vmul.f32 %v311, 1.442695
      %v313 = vpow.pop %v312
      %v314 = vsel %vm303, %v313, 0.0
      %v315 = vrot.slane %v314, 4
      %v316 = vadd.f32 %v314, %v315
      %v317 = vrot.slane %v316, 2
      %v318 = vadd.f32 %v316, %v317
      %v319 = vrot.slane %v318, 1
      %v320 = vadd.f32 %v318, %v319
      %v321 = vrcp.pop %v320
      %v322 = vmul.f32 %v313, %v321
      %vm323 = vcmask 23556
      %v324 = vsel %vm323, %v297, -inf
      %v325 = vrot.slane %v324, 4
      %v326 = vmax.f32 %v324, %v325
      %v327 = vrot.slane %v326, 2
      %v328 = vmax.f32 %v326, %v327
      %v329 = vrot.slane %v328, 1
      %v330 = vmax.f32 %v328, %v329
      %v331 = vsub.f32 %v297, %v330
      %v332 = vmul.f32 %v331, 1.442695
      %v333 = vpow.pop %v332
      %v335 = vrot.slane %v333, 4
      %v337 = vsel %vm303, %v335, 0.0
      %v338 = vrot.slane %v337, 4
      %v339 = vadd.f32 %v337, %v338
      %v340 = vrot.slane %v339, 2
      %v341 = vadd.f32 %v339, %v340
      %v342 = vrot.slane %v341, 1
      %v343 = vadd.f32 %v341, %v342
      %v344 = vrcp.pop %v343
      %v345 = vmul.f32 %v333, %v344
      %v346 = vsel %vm303, %v300, -inf
      %v347 = vrot.slane %v346, 4
      %v348 = vmax.f32 %v346, %v347
      %v349 = vrot.slane %v348, 2
      %v350 = vmax.f32 %v348, %v349
      %v351 = vrot.slane %v350, 1
      %v352 = vmax.f32 %v350, %v351
      %v353 = vsub.f32 %v300, %v352
      %v354 = vmul.f32 %v353, 1.442695
      %v355 = vpow.pop %v354
      %v356 = vsel %vm303, %v355, 0.0
      %v357 = vrot.slane %v356, 4
      %v358 = vadd.f32 %v356, %v357
      %v359 = vrot.slane %v358, 2
      %v360 = vadd.f32 %v358, %v359
      %v361 = vrot.slane %v360, 1
      %v362 = vadd.f32 %v360, %v361
      %v363 = vrcp.pop %v362
      %v364 = vmul.f32 %v355, %v363
      %v365 = vsel %vm323, %v300, -inf
      %v366 = vrot.slane %v365, 4
      %v367 = vmax.f32 %v365, %v366
      %v368 = vrot.slane %v367, 2
      %v369 = vmax.f32 %v367, %v368
      %v370 = vrot.slane %v369, 1
      %v371 = vmax.f32 %v369, %v370
      %v372 = vsub.f32 %v300, %v371
      %v373 = vmul.f32 %v372, 1.442695
      %v374 = vpow.pop %v373
      %v376 = vrot.slane %v374, 4
      %v378 = vsel %vm303, %v376, 0.0
      %v379 = vrot.slane %v378, 4
      %v380 = vadd.f32 %v378, %v379
      %v381 = vrot.slane %v380, 2
      %v382 = vadd.f32 %v380, %v381
      %v383 = vrot.slane %v382, 1
      %v384 = vadd.f32 %v382, %v383
      %v385 = vrcp.pop %v384
      %v386 = vmul.f32 %v374, %v385
      %v387 = vsel %vm189, %v322, %v345
      %v388 = vsel %vm189, %v364, %v386
      %vm389 = vcmask 23552
      %390 = vst.msk [vmem:[%s167] sm:$0xff] %vm389, %v289
      %391 = vst.msk [vmem:[%s167 + $0x8] sm:$0xff] %vm389, %v292
      %392 = vst.msk [vmem:[%s167 + $0x10] sm:$0xff] %vm389, %v387
      %393 = vst.msk [vmem:[%s167 + $0x18] sm:$0xff] %vm389, %v388
      %p394 = scmp.lt.s32.totalorder %s14, 1
      %s395 = scalar_select %p394, %s14, 1
      %s396 = smul.addr %s395, 4
      %s397 = smul.addr %s396, 8
      %s398 = scalar_lea.vmem %s3, %s397
      // Predicated region
      $region33: #{rfbnet_forward.23} parent=31 // pred_check
        %p399 = pneg %p100
      $region34: #{rfbnet_forward.23} parent=31 // pred_check_branch
        %401 = sbr.rel (%p399) target = $region36
      $region35: #{rfbnet_forward.23} parent=31 // pred_region
        _
      $region36: #{rfbnet_forward.23} parent=31 // pred_fallthru
        _
    $region32: #{rfbnet_forward.23} parent=5 // pred_fallthru
      _
    %p402 = scmp.le.s32.totalorder 2, %s9
    // Predicated region
    $region37: #{rfbnet_forward.23} parent=5 // pred_check
      %p403 = pneg %p402
    $region38: #{rfbnet_forward.23} parent=5 // pred_check_branch
      %405 = sbr.rel (%p403) target = $region40
    $region39: #{rfbnet_forward.23} parent=5 // pred_region
      %s406 = ssub.s32 %s9, 2
      // Predicated region
      $region41: #{rfbnet_forward.23} parent=39 // pred_check
        %p407 = pneg %p106
      $region42: #{rfbnet_forward.23} parent=39 // pred_check_branch
        %409 = sbr.rel (%p407) target = $region44
      $region43: #{rfbnet_forward.23} parent=39 // pred_region
        %p410 = scmp.lt.s32.totalorder %s15, 1
        %s411 = scalar_select %p410, %s15, 1
        %s412 = smul.addr %s411, 4
        %s413 = smul.addr %s412, 8
        %s414 = scalar_lea.vmem %s3, %s413
      $region44: #{rfbnet_forward.23} parent=39 // pred_fallthru
        _
    $region40: #{rfbnet_forward.23} parent=5 // pred_fallthru
      _
  $region6: #{rfbnet_forward.23} parent=0 // loop_footer
    %s13 = sadd.s32 1, %s9
  $region7: #{rfbnet_forward.23} parent=0 // loop_footer_branch
    %8 = sbr.rel target = $region3
  $region8: #{rfbnet_forward.23} parent=0 // loop_exit
    _

// kernel: rfbnet_forward.21
$region0: #{rfbnet_forward.21}
  #allocation0 [shape = 'u32[]', space=smem, size = 0x4, offset = 0x4, fixed_abs, tag = 'smem constant byte address 0x4 - core index']
  #allocation1 [shape = 'u32[144,128]{1,0:T(1,128)}', space=vmem, size = 0x12000, scoped, tag = 'internal scratch']
  %s0 = inlined_call_operand.vmem [shape: bf16[2,8,18], index: 0, kind: input, shape index: {}]
  %s1 = inlined_call_operand.vmem [shape: bf16[48,72], index: 1, kind: input, shape index: {}]
  %s2 = inlined_call_operand.vmem [shape: f32[48,1], index: 2, kind: input, shape index: {}]
  %s3 = inlined_call_operand.vmem [shape: f32[2,48,8], index: 3, kind: output, shape index: {}]
  %s4 = sld [smem:[#allocation0]]
  $region45: #{rfbnet_forward.21} parent=0
    _
  %s6 = ssub.s32 1, %s4
  %s7 = scalar_select 0, %s6, %s4
  loop: start=0, step=1, limit=4
  $region2: #{rfbnet_forward.21} parent=0 // loop_pre_header
    _
  $region3: #{rfbnet_forward.21} parent=0 // loop_header
    %s9 = sphi 0, %s13
    %p10 = scmp.ge.s32.totalorder %s9, 4
    %s19 = sphi 0, %s21
    %s22 = sphi 0, %s19
    %s23 = sphi 0, %s22
    %s39 = sphi 0, %s23
    %s43 = sphi 0, %s43
    %s45 = sphi 0, %s43
    %s46 = sphi 0, %s45
    %s60 = sphi 0, %s46
    %s64 = sphi 0, %s64
    %s66 = sphi 0, %s64
    %s67 = sphi 0, %s66
    %s81 = sphi 0, %s67
    %s87 = sphi 0, %s89
    %s90 = sphi 0, %s87
    %s91 = sphi 0, %s90
    %s107 = sphi 0, %s91
  $region4: #{rfbnet_forward.21} parent=0 // loop_header_branch
    %12 = sbr.rel (%p10) target = $region8
  $region5: #{rfbnet_forward.21} parent=0 // loop_body
    %s14 = ssub.s32 %s9, 1
    %s15 = ssub.s32 %s9, 2
    %s16 = sadd.s32 %s9, 1
    %s17 = ssub.s32 %s9, %s16
    %p18 = scmp.eq.s32.totalorder %s17, 0
    %s20 = sadd.s32 %s19, 1
    %s21 = scalar_select %p18, %s19, %s20
    %p24 = pneg %p18
    %p25 = scmp.eq.s32.totalorder %s9, 1
    %p26 = por %p24, %p25
    %p27 = scmp.ne.s32.totalorder %s19, %s22
    %p28 = scmp.eq.s32.totalorder %s9, 0
    %p29 = por %p27, %p28
    %p30 = scmp.ne.s32.totalorder %s19, %s22
    %p31 = scmp.eq.s32.totalorder %s14, 1
    %p32 = por %p30, %p31
    %p33 = scmp.ne.s32.totalorder %s22, %s23
    %p34 = scmp.eq.s32.totalorder %s14, 0
    %p35 = por %p33, %p34
    %p36 = scmp.ne.s32.totalorder %s22, %s23
    %p37 = scmp.eq.s32.totalorder %s15, 1
    %p38 = por %p36, %p37
    %p40 = scmp.ne.s32.totalorder %s23, %s39
    %p41 = scmp.eq.s32.totalorder %s15, 0
    %p42 = por %p40, %p41
    %s44 = sadd.s32 %s43, 1
    %p47 = scmp.eq.s32.totalorder %s9, 1
    %p48 = scmp.ne.s32.totalorder %s43, %s45
    %p49 = scmp.eq.s32.totalorder %s9, 0
    %p50 = por %p48, %p49
    %p51 = scmp.ne.s32.totalorder %s43, %s45
    %p52 = scmp.eq.s32.totalorder %s14, 1
    %p53 = por %p51, %p52
    %p54 = scmp.ne.s32.totalorder %s45, %s46
    %p55 = scmp.eq.s32.totalorder %s14, 0
    %p56 = por %p54, %p55
    %p57 = scmp.ne.s32.totalorder %s45, %s46
    %p58 = scmp.eq.s32.totalorder %s15, 1
    %p59 = por %p57, %p58
    %p61 = scmp.ne.s32.totalorder %s46, %s60
    %p62 = scmp.eq.s32.totalorder %s15, 0
    %p63 = por %p61, %p62
    %s65 = sadd.s32 %s64, 1
    %p68 = scmp.eq.s32.totalorder %s9, 1
    %p69 = scmp.ne.s32.totalorder %s64, %s66
    %p70 = scmp.eq.s32.totalorder %s9, 0
    %p71 = por %p69, %p70
    %p72 = scmp.ne.s32.totalorder %s64, %s66
    %p73 = scmp.eq.s32.totalorder %s14, 1
    %p74 = por %p72, %p73
    %p75 = scmp.ne.s32.totalorder %s66, %s67
    %p76 = scmp.eq.s32.totalorder %s14, 0
    %p77 = por %p75, %p76
    %p78 = scmp.ne.s32.totalorder %s66, %s67
    %p79 = scmp.eq.s32.totalorder %s15, 1
    %p80 = por %p78, %p79
    %p82 = scmp.ne.s32.totalorder %s67, %s81
    %p83 = scmp.eq.s32.totalorder %s15, 0
    %p84 = por %p82, %p83
    %s85 = ssub.s32 %s9, %s16
    %p86 = scmp.eq.s32.totalorder %s85, 0
    %s88 = sadd.s32 %s87, 1
    %s89 = scalar_select %p86, %s87, %s88
    %p92 = pneg %p86
    %p93 = scmp.eq.s32.totalorder %s9, 1
    %p94 = por %p92, %p93
    %p95 = scmp.ne.s32.totalorder %s87, %s90
    %p96 = scmp.eq.s32.totalorder %s9, 0
    %p97 = por %p95, %p96
    %p98 = scmp.ne.s32.totalorder %s87, %s90
    %p99 = scmp.eq.s32.totalorder %s14, 1
    %p100 = por %p98, %p99
    %p101 = scmp.ne.s32.totalorder %s90, %s91
    %p102 = scmp.eq.s32.totalorder %s14, 0
    %p103 = por %p101, %p102
    %p104 = scmp.ne.s32.totalorder %s90, %s91
    %p105 = scmp.eq.s32.totalorder %s15, 1
    %p106 = por %p104, %p105
    %p108 = scmp.ne.s32.totalorder %s91, %s107
    %p109 = scmp.eq.s32.totalorder %s15, 0
    %p110 = por %p108, %p109
    %p111 = scmp.le.s32.totalorder 1, %s9
    %p112 = scmp.lt.s32.totalorder %s9, 3
    %p113 = pnand %p111, %p112
    %p114 = pneg %p113
    // Predicated region
    $region9: #{rfbnet_forward.21} parent=5 // pred_check
      _
    $region10: #{rfbnet_forward.21} parent=5 // pred_check_branch
      %116 = sbr.rel (%p113) target = $region12
    $region11: #{rfbnet_forward.21} parent=5 // pred_region
      %s117 = ssub.s32 %s9, 1
      // Predicated region
      $region13: #{rfbnet_forward.21} parent=11 // pred_check
        %p118 = pneg %p56
      $region14: #{rfbnet_forward.21} parent=11 // pred_check_branch
        %120 = sbr.rel (%p118) target = $region16
      $region15: #{rfbnet_forward.21} parent=11 // pred_region
        _
      $region16: #{rfbnet_forward.21} parent=11 // pred_fallthru
        _
      // Predicated region
      $region17: #{rfbnet_forward.21} parent=11 // pred_check
        %p121 = pneg %p77
      $region18: #{rfbnet_forward.21} parent=11 // pred_check_branch
        %123 = sbr.rel (%p121) target = $region20
      $region19: #{rfbnet_forward.21} parent=11 // pred_region
        _
      $region20: #{rfbnet_forward.21} parent=11 // pred_fallthru
        _
    $region12: #{rfbnet_forward.21} parent=5 // pred_fallthru
      _
    %p124 = scmp.lt.s32.totalorder %s9, 2
    // Predicated region
    $region21: #{rfbnet_forward.21} parent=5 // pred_check
      %p125 = pneg %p124
    $region22: #{rfbnet_forward.21} parent=5 // pred_check_branch
      %127 = sbr.rel (%p125) target = $region24
    $region23: #{rfbnet_forward.21} parent=5 // pred_region
      // Predicated region
      $region25: #{rfbnet_forward.21} parent=23 // pred_check
        %p128 = pneg %p29
      $region26: #{rfbnet_forward.21} parent=23 // pred_check_branch
        %130 = sbr.rel (%p128) target = $region28
      $region27: #{rfbnet_forward.21} parent=23 // pred_region
        %p131 = scmp.lt.s32.totalorder %s9, 1
        %s132 = scalar_select %p131, %s9, 1
        %s133 = smul.addr %s132, 4
        %s134 = scalar_lea.vmem %s0, %s133
      $region28: #{rfbnet_forward.21} parent=23 // pred_fallthru
        _
    $region24: #{rfbnet_forward.21} parent=5 // pred_fallthru
      _
    %p135 = scmp.le.s32.totalorder 1, %s9
    %p136 = scmp.lt.s32.totalorder %s9, 3
    %p137 = pnand %p135, %p136
    %p138 = pneg %p137
    // Predicated region
    $region29: #{rfbnet_forward.21} parent=5 // pred_check
      _
    $region30: #{rfbnet_forward.21} parent=5 // pred_check_branch
      %140 = sbr.rel (%p137) target = $region32
    $region31: #{rfbnet_forward.21} parent=5 // pred_region
      %s141 = ssub.s32 %s9, 1
      %p142 = scmp.lt.s32.totalorder %s14, 1
      %s143 = scalar_select %p142, %s14, 1
      %s144 = smul.addr %s143, 4
      %s145 = scalar_lea.vmem %s0, %s144
      %p146 = pneg %p35
      %p147 = pneg %p32
      %p148 = pneg %p56
      %p149 = pneg %p53
      %p150 = pneg %p77
      %p151 = pneg %p74
      %p152 = pneg %p103
      %p153 = pneg %p100
      %p154 = scmp.lt.s32.totalorder %s14, 1
      %s155 = scalar_select %p154, %s14, 1
      %s156 = smul.addr %s155, 6
      %s157 = smul.addr %s156, 8
      %s158 = scalar_lea.vmem %s3, %s157
      %p159 = scmp.lt.s32.totalorder %s14, 1
      %s160 = scalar_select %p159, %s14, 1
      %s161 = smul.addr %s160, 4
      %s162 = scalar_lea.vmem %s0, %s161
      %p163 = scmp.lt.s32.totalorder %s14, 1
      %s164 = scalar_select %p163, %s14, 1
      %s165 = smul.addr %s164, 6
      %s166 = smul.addr %s165, 8
      %s167 = scalar_lea.vmem %s3, %s166
      %v169 = vld [vmem:[%s162] sm:$0xf]
      %v171 = vunpack.c.l.b16 %v169
      %v172 = vpack.c.b16 %v171, %v171
      %173 = vrot.lane.b32.xlu0 %v172, 127
      %v174 = vpop.permute.xlu0 %173
      %175 = vrot.lane.b32.xlu0 %v172, 126
      %v176 = vpop.permute.xlu0 %175
      %177 = vrot.lane.b32.xlu0 %v172, 124
      %v178 = vpop.permute.xlu0 %177
      %179 = vrot.lane.b32.xlu0 %v172, 123
      %v180 = vpop.permute.xlu0 %179
      %181 = vrot.lane.b32.xlu0 %v172, 122
      %v182 = vpop.permute.xlu0 %181
      %183 = vrot.lane.b32.xlu0 %v172, 120
      %v184 = vpop.permute.xlu0 %183
      %185 = vrot.lane.b32.xlu0 %v172, 119
      %v186 = vpop.permute.xlu0 %185
      %187 = vrot.lane.b32.xlu0 %v172, 118
      %v188 = vpop.permute.xlu0 %187
      %vm189 = vcmask 1043456
      %v192 = vsel %vm189, %v169, %v174
      %v196 = vsel %vm189, %v176, %v178
      %v200 = vsel %vm189, %v180, %v182
      %v204 = vsel %vm189, %v184, %v186
      %v206 = vld [vmem:[%s1] sm:$0xf]
      %v207 = vld [vmem:[%s1 + $0x4] sm:$0xf]
      %v208 = vld [vmem:[%s1 + $0x8] sm:$0xf]
      %v209 = vld [vmem:[%s1 + $0xc] sm:$0xf]
      %v210 = vld [vmem:[%s1 + $0x10] sm:$0xf]
      %v211 = vld [vmem:[%s1 + $0x14] sm:$0xf]
      %v212 = vld [vmem:[%s2] sm:$0xff]
      %v213 = vld [vmem:[%s2 + $0x8] sm:$0xff]
      %v214 = vld [vmem:[%s2 + $0x10] sm:$0xff]
      %v215 = vld [vmem:[%s2 + $0x18] sm:$0xff]
      %v216 = vld [vmem:[%s2 + $0x20] sm:$0xff]
      %v217 = vld [vmem:[%s2 + $0x28] sm:$0xff]
      %219 = vset.pattern.permute.xlu0 0
      %220 = vperm.xlu0 %219, %v212
      %v221 = vpop.permute.xlu0 %220
      %224 = vset.pattern.permute.xlu0 0
      %225 = vperm.xlu0 %224, %v213
      %v226 = vpop.permute.xlu0 %225
      %229 = vset.pattern.permute.xlu0 0
      %230 = vperm.xlu0 %229, %v214
      %v231 = vpop.permute.xlu0 %230
      %234 = vset.pattern.permute.xlu0 0
      %235 = vperm.xlu0 %234, %v215
      %v236 = vpop.permute.xlu0 %235
      %239 = vset.pattern.permute.xlu0 0
      %240 = vperm.xlu0 %239, %v216
      %v241 = vpop.permute.xlu0 %240
      %244 = vset.pattern.permute.xlu0 0
      %245 = vperm.xlu0 %244, %v217
      %v246 = vpop.permute.xlu0 %245
      %v254 = vunpack.c.l.b16 %v206
      %v255 = vunpack.c.l.b16 %v207
      %v256 = vunpack.c.l.b16 %v208
      %v257 = vunpack.c.l.b16 %v209
      %v258 = vunpack.c.l.b16 %v210
      %v259 = vunpack.c.l.b16 %v211
      %v260 = vpack.c.b16 %v255, %v254
      %v261 = vpack.c.b16 %v257, %v256
      %v262 = vpack.c.b16 %v259, %v258
      %vm263 = vcmask 588800
      %v265 = vsel %vm263, %v260, 0
      %v268 = vsel %vm263, %v261, 0
      %v271 = vsel %vm263, %v262, 0
      %v274 = vsel %vm189, %v188, 0
      %276 = vmatprep.subr.bf16.mxu0 0
      %277 = vmatpush1.bf16.msra.mxu0 %v192
      %278 = vmatprep.subr.bf16.mxu0 0
      %279 = vmatpush1.bf16.msra.mxu0 %v196
      %280 = vmatprep.subr.bf16.mxu0 0
      %281 = vmatpush1.bf16.msra.mxu0 %v200
      %282 = vmatprep.subr.bf16.mxu0 0
      %283 = vmatpush1.bf16.msra.mxu0 %v204
      %284 = vmatprep.subr.bf16.mxu0 0
      %285 = vmatpush1.bf16.msra.mxu0 %v274
      %286 = vmatprep.subr.bf16.mxu0 0
      %287 = vmatpush1.bf16.msra.mxu0 0
      %288 = vmatprep.subr.bf16.mxu0 0
      %289 = vmatpush1.bf16.msra.mxu0 0
      %290 = vmatprep.subr.bf16.mxu0 0
      %291 = vmatpush1.bf16.msra.mxu0 0
      %292 = vmatprep.subr.bf16.mxu0 0
      %293 = vmatpush1.bf16.msra.mxu0 0
      %294 = vmatprep.subr.bf16.mxu0 0
      %295 = vmatpush1.bf16.msra.mxu0 0
      %296 = vmatprep.subr.bf16.mxu0 0
      %297 = vmatpush1.bf16.msra.mxu0 0
      %298 = vmatprep.subr.bf16.mxu0 0
      %299 = vmatpush1.bf16.msra.mxu0 0
      %300 = vmatprep.subr.bf16.mxu0 0
      %301 = vmatpush1.bf16.msra.mxu0 0
      %302 = vmatprep.subr.bf16.mxu0 0
      %303 = vmatpush1.bf16.msra.mxu0 0
      %304 = vmatprep.subr.bf16.mxu0 0
      %305 = vmatpush1.bf16.msra.mxu0 0
      %306 = vmatprep.subr.bf16.mxu0 0
      %307 = vmatpush1.bf16.msra.mxu0 0
      %308 = vmatprep.mubr.bf16.mxu0 0
      %309 = vmatmul.mubr.bf16.gmra.mrb[0].mxu0 %v265
      %v310 = vpop.f32.mrb[0].mxu0
      %v311 = vadd.f32 %v221, %v310
      %v312 = vpop.f32.mrb[0].mxu0
      %v313 = vpop.f32.mrb[0].mxu0
      %v314 = vadd.f32 %v226, %v313
      %v315 = vpop.f32.mrb[0].mxu0
      %316 = vmatprep.mubr.bf16.mxu0 0
      %317 = vmatmul.mubr.bf16.gmra.mrb[0].mxu0 %v268
      %v318 = vpop.f32.mrb[0].mxu0
      %v319 = vadd.f32 %v231, %v318
      %v320 = vpop.f32.mrb[0].mxu0
      %v321 = vpop.f32.mrb[0].mxu0
      %v322 = vadd.f32 %v236, %v321
      %v323 = vpop.f32.mrb[0].mxu0
      %324 = vmatprep.mubr.bf16.mxu0 0
      %325 = vmatmul.mubr.bf16.gmra.mrb[0].mxu0 %v271
      %v326 = vpop.f32.mrb[0].mxu0
      %v327 = vadd.f32 %v241, %v326
      %v328 = vpop.f32.mrb[0].mxu0
      %v329 = vpop.f32.mrb[0].mxu0
      %v330 = vadd.f32 %v246, %v329
      %v331 = vpop.f32.mrb[0].mxu0
      %332 = vdwg.mxu0
      %vm333 = vcmask 60416
      %v334 = vsel %vm333, %v322, -inf
      %v335 = vrot.slane %v334, 4
      %v336 = vmax.f32 %v334, %v335
      %v337 = vrot.slane %v336, 2
      %v338 = vmax.f32 %v336, %v337
      %v339 = vrot.slane %v338, 1
      %v340 = vmax.f32 %v338, %v339
      %v341 = vsub.f32 %v322, %v340
      %v342 = vmul.f32 %v341, 1.442695
      %v343 = vpow.pop %v342
      %v344 = vsel %vm333, %v343, 0.0
      %v345 = vrot.slane %v344, 4
      %v346 = vadd.f32 %v344, %v345
      %v347 = vrot.slane %v346, 2
      %v348 = vadd.f32 %v346, %v347
      %v349 = vrot.slane %v348, 1
      %v350 = vadd.f32 %v348, %v349
      %v351 = vrcp.pop %v350
      %v352 = vmul.f32 %v343, %v351
      %vm353 = vcmask 64516
      %v354 = vsel %vm353, %v322, -inf
      %v355 = vrot.slane %v354, 4
      %v356 = vmax.f32 %v354, %v355
      %v357 = vrot.slane %v356, 2
      %v358 = vmax.f32 %v356, %v357
      %v359 = vrot.slane %v358, 1
      %v360 = vmax.f32 %v358, %v359
      %v361 = vsub.f32 %v322, %v360
      %v362 = vmul.f32 %v361, 1.442695
      %v363 = vpow.pop %v362
      %v365 = vrot.slane %v363, 4
      %v367 = vsel %vm333, %v365, 0.0
      %v368 = vrot.slane %v367, 4
      %v369 = vadd.f32 %v367, %v368
      %v370 = vrot.slane %v369, 2
      %v371 = vadd.f32 %v369, %v370
      %v372 = vrot.slane %v371, 1
      %v373 = vadd.f32 %v371, %v372
      %v374 = vrcp.pop %v373
      %v375 = vmul.f32 %v363, %v374
      %v376 = vsel %vm333, %v327, -inf
      %v377 = vrot.slane %v376, 4
      %v378 = vmax.f32 %v376, %v377
      %v379 = vrot.slane %v378, 2
      %v380 = vmax.f32 %v378, %v379
      %v381 = vrot.slane %v380, 1
      %v382 = vmax.f32 %v380, %v381
      %v383 = vsub.f32 %v327, %v382
      %v384 = vmul.f32 %v383, 1.442695
      %v385 = vpow.pop %v384
      %v386 = vsel %vm333, %v385, 0.0
      %v387 = vrot.slane %v386, 4
      %v388 = vadd.f32 %v386, %v387
      %v389 = vrot.slane %v388, 2
      %v390 = vadd.f32 %v388, %v389
      %v391 = vrot.slane %v390, 1
      %v392 = vadd.f32 %v390, %v391
      %v393 = vrcp.pop %v392
      %v394 = vmul.f32 %v385, %v393
      %v395 = vsel %vm353, %v327, -inf
      %v396 = vrot.slane %v395, 4
      %v397 = vmax.f32 %v395, %v396
      %v398 = vrot.slane %v397, 2
      %v399 = vmax.f32 %v397, %v398
      %v400 = vrot.slane %v399, 1
      %v401 = vmax.f32 %v399, %v400
      %v402 = vsub.f32 %v327, %v401
      %v403 = vmul.f32 %v402, 1.442695
      %v404 = vpow.pop %v403
      %v406 = vrot.slane %v404, 4
      %v408 = vsel %vm333, %v406, 0.0
      %v409 = vrot.slane %v408, 4
      %v410 = vadd.f32 %v408, %v409
      %v411 = vrot.slane %v410, 2
      %v412 = vadd.f32 %v410, %v411
      %v413 = vrot.slane %v412, 1
      %v414 = vadd.f32 %v412, %v413
      %v415 = vrcp.pop %v414
      %v416 = vmul.f32 %v404, %v415
      %v417 = vsel %vm333, %v330, -inf
      %v418 = vrot.slane %v417, 4
      %v419 = vmax.f32 %v417, %v418
      %v420 = vrot.slane %v419, 2
      %v421 = vmax.f32 %v419, %v420
      %v422 = vrot.slane %v421, 1
      %v423 = vmax.f32 %v421, %v422
      %v424 = vsub.f32 %v330, %v423
      %v425 = vmul.f32 %v424, 1.442695
      %v426 = vpow.pop %v425
      %v427 = vsel %vm333, %v426, 0.0
      %v428 = vrot.slane %v427, 4
      %v429 = vadd.f32 %v427, %v428
      %v430 = vrot.slane %v429, 2
      %v431 = vadd.f32 %v429, %v430
      %v432 = vrot.slane %v431, 1
      %v433 = vadd.f32 %v431, %v432
      %v434 = vrcp.pop %v433
      %v435 = vmul.f32 %v426, %v434
      %v436 = vsel %vm353, %v330, -inf
      %v437 = vrot.slane %v436, 4
      %v438 = vmax.f32 %v436, %v437
      %v439 = vrot.slane %v438, 2
      %v440 = vmax.f32 %v438, %v439
      %v441 = vrot.slane %v440, 1
      %v442 = vmax.f32 %v440, %v441
      %v443 = vsub.f32 %v330, %v442
      %v444 = vmul.f32 %v443, 1.442695
      %v445 = vpow.pop %v444
      %v447 = vrot.slane %v445, 4
      %v449 = vsel %vm333, %v447, 0.0
      %v450 = vrot.slane %v449, 4
      %v451 = vadd.f32 %v449, %v450
      %v452 = vrot.slane %v451, 2
      %v453 = vadd.f32 %v451, %v452
      %v454 = vrot.slane %v453, 1
      %v455 = vadd.f32 %v453, %v454
      %v456 = vrcp.pop %v455
      %v457 = vmul.f32 %v445, %v456
      %v458 = vsel %vm189, %v352, %v375
      %v459 = vsel %vm189, %v394, %v416
      %v460 = vsel %vm189, %v435, %v457
      %vm461 = vcmask 64512
      %462 = vst.msk [vmem:[%s167] sm:$0xff] %vm461, %v311
      %463 = vst.msk [vmem:[%s167 + $0x8] sm:$0xff] %vm461, %v314
      %464 = vst.msk [vmem:[%s167 + $0x10] sm:$0xff] %vm461, %v319
      %465 = vst.msk [vmem:[%s167 + $0x18] sm:$0xff] %vm461, %v458
      %466 = vst.msk [vmem:[%s167 + $0x20] sm:$0xff] %vm461, %v459
      %467 = vst.msk [vmem:[%s167 + $0x28] sm:$0xff] %vm461, %v460
      %p468 = scmp.lt.s32.totalorder %s14, 1
      %s469 = scalar_select %p468, %s14, 1
      %s470 = smul.addr %s469, 6
      %s471 = smul.addr %s470, 8
      %s472 = scalar_lea.vmem %s3, %s471
      // Predicated region
      $region33: #{rfbnet_forward.21} parent=31 // pred_check
        %p473 = pneg %p100
      $region34: #{rfbnet_forward.21} parent=31 // pred_check_branch
        %475 = sbr.rel (%p473) target = $region36
      $region35: #{rfbnet_forward.21} parent=31 // pred_region
        _
      $region36: #{rfbnet_forward.21} parent=31 // pred_fallthru
        _
    $region32: #{rfbnet_forward.21} parent=5 // pred_fallthru
      _
    %p476 = scmp.le.s32.totalorder 2, %s9
    // Predicated region
    $region37: #{rfbnet_forward.21} parent=5 // pred_check
      %p477 = pneg %p476
    $region38: #{rfbnet_forward.21} parent=5 // pred_check_branch
      %479 = sbr.rel (%p477) target = $region40
    $region39: #{rfbnet_forward.21} parent=5 // pred_region
      %s480 = ssub.s32 %s9, 2
      // Predicated region
      $region41: #{rfbnet_forward.21} parent=39 // pred_check
        %p481 = pneg %p106
      $region42: #{rfbnet_forward.21} parent=39 // pred_check_branch
        %483 = sbr.rel (%p481) target = $region44
      $region43: #{rfbnet_forward.21} parent=39 // pred_region
        %p484 = scmp.lt.s32.totalorder %s15, 1
        %s485 = scalar_select %p484, %s15, 1
        %s486 = smul.addr %s485, 6
        %s487 = smul.addr %s486, 8
        %s488 = scalar_lea.vmem %s3, %s487
      $region44: #{rfbnet_forward.21} parent=39 // pred_fallthru
        _
    $region40: #{rfbnet_forward.21} parent=5 // pred_fallthru
      _
  $region6: #{rfbnet_forward.21} parent=0 // loop_footer
    %s13 = sadd.s32 1, %s9
  $region7: #{rfbnet_forward.21} parent=0 // loop_footer_branch
    %8 = sbr.rel target = $region3
  $region8: #{rfbnet_forward.21} parent=0 // loop_exit
    _

</llo_original>
